<compile_context>
chip_gen: v7x
topology: tpu7x:2x2x1
jax: 0.10.0
libtpu: 0.0.40
codegen_flags: <defaults>
</compile_context>

<pallas_src>
import functools

import jax
import jax.numpy as jnp
import numpy as np
from jax import lax
from jax.experimental import pallas as pl
from jax.experimental.pallas import tpu as pltpu

_VMEM = pl.BlockSpec(memory_space=pltpu.MemorySpace.VMEM)
_BIG = float(np.finfo(np.float32).max)
_HEAD_PAD = 8          # output heads padded to 8 sublanes (true width is 1)
_LN_EPS = 1e-5


# ----------------------------------------------------------------------------
# In-kernel math helpers (traced inside the Pallas kernel body)
# ----------------------------------------------------------------------------
def _mm(a, w_bf16):
    """MXU matmul: activation cast to bf16, weights already bf16, f32 accumulate."""
    return jnp.dot(a.astype(jnp.bfloat16), w_bf16, preferred_element_type=jnp.float32)


def _gather(oh_bf16, vals):
    """Exact data movement via bf16 one-hot matmul (one-hot values 0/1 are exact in bf16)."""
    return jnp.dot(oh_bf16, vals.astype(jnp.bfloat16), preferred_element_type=jnp.float32)


def _segment_sum(oh_bf16, vals):
    """Segment sum contracting over the ROW axis of the gather one-hot (no transposed copy)."""
    return lax.dot_general(oh_bf16, vals.astype(jnp.bfloat16),
                           dimension_numbers=(((0,), (0,)), ((), ())),
                           preferred_element_type=jnp.float32)


def _relu(x):
    return jnp.maximum(x, 0.0)


def _sigmoid(x):
    # stable sigmoid on the EUP: sigmoid(x) = 0.5 * (tanh(x/2) + 1)
    return 0.5 * (jnp.tanh(0.5 * x) + 1.0)


def _layer_norm(y, gamma, beta):
    mu = jnp.mean(y, axis=-1, keepdims=True)
    var = jnp.mean((y - mu) * (y - mu), axis=-1, keepdims=True)
    return (y - mu) * lax.rsqrt(var + _LN_EPS) * gamma + beta


def _mlp(x, layers):
    # MLP layer = Linear -> ReLU (no LayerNorm in encoder/decoder blocks)
    for (w, b) in layers:
        x = _relu(_mm(x, w) + b)
    return x


def _multi_agg_scatter(vals, oh_bf16, seg_col, inv_cnt, nonempty, smax_ref, smin_ref):
    """Segment (add, max, mean, min) for arbitrary segment assignment.

    vals     [R, F] f32, oh_bf16 [R, S] bf16 one-hot (row entity -> segment column),
    seg_col  [R, 1] i32 segment id per entity,
    inv_cnt / nonempty [S, 1] f32 (precomputed in the wrapper),
    smax_ref / smin_ref: VMEM scratch [S, F] f32.
    """
    S = oh_bf16.shape[1]
    ssum = _segment_sum(oh_bf16, vals)                 # [S, F]  (MXU)
    smean = ssum * inv_cnt

    @pl.loop(0, S)
    def _(s):
        m = seg_col == s                               # [R, 1]
        smax_ref[pl.ds(s, 1), :] = jnp.max(jnp.where(m, vals, -_BIG), axis=0, keepdims=True)
        smin_ref[pl.ds(s, 1), :] = jnp.min(jnp.where(m, vals, _BIG), axis=0, keepdims=True)

    ne = nonempty > 0.5                                # empty segments aggregate to 0
    smax = jnp.where(ne, smax_ref[...], 0.0)
    smin = jnp.where(ne, smin_ref[...], 0.0)
    return ssum, smax, smean, smin


def _multi_agg_uniform(vals, n_seg, per):
    """Segment (add, max, mean, min) when entities are contiguous per segment with equal counts."""
    parts_sum, parts_max, parts_min = [], [], []
    for i in range(n_seg):
        v = vals[i * per:(i + 1) * per]                # static sublane slice [per, F]
        parts_sum.append(jnp.sum(v, axis=0, keepdims=True))
        parts_max.append(jnp.max(v, axis=0, keepdims=True))
        parts_min.append(jnp.min(v, axis=0, keepdims=True))
    ssum = jnp.concatenate(parts_sum, axis=0) if n_seg > 1 else parts_sum[0]
    smax = jnp.concatenate(parts_max, axis=0) if n_seg > 1 else parts_max[0]
    smin = jnp.concatenate(parts_min, axis=0) if n_seg > 1 else parts_min[0]
    smean = ssum * (1.0 / per)
    return ssum, smax, smean, smin


def _agg_project(parts, P):
    """MultiAggregator projection: (4F -> F) done as 4 split-weight matmuls (no lane concat)."""
    ssum, smax, smean, smin = parts
    y = (_mm(ssum, P["w_sum"]) + _mm(smax, P["w_max"])
         + _mm(smean, P["w_mean"]) + _mm(smin, P["w_min"]) + P["b"])
    return _relu(y)


def _bcast_uniform(gvals, per):
    """Broadcast per-graph rows [G, F] to per-entity rows [G*per, F] (uniform segment layout)."""
    G, F = gvals.shape
    rows = [jnp.broadcast_to(gvals[i:i + 1, :], (per, F)) for i in range(G)]
    return jnp.concatenate(rows, axis=0) if G > 1 else rows[0]


def _head(wT_bf16, bT, z):
    """Output head in transposed orientation: [HEAD_PAD, l] x [R, l] -> [HEAD_PAD, R]."""
    y = lax.dot_general(wT_bf16, z.astype(jnp.bfloat16),
                        dimension_numbers=(((1,), (1,)), ((), ())),
                        preferred_element_type=jnp.float32)
    return y + bT


# ----------------------------------------------------------------------------
# The single fused kernel: full forward pass
# ----------------------------------------------------------------------------
def _network_kernel(*refs, treedef, steps, n_fixed, uniform, per_e, per_n):
    n_params = treedef.num_leaves
    fixed_refs = refs[:n_fixed]
    param_refs = refs[n_fixed:n_fixed + n_params]
    oe_ref, ox_ref, og_ref = refs[n_fixed + n_params:n_fixed + n_params + 3]
    scratch_refs = refs[n_fixed + n_params + 3:]

    fixed = [r[...] for r in fixed_refs]
    if uniform:
        (x_in, e_in, g_in, oh_src, oh_dst, dst_col, inv_dst, ne_dst) = fixed
        smax_n, smin_n = scratch_refs
    else:
        (x_in, e_in, g_in, oh_src, oh_dst, dst_col, inv_dst, ne_dst,
         oh_eg, oh_ng, egid_col, ngid_col, inv_eg, ne_eg, inv_ng, ne_ng) = fixed
        smax_n, smin_n, smax_ge, smin_ge, smax_gn, smin_gn = scratch_refs

    P = jax.tree_util.tree_unflatten(treedef, [r[...] for r in param_refs])
    pe, pn, pg = P["core_edge"], P["core_node"], P["core_glob"]

    # ---------------- encoder (independent blocks) ----------------
    e = _mlp(e_in, P["enc_edge"])
    x = _mlp(x_in, P["enc_node"])
    g = _mlp(g_in, P["enc_glob"])
    e0, x0, g0 = e, x, g
    G = g0.shape[0]

    # -------- hoisted latent0 partial products (constant across steps) --------
    x0_src = _gather(oh_src, x0)
    x0_dst = _gather(oh_dst, x0)
    g0We = _mm(g0, pe["w_g0"])                                           # [G, l_e]
    g0We_e = _bcast_uniform(g0We, per_e) if uniform else _gather(oh_eg, g0We)
    edge_const = (_mm(e0, pe["w_e0"]) + _mm(x0_src, pe["w_xs0"])
                  + _mm(x0_dst, pe["w_xd0"]) + g0We_e + pe["b"])

    g0Wn = _mm(g0, pn["w_g0"])                                           # [G, l_x]
    g0Wn_n = _bcast_uniform(g0Wn, per_n) if uniform else _gather(oh_ng, g0Wn)
    node_const = _mm(x0, pn["w_x0"]) + g0Wn_n + pn["b"]

    glob_const = _mm(g0, pg["w_g0"]) + pg["b"]

    # ---------------- core x steps (graph state stays VMEM/vreg resident) ----------------
    for _ in range(steps):
        # AggregatingEdgeBlock: split-weight matmuls, no lane-axis concats
        x_src = _gather(oh_src, x)
        x_dst = _gather(oh_dst, x)
        gWe = _mm(g, pe["w_g"])
        gWe_e = _bcast_uniform(gWe, per_e) if uniform else _gather(oh_eg, gWe)
        y_e = (edge_const + _mm(e, pe["w_e"]) + _mm(x_src, pe["w_xs"])
               + _mm(x_dst, pe["w_xd"]) + gWe_e)
        e_new = _layer_norm(_relu(y_e), pe["gamma"], pe["beta"])

        # AggregatingNodeBlock: edge->dst-node MultiAggregator (scratch-based max/min)
        parts_en = _multi_agg_scatter(e_new, oh_dst, dst_col, inv_dst, ne_dst, smax_n, smin_n)
        agg_en = _agg_project(parts_en, P["core_node_agg"])               # [N, l_e]
        gWn = _mm(g, pn["w_g"])
        gWn_n = _bcast_uniform(gWn, per_n) if uniform else _gather(oh_ng, gWn)
        y_x = node_const + _mm(x, pn["w_x"]) + _mm(agg_en, pn["w_agg"]) + gWn_n
        x_new = _layer_norm(_relu(y_x), pn["gamma"], pn["beta"])

        # AggregatingGlobalBlock: edge & node MultiAggregators then MLP(LN)
        if uniform:
            parts_eg = _multi_agg_uniform(e_new, G, per_e)
            parts_ng = _multi_agg_uniform(x_new, G, per_n)
        else:
            parts_eg = _multi_agg_scatter(e_new, oh_eg, egid_col, inv_eg, ne_eg, smax_ge, smin_ge)
            parts_ng = _multi_agg_scatter(x_new, oh_ng, ngid_col, inv_ng, ne_ng, smax_gn, smin_gn)
        e_agg = _agg_project(parts_eg, P["core_glob_eagg"])               # [G, l_e]
        n_agg = _agg_project(parts_ng, P["core_glob_nagg"])               # [G, l_x]
        y_g = glob_const + _mm(g, pg["w_g"]) + _mm(n_agg, pg["w_na"]) + _mm(e_agg, pg["w_ea"])
        g_new = _layer_norm(_relu(y_g), pg["gamma"], pg["beta"])

        e, x, g = e_new, x_new, g_new

    # ------------- decoder + output transform (save_all=False -> last step only) -------------
    de = _mlp(e, P["dec_edge"])
    dx = _mlp(x, P["dec_node"])
    dg = _mlp(g, P["dec_glob"])
    # transposed heads: outputs are [HEAD_PAD, entities] (lane axis = entities); row 0 is real
    oe_ref[...] = _sigmoid(_head(*P["out_edge"], de))
    ox_ref[...] = _sigmoid(_head(*P["out_node"], dx))
    og_ref[...] = _head(*P["out_glob"], dg)


# ----------------------------------------------------------------------------
# Parameter restructuring for the kernel (split weights, bf16 cast, transposed heads)
# ----------------------------------------------------------------------------
def _prep_params(params, l_e, l_x, l_g):
    bf16, f32 = jnp.bfloat16, jnp.float32
    _w = lambda a: jnp.asarray(a, bf16)
    _f = lambda a: jnp.asarray(a, f32)

    def cast_mlp(layers):
        return [(_w(w), _f(b)) for (w, b, _gm, _bt) in layers]

    def split(w, sizes):
        out, o = [], 0
        for s in sizes:
            out.append(w[o:o + s])
            o += s
        return out

    kp = {}
    for k in ("enc_edge", "enc_node", "enc_glob", "dec_edge", "dec_node", "dec_glob"):
        kp[k] = cast_mlp(params[k])

    (w, b, gm, bt), = params["core_edge"]
    we0, we, wxs0, wxs, wxd0, wxd, wg0, wg = split(w, [l_e, l_e, l_x, l_x, l_x, l_x, l_g, l_g])
    kp["core_edge"] = dict(w_e0=_w(we0), w_e=_w(we), w_xs0=_w(wxs0), w_xs=_w(wxs),
                           w_xd0=_w(wxd0), w_xd=_w(wxd), w_g0=_w(wg0), w_g=_w(wg),
                           b=_f(b), gamma=_f(gm), beta=_f(bt))

    (w, b, gm, bt), = params["core_node"]
    wx0, wx, wagg, wg0, wg = split(w, [l_x, l_x, l_e, l_g, l_g])
    kp["core_node"] = dict(w_x0=_w(wx0), w_x=_w(wx), w_agg=_w(wagg), w_g0=_w(wg0), w_g=_w(wg),
                           b=_f(b), gamma=_f(gm), beta=_f(bt))

    (w, b, gm, bt), = params["core_glob"]
    wg0, wg, wna, wea = split(w, [l_g, l_g, l_x, l_e])
    kp["core_glob"] = dict(w_g0=_w(wg0), w_g=_w(wg), w_na=_w(wna), w_ea=_w(wea),
                           b=_f(b), gamma=_f(gm), beta=_f(bt))

    def split_agg(wb, f):
        w, b = wb
        ws = split(w, [f, f, f, f])   # order matches ('add', 'max', 'mean', 'min')
        return dict(w_sum=_w(ws[0]), w_max=_w(ws[1]), w_mean=_w(ws[2]), w_min=_w(ws[3]), b=_f(b))

    kp["core_node_agg"] = split_agg(params["core_node_agg"], l_e)
    kp["core_glob_eagg"] = split_agg(params["core_glob_eagg"], l_e)
    kp["core_glob_nagg"] = split_agg(params["core_glob_nagg"], l_x)

    def head(wb, l):
        w, b = wb
        wT = jnp.zeros((_HEAD_PAD, l), f32).at[0, :].set(w[:, 0]).astype(bf16)
        bT = jnp.zeros((_HEAD_PAD, 1), f32).at[0, 0].set(b[0, 0])
        return (wT, bT)

    kp["out_edge"] = head(params["out_edge"], l_e)
    kp["out_node"] = head(params["out_node"], l_x)
    kp["out_glob"] = head(params["out_glob"], l_g)
    return kp


# ----------------------------------------------------------------------------
# Wrapper (one pallas_call for the whole network forward)
# ----------------------------------------------------------------------------
def network_forward(params, x, e, g, edges, node_idx, edge_idx, steps):
    f32, bf16 = jnp.float32, jnp.bfloat16
    # graph structure is static metadata (concrete) -> preprocessed with numpy
    edges_np = np.asarray(edges).astype(np.int32)
    node_idx_np = np.asarray(node_idx).astype(np.int32)
    edge_idx_np = np.asarray(edge_idx).astype(np.int32)
    N, E, G = int(x.shape[0]), int(e.shape[0]), int(g.shape[0])
    src, dst = edges_np[0], edges_np[1]

    l_e = params["enc_edge"][0][0].shape[1]
    l_x = params["enc_node"][0][0].shape[1]
    l_g = params["enc_glob"][0][0].shape[1]

    def uniform_check(idx, n_seg, n_ent):
        if n_seg <= 0 or n_ent % n_seg != 0:
            return None
        per = n_ent // n_seg
        return per if np.array_equal(idx, np.repeat(np.arange(n_seg), per)) else None

    per_n = uniform_check(node_idx_np, G, N)
    per_e = uniform_check(edge_idx_np, G, E)
    uniform = (per_n is not None) and (per_e is not None)

    def onehot(idx, n):
        return jnp.asarray((idx[:, None] == np.arange(n)[None, :]).astype(np.float32), dtype=bf16)

    def seg_meta(idx, n_seg):
        cnt = np.bincount(idx, minlength=n_seg).astype(np.float32).reshape(n_seg, 1)
        return (jnp.asarray(1.0 / np.maximum(cnt, 1.0)),
                jnp.asarray((cnt > 0).astype(np.float32)))

    oh_src = onehot(src, N)                       # [E, N] gather x[src]
    oh_dst = onehot(dst, N)                       # [E, N] gather x[dst] + segment sum edge->node
    dst_col = jnp.asarray(dst.reshape(E, 1), dtype=jnp.int32)
    inv_dst, ne_dst = seg_meta(dst, N)

    fixed = [jnp.asarray(x, f32), jnp.asarray(e, f32), jnp.asarray(g, f32),
             oh_src, oh_dst, dst_col, inv_dst, ne_dst]
    scratch = [pltpu.VMEM((N, l_e), jnp.float32), pltpu.VMEM((N, l_e), jnp.float32)]

    if not uniform:
        inv_eg, ne_eg = seg_meta(edge_idx_np, G)
        inv_ng, ne_ng = seg_meta(node_idx_np, G)
        fixed += [onehot(edge_idx_np, G), onehot(node_idx_np, G),
                  jnp.asarray(edge_idx_np.reshape(E, 1), dtype=jnp.int32),
                  jnp.asarray(node_idx_np.reshape(N, 1), dtype=jnp.int32),
                  inv_eg, ne_eg, inv_ng, ne_ng]
        scratch += [pltpu.VMEM((G, l_e), jnp.float32), pltpu.VMEM((G, l_e), jnp.float32),
                    pltpu.VMEM((G, l_x), jnp.float32), pltpu.VMEM((G, l_x), jnp.float32)]

    kparams = _prep_params(params, l_e, l_x, l_g)
    leaves, treedef = jax.tree_util.tree_flatten(kparams)

    kernel = functools.partial(_network_kernel, treedef=treedef, steps=int(steps),
                               n_fixed=len(fixed), uniform=uniform,
                               per_e=per_e or 0, per_n=per_n or 0)

    out_eT, out_xT, out_gT = pl.pallas_call(
        kernel,
        out_shape=(jax.ShapeDtypeStruct((_HEAD_PAD, E), f32),
                   jax.ShapeDtypeStruct((_HEAD_PAD, N), f32),
                   jax.ShapeDtypeStruct((_HEAD_PAD, G), f32)),
        in_specs=[_VMEM] * (len(fixed) + len(leaves)),
        out_specs=(_VMEM, _VMEM, _VMEM),
        scratch_shapes=scratch,
        compiler_params=pltpu.CompilerParams(vmem_limit_bytes=32 * 1024 * 1024),
    )(*fixed, *leaves)

    # row 0 of each transposed head is the real width-1 output
    return out_eT[0:1, :].T, out_xT[0:1, :].T, out_gT[0:1, :].T


# ----------------------------------------------------------------------------
# Deterministic parameter initialization (same structure/dims as the reference config)
# ----------------------------------------------------------------------------
def init_params(key, f_e=8, f_x=8, f_g=8, l_e=16, l_x=16, l_g=1):
    keys = iter(jax.random.split(key, 64))

    def lin(fi, fo):
        w = jax.random.normal(next(keys), (fi, fo), jnp.float32) / np.sqrt(fi)
        b = jnp.zeros((1, fo), jnp.float32)
        return w, b

    def mlp_layers(dims):
        layers = []
        for fi, fo in zip(dims[:-1], dims[1:]):
            w, b = lin(fi, fo)
            layers.append((w, b, jnp.ones((1, fo), jnp.float32), jnp.zeros((1, fo), jnp.float32)))
        return layers

    p = {}
    # encoder
    p["enc_edge"] = mlp_layers([f_e, l_e])
    p["enc_node"] = mlp_layers([f_x, l_x])
    p["enc_glob"] = mlp_layers([f_g, l_g])
    # core (inputs are [latent0 ; current] concatenations)
    e_cat, x_cat, g_cat = 2 * l_e, 2 * l_x, 2 * l_g
    p["core_edge"] = mlp_layers([e_cat + 2 * x_cat + g_cat, l_e])
    p["core_node_agg"] = lin(4 * l_e, l_e)
    p["core_node"] = mlp_layers([x_cat + l_e + g_cat, l_x])
    p["core_glob_eagg"] = lin(4 * l_e, l_e)
    p["core_glob_nagg"] = lin(4 * l_x, l_x)
    p["core_glob"] = mlp_layers([g_cat + l_x + l_e, l_g])
    # decoder
    p["dec_edge"] = mlp_layers([l_e, l_e, l_e])
    p["dec_node"] = mlp_layers([l_x, l_x, l_x])
    p["dec_glob"] = mlp_layers([l_g, l_g])
    # output transform
    p["out_edge"] = lin(l_e, 1)
    p["out_node"] = lin(l_x, 1)
    p["out_glob"] = lin(l_g, 1)
    return p


# ----------------------------------------------------------------------------
if __name__ == "__main__":
    N_NODES, N_EDGES, N_GRAPHS = 16, 32, 2
    F_X = F_E = F_G = 8
    STEPS = 2

    key = jax.random.PRNGKey(0)
    kx, ke, kg, ks, kd = jax.random.split(key, 5)
    x = jax.random.normal(kx, (N_NODES, F_X), jnp.float32)
    e = jax.random.normal(ke, (N_EDGES, F_E), jnp.float32)
    g = jax.random.normal(kg, (N_GRAPHS, F_G), jnp.float32)

    nodes_per_graph = N_NODES // N_GRAPHS
    edges_per_graph = N_EDGES // N_GRAPHS
    node_idx = jnp.repeat(jnp.arange(N_GRAPHS, dtype=jnp.int32), nodes_per_graph)
    edge_idx = jnp.repeat(jnp.arange(N_GRAPHS, dtype=jnp.int32), edges_per_graph)
    src = jax.random.randint(ks, (N_EDGES,), 0, nodes_per_graph)
    dst = jax.random.randint(kd, (N_EDGES,), 0, nodes_per_graph)
    offset = edge_idx * nodes_per_graph
    edges = jnp.stack([src + offset, dst + offset]).astype(jnp.int32)

    params = init_params(jax.random.PRNGKey(42), F_E, F_X, F_G, 16, 16, 1)

    out_e, out_x, out_g = network_forward(params, x, e, g, edges, node_idx, edge_idx, STEPS)
    jax.block_until_ready((out_e, out_x, out_g))

    assert out_e.shape == (N_EDGES, 1)
    assert out_x.shape == (N_NODES, 1)
    assert out_g.shape == (N_GRAPHS, 1)
    assert bool(jnp.all(jnp.isfinite(out_e))) and bool(jnp.all(jnp.isfinite(out_x)))
    assert bool(jnp.all(jnp.isfinite(out_g)))
    assert bool(jnp.all((out_e >= 0.0) & (out_e <= 1.0)))   # sigmoid heads
    assert bool(jnp.all((out_x >= 0.0) & (out_x <= 1.0)))
    print("KERNEL_OK")
</pallas_src>

<mosaic_0001>
module attributes {stable_mosaic.version = 11 : i64} {
  func.func @_network_kernel(%arg0: memref<16x8xf32, #tpu.memory_space<vmem>>, %arg1: memref<32x8xf32, #tpu.memory_space<vmem>>, %arg2: memref<2x8xf32, #tpu.memory_space<vmem>>, %arg3: memref<32x16xbf16, #tpu.memory_space<vmem>>, %arg4: memref<32x16xbf16, #tpu.memory_space<vmem>>, %arg5: memref<32x1xi32, #tpu.memory_space<vmem>>, %arg6: memref<16x1xf32, #tpu.memory_space<vmem>>, %arg7: memref<16x1xf32, #tpu.memory_space<vmem>>, %arg8: memref<1x16xf32, #tpu.memory_space<vmem>>, %arg9: memref<1x16xf32, #tpu.memory_space<vmem>>, %arg10: memref<1x16xf32, #tpu.memory_space<vmem>>, %arg11: memref<16x16xbf16, #tpu.memory_space<vmem>>, %arg12: memref<16x16xbf16, #tpu.memory_space<vmem>>, %arg13: memref<1x16xbf16, #tpu.memory_space<vmem>>, %arg14: memref<1x16xbf16, #tpu.memory_space<vmem>>, %arg15: memref<16x16xbf16, #tpu.memory_space<vmem>>, %arg16: memref<16x16xbf16, #tpu.memory_space<vmem>>, %arg17: memref<16x16xbf16, #tpu.memory_space<vmem>>, %arg18: memref<16x16xbf16, #tpu.memory_space<vmem>>, %arg19: memref<1x1xf32, #tpu.memory_space<vmem>>, %arg20: memref<1x1xf32, #tpu.memory_space<vmem>>, %arg21: memref<1x1xf32, #tpu.memory_space<vmem>>, %arg22: memref<16x1xbf16, #tpu.memory_space<vmem>>, %arg23: memref<1x1xbf16, #tpu.memory_space<vmem>>, %arg24: memref<1x1xbf16, #tpu.memory_space<vmem>>, %arg25: memref<16x1xbf16, #tpu.memory_space<vmem>>, %arg26: memref<1x16xf32, #tpu.memory_space<vmem>>, %arg27: memref<16x16xbf16, #tpu.memory_space<vmem>>, %arg28: memref<16x16xbf16, #tpu.memory_space<vmem>>, %arg29: memref<16x16xbf16, #tpu.memory_space<vmem>>, %arg30: memref<16x16xbf16, #tpu.memory_space<vmem>>, %arg31: memref<1x16xf32, #tpu.memory_space<vmem>>, %arg32: memref<16x16xbf16, #tpu.memory_space<vmem>>, %arg33: memref<16x16xbf16, #tpu.memory_space<vmem>>, %arg34: memref<16x16xbf16, #tpu.memory_space<vmem>>, %arg35: memref<16x16xbf16, #tpu.memory_space<vmem>>, %arg36: memref<1x16xf32, #tpu.memory_space<vmem>>, %arg37: memref<1x16xf32, #tpu.memory_space<vmem>>, %arg38: memref<1x16xf32, #tpu.memory_space<vmem>>, %arg39: memref<16x16xbf16, #tpu.memory_space<vmem>>, %arg40: memref<1x16xbf16, #tpu.memory_space<vmem>>, %arg41: memref<1x16xbf16, #tpu.memory_space<vmem>>, %arg42: memref<16x16xbf16, #tpu.memory_space<vmem>>, %arg43: memref<16x16xbf16, #tpu.memory_space<vmem>>, %arg44: memref<1x16xf32, #tpu.memory_space<vmem>>, %arg45: memref<16x16xbf16, #tpu.memory_space<vmem>>, %arg46: memref<16x16xbf16, #tpu.memory_space<vmem>>, %arg47: memref<16x16xbf16, #tpu.memory_space<vmem>>, %arg48: memref<16x16xbf16, #tpu.memory_space<vmem>>, %arg49: memref<16x16xbf16, #tpu.memory_space<vmem>>, %arg50: memref<1x16xf32, #tpu.memory_space<vmem>>, %arg51: memref<16x16xbf16, #tpu.memory_space<vmem>>, %arg52: memref<1x16xf32, #tpu.memory_space<vmem>>, %arg53: memref<1x1xbf16, #tpu.memory_space<vmem>>, %arg54: memref<1x1xf32, #tpu.memory_space<vmem>>, %arg55: memref<16x16xbf16, #tpu.memory_space<vmem>>, %arg56: memref<1x16xf32, #tpu.memory_space<vmem>>, %arg57: memref<16x16xbf16, #tpu.memory_space<vmem>>, %arg58: memref<1x16xf32, #tpu.memory_space<vmem>>, %arg59: memref<8x16xbf16, #tpu.memory_space<vmem>>, %arg60: memref<1x16xf32, #tpu.memory_space<vmem>>, %arg61: memref<8x1xbf16, #tpu.memory_space<vmem>>, %arg62: memref<1x1xf32, #tpu.memory_space<vmem>>, %arg63: memref<8x16xbf16, #tpu.memory_space<vmem>>, %arg64: memref<1x16xf32, #tpu.memory_space<vmem>>, %arg65: memref<8x16xbf16, #tpu.memory_space<vmem>>, %arg66: memref<8x1xf32, #tpu.memory_space<vmem>>, %arg67: memref<8x1xbf16, #tpu.memory_space<vmem>>, %arg68: memref<8x1xf32, #tpu.memory_space<vmem>>, %arg69: memref<8x16xbf16, #tpu.memory_space<vmem>>, %arg70: memref<8x1xf32, #tpu.memory_space<vmem>>, %arg71: memref<8x32xf32, #tpu.memory_space<vmem>>, %arg72: memref<8x16xf32, #tpu.memory_space<vmem>>, %arg73: memref<8x2xf32, #tpu.memory_space<vmem>>, %arg74: memref<16x16xf32, #tpu.memory_space<vmem>>, %arg75: memref<16x16xf32, #tpu.memory_space<vmem>>) attributes {dimension_semantics = [], scalar_prefetch = 0 : i64, scratch_operands = 2 : i64, tpu.core_type = #tpu.core_type<tc>} {
    %c0 = arith.constant 0 : index
    %c0_0 = arith.constant 0 : index
    %0 = vector.load %arg0[%c0, %c0_0] : memref<16x8xf32, #tpu.memory_space<vmem>>, vector<16x8xf32>
    %c0_1 = arith.constant 0 : index
    %c0_2 = arith.constant 0 : index
    %1 = vector.load %arg1[%c0_1, %c0_2] : memref<32x8xf32, #tpu.memory_space<vmem>>, vector<32x8xf32>
    %c0_3 = arith.constant 0 : index
    %c0_4 = arith.constant 0 : index
    %2 = vector.load %arg2[%c0_3, %c0_4] : memref<2x8xf32, #tpu.memory_space<vmem>>, vector<2x8xf32>
    %c0_5 = arith.constant 0 : index
    %c0_6 = arith.constant 0 : index
    %3 = vector.load %arg3[%c0_5, %c0_6] : memref<32x16xbf16, #tpu.memory_space<vmem>>, vector<32x16xbf16>
    %c0_7 = arith.constant 0 : index
    %c0_8 = arith.constant 0 : index
    %4 = vector.load %arg4[%c0_7, %c0_8] : memref<32x16xbf16, #tpu.memory_space<vmem>>, vector<32x16xbf16>
    %c0_9 = arith.constant 0 : index
    %c0_10 = arith.constant 0 : index
    %5 = vector.load %arg5[%c0_9, %c0_10] : memref<32x1xi32, #tpu.memory_space<vmem>>, vector<32x1xi32>
    %c0_11 = arith.constant 0 : index
    %c0_12 = arith.constant 0 : index
    %6 = vector.load %arg6[%c0_11, %c0_12] : memref<16x1xf32, #tpu.memory_space<vmem>>, vector<16x1xf32>
    %c0_13 = arith.constant 0 : index
    %c0_14 = arith.constant 0 : index
    %7 = vector.load %arg7[%c0_13, %c0_14] : memref<16x1xf32, #tpu.memory_space<vmem>>, vector<16x1xf32>
    %c0_15 = arith.constant 0 : index
    %c0_16 = arith.constant 0 : index
    %8 = vector.load %arg8[%c0_15, %c0_16] : memref<1x16xf32, #tpu.memory_space<vmem>>, vector<1x16xf32>
    %c0_17 = arith.constant 0 : index
    %c0_18 = arith.constant 0 : index
    %9 = vector.load %arg9[%c0_17, %c0_18] : memref<1x16xf32, #tpu.memory_space<vmem>>, vector<1x16xf32>
    %c0_19 = arith.constant 0 : index
    %c0_20 = arith.constant 0 : index
    %10 = vector.load %arg10[%c0_19, %c0_20] : memref<1x16xf32, #tpu.memory_space<vmem>>, vector<1x16xf32>
    %c0_21 = arith.constant 0 : index
    %c0_22 = arith.constant 0 : index
    %11 = vector.load %arg11[%c0_21, %c0_22] : memref<16x16xbf16, #tpu.memory_space<vmem>>, vector<16x16xbf16>
    %c0_23 = arith.constant 0 : index
    %c0_24 = arith.constant 0 : index
    %12 = vector.load %arg12[%c0_23, %c0_24] : memref<16x16xbf16, #tpu.memory_space<vmem>>, vector<16x16xbf16>
    %c0_25 = arith.constant 0 : index
    %c0_26 = arith.constant 0 : index
    %13 = vector.load %arg13[%c0_25, %c0_26] : memref<1x16xbf16, #tpu.memory_space<vmem>>, vector<1x16xbf16>
    %c0_27 = arith.constant 0 : index
    %c0_28 = arith.constant 0 : index
    %14 = vector.load %arg14[%c0_27, %c0_28] : memref<1x16xbf16, #tpu.memory_space<vmem>>, vector<1x16xbf16>
    %c0_29 = arith.constant 0 : index
    %c0_30 = arith.constant 0 : index
    %15 = vector.load %arg15[%c0_29, %c0_30] : memref<16x16xbf16, #tpu.memory_space<vmem>>, vector<16x16xbf16>
    %c0_31 = arith.constant 0 : index
    %c0_32 = arith.constant 0 : index
    %16 = vector.load %arg16[%c0_31, %c0_32] : memref<16x16xbf16, #tpu.memory_space<vmem>>, vector<16x16xbf16>
    %c0_33 = arith.constant 0 : index
    %c0_34 = arith.constant 0 : index
    %17 = vector.load %arg17[%c0_33, %c0_34] : memref<16x16xbf16, #tpu.memory_space<vmem>>, vector<16x16xbf16>
    %c0_35 = arith.constant 0 : index
    %c0_36 = arith.constant 0 : index
    %18 = vector.load %arg18[%c0_35, %c0_36] : memref<16x16xbf16, #tpu.memory_space<vmem>>, vector<16x16xbf16>
    %c0_37 = arith.constant 0 : index
    %c0_38 = arith.constant 0 : index
    %19 = vector.load %arg19[%c0_37, %c0_38] : memref<1x1xf32, #tpu.memory_space<vmem>>, vector<1x1xf32>
    %c0_39 = arith.constant 0 : index
    %c0_40 = arith.constant 0 : index
    %20 = vector.load %arg20[%c0_39, %c0_40] : memref<1x1xf32, #tpu.memory_space<vmem>>, vector<1x1xf32>
    %c0_41 = arith.constant 0 : index
    %c0_42 = arith.constant 0 : index
    %21 = vector.load %arg21[%c0_41, %c0_42] : memref<1x1xf32, #tpu.memory_space<vmem>>, vector<1x1xf32>
    %c0_43 = arith.constant 0 : index
    %c0_44 = arith.constant 0 : index
    %22 = vector.load %arg22[%c0_43, %c0_44] : memref<16x1xbf16, #tpu.memory_space<vmem>>, vector<16x1xbf16>
    %c0_45 = arith.constant 0 : index
    %c0_46 = arith.constant 0 : index
    %23 = vector.load %arg23[%c0_45, %c0_46] : memref<1x1xbf16, #tpu.memory_space<vmem>>, vector<1x1xbf16>
    %c0_47 = arith.constant 0 : index
    %c0_48 = arith.constant 0 : index
    %24 = vector.load %arg24[%c0_47, %c0_48] : memref<1x1xbf16, #tpu.memory_space<vmem>>, vector<1x1xbf16>
    %c0_49 = arith.constant 0 : index
    %c0_50 = arith.constant 0 : index
    %25 = vector.load %arg25[%c0_49, %c0_50] : memref<16x1xbf16, #tpu.memory_space<vmem>>, vector<16x1xbf16>
    %c0_51 = arith.constant 0 : index
    %c0_52 = arith.constant 0 : index
    %26 = vector.load %arg26[%c0_51, %c0_52] : memref<1x16xf32, #tpu.memory_space<vmem>>, vector<1x16xf32>
    %c0_53 = arith.constant 0 : index
    %c0_54 = arith.constant 0 : index
    %27 = vector.load %arg27[%c0_53, %c0_54] : memref<16x16xbf16, #tpu.memory_space<vmem>>, vector<16x16xbf16>
    %c0_55 = arith.constant 0 : index
    %c0_56 = arith.constant 0 : index
    %28 = vector.load %arg28[%c0_55, %c0_56] : memref<16x16xbf16, #tpu.memory_space<vmem>>, vector<16x16xbf16>
    %c0_57 = arith.constant 0 : index
    %c0_58 = arith.constant 0 : index
    %29 = vector.load %arg29[%c0_57, %c0_58] : memref<16x16xbf16, #tpu.memory_space<vmem>>, vector<16x16xbf16>
    %c0_59 = arith.constant 0 : index
    %c0_60 = arith.constant 0 : index
    %30 = vector.load %arg30[%c0_59, %c0_60] : memref<16x16xbf16, #tpu.memory_space<vmem>>, vector<16x16xbf16>
    %c0_61 = arith.constant 0 : index
    %c0_62 = arith.constant 0 : index
    %31 = vector.load %arg31[%c0_61, %c0_62] : memref<1x16xf32, #tpu.memory_space<vmem>>, vector<1x16xf32>
    %c0_63 = arith.constant 0 : index
    %c0_64 = arith.constant 0 : index
    %32 = vector.load %arg32[%c0_63, %c0_64] : memref<16x16xbf16, #tpu.memory_space<vmem>>, vector<16x16xbf16>
    %c0_65 = arith.constant 0 : index
    %c0_66 = arith.constant 0 : index
    %33 = vector.load %arg33[%c0_65, %c0_66] : memref<16x16xbf16, #tpu.memory_space<vmem>>, vector<16x16xbf16>
    %c0_67 = arith.constant 0 : index
    %c0_68 = arith.constant 0 : index
    %34 = vector.load %arg34[%c0_67, %c0_68] : memref<16x16xbf16, #tpu.memory_space<vmem>>, vector<16x16xbf16>
    %c0_69 = arith.constant 0 : index
    %c0_70 = arith.constant 0 : index
    %35 = vector.load %arg35[%c0_69, %c0_70] : memref<16x16xbf16, #tpu.memory_space<vmem>>, vector<16x16xbf16>
    %c0_71 = arith.constant 0 : index
    %c0_72 = arith.constant 0 : index
    %36 = vector.load %arg36[%c0_71, %c0_72] : memref<1x16xf32, #tpu.memory_space<vmem>>, vector<1x16xf32>
    %c0_73 = arith.constant 0 : index
    %c0_74 = arith.constant 0 : index
    %37 = vector.load %arg37[%c0_73, %c0_74] : memref<1x16xf32, #tpu.memory_space<vmem>>, vector<1x16xf32>
    %c0_75 = arith.constant 0 : index
    %c0_76 = arith.constant 0 : index
    %38 = vector.load %arg38[%c0_75, %c0_76] : memref<1x16xf32, #tpu.memory_space<vmem>>, vector<1x16xf32>
    %c0_77 = arith.constant 0 : index
    %c0_78 = arith.constant 0 : index
    %39 = vector.load %arg39[%c0_77, %c0_78] : memref<16x16xbf16, #tpu.memory_space<vmem>>, vector<16x16xbf16>
    %c0_79 = arith.constant 0 : index
    %c0_80 = arith.constant 0 : index
    %40 = vector.load %arg40[%c0_79, %c0_80] : memref<1x16xbf16, #tpu.memory_space<vmem>>, vector<1x16xbf16>
    %c0_81 = arith.constant 0 : index
    %c0_82 = arith.constant 0 : index
    %41 = vector.load %arg41[%c0_81, %c0_82] : memref<1x16xbf16, #tpu.memory_space<vmem>>, vector<1x16xbf16>
    %c0_83 = arith.constant 0 : index
    %c0_84 = arith.constant 0 : index
    %42 = vector.load %arg42[%c0_83, %c0_84] : memref<16x16xbf16, #tpu.memory_space<vmem>>, vector<16x16xbf16>
    %c0_85 = arith.constant 0 : index
    %c0_86 = arith.constant 0 : index
    %43 = vector.load %arg43[%c0_85, %c0_86] : memref<16x16xbf16, #tpu.memory_space<vmem>>, vector<16x16xbf16>
    %c0_87 = arith.constant 0 : index
    %c0_88 = arith.constant 0 : index
    %44 = vector.load %arg44[%c0_87, %c0_88] : memref<1x16xf32, #tpu.memory_space<vmem>>, vector<1x16xf32>
    %c0_89 = arith.constant 0 : index
    %c0_90 = arith.constant 0 : index
    %45 = vector.load %arg45[%c0_89, %c0_90] : memref<16x16xbf16, #tpu.memory_space<vmem>>, vector<16x16xbf16>
    %c0_91 = arith.constant 0 : index
    %c0_92 = arith.constant 0 : index
    %46 = vector.load %arg46[%c0_91, %c0_92] : memref<16x16xbf16, #tpu.memory_space<vmem>>, vector<16x16xbf16>
    %c0_93 = arith.constant 0 : index
    %c0_94 = arith.constant 0 : index
    %47 = vector.load %arg47[%c0_93, %c0_94] : memref<16x16xbf16, #tpu.memory_space<vmem>>, vector<16x16xbf16>
    %c0_95 = arith.constant 0 : index
    %c0_96 = arith.constant 0 : index
    %48 = vector.load %arg48[%c0_95, %c0_96] : memref<16x16xbf16, #tpu.memory_space<vmem>>, vector<16x16xbf16>
    %c0_97 = arith.constant 0 : index
    %c0_98 = arith.constant 0 : index
    %49 = vector.load %arg49[%c0_97, %c0_98] : memref<16x16xbf16, #tpu.memory_space<vmem>>, vector<16x16xbf16>
    %c0_99 = arith.constant 0 : index
    %c0_100 = arith.constant 0 : index
    %50 = vector.load %arg50[%c0_99, %c0_100] : memref<1x16xf32, #tpu.memory_space<vmem>>, vector<1x16xf32>
    %c0_101 = arith.constant 0 : index
    %c0_102 = arith.constant 0 : index
    %51 = vector.load %arg51[%c0_101, %c0_102] : memref<16x16xbf16, #tpu.memory_space<vmem>>, vector<16x16xbf16>
    %c0_103 = arith.constant 0 : index
    %c0_104 = arith.constant 0 : index
    %52 = vector.load %arg52[%c0_103, %c0_104] : memref<1x16xf32, #tpu.memory_space<vmem>>, vector<1x16xf32>
    %c0_105 = arith.constant 0 : index
    %c0_106 = arith.constant 0 : index
    %53 = vector.load %arg53[%c0_105, %c0_106] : memref<1x1xbf16, #tpu.memory_space<vmem>>, vector<1x1xbf16>
    %c0_107 = arith.constant 0 : index
    %c0_108 = arith.constant 0 : index
    %54 = vector.load %arg54[%c0_107, %c0_108] : memref<1x1xf32, #tpu.memory_space<vmem>>, vector<1x1xf32>
    %c0_109 = arith.constant 0 : index
    %c0_110 = arith.constant 0 : index
    %55 = vector.load %arg55[%c0_109, %c0_110] : memref<16x16xbf16, #tpu.memory_space<vmem>>, vector<16x16xbf16>
    %c0_111 = arith.constant 0 : index
    %c0_112 = arith.constant 0 : index
    %56 = vector.load %arg56[%c0_111, %c0_112] : memref<1x16xf32, #tpu.memory_space<vmem>>, vector<1x16xf32>
    %c0_113 = arith.constant 0 : index
    %c0_114 = arith.constant 0 : index
    %57 = vector.load %arg57[%c0_113, %c0_114] : memref<16x16xbf16, #tpu.memory_space<vmem>>, vector<16x16xbf16>
    %c0_115 = arith.constant 0 : index
    %c0_116 = arith.constant 0 : index
    %58 = vector.load %arg58[%c0_115, %c0_116] : memref<1x16xf32, #tpu.memory_space<vmem>>, vector<1x16xf32>
    %c0_117 = arith.constant 0 : index
    %c0_118 = arith.constant 0 : index
    %59 = vector.load %arg59[%c0_117, %c0_118] : memref<8x16xbf16, #tpu.memory_space<vmem>>, vector<8x16xbf16>
    %c0_119 = arith.constant 0 : index
    %c0_120 = arith.constant 0 : index
    %60 = vector.load %arg60[%c0_119, %c0_120] : memref<1x16xf32, #tpu.memory_space<vmem>>, vector<1x16xf32>
    %c0_121 = arith.constant 0 : index
    %c0_122 = arith.constant 0 : index
    %61 = vector.load %arg61[%c0_121, %c0_122] : memref<8x1xbf16, #tpu.memory_space<vmem>>, vector<8x1xbf16>
    %c0_123 = arith.constant 0 : index
    %c0_124 = arith.constant 0 : index
    %62 = vector.load %arg62[%c0_123, %c0_124] : memref<1x1xf32, #tpu.memory_space<vmem>>, vector<1x1xf32>
    %c0_125 = arith.constant 0 : index
    %c0_126 = arith.constant 0 : index
    %63 = vector.load %arg63[%c0_125, %c0_126] : memref<8x16xbf16, #tpu.memory_space<vmem>>, vector<8x16xbf16>
    %c0_127 = arith.constant 0 : index
    %c0_128 = arith.constant 0 : index
    %64 = vector.load %arg64[%c0_127, %c0_128] : memref<1x16xf32, #tpu.memory_space<vmem>>, vector<1x16xf32>
    %c0_129 = arith.constant 0 : index
    %c0_130 = arith.constant 0 : index
    %65 = vector.load %arg65[%c0_129, %c0_130] : memref<8x16xbf16, #tpu.memory_space<vmem>>, vector<8x16xbf16>
    %c0_131 = arith.constant 0 : index
    %c0_132 = arith.constant 0 : index
    %66 = vector.load %arg66[%c0_131, %c0_132] : memref<8x1xf32, #tpu.memory_space<vmem>>, vector<8x1xf32>
    %c0_133 = arith.constant 0 : index
    %c0_134 = arith.constant 0 : index
    %67 = vector.load %arg67[%c0_133, %c0_134] : memref<8x1xbf16, #tpu.memory_space<vmem>>, vector<8x1xbf16>
    %c0_135 = arith.constant 0 : index
    %c0_136 = arith.constant 0 : index
    %68 = vector.load %arg68[%c0_135, %c0_136] : memref<8x1xf32, #tpu.memory_space<vmem>>, vector<8x1xf32>
    %c0_137 = arith.constant 0 : index
    %c0_138 = arith.constant 0 : index
    %69 = vector.load %arg69[%c0_137, %c0_138] : memref<8x16xbf16, #tpu.memory_space<vmem>>, vector<8x16xbf16>
    %c0_139 = arith.constant 0 : index
    %c0_140 = arith.constant 0 : index
    %70 = vector.load %arg70[%c0_139, %c0_140] : memref<8x1xf32, #tpu.memory_space<vmem>>, vector<8x1xf32>
    %71 = arith.truncf %1 : vector<32x8xf32> to vector<32x8xbf16>
    %cst = arith.constant dense<0.000000e+00> : vector<32x16xf32>
    %72 = tpu.matmul %71, %59, %cst {dimension_numbers = #tpu.dot_dimension_numbers<[1], [0], [0], [1], [0, 0, 1, 1], [], []>} : vector<32x8xbf16>, vector<8x16xbf16>, vector<32x16xf32> -> vector<32x16xf32>
    %73 = vector.broadcast %60 : vector<1x16xf32> to vector<32x16xf32>
    %74 = arith.addf %72, %73 : vector<32x16xf32>
    %cst_141 = arith.constant 0.000000e+00 : f32
    %75 = vector.broadcast %cst_141 : f32 to vector<32x16xf32>
    %76 = arith.maximumf %74, %75 : vector<32x16xf32>
    %77 = arith.truncf %0 : vector<16x8xf32> to vector<16x8xbf16>
    %cst_142 = arith.constant dense<0.000000e+00> : vector<16x16xf32>
    %78 = tpu.matmul %77, %63, %cst_142 {dimension_numbers = #tpu.dot_dimension_numbers<[1], [0], [0], [1], [0, 0, 1, 1], [], []>} : vector<16x8xbf16>, vector<8x16xbf16>, vector<16x16xf32> -> vector<16x16xf32>
    %79 = vector.broadcast %64 : vector<1x16xf32> to vector<16x16xf32>
    %80 = arith.addf %78, %79 : vector<16x16xf32>
    %cst_143 = arith.constant 0.000000e+00 : f32
    %81 = vector.broadcast %cst_143 : f32 to vector<16x16xf32>
    %82 = arith.maximumf %80, %81 : vector<16x16xf32>
    %83 = arith.truncf %2 : vector<2x8xf32> to vector<2x8xbf16>
    %cst_144 = arith.constant dense<0.000000e+00> : vector<2x1xf32>
    %84 = tpu.matmul %83, %61, %cst_144 {dimension_numbers = #tpu.dot_dimension_numbers<[1], [0], [0], [1], [0, 0, 1, 1], [], []>} : vector<2x8xbf16>, vector<8x1xbf16>, vector<2x1xf32> -> vector<2x1xf32>
    %85 = vector.broadcast %62 : vector<1x1xf32> to vector<2x1xf32>
    %86 = arith.addf %84, %85 : vector<2x1xf32>
    %cst_145 = arith.constant 0.000000e+00 : f32
    %87 = vector.broadcast %cst_145 : f32 to vector<2x1xf32>
    %88 = arith.maximumf %86, %87 : vector<2x1xf32>
    %89 = arith.truncf %82 : vector<16x16xf32> to vector<16x16xbf16>
    %cst_146 = arith.constant dense<0.000000e+00> : vector<32x16xf32>
    %90 = tpu.matmul %3, %89, %cst_146 {dimension_numbers = #tpu.dot_dimension_numbers<[1], [0], [0], [1], [0, 0, 1, 1], [], []>} : vector<32x16xbf16>, vector<16x16xbf16>, vector<32x16xf32> -> vector<32x16xf32>
    %91 = arith.truncf %82 : vector<16x16xf32> to vector<16x16xbf16>
    %cst_147 = arith.constant dense<0.000000e+00> : vector<32x16xf32>
    %92 = tpu.matmul %4, %91, %cst_147 {dimension_numbers = #tpu.dot_dimension_numbers<[1], [0], [0], [1], [0, 0, 1, 1], [], []>} : vector<32x16xbf16>, vector<16x16xbf16>, vector<32x16xf32> -> vector<32x16xf32>
    %93 = arith.truncf %88 : vector<2x1xf32> to vector<2x1xbf16>
    %cst_148 = arith.constant dense<0.000000e+00> : vector<2x16xf32>
    %94 = tpu.matmul %93, %14, %cst_148 {dimension_numbers = #tpu.dot_dimension_numbers<[1], [0], [0], [1], [0, 0, 1, 1], [], []>} : vector<2x1xbf16>, vector<1x16xbf16>, vector<2x16xf32> -> vector<2x16xf32>
    %95 = vector.extract_strided_slice %94 {offsets = [0, 0], sizes = [1, 16], strides = [1, 1]} : vector<2x16xf32> to vector<1x16xf32>
    %96 = vector.shape_cast %95 : vector<1x16xf32> to vector<1x16xf32>
    %97 = vector.broadcast %96 : vector<1x16xf32> to vector<16x16xf32>
    %98 = vector.extract_strided_slice %94 {offsets = [1, 0], sizes = [1, 16], strides = [1, 1]} : vector<2x16xf32> to vector<1x16xf32>
    %99 = vector.shape_cast %98 : vector<1x16xf32> to vector<1x16xf32>
    %100 = vector.broadcast %99 : vector<1x16xf32> to vector<16x16xf32>
    %101 = tpu.concatenate %97, %100 in 0 : vector<16x16xf32>, vector<16x16xf32> -> vector<32x16xf32>
    %102 = arith.truncf %76 : vector<32x16xf32> to vector<32x16xbf16>
    %cst_149 = arith.constant dense<0.000000e+00> : vector<32x16xf32>
    %103 = tpu.matmul %102, %12, %cst_149 {dimension_numbers = #tpu.dot_dimension_numbers<[1], [0], [0], [1], [0, 0, 1, 1], [], []>} : vector<32x16xbf16>, vector<16x16xbf16>, vector<32x16xf32> -> vector<32x16xf32>
    %104 = arith.truncf %90 : vector<32x16xf32> to vector<32x16xbf16>
    %cst_150 = arith.constant dense<0.000000e+00> : vector<32x16xf32>
    %105 = tpu.matmul %104, %18, %cst_150 {dimension_numbers = #tpu.dot_dimension_numbers<[1], [0], [0], [1], [0, 0, 1, 1], [], []>} : vector<32x16xbf16>, vector<16x16xbf16>, vector<32x16xf32> -> vector<32x16xf32>
    %106 = arith.addf %103, %105 : vector<32x16xf32>
    %107 = arith.truncf %92 : vector<32x16xf32> to vector<32x16xbf16>
    %cst_151 = arith.constant dense<0.000000e+00> : vector<32x16xf32>
    %108 = tpu.matmul %107, %16, %cst_151 {dimension_numbers = #tpu.dot_dimension_numbers<[1], [0], [0], [1], [0, 0, 1, 1], [], []>} : vector<32x16xbf16>, vector<16x16xbf16>, vector<32x16xf32> -> vector<32x16xf32>
    %109 = arith.addf %106, %108 : vector<32x16xf32>
    %110 = arith.addf %109, %101 : vector<32x16xf32>
    %111 = vector.broadcast %8 : vector<1x16xf32> to vector<32x16xf32>
    %112 = arith.addf %110, %111 : vector<32x16xf32>
    %113 = arith.truncf %88 : vector<2x1xf32> to vector<2x1xbf16>
    %cst_152 = arith.constant dense<0.000000e+00> : vector<2x16xf32>
    %114 = tpu.matmul %113, %41, %cst_152 {dimension_numbers = #tpu.dot_dimension_numbers<[1], [0], [0], [1], [0, 0, 1, 1], [], []>} : vector<2x1xbf16>, vector<1x16xbf16>, vector<2x16xf32> -> vector<2x16xf32>
    %115 = vector.extract_strided_slice %114 {offsets = [0, 0], sizes = [1, 16], strides = [1, 1]} : vector<2x16xf32> to vector<1x16xf32>
    %116 = vector.shape_cast %115 : vector<1x16xf32> to vector<1x16xf32>
    %117 = vector.broadcast %116 : vector<1x16xf32> to vector<8x16xf32>
    %118 = vector.extract_strided_slice %114 {offsets = [1, 0], sizes = [1, 16], strides = [1, 1]} : vector<2x16xf32> to vector<1x16xf32>
    %119 = vector.shape_cast %118 : vector<1x16xf32> to vector<1x16xf32>
    %120 = vector.broadcast %119 : vector<1x16xf32> to vector<8x16xf32>
    %121 = tpu.concatenate %117, %120 in 0 : vector<8x16xf32>, vector<8x16xf32> -> vector<16x16xf32>
    %122 = arith.truncf %82 : vector<16x16xf32> to vector<16x16xbf16>
    %cst_153 = arith.constant dense<0.000000e+00> : vector<16x16xf32>
    %123 = tpu.matmul %122, %43, %cst_153 {dimension_numbers = #tpu.dot_dimension_numbers<[1], [0], [0], [1], [0, 0, 1, 1], [], []>} : vector<16x16xbf16>, vector<16x16xbf16>, vector<16x16xf32> -> vector<16x16xf32>
    %124 = arith.addf %123, %121 : vector<16x16xf32>
    %125 = vector.broadcast %36 : vector<1x16xf32> to vector<16x16xf32>
    %126 = arith.addf %124, %125 : vector<16x16xf32>
    %127 = arith.truncf %88 : vector<2x1xf32> to vector<2x1xbf16>
    %cst_154 = arith.constant dense<0.000000e+00> : vector<2x1xf32>
    %128 = tpu.matmul %127, %24, %cst_154 {dimension_numbers = #tpu.dot_dimension_numbers<[1], [0], [0], [1], [0, 0, 1, 1], [], []>} : vector<2x1xbf16>, vector<1x1xbf16>, vector<2x1xf32> -> vector<2x1xf32>
    %129 = vector.broadcast %19 : vector<1x1xf32> to vector<2x1xf32>
    %130 = arith.addf %128, %129 : vector<2x1xf32>
    %131 = arith.truncf %82 : vector<16x16xf32> to vector<16x16xbf16>
    %cst_155 = arith.constant dense<0.000000e+00> : vector<32x16xf32>
    %132 = tpu.matmul %3, %131, %cst_155 {dimension_numbers = #tpu.dot_dimension_numbers<[1], [0], [0], [1], [0, 0, 1, 1], [], []>} : vector<32x16xbf16>, vector<16x16xbf16>, vector<32x16xf32> -> vector<32x16xf32>
    %133 = arith.truncf %82 : vector<16x16xf32> to vector<16x16xbf16>
    %cst_156 = arith.constant dense<0.000000e+00> : vector<32x16xf32>
    %134 = tpu.matmul %4, %133, %cst_156 {dimension_numbers = #tpu.dot_dimension_numbers<[1], [0], [0], [1], [0, 0, 1, 1], [], []>} : vector<32x16xbf16>, vector<16x16xbf16>, vector<32x16xf32> -> vector<32x16xf32>
    %135 = arith.truncf %88 : vector<2x1xf32> to vector<2x1xbf16>
    %cst_157 = arith.constant dense<0.000000e+00> : vector<2x16xf32>
    %136 = tpu.matmul %135, %13, %cst_157 {dimension_numbers = #tpu.dot_dimension_numbers<[1], [0], [0], [1], [0, 0, 1, 1], [], []>} : vector<2x1xbf16>, vector<1x16xbf16>, vector<2x16xf32> -> vector<2x16xf32>
    %137 = vector.extract_strided_slice %136 {offsets = [0, 0], sizes = [1, 16], strides = [1, 1]} : vector<2x16xf32> to vector<1x16xf32>
    %138 = vector.shape_cast %137 : vector<1x16xf32> to vector<1x16xf32>
    %139 = vector.broadcast %138 : vector<1x16xf32> to vector<16x16xf32>
    %140 = vector.extract_strided_slice %136 {offsets = [1, 0], sizes = [1, 16], strides = [1, 1]} : vector<2x16xf32> to vector<1x16xf32>
    %141 = vector.shape_cast %140 : vector<1x16xf32> to vector<1x16xf32>
    %142 = vector.broadcast %141 : vector<1x16xf32> to vector<16x16xf32>
    %143 = tpu.concatenate %139, %142 in 0 : vector<16x16xf32>, vector<16x16xf32> -> vector<32x16xf32>
    %144 = arith.truncf %76 : vector<32x16xf32> to vector<32x16xbf16>
    %cst_158 = arith.constant dense<0.000000e+00> : vector<32x16xf32>
    %145 = tpu.matmul %144, %11, %cst_158 {dimension_numbers = #tpu.dot_dimension_numbers<[1], [0], [0], [1], [0, 0, 1, 1], [], []>} : vector<32x16xbf16>, vector<16x16xbf16>, vector<32x16xf32> -> vector<32x16xf32>
    %146 = arith.addf %112, %145 : vector<32x16xf32>
    %147 = arith.truncf %132 : vector<32x16xf32> to vector<32x16xbf16>
    %cst_159 = arith.constant dense<0.000000e+00> : vector<32x16xf32>
    %148 = tpu.matmul %147, %17, %cst_159 {dimension_numbers = #tpu.dot_dimension_numbers<[1], [0], [0], [1], [0, 0, 1, 1], [], []>} : vector<32x16xbf16>, vector<16x16xbf16>, vector<32x16xf32> -> vector<32x16xf32>
    %149 = arith.addf %146, %148 : vector<32x16xf32>
    %150 = arith.truncf %134 : vector<32x16xf32> to vector<32x16xbf16>
    %cst_160 = arith.constant dense<0.000000e+00> : vector<32x16xf32>
    %151 = tpu.matmul %150, %15, %cst_160 {dimension_numbers = #tpu.dot_dimension_numbers<[1], [0], [0], [1], [0, 0, 1, 1], [], []>} : vector<32x16xbf16>, vector<16x16xbf16>, vector<32x16xf32> -> vector<32x16xf32>
    %152 = arith.addf %149, %151 : vector<32x16xf32>
    %153 = arith.addf %152, %143 : vector<32x16xf32>
    %cst_161 = arith.constant 0.000000e+00 : f32
    %154 = vector.broadcast %cst_161 : f32 to vector<32x16xf32>
    %155 = arith.maximumf %153, %154 : vector<32x16xf32>
    %cst_162 = arith.constant dense<0.000000e+00> : vector<32xf32>
    %156 = vector.multi_reduction <add>, %155, %cst_162 [1] : vector<32x16xf32> to vector<32xf32>
    %157 = vector.shape_cast %156 : vector<32xf32> to vector<32x1xf32>
    %cst_163 = arith.constant 1.600000e+01 : f32
    %158 = vector.broadcast %cst_163 : f32 to vector<32x1xf32>
    %159 = arith.divf %157, %158 : vector<32x1xf32>
    %160 = vector.broadcast %159 : vector<32x1xf32> to vector<32x16xf32>
    %161 = arith.subf %155, %160 : vector<32x16xf32>
    %162 = vector.broadcast %159 : vector<32x1xf32> to vector<32x16xf32>
    %163 = arith.subf %155, %162 : vector<32x16xf32>
    %164 = arith.mulf %161, %163 : vector<32x16xf32>
    %cst_164 = arith.constant dense<0.000000e+00> : vector<32xf32>
    %165 = vector.multi_reduction <add>, %164, %cst_164 [1] : vector<32x16xf32> to vector<32xf32>
    %166 = vector.shape_cast %165 : vector<32xf32> to vector<32x1xf32>
    %cst_165 = arith.constant 1.600000e+01 : f32
    %167 = vector.broadcast %cst_165 : f32 to vector<32x1xf32>
    %168 = arith.divf %166, %167 : vector<32x1xf32>
    %169 = vector.broadcast %159 : vector<32x1xf32> to vector<32x16xf32>
    %170 = arith.subf %155, %169 : vector<32x16xf32>
    %cst_166 = arith.constant 9.99999974E-6 : f32
    %171 = vector.broadcast %cst_166 : f32 to vector<32x1xf32>
    %172 = arith.addf %168, %171 : vector<32x1xf32>
    %173 = math.rsqrt %172 : vector<32x1xf32>
    %174 = vector.broadcast %173 : vector<32x1xf32> to vector<32x16xf32>
    %175 = arith.mulf %170, %174 : vector<32x16xf32>
    %176 = vector.broadcast %10 : vector<1x16xf32> to vector<32x16xf32>
    %177 = arith.mulf %175, %176 : vector<32x16xf32>
    %178 = vector.broadcast %9 : vector<1x16xf32> to vector<32x16xf32>
    %179 = arith.addf %177, %178 : vector<32x16xf32>
    %180 = arith.truncf %179 : vector<32x16xf32> to vector<32x16xbf16>
    %cst_167 = arith.constant dense<0.000000e+00> : vector<16x16xf32>
    %181 = tpu.matmul %4, %180, %cst_167 {dimension_numbers = #tpu.dot_dimension_numbers<[0], [0], [1], [1], [0, 1, 1, 1], [], []>} : vector<32x16xbf16>, vector<32x16xbf16>, vector<16x16xf32> -> vector<16x16xf32>
    %182 = vector.broadcast %6 : vector<16x1xf32> to vector<16x16xf32>
    %183 = arith.mulf %181, %182 : vector<16x16xf32>
    %c0_i32 = arith.constant 0 : i32
    %c16_i32 = arith.constant 16 : i32
    %184 = arith.addi %c0_i32, %c16_i32 : i32
    %c1_i32 = arith.constant 1 : i32
    scf.for %arg76 = %c0_i32 to %184 step %c1_i32  : i32 {
      %c1_i32_319 = arith.constant 1 : i32
      %634 = arith.muli %arg76, %c1_i32_319 : i32
      %c0_i32_320 = arith.constant 0 : i32
      %635 = arith.addi %c0_i32_320, %634 : i32
      %636 = vector.broadcast %635 : i32 to vector<32x1xi32>
      %637 = arith.cmpi eq, %5, %636 : vector<32x1xi32>
      %cst_321 = arith.constant -3.40282347E+38 : f32
      %638 = vector.shape_cast %637 : vector<32x1xi1> to vector<32x1xi1>
      %639 = vector.broadcast %638 : vector<32x1xi1> to vector<32x16xi1>
      %640 = vector.broadcast %cst_321 : f32 to vector<32x16xf32>
      %641 = arith.select %639, %179, %640 : vector<32x16xi1>, vector<32x16xf32>
      %cst_322 = arith.constant dense<0xFF800000> : vector<16xf32>
      %642 = vector.multi_reduction <maximumf>, %641, %cst_322 [0] : vector<32x16xf32> to vector<16xf32>
      %643 = vector.shape_cast %642 : vector<16xf32> to vector<1x16xf32>
      %644 = arith.index_cast %635 : i32 to index
      %c0_323 = arith.constant 0 : index
      %645 = vector.load %arg74[%644, %c0_323] : memref<16x16xf32, #tpu.memory_space<vmem>>, vector<1x16xf32>
      tpu.vector_store %arg74[%644, %c0_323], %643 {strides = array<i32>} : memref<16x16xf32, #tpu.memory_space<vmem>>, vector<1x16xf32>,
      %cst_324 = arith.constant 3.40282347E+38 : f32
      %646 = vector.shape_cast %637 : vector<32x1xi1> to vector<32x1xi1>
      %647 = vector.broadcast %646 : vector<32x1xi1> to vector<32x16xi1>
      %648 = vector.broadcast %cst_324 : f32 to vector<32x16xf32>
      %649 = arith.select %647, %179, %648 : vector<32x16xi1>, vector<32x16xf32>
      %cst_325 = arith.constant dense<0x7F800000> : vector<16xf32>
      %650 = vector.multi_reduction <minimumf>, %649, %cst_325 [0] : vector<32x16xf32> to vector<16xf32>
      %651 = vector.shape_cast %650 : vector<16xf32> to vector<1x16xf32>
      %652 = arith.index_cast %635 : i32 to index
      %c0_326 = arith.constant 0 : index
      %653 = vector.load %arg75[%652, %c0_326] : memref<16x16xf32, #tpu.memory_space<vmem>>, vector<1x16xf32>
      tpu.vector_store %arg75[%652, %c0_326], %651 {strides = array<i32>} : memref<16x16xf32, #tpu.memory_space<vmem>>, vector<1x16xf32>,
    }
    %c16_i32_168 = arith.constant 16 : i32
    %cst_169 = arith.constant 5.000000e-01 : f32
    %185 = vector.broadcast %cst_169 : f32 to vector<16x1xf32>
    %186 = arith.cmpf ogt, %7, %185 : vector<16x1xf32>
    %c0_170 = arith.constant 0 : index
    %c0_171 = arith.constant 0 : index
    %187 = vector.load %arg74[%c0_170, %c0_171] : memref<16x16xf32, #tpu.memory_space<vmem>>, vector<16x16xf32>
    %cst_172 = arith.constant 0.000000e+00 : f32
    %188 = vector.shape_cast %186 : vector<16x1xi1> to vector<16x1xi1>
    %189 = vector.broadcast %188 : vector<16x1xi1> to vector<16x16xi1>
    %190 = vector.broadcast %cst_172 : f32 to vector<16x16xf32>
    %191 = arith.select %189, %187, %190 : vector<16x16xi1>, vector<16x16xf32>
    %c0_173 = arith.constant 0 : index
    %c0_174 = arith.constant 0 : index
    %192 = vector.load %arg75[%c0_173, %c0_174] : memref<16x16xf32, #tpu.memory_space<vmem>>, vector<16x16xf32>
    %cst_175 = arith.constant 0.000000e+00 : f32
    %193 = vector.shape_cast %186 : vector<16x1xi1> to vector<16x1xi1>
    %194 = vector.broadcast %193 : vector<16x1xi1> to vector<16x16xi1>
    %195 = vector.broadcast %cst_175 : f32 to vector<16x16xf32>
    %196 = arith.select %194, %192, %195 : vector<16x16xi1>, vector<16x16xf32>
    %197 = arith.truncf %181 : vector<16x16xf32> to vector<16x16xbf16>
    %cst_176 = arith.constant dense<0.000000e+00> : vector<16x16xf32>
    %198 = tpu.matmul %197, %48, %cst_176 {dimension_numbers = #tpu.dot_dimension_numbers<[1], [0], [0], [1], [0, 0, 1, 1], [], []>} : vector<16x16xbf16>, vector<16x16xbf16>, vector<16x16xf32> -> vector<16x16xf32>
    %199 = arith.truncf %191 : vector<16x16xf32> to vector<16x16xbf16>
    %cst_177 = arith.constant dense<0.000000e+00> : vector<16x16xf32>
    %200 = tpu.matmul %199, %45, %cst_177 {dimension_numbers = #tpu.dot_dimension_numbers<[1], [0], [0], [1], [0, 0, 1, 1], [], []>} : vector<16x16xbf16>, vector<16x16xbf16>, vector<16x16xf32> -> vector<16x16xf32>
    %201 = arith.addf %198, %200 : vector<16x16xf32>
    %202 = arith.truncf %183 : vector<16x16xf32> to vector<16x16xbf16>
    %cst_178 = arith.constant dense<0.000000e+00> : vector<16x16xf32>
    %203 = tpu.matmul %202, %46, %cst_178 {dimension_numbers = #tpu.dot_dimension_numbers<[1], [0], [0], [1], [0, 0, 1, 1], [], []>} : vector<16x16xbf16>, vector<16x16xbf16>, vector<16x16xf32> -> vector<16x16xf32>
    %204 = arith.addf %201, %203 : vector<16x16xf32>
    %205 = arith.truncf %196 : vector<16x16xf32> to vector<16x16xbf16>
    %cst_179 = arith.constant dense<0.000000e+00> : vector<16x16xf32>
    %206 = tpu.matmul %205, %47, %cst_179 {dimension_numbers = #tpu.dot_dimension_numbers<[1], [0], [0], [1], [0, 0, 1, 1], [], []>} : vector<16x16xbf16>, vector<16x16xbf16>, vector<16x16xf32> -> vector<16x16xf32>
    %207 = arith.addf %204, %206 : vector<16x16xf32>
    %208 = vector.broadcast %44 : vector<1x16xf32> to vector<16x16xf32>
    %209 = arith.addf %207, %208 : vector<16x16xf32>
    %cst_180 = arith.constant 0.000000e+00 : f32
    %210 = vector.broadcast %cst_180 : f32 to vector<16x16xf32>
    %211 = arith.maximumf %209, %210 : vector<16x16xf32>
    %212 = arith.truncf %88 : vector<2x1xf32> to vector<2x1xbf16>
    %cst_181 = arith.constant dense<0.000000e+00> : vector<2x16xf32>
    %213 = tpu.matmul %212, %40, %cst_181 {dimension_numbers = #tpu.dot_dimension_numbers<[1], [0], [0], [1], [0, 0, 1, 1], [], []>} : vector<2x1xbf16>, vector<1x16xbf16>, vector<2x16xf32> -> vector<2x16xf32>
    %214 = vector.extract_strided_slice %213 {offsets = [0, 0], sizes = [1, 16], strides = [1, 1]} : vector<2x16xf32> to vector<1x16xf32>
    %215 = vector.shape_cast %214 : vector<1x16xf32> to vector<1x16xf32>
    %216 = vector.broadcast %215 : vector<1x16xf32> to vector<8x16xf32>
    %217 = vector.extract_strided_slice %213 {offsets = [1, 0], sizes = [1, 16], strides = [1, 1]} : vector<2x16xf32> to vector<1x16xf32>
    %218 = vector.shape_cast %217 : vector<1x16xf32> to vector<1x16xf32>
    %219 = vector.broadcast %218 : vector<1x16xf32> to vector<8x16xf32>
    %220 = tpu.concatenate %216, %219 in 0 : vector<8x16xf32>, vector<8x16xf32> -> vector<16x16xf32>
    %221 = arith.truncf %82 : vector<16x16xf32> to vector<16x16xbf16>
    %cst_182 = arith.constant dense<0.000000e+00> : vector<16x16xf32>
    %222 = tpu.matmul %221, %42, %cst_182 {dimension_numbers = #tpu.dot_dimension_numbers<[1], [0], [0], [1], [0, 0, 1, 1], [], []>} : vector<16x16xbf16>, vector<16x16xbf16>, vector<16x16xf32> -> vector<16x16xf32>
    %223 = arith.addf %126, %222 : vector<16x16xf32>
    %224 = arith.truncf %211 : vector<16x16xf32> to vector<16x16xbf16>
    %cst_183 = arith.constant dense<0.000000e+00> : vector<16x16xf32>
    %225 = tpu.matmul %224, %39, %cst_183 {dimension_numbers = #tpu.dot_dimension_numbers<[1], [0], [0], [1], [0, 0, 1, 1], [], []>} : vector<16x16xbf16>, vector<16x16xbf16>, vector<16x16xf32> -> vector<16x16xf32>
    %226 = arith.addf %223, %225 : vector<16x16xf32>
    %227 = arith.addf %226, %220 : vector<16x16xf32>
    %cst_184 = arith.constant 0.000000e+00 : f32
    %228 = vector.broadcast %cst_184 : f32 to vector<16x16xf32>
    %229 = arith.maximumf %227, %228 : vector<16x16xf32>
    %cst_185 = arith.constant dense<0.000000e+00> : vector<16xf32>
    %230 = vector.multi_reduction <add>, %229, %cst_185 [1] : vector<16x16xf32> to vector<16xf32>
    %231 = vector.shape_cast %230 : vector<16xf32> to vector<16x1xf32>
    %cst_186 = arith.constant 1.600000e+01 : f32
    %232 = vector.broadcast %cst_186 : f32 to vector<16x1xf32>
    %233 = arith.divf %231, %232 : vector<16x1xf32>
    %234 = vector.broadcast %233 : vector<16x1xf32> to vector<16x16xf32>
    %235 = arith.subf %229, %234 : vector<16x16xf32>
    %236 = vector.broadcast %233 : vector<16x1xf32> to vector<16x16xf32>
    %237 = arith.subf %229, %236 : vector<16x16xf32>
    %238 = arith.mulf %235, %237 : vector<16x16xf32>
    %cst_187 = arith.constant dense<0.000000e+00> : vector<16xf32>
    %239 = vector.multi_reduction <add>, %238, %cst_187 [1] : vector<16x16xf32> to vector<16xf32>
    %240 = vector.shape_cast %239 : vector<16xf32> to vector<16x1xf32>
    %cst_188 = arith.constant 1.600000e+01 : f32
    %241 = vector.broadcast %cst_188 : f32 to vector<16x1xf32>
    %242 = arith.divf %240, %241 : vector<16x1xf32>
    %243 = vector.broadcast %233 : vector<16x1xf32> to vector<16x16xf32>
    %244 = arith.subf %229, %243 : vector<16x16xf32>
    %cst_189 = arith.constant 9.99999974E-6 : f32
    %245 = vector.broadcast %cst_189 : f32 to vector<16x1xf32>
    %246 = arith.addf %242, %245 : vector<16x1xf32>
    %247 = math.rsqrt %246 : vector<16x1xf32>
    %248 = vector.broadcast %247 : vector<16x1xf32> to vector<16x16xf32>
    %249 = arith.mulf %244, %248 : vector<16x16xf32>
    %250 = vector.broadcast %38 : vector<1x16xf32> to vector<16x16xf32>
    %251 = arith.mulf %249, %250 : vector<16x16xf32>
    %252 = vector.broadcast %37 : vector<1x16xf32> to vector<16x16xf32>
    %253 = arith.addf %251, %252 : vector<16x16xf32>
    %254 = vector.extract_strided_slice %179 {offsets = [0, 0], sizes = [16, 16], strides = [1, 1]} : vector<32x16xf32> to vector<16x16xf32>
    %cst_190 = arith.constant dense<0.000000e+00> : vector<16xf32>
    %255 = vector.multi_reduction <add>, %254, %cst_190 [0] : vector<16x16xf32> to vector<16xf32>
    %256 = vector.shape_cast %255 : vector<16xf32> to vector<1x16xf32>
    %cst_191 = arith.constant dense<0xFF800000> : vector<16xf32>
    %257 = vector.multi_reduction <maximumf>, %254, %cst_191 [0] : vector<16x16xf32> to vector<16xf32>
    %258 = vector.shape_cast %257 : vector<16xf32> to vector<1x16xf32>
    %cst_192 = arith.constant dense<0x7F800000> : vector<16xf32>
    %259 = vector.multi_reduction <minimumf>, %254, %cst_192 [0] : vector<16x16xf32> to vector<16xf32>
    %260 = vector.shape_cast %259 : vector<16xf32> to vector<1x16xf32>
    %261 = vector.extract_strided_slice %179 {offsets = [16, 0], sizes = [16, 16], strides = [1, 1]} : vector<32x16xf32> to vector<16x16xf32>
    %cst_193 = arith.constant dense<0.000000e+00> : vector<16xf32>
    %262 = vector.multi_reduction <add>, %261, %cst_193 [0] : vector<16x16xf32> to vector<16xf32>
    %263 = vector.shape_cast %262 : vector<16xf32> to vector<1x16xf32>
    %cst_194 = arith.constant dense<0xFF800000> : vector<16xf32>
    %264 = vector.multi_reduction <maximumf>, %261, %cst_194 [0] : vector<16x16xf32> to vector<16xf32>
    %265 = vector.shape_cast %264 : vector<16xf32> to vector<1x16xf32>
    %cst_195 = arith.constant dense<0x7F800000> : vector<16xf32>
    %266 = vector.multi_reduction <minimumf>, %261, %cst_195 [0] : vector<16x16xf32> to vector<16xf32>
    %267 = vector.shape_cast %266 : vector<16xf32> to vector<1x16xf32>
    %268 = tpu.concatenate %256, %263 in 0 : vector<1x16xf32>, vector<1x16xf32> -> vector<2x16xf32>
    %269 = tpu.concatenate %258, %265 in 0 : vector<1x16xf32>, vector<1x16xf32> -> vector<2x16xf32>
    %270 = tpu.concatenate %260, %267 in 0 : vector<1x16xf32>, vector<1x16xf32> -> vector<2x16xf32>
    %cst_196 = arith.constant 6.250000e-02 : f32
    %271 = vector.broadcast %cst_196 : f32 to vector<2x16xf32>
    %272 = arith.mulf %268, %271 : vector<2x16xf32>
    %273 = vector.extract_strided_slice %253 {offsets = [0, 0], sizes = [8, 16], strides = [1, 1]} : vector<16x16xf32> to vector<8x16xf32>
    %cst_197 = arith.constant dense<0.000000e+00> : vector<16xf32>
    %274 = vector.multi_reduction <add>, %273, %cst_197 [0] : vector<8x16xf32> to vector<16xf32>
    %275 = vector.shape_cast %274 : vector<16xf32> to vector<1x16xf32>
    %cst_198 = arith.constant dense<0xFF800000> : vector<16xf32>
    %276 = vector.multi_reduction <maximumf>, %273, %cst_198 [0] : vector<8x16xf32> to vector<16xf32>
    %277 = vector.shape_cast %276 : vector<16xf32> to vector<1x16xf32>
    %cst_199 = arith.constant dense<0x7F800000> : vector<16xf32>
    %278 = vector.multi_reduction <minimumf>, %273, %cst_199 [0] : vector<8x16xf32> to vector<16xf32>
    %279 = vector.shape_cast %278 : vector<16xf32> to vector<1x16xf32>
    %280 = vector.extract_strided_slice %253 {offsets = [8, 0], sizes = [8, 16], strides = [1, 1]} : vector<16x16xf32> to vector<8x16xf32>
    %cst_200 = arith.constant dense<0.000000e+00> : vector<16xf32>
    %281 = vector.multi_reduction <add>, %280, %cst_200 [0] : vector<8x16xf32> to vector<16xf32>
    %282 = vector.shape_cast %281 : vector<16xf32> to vector<1x16xf32>
    %cst_201 = arith.constant dense<0xFF800000> : vector<16xf32>
    %283 = vector.multi_reduction <maximumf>, %280, %cst_201 [0] : vector<8x16xf32> to vector<16xf32>
    %284 = vector.shape_cast %283 : vector<16xf32> to vector<1x16xf32>
    %cst_202 = arith.constant dense<0x7F800000> : vector<16xf32>
    %285 = vector.multi_reduction <minimumf>, %280, %cst_202 [0] : vector<8x16xf32> to vector<16xf32>
    %286 = vector.shape_cast %285 : vector<16xf32> to vector<1x16xf32>
    %287 = tpu.concatenate %275, %282 in 0 : vector<1x16xf32>, vector<1x16xf32> -> vector<2x16xf32>
    %288 = tpu.concatenate %277, %284 in 0 : vector<1x16xf32>, vector<1x16xf32> -> vector<2x16xf32>
    %289 = tpu.concatenate %279, %286 in 0 : vector<1x16xf32>, vector<1x16xf32> -> vector<2x16xf32>
    %cst_203 = arith.constant 1.250000e-01 : f32
    %290 = vector.broadcast %cst_203 : f32 to vector<2x16xf32>
    %291 = arith.mulf %287, %290 : vector<2x16xf32>
    %292 = arith.truncf %268 : vector<2x16xf32> to vector<2x16xbf16>
    %cst_204 = arith.constant dense<0.000000e+00> : vector<2x16xf32>
    %293 = tpu.matmul %292, %30, %cst_204 {dimension_numbers = #tpu.dot_dimension_numbers<[1], [0], [0], [1], [0, 0, 1, 1], [], []>} : vector<2x16xbf16>, vector<16x16xbf16>, vector<2x16xf32> -> vector<2x16xf32>
    %294 = arith.truncf %269 : vector<2x16xf32> to vector<2x16xbf16>
    %cst_205 = arith.constant dense<0.000000e+00> : vector<2x16xf32>
    %295 = tpu.matmul %294, %27, %cst_205 {dimension_numbers = #tpu.dot_dimension_numbers<[1], [0], [0], [1], [0, 0, 1, 1], [], []>} : vector<2x16xbf16>, vector<16x16xbf16>, vector<2x16xf32> -> vector<2x16xf32>
    %296 = arith.addf %293, %295 : vector<2x16xf32>
    %297 = arith.truncf %272 : vector<2x16xf32> to vector<2x16xbf16>
    %cst_206 = arith.constant dense<0.000000e+00> : vector<2x16xf32>
    %298 = tpu.matmul %297, %28, %cst_206 {dimension_numbers = #tpu.dot_dimension_numbers<[1], [0], [0], [1], [0, 0, 1, 1], [], []>} : vector<2x16xbf16>, vector<16x16xbf16>, vector<2x16xf32> -> vector<2x16xf32>
    %299 = arith.addf %296, %298 : vector<2x16xf32>
    %300 = arith.truncf %270 : vector<2x16xf32> to vector<2x16xbf16>
    %cst_207 = arith.constant dense<0.000000e+00> : vector<2x16xf32>
    %301 = tpu.matmul %300, %29, %cst_207 {dimension_numbers = #tpu.dot_dimension_numbers<[1], [0], [0], [1], [0, 0, 1, 1], [], []>} : vector<2x16xbf16>, vector<16x16xbf16>, vector<2x16xf32> -> vector<2x16xf32>
    %302 = arith.addf %299, %301 : vector<2x16xf32>
    %303 = vector.broadcast %26 : vector<1x16xf32> to vector<2x16xf32>
    %304 = arith.addf %302, %303 : vector<2x16xf32>
    %cst_208 = arith.constant 0.000000e+00 : f32
    %305 = vector.broadcast %cst_208 : f32 to vector<2x16xf32>
    %306 = arith.maximumf %304, %305 : vector<2x16xf32>
    %307 = arith.truncf %287 : vector<2x16xf32> to vector<2x16xbf16>
    %cst_209 = arith.constant dense<0.000000e+00> : vector<2x16xf32>
    %308 = tpu.matmul %307, %35, %cst_209 {dimension_numbers = #tpu.dot_dimension_numbers<[1], [0], [0], [1], [0, 0, 1, 1], [], []>} : vector<2x16xbf16>, vector<16x16xbf16>, vector<2x16xf32> -> vector<2x16xf32>
    %309 = arith.truncf %288 : vector<2x16xf32> to vector<2x16xbf16>
    %cst_210 = arith.constant dense<0.000000e+00> : vector<2x16xf32>
    %310 = tpu.matmul %309, %32, %cst_210 {dimension_numbers = #tpu.dot_dimension_numbers<[1], [0], [0], [1], [0, 0, 1, 1], [], []>} : vector<2x16xbf16>, vector<16x16xbf16>, vector<2x16xf32> -> vector<2x16xf32>
    %311 = arith.addf %308, %310 : vector<2x16xf32>
    %312 = arith.truncf %291 : vector<2x16xf32> to vector<2x16xbf16>
    %cst_211 = arith.constant dense<0.000000e+00> : vector<2x16xf32>
    %313 = tpu.matmul %312, %33, %cst_211 {dimension_numbers = #tpu.dot_dimension_numbers<[1], [0], [0], [1], [0, 0, 1, 1], [], []>} : vector<2x16xbf16>, vector<16x16xbf16>, vector<2x16xf32> -> vector<2x16xf32>
    %314 = arith.addf %311, %313 : vector<2x16xf32>
    %315 = arith.truncf %289 : vector<2x16xf32> to vector<2x16xbf16>
    %cst_212 = arith.constant dense<0.000000e+00> : vector<2x16xf32>
    %316 = tpu.matmul %315, %34, %cst_212 {dimension_numbers = #tpu.dot_dimension_numbers<[1], [0], [0], [1], [0, 0, 1, 1], [], []>} : vector<2x16xbf16>, vector<16x16xbf16>, vector<2x16xf32> -> vector<2x16xf32>
    %317 = arith.addf %314, %316 : vector<2x16xf32>
    %318 = vector.broadcast %31 : vector<1x16xf32> to vector<2x16xf32>
    %319 = arith.addf %317, %318 : vector<2x16xf32>
    %cst_213 = arith.constant 0.000000e+00 : f32
    %320 = vector.broadcast %cst_213 : f32 to vector<2x16xf32>
    %321 = arith.maximumf %319, %320 : vector<2x16xf32>
    %322 = arith.truncf %88 : vector<2x1xf32> to vector<2x1xbf16>
    %cst_214 = arith.constant dense<0.000000e+00> : vector<2x1xf32>
    %323 = tpu.matmul %322, %23, %cst_214 {dimension_numbers = #tpu.dot_dimension_numbers<[1], [0], [0], [1], [0, 0, 1, 1], [], []>} : vector<2x1xbf16>, vector<1x1xbf16>, vector<2x1xf32> -> vector<2x1xf32>
    %324 = arith.addf %130, %323 : vector<2x1xf32>
    %325 = arith.truncf %321 : vector<2x16xf32> to vector<2x16xbf16>
    %cst_215 = arith.constant dense<0.000000e+00> : vector<2x1xf32>
    %326 = tpu.matmul %325, %25, %cst_215 {dimension_numbers = #tpu.dot_dimension_numbers<[1], [0], [0], [1], [0, 0, 1, 1], [], []>} : vector<2x16xbf16>, vector<16x1xbf16>, vector<2x1xf32> -> vector<2x1xf32>
    %327 = arith.addf %324, %326 : vector<2x1xf32>
    %328 = arith.truncf %306 : vector<2x16xf32> to vector<2x16xbf16>
    %cst_216 = arith.constant dense<0.000000e+00> : vector<2x1xf32>
    %329 = tpu.matmul %328, %22, %cst_216 {dimension_numbers = #tpu.dot_dimension_numbers<[1], [0], [0], [1], [0, 0, 1, 1], [], []>} : vector<2x16xbf16>, vector<16x1xbf16>, vector<2x1xf32> -> vector<2x1xf32>
    %330 = arith.addf %327, %329 : vector<2x1xf32>
    %cst_217 = arith.constant 0.000000e+00 : f32
    %331 = vector.broadcast %cst_217 : f32 to vector<2x1xf32>
    %332 = arith.maximumf %330, %331 : vector<2x1xf32>
    %cst_218 = arith.constant dense<0.000000e+00> : vector<2xf32>
    %333 = vector.multi_reduction <add>, %332, %cst_218 [1] : vector<2x1xf32> to vector<2xf32>
    %334 = vector.shape_cast %333 : vector<2xf32> to vector<2x1xf32>
    %cst_219 = arith.constant 1.000000e+00 : f32
    %335 = vector.broadcast %cst_219 : f32 to vector<2x1xf32>
    %336 = arith.divf %334, %335 : vector<2x1xf32>
    %337 = arith.subf %332, %336 : vector<2x1xf32>
    %338 = arith.subf %332, %336 : vector<2x1xf32>
    %339 = arith.mulf %337, %338 : vector<2x1xf32>
    %cst_220 = arith.constant dense<0.000000e+00> : vector<2xf32>
    %340 = vector.multi_reduction <add>, %339, %cst_220 [1] : vector<2x1xf32> to vector<2xf32>
    %341 = vector.shape_cast %340 : vector<2xf32> to vector<2x1xf32>
    %cst_221 = arith.constant 1.000000e+00 : f32
    %342 = vector.broadcast %cst_221 : f32 to vector<2x1xf32>
    %343 = arith.divf %341, %342 : vector<2x1xf32>
    %344 = arith.subf %332, %336 : vector<2x1xf32>
    %cst_222 = arith.constant 9.99999974E-6 : f32
    %345 = vector.broadcast %cst_222 : f32 to vector<2x1xf32>
    %346 = arith.addf %343, %345 : vector<2x1xf32>
    %347 = math.rsqrt %346 : vector<2x1xf32>
    %348 = arith.mulf %344, %347 : vector<2x1xf32>
    %349 = vector.broadcast %21 : vector<1x1xf32> to vector<2x1xf32>
    %350 = arith.mulf %348, %349 : vector<2x1xf32>
    %351 = vector.broadcast %20 : vector<1x1xf32> to vector<2x1xf32>
    %352 = arith.addf %350, %351 : vector<2x1xf32>
    %353 = arith.truncf %253 : vector<16x16xf32> to vector<16x16xbf16>
    %cst_223 = arith.constant dense<0.000000e+00> : vector<32x16xf32>
    %354 = tpu.matmul %3, %353, %cst_223 {dimension_numbers = #tpu.dot_dimension_numbers<[1], [0], [0], [1], [0, 0, 1, 1], [], []>} : vector<32x16xbf16>, vector<16x16xbf16>, vector<32x16xf32> -> vector<32x16xf32>
    %355 = arith.truncf %253 : vector<16x16xf32> to vector<16x16xbf16>
    %cst_224 = arith.constant dense<0.000000e+00> : vector<32x16xf32>
    %356 = tpu.matmul %4, %355, %cst_224 {dimension_numbers = #tpu.dot_dimension_numbers<[1], [0], [0], [1], [0, 0, 1, 1], [], []>} : vector<32x16xbf16>, vector<16x16xbf16>, vector<32x16xf32> -> vector<32x16xf32>
    %357 = arith.truncf %352 : vector<2x1xf32> to vector<2x1xbf16>
    %cst_225 = arith.constant dense<0.000000e+00> : vector<2x16xf32>
    %358 = tpu.matmul %357, %13, %cst_225 {dimension_numbers = #tpu.dot_dimension_numbers<[1], [0], [0], [1], [0, 0, 1, 1], [], []>} : vector<2x1xbf16>, vector<1x16xbf16>, vector<2x16xf32> -> vector<2x16xf32>
    %359 = vector.extract_strided_slice %358 {offsets = [0, 0], sizes = [1, 16], strides = [1, 1]} : vector<2x16xf32> to vector<1x16xf32>
    %360 = vector.shape_cast %359 : vector<1x16xf32> to vector<1x16xf32>
    %361 = vector.broadcast %360 : vector<1x16xf32> to vector<16x16xf32>
    %362 = vector.extract_strided_slice %358 {offsets = [1, 0], sizes = [1, 16], strides = [1, 1]} : vector<2x16xf32> to vector<1x16xf32>
    %363 = vector.shape_cast %362 : vector<1x16xf32> to vector<1x16xf32>
    %364 = vector.broadcast %363 : vector<1x16xf32> to vector<16x16xf32>
    %365 = tpu.concatenate %361, %364 in 0 : vector<16x16xf32>, vector<16x16xf32> -> vector<32x16xf32>
    %366 = arith.truncf %179 : vector<32x16xf32> to vector<32x16xbf16>
    %cst_226 = arith.constant dense<0.000000e+00> : vector<32x16xf32>
    %367 = tpu.matmul %366, %11, %cst_226 {dimension_numbers = #tpu.dot_dimension_numbers<[1], [0], [0], [1], [0, 0, 1, 1], [], []>} : vector<32x16xbf16>, vector<16x16xbf16>, vector<32x16xf32> -> vector<32x16xf32>
    %368 = arith.addf %112, %367 : vector<32x16xf32>
    %369 = arith.truncf %354 : vector<32x16xf32> to vector<32x16xbf16>
    %cst_227 = arith.constant dense<0.000000e+00> : vector<32x16xf32>
    %370 = tpu.matmul %369, %17, %cst_227 {dimension_numbers = #tpu.dot_dimension_numbers<[1], [0], [0], [1], [0, 0, 1, 1], [], []>} : vector<32x16xbf16>, vector<16x16xbf16>, vector<32x16xf32> -> vector<32x16xf32>
    %371 = arith.addf %368, %370 : vector<32x16xf32>
    %372 = arith.truncf %356 : vector<32x16xf32> to vector<32x16xbf16>
    %cst_228 = arith.constant dense<0.000000e+00> : vector<32x16xf32>
    %373 = tpu.matmul %372, %15, %cst_228 {dimension_numbers = #tpu.dot_dimension_numbers<[1], [0], [0], [1], [0, 0, 1, 1], [], []>} : vector<32x16xbf16>, vector<16x16xbf16>, vector<32x16xf32> -> vector<32x16xf32>
    %374 = arith.addf %371, %373 : vector<32x16xf32>
    %375 = arith.addf %374, %365 : vector<32x16xf32>
    %cst_229 = arith.constant 0.000000e+00 : f32
    %376 = vector.broadcast %cst_229 : f32 to vector<32x16xf32>
    %377 = arith.maximumf %375, %376 : vector<32x16xf32>
    %cst_230 = arith.constant dense<0.000000e+00> : vector<32xf32>
    %378 = vector.multi_reduction <add>, %377, %cst_230 [1] : vector<32x16xf32> to vector<32xf32>
    %379 = vector.shape_cast %378 : vector<32xf32> to vector<32x1xf32>
    %cst_231 = arith.constant 1.600000e+01 : f32
    %380 = vector.broadcast %cst_231 : f32 to vector<32x1xf32>
    %381 = arith.divf %379, %380 : vector<32x1xf32>
    %382 = vector.broadcast %381 : vector<32x1xf32> to vector<32x16xf32>
    %383 = arith.subf %377, %382 : vector<32x16xf32>
    %384 = vector.broadcast %381 : vector<32x1xf32> to vector<32x16xf32>
    %385 = arith.subf %377, %384 : vector<32x16xf32>
    %386 = arith.mulf %383, %385 : vector<32x16xf32>
    %cst_232 = arith.constant dense<0.000000e+00> : vector<32xf32>
    %387 = vector.multi_reduction <add>, %386, %cst_232 [1] : vector<32x16xf32> to vector<32xf32>
    %388 = vector.shape_cast %387 : vector<32xf32> to vector<32x1xf32>
    %cst_233 = arith.constant 1.600000e+01 : f32
    %389 = vector.broadcast %cst_233 : f32 to vector<32x1xf32>
    %390 = arith.divf %388, %389 : vector<32x1xf32>
    %391 = vector.broadcast %381 : vector<32x1xf32> to vector<32x16xf32>
    %392 = arith.subf %377, %391 : vector<32x16xf32>
    %cst_234 = arith.constant 9.99999974E-6 : f32
    %393 = vector.broadcast %cst_234 : f32 to vector<32x1xf32>
    %394 = arith.addf %390, %393 : vector<32x1xf32>
    %395 = math.rsqrt %394 : vector<32x1xf32>
    %396 = vector.broadcast %395 : vector<32x1xf32> to vector<32x16xf32>
    %397 = arith.mulf %392, %396 : vector<32x16xf32>
    %398 = vector.broadcast %10 : vector<1x16xf32> to vector<32x16xf32>
    %399 = arith.mulf %397, %398 : vector<32x16xf32>
    %400 = vector.broadcast %9 : vector<1x16xf32> to vector<32x16xf32>
    %401 = arith.addf %399, %400 : vector<32x16xf32>
    %402 = arith.truncf %401 : vector<32x16xf32> to vector<32x16xbf16>
    %cst_235 = arith.constant dense<0.000000e+00> : vector<16x16xf32>
    %403 = tpu.matmul %4, %402, %cst_235 {dimension_numbers = #tpu.dot_dimension_numbers<[0], [0], [1], [1], [0, 1, 1, 1], [], []>} : vector<32x16xbf16>, vector<32x16xbf16>, vector<16x16xf32> -> vector<16x16xf32>
    %404 = vector.broadcast %6 : vector<16x1xf32> to vector<16x16xf32>
    %405 = arith.mulf %403, %404 : vector<16x16xf32>
    %c0_i32_236 = arith.constant 0 : i32
    %c16_i32_237 = arith.constant 16 : i32
    %406 = arith.addi %c0_i32_236, %c16_i32_237 : i32
    %c1_i32_238 = arith.constant 1 : i32
    scf.for %arg76 = %c0_i32_236 to %406 step %c1_i32_238  : i32 {
      %c1_i32_319 = arith.constant 1 : i32
      %634 = arith.muli %arg76, %c1_i32_319 : i32
      %c0_i32_320 = arith.constant 0 : i32
      %635 = arith.addi %c0_i32_320, %634 : i32
      %636 = vector.broadcast %635 : i32 to vector<32x1xi32>
      %637 = arith.cmpi eq, %5, %636 : vector<32x1xi32>
      %cst_321 = arith.constant -3.40282347E+38 : f32
      %638 = vector.shape_cast %637 : vector<32x1xi1> to vector<32x1xi1>
      %639 = vector.broadcast %638 : vector<32x1xi1> to vector<32x16xi1>
      %640 = vector.broadcast %cst_321 : f32 to vector<32x16xf32>
      %641 = arith.select %639, %401, %640 : vector<32x16xi1>, vector<32x16xf32>
      %cst_322 = arith.constant dense<0xFF800000> : vector<16xf32>
      %642 = vector.multi_reduction <maximumf>, %641, %cst_322 [0] : vector<32x16xf32> to vector<16xf32>
      %643 = vector.shape_cast %642 : vector<16xf32> to vector<1x16xf32>
      %644 = arith.index_cast %635 : i32 to index
      %c0_323 = arith.constant 0 : index
      %645 = vector.load %arg74[%644, %c0_323] : memref<16x16xf32, #tpu.memory_space<vmem>>, vector<1x16xf32>
      tpu.vector_store %arg74[%644, %c0_323], %643 {strides = array<i32>} : memref<16x16xf32, #tpu.memory_space<vmem>>, vector<1x16xf32>,
      %cst_324 = arith.constant 3.40282347E+38 : f32
      %646 = vector.shape_cast %637 : vector<32x1xi1> to vector<32x1xi1>
      %647 = vector.broadcast %646 : vector<32x1xi1> to vector<32x16xi1>
      %648 = vector.broadcast %cst_324 : f32 to vector<32x16xf32>
      %649 = arith.select %647, %401, %648 : vector<32x16xi1>, vector<32x16xf32>
      %cst_325 = arith.constant dense<0x7F800000> : vector<16xf32>
      %650 = vector.multi_reduction <minimumf>, %649, %cst_325 [0] : vector<32x16xf32> to vector<16xf32>
      %651 = vector.shape_cast %650 : vector<16xf32> to vector<1x16xf32>
      %652 = arith.index_cast %635 : i32 to index
      %c0_326 = arith.constant 0 : index
      %653 = vector.load %arg75[%652, %c0_326] : memref<16x16xf32, #tpu.memory_space<vmem>>, vector<1x16xf32>
      tpu.vector_store %arg75[%652, %c0_326], %651 {strides = array<i32>} : memref<16x16xf32, #tpu.memory_space<vmem>>, vector<1x16xf32>,
    }
    %c16_i32_239 = arith.constant 16 : i32
    %cst_240 = arith.constant 5.000000e-01 : f32
    %407 = vector.broadcast %cst_240 : f32 to vector<16x1xf32>
    %408 = arith.cmpf ogt, %7, %407 : vector<16x1xf32>
    %c0_241 = arith.constant 0 : index
    %c0_242 = arith.constant 0 : index
    %409 = vector.load %arg74[%c0_241, %c0_242] : memref<16x16xf32, #tpu.memory_space<vmem>>, vector<16x16xf32>
    %cst_243 = arith.constant 0.000000e+00 : f32
    %410 = vector.shape_cast %408 : vector<16x1xi1> to vector<16x1xi1>
    %411 = vector.broadcast %410 : vector<16x1xi1> to vector<16x16xi1>
    %412 = vector.broadcast %cst_243 : f32 to vector<16x16xf32>
    %413 = arith.select %411, %409, %412 : vector<16x16xi1>, vector<16x16xf32>
    %c0_244 = arith.constant 0 : index
    %c0_245 = arith.constant 0 : index
    %414 = vector.load %arg75[%c0_244, %c0_245] : memref<16x16xf32, #tpu.memory_space<vmem>>, vector<16x16xf32>
    %cst_246 = arith.constant 0.000000e+00 : f32
    %415 = vector.shape_cast %408 : vector<16x1xi1> to vector<16x1xi1>
    %416 = vector.broadcast %415 : vector<16x1xi1> to vector<16x16xi1>
    %417 = vector.broadcast %cst_246 : f32 to vector<16x16xf32>
    %418 = arith.select %416, %414, %417 : vector<16x16xi1>, vector<16x16xf32>
    %419 = arith.truncf %403 : vector<16x16xf32> to vector<16x16xbf16>
    %cst_247 = arith.constant dense<0.000000e+00> : vector<16x16xf32>
    %420 = tpu.matmul %419, %48, %cst_247 {dimension_numbers = #tpu.dot_dimension_numbers<[1], [0], [0], [1], [0, 0, 1, 1], [], []>} : vector<16x16xbf16>, vector<16x16xbf16>, vector<16x16xf32> -> vector<16x16xf32>
    %421 = arith.truncf %413 : vector<16x16xf32> to vector<16x16xbf16>
    %cst_248 = arith.constant dense<0.000000e+00> : vector<16x16xf32>
    %422 = tpu.matmul %421, %45, %cst_248 {dimension_numbers = #tpu.dot_dimension_numbers<[1], [0], [0], [1], [0, 0, 1, 1], [], []>} : vector<16x16xbf16>, vector<16x16xbf16>, vector<16x16xf32> -> vector<16x16xf32>
    %423 = arith.addf %420, %422 : vector<16x16xf32>
    %424 = arith.truncf %405 : vector<16x16xf32> to vector<16x16xbf16>
    %cst_249 = arith.constant dense<0.000000e+00> : vector<16x16xf32>
    %425 = tpu.matmul %424, %46, %cst_249 {dimension_numbers = #tpu.dot_dimension_numbers<[1], [0], [0], [1], [0, 0, 1, 1], [], []>} : vector<16x16xbf16>, vector<16x16xbf16>, vector<16x16xf32> -> vector<16x16xf32>
    %426 = arith.addf %423, %425 : vector<16x16xf32>
    %427 = arith.truncf %418 : vector<16x16xf32> to vector<16x16xbf16>
    %cst_250 = arith.constant dense<0.000000e+00> : vector<16x16xf32>
    %428 = tpu.matmul %427, %47, %cst_250 {dimension_numbers = #tpu.dot_dimension_numbers<[1], [0], [0], [1], [0, 0, 1, 1], [], []>} : vector<16x16xbf16>, vector<16x16xbf16>, vector<16x16xf32> -> vector<16x16xf32>
    %429 = arith.addf %426, %428 : vector<16x16xf32>
    %430 = vector.broadcast %44 : vector<1x16xf32> to vector<16x16xf32>
    %431 = arith.addf %429, %430 : vector<16x16xf32>
    %cst_251 = arith.constant 0.000000e+00 : f32
    %432 = vector.broadcast %cst_251 : f32 to vector<16x16xf32>
    %433 = arith.maximumf %431, %432 : vector<16x16xf32>
    %434 = arith.truncf %352 : vector<2x1xf32> to vector<2x1xbf16>
    %cst_252 = arith.constant dense<0.000000e+00> : vector<2x16xf32>
    %435 = tpu.matmul %434, %40, %cst_252 {dimension_numbers = #tpu.dot_dimension_numbers<[1], [0], [0], [1], [0, 0, 1, 1], [], []>} : vector<2x1xbf16>, vector<1x16xbf16>, vector<2x16xf32> -> vector<2x16xf32>
    %436 = vector.extract_strided_slice %435 {offsets = [0, 0], sizes = [1, 16], strides = [1, 1]} : vector<2x16xf32> to vector<1x16xf32>
    %437 = vector.shape_cast %436 : vector<1x16xf32> to vector<1x16xf32>
    %438 = vector.broadcast %437 : vector<1x16xf32> to vector<8x16xf32>
    %439 = vector.extract_strided_slice %435 {offsets = [1, 0], sizes = [1, 16], strides = [1, 1]} : vector<2x16xf32> to vector<1x16xf32>
    %440 = vector.shape_cast %439 : vector<1x16xf32> to vector<1x16xf32>
    %441 = vector.broadcast %440 : vector<1x16xf32> to vector<8x16xf32>
    %442 = tpu.concatenate %438, %441 in 0 : vector<8x16xf32>, vector<8x16xf32> -> vector<16x16xf32>
    %443 = arith.truncf %253 : vector<16x16xf32> to vector<16x16xbf16>
    %cst_253 = arith.constant dense<0.000000e+00> : vector<16x16xf32>
    %444 = tpu.matmul %443, %42, %cst_253 {dimension_numbers = #tpu.dot_dimension_numbers<[1], [0], [0], [1], [0, 0, 1, 1], [], []>} : vector<16x16xbf16>, vector<16x16xbf16>, vector<16x16xf32> -> vector<16x16xf32>
    %445 = arith.addf %126, %444 : vector<16x16xf32>
    %446 = arith.truncf %433 : vector<16x16xf32> to vector<16x16xbf16>
    %cst_254 = arith.constant dense<0.000000e+00> : vector<16x16xf32>
    %447 = tpu.matmul %446, %39, %cst_254 {dimension_numbers = #tpu.dot_dimension_numbers<[1], [0], [0], [1], [0, 0, 1, 1], [], []>} : vector<16x16xbf16>, vector<16x16xbf16>, vector<16x16xf32> -> vector<16x16xf32>
    %448 = arith.addf %445, %447 : vector<16x16xf32>
    %449 = arith.addf %448, %442 : vector<16x16xf32>
    %cst_255 = arith.constant 0.000000e+00 : f32
    %450 = vector.broadcast %cst_255 : f32 to vector<16x16xf32>
    %451 = arith.maximumf %449, %450 : vector<16x16xf32>
    %cst_256 = arith.constant dense<0.000000e+00> : vector<16xf32>
    %452 = vector.multi_reduction <add>, %451, %cst_256 [1] : vector<16x16xf32> to vector<16xf32>
    %453 = vector.shape_cast %452 : vector<16xf32> to vector<16x1xf32>
    %cst_257 = arith.constant 1.600000e+01 : f32
    %454 = vector.broadcast %cst_257 : f32 to vector<16x1xf32>
    %455 = arith.divf %453, %454 : vector<16x1xf32>
    %456 = vector.broadcast %455 : vector<16x1xf32> to vector<16x16xf32>
    %457 = arith.subf %451, %456 : vector<16x16xf32>
    %458 = vector.broadcast %455 : vector<16x1xf32> to vector<16x16xf32>
    %459 = arith.subf %451, %458 : vector<16x16xf32>
    %460 = arith.mulf %457, %459 : vector<16x16xf32>
    %cst_258 = arith.constant dense<0.000000e+00> : vector<16xf32>
    %461 = vector.multi_reduction <add>, %460, %cst_258 [1] : vector<16x16xf32> to vector<16xf32>
    %462 = vector.shape_cast %461 : vector<16xf32> to vector<16x1xf32>
    %cst_259 = arith.constant 1.600000e+01 : f32
    %463 = vector.broadcast %cst_259 : f32 to vector<16x1xf32>
    %464 = arith.divf %462, %463 : vector<16x1xf32>
    %465 = vector.broadcast %455 : vector<16x1xf32> to vector<16x16xf32>
    %466 = arith.subf %451, %465 : vector<16x16xf32>
    %cst_260 = arith.constant 9.99999974E-6 : f32
    %467 = vector.broadcast %cst_260 : f32 to vector<16x1xf32>
    %468 = arith.addf %464, %467 : vector<16x1xf32>
    %469 = math.rsqrt %468 : vector<16x1xf32>
    %470 = vector.broadcast %469 : vector<16x1xf32> to vector<16x16xf32>
    %471 = arith.mulf %466, %470 : vector<16x16xf32>
    %472 = vector.broadcast %38 : vector<1x16xf32> to vector<16x16xf32>
    %473 = arith.mulf %471, %472 : vector<16x16xf32>
    %474 = vector.broadcast %37 : vector<1x16xf32> to vector<16x16xf32>
    %475 = arith.addf %473, %474 : vector<16x16xf32>
    %476 = vector.extract_strided_slice %401 {offsets = [0, 0], sizes = [16, 16], strides = [1, 1]} : vector<32x16xf32> to vector<16x16xf32>
    %cst_261 = arith.constant dense<0.000000e+00> : vector<16xf32>
    %477 = vector.multi_reduction <add>, %476, %cst_261 [0] : vector<16x16xf32> to vector<16xf32>
    %478 = vector.shape_cast %477 : vector<16xf32> to vector<1x16xf32>
    %cst_262 = arith.constant dense<0xFF800000> : vector<16xf32>
    %479 = vector.multi_reduction <maximumf>, %476, %cst_262 [0] : vector<16x16xf32> to vector<16xf32>
    %480 = vector.shape_cast %479 : vector<16xf32> to vector<1x16xf32>
    %cst_263 = arith.constant dense<0x7F800000> : vector<16xf32>
    %481 = vector.multi_reduction <minimumf>, %476, %cst_263 [0] : vector<16x16xf32> to vector<16xf32>
    %482 = vector.shape_cast %481 : vector<16xf32> to vector<1x16xf32>
    %483 = vector.extract_strided_slice %401 {offsets = [16, 0], sizes = [16, 16], strides = [1, 1]} : vector<32x16xf32> to vector<16x16xf32>
    %cst_264 = arith.constant dense<0.000000e+00> : vector<16xf32>
    %484 = vector.multi_reduction <add>, %483, %cst_264 [0] : vector<16x16xf32> to vector<16xf32>
    %485 = vector.shape_cast %484 : vector<16xf32> to vector<1x16xf32>
    %cst_265 = arith.constant dense<0xFF800000> : vector<16xf32>
    %486 = vector.multi_reduction <maximumf>, %483, %cst_265 [0] : vector<16x16xf32> to vector<16xf32>
    %487 = vector.shape_cast %486 : vector<16xf32> to vector<1x16xf32>
    %cst_266 = arith.constant dense<0x7F800000> : vector<16xf32>
    %488 = vector.multi_reduction <minimumf>, %483, %cst_266 [0] : vector<16x16xf32> to vector<16xf32>
    %489 = vector.shape_cast %488 : vector<16xf32> to vector<1x16xf32>
    %490 = tpu.concatenate %478, %485 in 0 : vector<1x16xf32>, vector<1x16xf32> -> vector<2x16xf32>
    %491 = tpu.concatenate %480, %487 in 0 : vector<1x16xf32>, vector<1x16xf32> -> vector<2x16xf32>
    %492 = tpu.concatenate %482, %489 in 0 : vector<1x16xf32>, vector<1x16xf32> -> vector<2x16xf32>
    %cst_267 = arith.constant 6.250000e-02 : f32
    %493 = vector.broadcast %cst_267 : f32 to vector<2x16xf32>
    %494 = arith.mulf %490, %493 : vector<2x16xf32>
    %495 = vector.extract_strided_slice %475 {offsets = [0, 0], sizes = [8, 16], strides = [1, 1]} : vector<16x16xf32> to vector<8x16xf32>
    %cst_268 = arith.constant dense<0.000000e+00> : vector<16xf32>
    %496 = vector.multi_reduction <add>, %495, %cst_268 [0] : vector<8x16xf32> to vector<16xf32>
    %497 = vector.shape_cast %496 : vector<16xf32> to vector<1x16xf32>
    %cst_269 = arith.constant dense<0xFF800000> : vector<16xf32>
    %498 = vector.multi_reduction <maximumf>, %495, %cst_269 [0] : vector<8x16xf32> to vector<16xf32>
    %499 = vector.shape_cast %498 : vector<16xf32> to vector<1x16xf32>
    %cst_270 = arith.constant dense<0x7F800000> : vector<16xf32>
    %500 = vector.multi_reduction <minimumf>, %495, %cst_270 [0] : vector<8x16xf32> to vector<16xf32>
    %501 = vector.shape_cast %500 : vector<16xf32> to vector<1x16xf32>
    %502 = vector.extract_strided_slice %475 {offsets = [8, 0], sizes = [8, 16], strides = [1, 1]} : vector<16x16xf32> to vector<8x16xf32>
    %cst_271 = arith.constant dense<0.000000e+00> : vector<16xf32>
    %503 = vector.multi_reduction <add>, %502, %cst_271 [0] : vector<8x16xf32> to vector<16xf32>
    %504 = vector.shape_cast %503 : vector<16xf32> to vector<1x16xf32>
    %cst_272 = arith.constant dense<0xFF800000> : vector<16xf32>
    %505 = vector.multi_reduction <maximumf>, %502, %cst_272 [0] : vector<8x16xf32> to vector<16xf32>
    %506 = vector.shape_cast %505 : vector<16xf32> to vector<1x16xf32>
    %cst_273 = arith.constant dense<0x7F800000> : vector<16xf32>
    %507 = vector.multi_reduction <minimumf>, %502, %cst_273 [0] : vector<8x16xf32> to vector<16xf32>
    %508 = vector.shape_cast %507 : vector<16xf32> to vector<1x16xf32>
    %509 = tpu.concatenate %497, %504 in 0 : vector<1x16xf32>, vector<1x16xf32> -> vector<2x16xf32>
    %510 = tpu.concatenate %499, %506 in 0 : vector<1x16xf32>, vector<1x16xf32> -> vector<2x16xf32>
    %511 = tpu.concatenate %501, %508 in 0 : vector<1x16xf32>, vector<1x16xf32> -> vector<2x16xf32>
    %cst_274 = arith.constant 1.250000e-01 : f32
    %512 = vector.broadcast %cst_274 : f32 to vector<2x16xf32>
    %513 = arith.mulf %509, %512 : vector<2x16xf32>
    %514 = arith.truncf %490 : vector<2x16xf32> to vector<2x16xbf16>
    %cst_275 = arith.constant dense<0.000000e+00> : vector<2x16xf32>
    %515 = tpu.matmul %514, %30, %cst_275 {dimension_numbers = #tpu.dot_dimension_numbers<[1], [0], [0], [1], [0, 0, 1, 1], [], []>} : vector<2x16xbf16>, vector<16x16xbf16>, vector<2x16xf32> -> vector<2x16xf32>
    %516 = arith.truncf %491 : vector<2x16xf32> to vector<2x16xbf16>
    %cst_276 = arith.constant dense<0.000000e+00> : vector<2x16xf32>
    %517 = tpu.matmul %516, %27, %cst_276 {dimension_numbers = #tpu.dot_dimension_numbers<[1], [0], [0], [1], [0, 0, 1, 1], [], []>} : vector<2x16xbf16>, vector<16x16xbf16>, vector<2x16xf32> -> vector<2x16xf32>
    %518 = arith.addf %515, %517 : vector<2x16xf32>
    %519 = arith.truncf %494 : vector<2x16xf32> to vector<2x16xbf16>
    %cst_277 = arith.constant dense<0.000000e+00> : vector<2x16xf32>
    %520 = tpu.matmul %519, %28, %cst_277 {dimension_numbers = #tpu.dot_dimension_numbers<[1], [0], [0], [1], [0, 0, 1, 1], [], []>} : vector<2x16xbf16>, vector<16x16xbf16>, vector<2x16xf32> -> vector<2x16xf32>
    %521 = arith.addf %518, %520 : vector<2x16xf32>
    %522 = arith.truncf %492 : vector<2x16xf32> to vector<2x16xbf16>
    %cst_278 = arith.constant dense<0.000000e+00> : vector<2x16xf32>
    %523 = tpu.matmul %522, %29, %cst_278 {dimension_numbers = #tpu.dot_dimension_numbers<[1], [0], [0], [1], [0, 0, 1, 1], [], []>} : vector<2x16xbf16>, vector<16x16xbf16>, vector<2x16xf32> -> vector<2x16xf32>
    %524 = arith.addf %521, %523 : vector<2x16xf32>
    %525 = vector.broadcast %26 : vector<1x16xf32> to vector<2x16xf32>
    %526 = arith.addf %524, %525 : vector<2x16xf32>
    %cst_279 = arith.constant 0.000000e+00 : f32
    %527 = vector.broadcast %cst_279 : f32 to vector<2x16xf32>
    %528 = arith.maximumf %526, %527 : vector<2x16xf32>
    %529 = arith.truncf %509 : vector<2x16xf32> to vector<2x16xbf16>
    %cst_280 = arith.constant dense<0.000000e+00> : vector<2x16xf32>
    %530 = tpu.matmul %529, %35, %cst_280 {dimension_numbers = #tpu.dot_dimension_numbers<[1], [0], [0], [1], [0, 0, 1, 1], [], []>} : vector<2x16xbf16>, vector<16x16xbf16>, vector<2x16xf32> -> vector<2x16xf32>
    %531 = arith.truncf %510 : vector<2x16xf32> to vector<2x16xbf16>
    %cst_281 = arith.constant dense<0.000000e+00> : vector<2x16xf32>
    %532 = tpu.matmul %531, %32, %cst_281 {dimension_numbers = #tpu.dot_dimension_numbers<[1], [0], [0], [1], [0, 0, 1, 1], [], []>} : vector<2x16xbf16>, vector<16x16xbf16>, vector<2x16xf32> -> vector<2x16xf32>
    %533 = arith.addf %530, %532 : vector<2x16xf32>
    %534 = arith.truncf %513 : vector<2x16xf32> to vector<2x16xbf16>
    %cst_282 = arith.constant dense<0.000000e+00> : vector<2x16xf32>
    %535 = tpu.matmul %534, %33, %cst_282 {dimension_numbers = #tpu.dot_dimension_numbers<[1], [0], [0], [1], [0, 0, 1, 1], [], []>} : vector<2x16xbf16>, vector<16x16xbf16>, vector<2x16xf32> -> vector<2x16xf32>
    %536 = arith.addf %533, %535 : vector<2x16xf32>
    %537 = arith.truncf %511 : vector<2x16xf32> to vector<2x16xbf16>
    %cst_283 = arith.constant dense<0.000000e+00> : vector<2x16xf32>
    %538 = tpu.matmul %537, %34, %cst_283 {dimension_numbers = #tpu.dot_dimension_numbers<[1], [0], [0], [1], [0, 0, 1, 1], [], []>} : vector<2x16xbf16>, vector<16x16xbf16>, vector<2x16xf32> -> vector<2x16xf32>
    %539 = arith.addf %536, %538 : vector<2x16xf32>
    %540 = vector.broadcast %31 : vector<1x16xf32> to vector<2x16xf32>
    %541 = arith.addf %539, %540 : vector<2x16xf32>
    %cst_284 = arith.constant 0.000000e+00 : f32
    %542 = vector.broadcast %cst_284 : f32 to vector<2x16xf32>
    %543 = arith.maximumf %541, %542 : vector<2x16xf32>
    %544 = arith.truncf %352 : vector<2x1xf32> to vector<2x1xbf16>
    %cst_285 = arith.constant dense<0.000000e+00> : vector<2x1xf32>
    %545 = tpu.matmul %544, %23, %cst_285 {dimension_numbers = #tpu.dot_dimension_numbers<[1], [0], [0], [1], [0, 0, 1, 1], [], []>} : vector<2x1xbf16>, vector<1x1xbf16>, vector<2x1xf32> -> vector<2x1xf32>
    %546 = arith.addf %130, %545 : vector<2x1xf32>
    %547 = arith.truncf %543 : vector<2x16xf32> to vector<2x16xbf16>
    %cst_286 = arith.constant dense<0.000000e+00> : vector<2x1xf32>
    %548 = tpu.matmul %547, %25, %cst_286 {dimension_numbers = #tpu.dot_dimension_numbers<[1], [0], [0], [1], [0, 0, 1, 1], [], []>} : vector<2x16xbf16>, vector<16x1xbf16>, vector<2x1xf32> -> vector<2x1xf32>
    %549 = arith.addf %546, %548 : vector<2x1xf32>
    %550 = arith.truncf %528 : vector<2x16xf32> to vector<2x16xbf16>
    %cst_287 = arith.constant dense<0.000000e+00> : vector<2x1xf32>
    %551 = tpu.matmul %550, %22, %cst_287 {dimension_numbers = #tpu.dot_dimension_numbers<[1], [0], [0], [1], [0, 0, 1, 1], [], []>} : vector<2x16xbf16>, vector<16x1xbf16>, vector<2x1xf32> -> vector<2x1xf32>
    %552 = arith.addf %549, %551 : vector<2x1xf32>
    %cst_288 = arith.constant 0.000000e+00 : f32
    %553 = vector.broadcast %cst_288 : f32 to vector<2x1xf32>
    %554 = arith.maximumf %552, %553 : vector<2x1xf32>
    %cst_289 = arith.constant dense<0.000000e+00> : vector<2xf32>
    %555 = vector.multi_reduction <add>, %554, %cst_289 [1] : vector<2x1xf32> to vector<2xf32>
    %556 = vector.shape_cast %555 : vector<2xf32> to vector<2x1xf32>
    %cst_290 = arith.constant 1.000000e+00 : f32
    %557 = vector.broadcast %cst_290 : f32 to vector<2x1xf32>
    %558 = arith.divf %556, %557 : vector<2x1xf32>
    %559 = arith.subf %554, %558 : vector<2x1xf32>
    %560 = arith.subf %554, %558 : vector<2x1xf32>
    %561 = arith.mulf %559, %560 : vector<2x1xf32>
    %cst_291 = arith.constant dense<0.000000e+00> : vector<2xf32>
    %562 = vector.multi_reduction <add>, %561, %cst_291 [1] : vector<2x1xf32> to vector<2xf32>
    %563 = vector.shape_cast %562 : vector<2xf32> to vector<2x1xf32>
    %cst_292 = arith.constant 1.000000e+00 : f32
    %564 = vector.broadcast %cst_292 : f32 to vector<2x1xf32>
    %565 = arith.divf %563, %564 : vector<2x1xf32>
    %566 = arith.subf %554, %558 : vector<2x1xf32>
    %cst_293 = arith.constant 9.99999974E-6 : f32
    %567 = vector.broadcast %cst_293 : f32 to vector<2x1xf32>
    %568 = arith.addf %565, %567 : vector<2x1xf32>
    %569 = math.rsqrt %568 : vector<2x1xf32>
    %570 = arith.mulf %566, %569 : vector<2x1xf32>
    %571 = vector.broadcast %21 : vector<1x1xf32> to vector<2x1xf32>
    %572 = arith.mulf %570, %571 : vector<2x1xf32>
    %573 = vector.broadcast %20 : vector<1x1xf32> to vector<2x1xf32>
    %574 = arith.addf %572, %573 : vector<2x1xf32>
    %575 = arith.truncf %401 : vector<32x16xf32> to vector<32x16xbf16>
    %cst_294 = arith.constant dense<0.000000e+00> : vector<32x16xf32>
    %576 = tpu.matmul %575, %49, %cst_294 {dimension_numbers = #tpu.dot_dimension_numbers<[1], [0], [0], [1], [0, 0, 1, 1], [], []>} : vector<32x16xbf16>, vector<16x16xbf16>, vector<32x16xf32> -> vector<32x16xf32>
    %577 = vector.broadcast %50 : vector<1x16xf32> to vector<32x16xf32>
    %578 = arith.addf %576, %577 : vector<32x16xf32>
    %cst_295 = arith.constant 0.000000e+00 : f32
    %579 = vector.broadcast %cst_295 : f32 to vector<32x16xf32>
    %580 = arith.maximumf %578, %579 : vector<32x16xf32>
    %581 = arith.truncf %580 : vector<32x16xf32> to vector<32x16xbf16>
    %cst_296 = arith.constant dense<0.000000e+00> : vector<32x16xf32>
    %582 = tpu.matmul %581, %51, %cst_296 {dimension_numbers = #tpu.dot_dimension_numbers<[1], [0], [0], [1], [0, 0, 1, 1], [], []>} : vector<32x16xbf16>, vector<16x16xbf16>, vector<32x16xf32> -> vector<32x16xf32>
    %583 = vector.broadcast %52 : vector<1x16xf32> to vector<32x16xf32>
    %584 = arith.addf %582, %583 : vector<32x16xf32>
    %cst_297 = arith.constant 0.000000e+00 : f32
    %585 = vector.broadcast %cst_297 : f32 to vector<32x16xf32>
    %586 = arith.maximumf %584, %585 : vector<32x16xf32>
    %587 = arith.truncf %475 : vector<16x16xf32> to vector<16x16xbf16>
    %cst_298 = arith.constant dense<0.000000e+00> : vector<16x16xf32>
    %588 = tpu.matmul %587, %55, %cst_298 {dimension_numbers = #tpu.dot_dimension_numbers<[1], [0], [0], [1], [0, 0, 1, 1], [], []>} : vector<16x16xbf16>, vector<16x16xbf16>, vector<16x16xf32> -> vector<16x16xf32>
    %589 = vector.broadcast %56 : vector<1x16xf32> to vector<16x16xf32>
    %590 = arith.addf %588, %589 : vector<16x16xf32>
    %cst_299 = arith.constant 0.000000e+00 : f32
    %591 = vector.broadcast %cst_299 : f32 to vector<16x16xf32>
    %592 = arith.maximumf %590, %591 : vector<16x16xf32>
    %593 = arith.truncf %592 : vector<16x16xf32> to vector<16x16xbf16>
    %cst_300 = arith.constant dense<0.000000e+00> : vector<16x16xf32>
    %594 = tpu.matmul %593, %57, %cst_300 {dimension_numbers = #tpu.dot_dimension_numbers<[1], [0], [0], [1], [0, 0, 1, 1], [], []>} : vector<16x16xbf16>, vector<16x16xbf16>, vector<16x16xf32> -> vector<16x16xf32>
    %595 = vector.broadcast %58 : vector<1x16xf32> to vector<16x16xf32>
    %596 = arith.addf %594, %595 : vector<16x16xf32>
    %cst_301 = arith.constant 0.000000e+00 : f32
    %597 = vector.broadcast %cst_301 : f32 to vector<16x16xf32>
    %598 = arith.maximumf %596, %597 : vector<16x16xf32>
    %599 = arith.truncf %574 : vector<2x1xf32> to vector<2x1xbf16>
    %cst_302 = arith.constant dense<0.000000e+00> : vector<2x1xf32>
    %600 = tpu.matmul %599, %53, %cst_302 {dimension_numbers = #tpu.dot_dimension_numbers<[1], [0], [0], [1], [0, 0, 1, 1], [], []>} : vector<2x1xbf16>, vector<1x1xbf16>, vector<2x1xf32> -> vector<2x1xf32>
    %601 = vector.broadcast %54 : vector<1x1xf32> to vector<2x1xf32>
    %602 = arith.addf %600, %601 : vector<2x1xf32>
    %cst_303 = arith.constant 0.000000e+00 : f32
    %603 = vector.broadcast %cst_303 : f32 to vector<2x1xf32>
    %604 = arith.maximumf %602, %603 : vector<2x1xf32>
    %605 = arith.truncf %586 : vector<32x16xf32> to vector<32x16xbf16>
    %cst_304 = arith.constant dense<0.000000e+00> : vector<8x32xf32>
    %606 = tpu.matmul %65, %605, %cst_304 {dimension_numbers = #tpu.dot_dimension_numbers<[1], [1], [0], [0], [0, 0, 1, 0], [], []>} : vector<8x16xbf16>, vector<32x16xbf16>, vector<8x32xf32> -> vector<8x32xf32>
    %607 = vector.broadcast %66 : vector<8x1xf32> to vector<8x32xf32>
    %608 = arith.addf %606, %607 : vector<8x32xf32>
    %cst_305 = arith.constant 5.000000e-01 : f32
    %609 = vector.broadcast %cst_305 : f32 to vector<8x32xf32>
    %610 = arith.mulf %609, %608 : vector<8x32xf32>
    %611 = math.tanh %610 : vector<8x32xf32>
    %cst_306 = arith.constant 1.000000e+00 : f32
    %612 = vector.broadcast %cst_306 : f32 to vector<8x32xf32>
    %613 = arith.addf %611, %612 : vector<8x32xf32>
    %cst_307 = arith.constant 5.000000e-01 : f32
    %614 = vector.broadcast %cst_307 : f32 to vector<8x32xf32>
    %615 = arith.mulf %614, %613 : vector<8x32xf32>
    %c0_308 = arith.constant 0 : index
    %c0_309 = arith.constant 0 : index
    %616 = vector.load %arg71[%c0_308, %c0_309] : memref<8x32xf32, #tpu.memory_space<vmem>>, vector<8x32xf32>
    tpu.vector_store %arg71[%c0_308, %c0_309], %615 {strides = array<i32>} : memref<8x32xf32, #tpu.memory_space<vmem>>, vector<8x32xf32>,
    %617 = arith.truncf %598 : vector<16x16xf32> to vector<16x16xbf16>
    %cst_310 = arith.constant dense<0.000000e+00> : vector<8x16xf32>
    %618 = tpu.matmul %69, %617, %cst_310 {dimension_numbers = #tpu.dot_dimension_numbers<[1], [1], [0], [0], [0, 0, 1, 0], [], []>} : vector<8x16xbf16>, vector<16x16xbf16>, vector<8x16xf32> -> vector<8x16xf32>
    %619 = vector.broadcast %70 : vector<8x1xf32> to vector<8x16xf32>
    %620 = arith.addf %618, %619 : vector<8x16xf32>
    %cst_311 = arith.constant 5.000000e-01 : f32
    %621 = vector.broadcast %cst_311 : f32 to vector<8x16xf32>
    %622 = arith.mulf %621, %620 : vector<8x16xf32>
    %623 = math.tanh %622 : vector<8x16xf32>
    %cst_312 = arith.constant 1.000000e+00 : f32
    %624 = vector.broadcast %cst_312 : f32 to vector<8x16xf32>
    %625 = arith.addf %623, %624 : vector<8x16xf32>
    %cst_313 = arith.constant 5.000000e-01 : f32
    %626 = vector.broadcast %cst_313 : f32 to vector<8x16xf32>
    %627 = arith.mulf %626, %625 : vector<8x16xf32>
    %c0_314 = arith.constant 0 : index
    %c0_315 = arith.constant 0 : index
    %628 = vector.load %arg72[%c0_314, %c0_315] : memref<8x16xf32, #tpu.memory_space<vmem>>, vector<8x16xf32>
    tpu.vector_store %arg72[%c0_314, %c0_315], %627 {strides = array<i32>} : memref<8x16xf32, #tpu.memory_space<vmem>>, vector<8x16xf32>,
    %629 = arith.truncf %604 : vector<2x1xf32> to vector<2x1xbf16>
    %cst_316 = arith.constant dense<0.000000e+00> : vector<8x2xf32>
    %630 = tpu.matmul %67, %629, %cst_316 {dimension_numbers = #tpu.dot_dimension_numbers<[1], [1], [0], [0], [0, 0, 1, 0], [], []>} : vector<8x1xbf16>, vector<2x1xbf16>, vector<8x2xf32> -> vector<8x2xf32>
    %631 = vector.broadcast %68 : vector<8x1xf32> to vector<8x2xf32>
    %632 = arith.addf %630, %631 : vector<8x2xf32>
    %c0_317 = arith.constant 0 : index
    %c0_318 = arith.constant 0 : index
    %633 = vector.load %arg73[%c0_317, %c0_318] : memref<8x2xf32, #tpu.memory_space<vmem>>, vector<8x2xf32>
    tpu.vector_store %arg73[%c0_317, %c0_318], %632 {strides = array<i32>} : memref<8x2xf32, #tpu.memory_space<vmem>>, vector<8x2xf32>,
    return
  }
}

</mosaic_0001>

<llo_original>
// kernel: tpu_custom_call.1
$region0: #{tpu_custom_call.1}
  #allocation0 [shape = 'u32[]', space=smem, size = 0x4, offset = 0x4, fixed_abs, tag = 'smem constant byte address 0x4 - core index']
  #allocation1 [shape = 'u32[144,128]{1,0:T(1,128)}', space=vmem, size = 0x12000, scoped, tag = 'internal scratch']
  #allocation2 [shape = 'f32[16,16]{1,0:T(8,128)}', space=vmem, size = 0x2000, scoped, tag = 'scratch operand']
  #allocation3 [shape = 'f32[16,16]{1,0:T(8,128)}', space=vmem, size = 0x2000, scoped, tag = 'scratch operand']
  #allocation4 [shape = 'f32[1,1]{1,0:T(1,128)S(1)}', space=vmem, size = 0x200, scoped, tag = 'scoped memory for tpu_custom_call.1']
  #allocation5 [shape = 'f32[1,1]{1,0:T(1,128)S(1)}', space=vmem, size = 0x200, scoped, tag = 'scoped memory for tpu_custom_call.1']
  #allocation6 [shape = 'f32[1,1]{1,0:T(1,128)S(1)}', space=vmem, size = 0x200, scoped, tag = 'scoped memory for tpu_custom_call.1']
  #allocation7 [shape = 'bf16[1,1]{1,0:T(2,128)S(1)}', space=vmem, size = 0x200, scoped, tag = 'scoped memory for tpu_custom_call.1']
  #allocation8 [shape = 'bf16[1,1]{1,0:T(2,128)S(1)}', space=vmem, size = 0x200, scoped, tag = 'scoped memory for tpu_custom_call.1']
  #allocation9 [shape = 'bf16[1,1]{1,0:T(2,128)S(1)}', space=vmem, size = 0x200, scoped, tag = 'scoped memory for tpu_custom_call.1']
  #allocation10 [shape = 'f32[1,1]{1,0:T(1,128)S(1)}', space=vmem, size = 0x200, scoped, tag = 'scoped memory for tpu_custom_call.1']
  #allocation11 [shape = 'f32[1,1]{1,0:T(1,128)S(1)}', space=vmem, size = 0x200, scoped, tag = 'scoped memory for tpu_custom_call.1']
  %s0 = inlined_call_operand.smem [shape: u32[74], index: -1, kind: input, shape index: {}]
  %s1 = sld [smem:[%s0]]
  %s2 = scalar_lea.smem %s0, 1
  %s3 = sld [smem:[%s2]]
  %s4 = scalar_lea.smem %s0, 2
  %s5 = sld [smem:[%s4]]
  %s6 = scalar_lea.smem %s0, 3
  %s7 = sld [smem:[%s6]]
  %s8 = scalar_lea.smem %s0, 4
  %s9 = sld [smem:[%s8]]
  %s10 = scalar_lea.smem %s0, 5
  %s11 = sld [smem:[%s10]]
  %s12 = scalar_lea.smem %s0, 6
  %s13 = sld [smem:[%s12]]
  %s14 = scalar_lea.smem %s0, 7
  %s15 = sld [smem:[%s14]]
  %s16 = scalar_lea.smem %s0, 8
  %s17 = sld [smem:[%s16]]
  %s18 = scalar_lea.smem %s0, 9
  %s19 = sld [smem:[%s18]]
  %s20 = scalar_lea.smem %s0, 10
  %s21 = sld [smem:[%s20]]
  %s22 = scalar_lea.smem %s0, 11
  %s23 = sld [smem:[%s22]]
  %s24 = scalar_lea.smem %s0, 12
  %s25 = sld [smem:[%s24]]
  %s26 = scalar_lea.smem %s0, 13
  %s27 = sld [smem:[%s26]]
  %s28 = scalar_lea.smem %s0, 14
  %s29 = sld [smem:[%s28]]
  %s30 = scalar_lea.smem %s0, 15
  %s31 = sld [smem:[%s30]]
  %s32 = scalar_lea.smem %s0, 16
  %s33 = sld [smem:[%s32]]
  %s34 = scalar_lea.smem %s0, 17
  %s35 = sld [smem:[%s34]]
  %s36 = scalar_lea.smem %s0, 18
  %s37 = sld [smem:[%s36]]
  %s38 = scalar_lea.smem %s0, 19
  %s39 = sld [smem:[%s38]]
  %s40 = scalar_lea.smem %s0, 20
  %s41 = sld [smem:[%s40]]
  %s42 = scalar_lea.smem %s0, 21
  %s43 = sld [smem:[%s42]]
  %s44 = scalar_lea.smem %s0, 22
  %s45 = sld [smem:[%s44]]
  %s46 = scalar_lea.smem %s0, 23
  %s47 = sld [smem:[%s46]]
  %s48 = scalar_lea.smem %s0, 24
  %s49 = sld [smem:[%s48]]
  %s50 = scalar_lea.smem %s0, 25
  %s51 = sld [smem:[%s50]]
  %s52 = scalar_lea.smem %s0, 26
  %s53 = sld [smem:[%s52]]
  %s54 = scalar_lea.smem %s0, 27
  %s55 = sld [smem:[%s54]]
  %s56 = scalar_lea.smem %s0, 28
  %s57 = sld [smem:[%s56]]
  %s58 = scalar_lea.smem %s0, 29
  %s59 = sld [smem:[%s58]]
  %s60 = scalar_lea.smem %s0, 30
  %s61 = sld [smem:[%s60]]
  %s62 = scalar_lea.smem %s0, 31
  %s63 = sld [smem:[%s62]]
  %s64 = scalar_lea.smem %s0, 32
  %s65 = sld [smem:[%s64]]
  %s66 = scalar_lea.smem %s0, 33
  %s67 = sld [smem:[%s66]]
  %s68 = scalar_lea.smem %s0, 34
  %s69 = sld [smem:[%s68]]
  %s70 = scalar_lea.smem %s0, 35
  %s71 = sld [smem:[%s70]]
  %s72 = scalar_lea.smem %s0, 36
  %s73 = sld [smem:[%s72]]
  %s74 = scalar_lea.smem %s0, 37
  %s75 = sld [smem:[%s74]]
  %s76 = scalar_lea.smem %s0, 38
  %s77 = sld [smem:[%s76]]
  %s78 = scalar_lea.smem %s0, 39
  %s79 = sld [smem:[%s78]]
  %s80 = scalar_lea.smem %s0, 40
  %s81 = sld [smem:[%s80]]
  %s82 = scalar_lea.smem %s0, 41
  %s83 = sld [smem:[%s82]]
  %s84 = scalar_lea.smem %s0, 42
  %s85 = sld [smem:[%s84]]
  %s86 = scalar_lea.smem %s0, 43
  %s87 = sld [smem:[%s86]]
  %s88 = scalar_lea.smem %s0, 44
  %s89 = sld [smem:[%s88]]
  %s90 = scalar_lea.smem %s0, 45
  %s91 = sld [smem:[%s90]]
  %s92 = scalar_lea.smem %s0, 46
  %s93 = sld [smem:[%s92]]
  %s94 = scalar_lea.smem %s0, 47
  %s95 = sld [smem:[%s94]]
  %s96 = scalar_lea.smem %s0, 48
  %s97 = sld [smem:[%s96]]
  %s98 = scalar_lea.smem %s0, 49
  %s99 = sld [smem:[%s98]]
  %s100 = scalar_lea.smem %s0, 50
  %s101 = sld [smem:[%s100]]
  %s102 = scalar_lea.smem %s0, 51
  %s103 = sld [smem:[%s102]]
  %s104 = scalar_lea.smem %s0, 52
  %s105 = sld [smem:[%s104]]
  %s106 = scalar_lea.smem %s0, 53
  %s107 = sld [smem:[%s106]]
  %s108 = scalar_lea.smem %s0, 54
  %s109 = sld [smem:[%s108]]
  %s110 = scalar_lea.smem %s0, 55
  %s111 = sld [smem:[%s110]]
  %s112 = scalar_lea.smem %s0, 56
  %s113 = sld [smem:[%s112]]
  %s114 = scalar_lea.smem %s0, 57
  %s115 = sld [smem:[%s114]]
  %s116 = scalar_lea.smem %s0, 58
  %s117 = sld [smem:[%s116]]
  %s118 = scalar_lea.smem %s0, 59
  %s119 = sld [smem:[%s118]]
  %s120 = scalar_lea.smem %s0, 60
  %s121 = sld [smem:[%s120]]
  %s122 = scalar_lea.smem %s0, 61
  %s123 = sld [smem:[%s122]]
  %s124 = scalar_lea.smem %s0, 62
  %s125 = sld [smem:[%s124]]
  %s126 = scalar_lea.smem %s0, 63
  %s127 = sld [smem:[%s126]]
  %s128 = scalar_lea.smem %s0, 64
  %s129 = sld [smem:[%s128]]
  %s130 = scalar_lea.smem %s0, 65
  %s131 = sld [smem:[%s130]]
  %s132 = scalar_lea.smem %s0, 66
  %s133 = sld [smem:[%s132]]
  %s134 = scalar_lea.smem %s0, 67
  %s135 = sld [smem:[%s134]]
  %s136 = scalar_lea.smem %s0, 68
  %s137 = sld [smem:[%s136]]
  %s138 = scalar_lea.smem %s0, 69
  %s139 = sld [smem:[%s138]]
  %s140 = scalar_lea.smem %s0, 70
  %s141 = sld [smem:[%s140]]
  %s142 = scalar_lea.smem %s0, 71
  %s143 = sld [smem:[%s142]]
  %s144 = scalar_lea.smem %s0, 72
  %s145 = sld [smem:[%s144]]
  %s146 = scalar_lea.smem %s0, 73
  %s147 = sld [smem:[%s146]]
  %148 = xla_tuple %s143, %s145, %s147
  %s149 = sld [smem:[#allocation0]]
  $region376: #{tpu_custom_call.1} parent=0
    _
  %s151 = ssub.s32 1, %s149
  %s152 = scalar_select 0, %s151, %s149
  %v153 = vstv %s39
  %154 = vst [vmem:[#allocation4] sm:$0x1] %v153
  %v155 = vstv %s41
  %156 = vst [vmem:[#allocation5] sm:$0x1] %v155
  %v157 = vstv %s43
  %158 = vst [vmem:[#allocation6] sm:$0x1] %v157
  %v159 = vstv %s47
  %160 = vst [vmem:[#allocation7] sm:$0x1] %v159
  %v161 = vstv %s49
  %162 = vst [vmem:[#allocation8] sm:$0x1] %v161
  %v163 = vstv %s107
  %164 = vst [vmem:[#allocation9] sm:$0x1] %v163
  %v165 = vstv %s109
  %166 = vst [vmem:[#allocation10] sm:$0x1] %v165
  %v167 = vstv %s125
  %168 = vst [vmem:[#allocation11] sm:$0x1] %v167
  $region1: #{tpu_custom_call.1} parent=0
    #allocation12 [shape = 'u8[512]{0}', space=vmem, size = 0x400, scoped, tag = 'input window, operand 31, single buffered']
    #allocation13 [shape = 's32[1]{0}', space=sflag, size = 0x4, scoped, tag = 'scoped memory for tpu_custom_call.1']
    #allocation14 [shape = 's32[1]{0}', space=sflag, size = 0x4, scoped, tag = 'scoped memory for tpu_custom_call.1']
    #allocation15 [shape = 'u8[512]{0}', space=vmem, size = 0x400, scoped, tag = 'input window, operand 36, single buffered']
    #allocation16 [shape = 's32[1]{0}', space=sflag, size = 0x4, scoped, tag = 'scoped memory for tpu_custom_call.1']
    #allocation17 [shape = 'u8[512]{0}', space=vmem, size = 0x400, scoped, tag = 'input window, operand 37, single buffered']
    #allocation18 [shape = 'u8[512]{0}', space=vmem, size = 0x400, scoped, tag = 'input window, operand 38, single buffered']
    #allocation19 [shape = 's32[1]{0}', space=sflag, size = 0x4, scoped, tag = 'scoped memory for tpu_custom_call.1']
    #allocation20 [shape = 'u8[512]{0}', space=vmem, size = 0x400, scoped, tag = 'input window, operand 40, single buffered']
    #allocation21 [shape = 'u8[512]{0}', space=vmem, size = 0x400, scoped, tag = 'input window, operand 41, single buffered']
    #allocation22 [shape = 's32[1]{0}', space=sflag, size = 0x4, scoped, tag = 'scoped memory for tpu_custom_call.1']
    #allocation23 [shape = 'u8[512]{0}', space=vmem, size = 0x400, scoped, tag = 'input window, operand 44, single buffered']
    #allocation24 [shape = 'u8[512]{0}', space=vmem, size = 0x400, scoped, tag = 'input window, operand 50, single buffered']
    #allocation25 [shape = 's32[1]{0}', space=sflag, size = 0x4, scoped, tag = 'scoped memory for tpu_custom_call.1']
    #allocation26 [shape = 'u8[512]{0}', space=vmem, size = 0x400, scoped, tag = 'input window, operand 52, single buffered']
    #allocation27 [shape = 'u8[512]{0}', space=vmem, size = 0x400, scoped, tag = 'input window, operand 56, single buffered']
    #allocation28 [shape = 's32[1]{0}', space=sflag, size = 0x4, scoped, tag = 'scoped memory for tpu_custom_call.1']
    #allocation29 [shape = 'u8[512]{0}', space=vmem, size = 0x400, scoped, tag = 'input window, operand 58, single buffered']
    #allocation30 [shape = 'u8[512]{0}', space=vmem, size = 0x400, scoped, tag = 'input window, operand 60, single buffered']
    #allocation31 [shape = 's32[1]{0}', space=sflag, size = 0x4, scoped, tag = 'scoped memory for tpu_custom_call.1']
    #allocation32 [shape = 'u8[512]{0}', space=vmem, size = 0x400, scoped, tag = 'input window, operand 64, single buffered']
    #allocation33 [shape = 'u8[4096]{0}', space=vmem, size = 0x1000, scoped, tag = 'output window, operand 0, single buffered']
    #allocation34 [shape = 'u8[4096]{0}', space=vmem, size = 0x1000, scoped, tag = 'output window, operand 1, single buffered']
    #allocation35 [shape = 's32[1]{0}', space=sflag, size = 0x4, scoped, tag = 'scoped memory for tpu_custom_call.1']
    %169 = vsyncpa [#allocation13], 0
    %170 = vsyncpa [#allocation16], 0
    %171 = vsyncpa [#allocation19], 0
    %172 = vsyncpa [#allocation22], 0
    %173 = vsyncpa [#allocation25], 0
    %174 = vsyncpa [#allocation28], 0
    %175 = vsyncpa [#allocation31], 0
    %176 = vsyncpa [#allocation14], 0
    %177 = vsyncpa [#allocation35], 0
    // Predicated region
    $region2: #{tpu_custom_call.1} parent=1 // pred_check
      _
    $region3: #{tpu_custom_call.1} parent=1 // pred_check_branch
      %179 = sbr.rel (0) target = $region5
    $region4: #{tpu_custom_call.1} parent=1 // pred_region
      _
    $region5: #{tpu_custom_call.1} parent=1 // pred_fallthru
      _
    // Predicated region
    $region6: #{tpu_custom_call.1} parent=1 // pred_check
      _
    $region7: #{tpu_custom_call.1} parent=1 // pred_check_branch
      %181 = sbr.rel (0) target = $region9
    $region8: #{tpu_custom_call.1} parent=1 // pred_region
      _
    $region9: #{tpu_custom_call.1} parent=1 // pred_fallthru
      _
    // Predicated region
    $region10: #{tpu_custom_call.1} parent=1 // pred_check
      _
    $region11: #{tpu_custom_call.1} parent=1 // pred_check_branch
      %183 = sbr.rel (0) target = $region13
    $region12: #{tpu_custom_call.1} parent=1 // pred_region
      _
    $region13: #{tpu_custom_call.1} parent=1 // pred_fallthru
      _
    // Predicated region
    $region14: #{tpu_custom_call.1} parent=1 // pred_check
      _
    $region15: #{tpu_custom_call.1} parent=1 // pred_check_branch
      %185 = sbr.rel (0) target = $region17
    $region16: #{tpu_custom_call.1} parent=1 // pred_region
      _
    $region17: #{tpu_custom_call.1} parent=1 // pred_fallthru
      _
    // Predicated region
    $region18: #{tpu_custom_call.1} parent=1 // pred_check
      _
    $region19: #{tpu_custom_call.1} parent=1 // pred_check_branch
      %187 = sbr.rel (0) target = $region21
    $region20: #{tpu_custom_call.1} parent=1 // pred_region
      _
    $region21: #{tpu_custom_call.1} parent=1 // pred_fallthru
      _
    // Predicated region
    $region22: #{tpu_custom_call.1} parent=1 // pred_check
      _
    $region23: #{tpu_custom_call.1} parent=1 // pred_check_branch
      %189 = sbr.rel (0) target = $region25
    $region24: #{tpu_custom_call.1} parent=1 // pred_region
      _
    $region25: #{tpu_custom_call.1} parent=1 // pred_fallthru
      _
    // Predicated region
    $region26: #{tpu_custom_call.1} parent=1 // pred_check
      _
    $region27: #{tpu_custom_call.1} parent=1 // pred_check_branch
      %191 = sbr.rel (0) target = $region29
    $region28: #{tpu_custom_call.1} parent=1 // pred_region
      _
    $region29: #{tpu_custom_call.1} parent=1 // pred_fallthru
      _
    // Predicated region
    $region30: #{tpu_custom_call.1} parent=1 // pred_check
      _
    $region31: #{tpu_custom_call.1} parent=1 // pred_check_branch
      %193 = sbr.rel (0) target = $region33
    $region32: #{tpu_custom_call.1} parent=1 // pred_region
      _
    $region33: #{tpu_custom_call.1} parent=1 // pred_fallthru
      _
    // Predicated region
    $region34: #{tpu_custom_call.1} parent=1 // pred_check
      _
    $region35: #{tpu_custom_call.1} parent=1 // pred_check_branch
      %195 = sbr.rel (0) target = $region37
    $region36: #{tpu_custom_call.1} parent=1 // pred_region
      _
    $region37: #{tpu_custom_call.1} parent=1 // pred_fallthru
      _
    // Predicated region
    $region38: #{tpu_custom_call.1} parent=1 // pred_check
      _
    $region39: #{tpu_custom_call.1} parent=1 // pred_check_branch
      %197 = sbr.rel (0) target = $region41
    $region40: #{tpu_custom_call.1} parent=1 // pred_region
      _
    $region41: #{tpu_custom_call.1} parent=1 // pred_fallthru
      _
    // Predicated region
    $region42: #{tpu_custom_call.1} parent=1 // pred_check
      _
    $region43: #{tpu_custom_call.1} parent=1 // pred_check_branch
      %199 = sbr.rel (0) target = $region45
    $region44: #{tpu_custom_call.1} parent=1 // pred_region
      _
    $region45: #{tpu_custom_call.1} parent=1 // pred_fallthru
      _
    // Predicated region
    $region46: #{tpu_custom_call.1} parent=1 // pred_check
      _
    $region47: #{tpu_custom_call.1} parent=1 // pred_check_branch
      %201 = sbr.rel (0) target = $region49
    $region48: #{tpu_custom_call.1} parent=1 // pred_region
      _
    $region49: #{tpu_custom_call.1} parent=1 // pred_fallthru
      _
    // Predicated region
    $region50: #{tpu_custom_call.1} parent=1 // pred_check
      _
    $region51: #{tpu_custom_call.1} parent=1 // pred_check_branch
      %203 = sbr.rel (0) target = $region53
    $region52: #{tpu_custom_call.1} parent=1 // pred_region
      _
    $region53: #{tpu_custom_call.1} parent=1 // pred_fallthru
      _
    // Predicated region
    $region54: #{tpu_custom_call.1} parent=1 // pred_check
      _
    $region55: #{tpu_custom_call.1} parent=1 // pred_check_branch
      %205 = sbr.rel (0) target = $region57
    $region56: #{tpu_custom_call.1} parent=1 // pred_region
      _
    $region57: #{tpu_custom_call.1} parent=1 // pred_fallthru
      _
    // Predicated region
    $region58: #{tpu_custom_call.1} parent=1 // pred_check
      _
    $region59: #{tpu_custom_call.1} parent=1 // pred_check_branch
      %207 = sbr.rel (0) target = $region61
    $region60: #{tpu_custom_call.1} parent=1 // pred_region
      _
    $region61: #{tpu_custom_call.1} parent=1 // pred_fallthru
      _
    // Predicated region
    $region62: #{tpu_custom_call.1} parent=1 // pred_check
      _
    $region63: #{tpu_custom_call.1} parent=1 // pred_check_branch
      %209 = sbr.rel (0) target = $region65
    $region64: #{tpu_custom_call.1} parent=1 // pred_region
      _
    $region65: #{tpu_custom_call.1} parent=1 // pred_fallthru
      _
    // Predicated region
    $region66: #{tpu_custom_call.1} parent=1 // pred_check
      _
    $region67: #{tpu_custom_call.1} parent=1 // pred_check_branch
      %211 = sbr.rel (0) target = $region69
    $region68: #{tpu_custom_call.1} parent=1 // pred_region
      _
    $region69: #{tpu_custom_call.1} parent=1 // pred_fallthru
      _
    // Predicated region
    $region70: #{tpu_custom_call.1} parent=1 // pred_check
      _
    $region71: #{tpu_custom_call.1} parent=1 // pred_check_branch
      %213 = sbr.rel (0) target = $region73
    $region72: #{tpu_custom_call.1} parent=1 // pred_region
      _
    $region73: #{tpu_custom_call.1} parent=1 // pred_fallthru
      _
    // Predicated region
    $region74: #{tpu_custom_call.1} parent=1 // pred_check
      _
    $region75: #{tpu_custom_call.1} parent=1 // pred_check_branch
      %215 = sbr.rel (0) target = $region77
    $region76: #{tpu_custom_call.1} parent=1 // pred_region
      _
    $region77: #{tpu_custom_call.1} parent=1 // pred_fallthru
      _
    // Predicated region
    $region78: #{tpu_custom_call.1} parent=1 // pred_check
      _
    $region79: #{tpu_custom_call.1} parent=1 // pred_check_branch
      %217 = sbr.rel (0) target = $region81
    $region80: #{tpu_custom_call.1} parent=1 // pred_region
      _
    $region81: #{tpu_custom_call.1} parent=1 // pred_fallthru
      _
    // Predicated region
    $region82: #{tpu_custom_call.1} parent=1 // pred_check
      _
    $region83: #{tpu_custom_call.1} parent=1 // pred_check_branch
      %219 = sbr.rel (0) target = $region85
    $region84: #{tpu_custom_call.1} parent=1 // pred_region
      _
    $region85: #{tpu_custom_call.1} parent=1 // pred_fallthru
      _
    // Predicated region
    $region86: #{tpu_custom_call.1} parent=1 // pred_check
      _
    $region87: #{tpu_custom_call.1} parent=1 // pred_check_branch
      %221 = sbr.rel (0) target = $region89
    $region88: #{tpu_custom_call.1} parent=1 // pred_region
      _
    $region89: #{tpu_custom_call.1} parent=1 // pred_fallthru
      _
    // Predicated region
    $region90: #{tpu_custom_call.1} parent=1 // pred_check
      _
    $region91: #{tpu_custom_call.1} parent=1 // pred_check_branch
      %223 = sbr.rel (0) target = $region93
    $region92: #{tpu_custom_call.1} parent=1 // pred_region
      _
    $region93: #{tpu_custom_call.1} parent=1 // pred_fallthru
      _
    // Predicated region
    $region94: #{tpu_custom_call.1} parent=1 // pred_check
      _
    $region95: #{tpu_custom_call.1} parent=1 // pred_check_branch
      %225 = sbr.rel (0) target = $region97
    $region96: #{tpu_custom_call.1} parent=1 // pred_region
      _
    $region97: #{tpu_custom_call.1} parent=1 // pred_fallthru
      _
    // Predicated region
    $region98: #{tpu_custom_call.1} parent=1 // pred_check
      _
    $region99: #{tpu_custom_call.1} parent=1 // pred_check_branch
      %227 = sbr.rel (0) target = $region101
    $region100: #{tpu_custom_call.1} parent=1 // pred_region
      _
    $region101: #{tpu_custom_call.1} parent=1 // pred_fallthru
      _
    // Predicated region
    $region102: #{tpu_custom_call.1} parent=1 // pred_check
      _
    $region103: #{tpu_custom_call.1} parent=1 // pred_check_branch
      %229 = sbr.rel (0) target = $region105
    $region104: #{tpu_custom_call.1} parent=1 // pred_region
      _
    $region105: #{tpu_custom_call.1} parent=1 // pred_fallthru
      _
    // Predicated region
    $region106: #{tpu_custom_call.1} parent=1 // pred_check
      _
    $region107: #{tpu_custom_call.1} parent=1 // pred_check_branch
      %231 = sbr.rel (0) target = $region109
    $region108: #{tpu_custom_call.1} parent=1 // pred_region
      _
    $region109: #{tpu_custom_call.1} parent=1 // pred_fallthru
      _
    // Predicated region
    $region110: #{tpu_custom_call.1} parent=1 // pred_check
      _
    $region111: #{tpu_custom_call.1} parent=1 // pred_check_branch
      %233 = sbr.rel (0) target = $region113
    $region112: #{tpu_custom_call.1} parent=1 // pred_region
      _
    $region113: #{tpu_custom_call.1} parent=1 // pred_fallthru
      _
    // Predicated region
    $region114: #{tpu_custom_call.1} parent=1 // pred_check
      _
    $region115: #{tpu_custom_call.1} parent=1 // pred_check_branch
      %235 = sbr.rel (0) target = $region117
    $region116: #{tpu_custom_call.1} parent=1 // pred_region
      _
    $region117: #{tpu_custom_call.1} parent=1 // pred_fallthru
      _
    // Predicated region
    $region118: #{tpu_custom_call.1} parent=1 // pred_check
      _
    $region119: #{tpu_custom_call.1} parent=1 // pred_check_branch
      %237 = sbr.rel (0) target = $region121
    $region120: #{tpu_custom_call.1} parent=1 // pred_region
      _
    $region121: #{tpu_custom_call.1} parent=1 // pred_fallthru
      _
    // Predicated region
    $region122: #{tpu_custom_call.1} parent=1 // pred_check
      _
    $region123: #{tpu_custom_call.1} parent=1 // pred_check_branch
      %239 = sbr.rel (0) target = $region125
    $region124: #{tpu_custom_call.1} parent=1 // pred_region
      _
    $region125: #{tpu_custom_call.1} parent=1 // pred_fallthru
      _
    // Predicated region
    $region126: #{tpu_custom_call.1} parent=1 // pred_check
      _
    $region127: #{tpu_custom_call.1} parent=1 // pred_check_branch
      %241 = sbr.rel (0) target = $region129
    $region128: #{tpu_custom_call.1} parent=1 // pred_region
      %s243 = ssub.s32 16, 16
      %244 = vsyncadd [#allocation13], %s243
      %s246 = sshll.u32 [#allocation12], 4
      %s247 = int_to_ptr.vmem [resolvable:$true] %s246
      %249 = dma.hbm_to_vmem [thread:$0]  %s63, 16, %s247, [#allocation13]
    $region129: #{tpu_custom_call.1} parent=1 // pred_fallthru
      _
    // Predicated region
    $region130: #{tpu_custom_call.1} parent=1 // pred_check
      _
    $region131: #{tpu_custom_call.1} parent=1 // pred_check_branch
      %251 = sbr.rel (0) target = $region133
    $region132: #{tpu_custom_call.1} parent=1 // pred_region
      _
    $region133: #{tpu_custom_call.1} parent=1 // pred_fallthru
      _
    // Predicated region
    $region134: #{tpu_custom_call.1} parent=1 // pred_check
      _
    $region135: #{tpu_custom_call.1} parent=1 // pred_check_branch
      %253 = sbr.rel (0) target = $region137
    $region136: #{tpu_custom_call.1} parent=1 // pred_region
      _
    $region137: #{tpu_custom_call.1} parent=1 // pred_fallthru
      _
    // Predicated region
    $region138: #{tpu_custom_call.1} parent=1 // pred_check
      _
    $region139: #{tpu_custom_call.1} parent=1 // pred_check_branch
      %255 = sbr.rel (0) target = $region141
    $region140: #{tpu_custom_call.1} parent=1 // pred_region
      _
    $region141: #{tpu_custom_call.1} parent=1 // pred_fallthru
      _
    // Predicated region
    $region142: #{tpu_custom_call.1} parent=1 // pred_check
      _
    $region143: #{tpu_custom_call.1} parent=1 // pred_check_branch
      %257 = sbr.rel (0) target = $region145
    $region144: #{tpu_custom_call.1} parent=1 // pred_region
      _
    $region145: #{tpu_custom_call.1} parent=1 // pred_fallthru
      _
    // Predicated region
    $region146: #{tpu_custom_call.1} parent=1 // pred_check
      _
    $region147: #{tpu_custom_call.1} parent=1 // pred_check_branch
      %259 = sbr.rel (0) target = $region149
    $region148: #{tpu_custom_call.1} parent=1 // pred_region
      %s261 = ssub.s32 16, 16
      %262 = vsyncadd [#allocation16], %s261
      %s264 = sshll.u32 [#allocation15], 4
      %s265 = int_to_ptr.vmem [resolvable:$true] %s264
      %267 = dma.hbm_to_vmem [thread:$0]  %s73, 16, %s265, [#allocation16]
    $region149: #{tpu_custom_call.1} parent=1 // pred_fallthru
      _
    // Predicated region
    $region150: #{tpu_custom_call.1} parent=1 // pred_check
      _
    $region151: #{tpu_custom_call.1} parent=1 // pred_check_branch
      %269 = sbr.rel (0) target = $region153
    $region152: #{tpu_custom_call.1} parent=1 // pred_region
      %s271 = ssub.s32 16, 16
      %272 = vsyncadd [#allocation16], %s271
      %s274 = sshll.u32 [#allocation17], 4
      %s275 = int_to_ptr.vmem [resolvable:$true] %s274
      %277 = dma.hbm_to_vmem [thread:$0]  %s75, 16, %s275, [#allocation16]
    $region153: #{tpu_custom_call.1} parent=1 // pred_fallthru
      _
    // Predicated region
    $region154: #{tpu_custom_call.1} parent=1 // pred_check
      _
    $region155: #{tpu_custom_call.1} parent=1 // pred_check_branch
      %279 = sbr.rel (0) target = $region157
    $region156: #{tpu_custom_call.1} parent=1 // pred_region
      %s281 = ssub.s32 16, 16
      %282 = vsyncadd [#allocation19], %s281
      %s284 = sshll.u32 [#allocation18], 4
      %s285 = int_to_ptr.vmem [resolvable:$true] %s284
      %287 = dma.hbm_to_vmem [thread:$0]  %s77, 16, %s285, [#allocation19]
    $region157: #{tpu_custom_call.1} parent=1 // pred_fallthru
      _
    // Predicated region
    $region158: #{tpu_custom_call.1} parent=1 // pred_check
      _
    $region159: #{tpu_custom_call.1} parent=1 // pred_check_branch
      %289 = sbr.rel (0) target = $region161
    $region160: #{tpu_custom_call.1} parent=1 // pred_region
      _
    $region161: #{tpu_custom_call.1} parent=1 // pred_fallthru
      _
    // Predicated region
    $region162: #{tpu_custom_call.1} parent=1 // pred_check
      _
    $region163: #{tpu_custom_call.1} parent=1 // pred_check_branch
      %291 = sbr.rel (0) target = $region165
    $region164: #{tpu_custom_call.1} parent=1 // pred_region
      %s293 = ssub.s32 16, 16
      %294 = vsyncadd [#allocation19], %s293
      %s296 = sshll.u32 [#allocation20], 4
      %s297 = int_to_ptr.vmem [resolvable:$true] %s296
      %299 = dma.hbm_to_vmem [thread:$0]  %s81, 16, %s297, [#allocation19]
    $region165: #{tpu_custom_call.1} parent=1 // pred_fallthru
      _
    // Predicated region
    $region166: #{tpu_custom_call.1} parent=1 // pred_check
      _
    $region167: #{tpu_custom_call.1} parent=1 // pred_check_branch
      %301 = sbr.rel (0) target = $region169
    $region168: #{tpu_custom_call.1} parent=1 // pred_region
      %s303 = ssub.s32 16, 16
      %304 = vsyncadd [#allocation22], %s303
      %s306 = sshll.u32 [#allocation21], 4
      %s307 = int_to_ptr.vmem [resolvable:$true] %s306
      %309 = dma.hbm_to_vmem [thread:$0]  %s83, 16, %s307, [#allocation22]
    $region169: #{tpu_custom_call.1} parent=1 // pred_fallthru
      _
    // Predicated region
    $region170: #{tpu_custom_call.1} parent=1 // pred_check
      _
    $region171: #{tpu_custom_call.1} parent=1 // pred_check_branch
      %311 = sbr.rel (0) target = $region173
    $region172: #{tpu_custom_call.1} parent=1 // pred_region
      _
    $region173: #{tpu_custom_call.1} parent=1 // pred_fallthru
      _
    // Predicated region
    $region174: #{tpu_custom_call.1} parent=1 // pred_check
      _
    $region175: #{tpu_custom_call.1} parent=1 // pred_check_branch
      %313 = sbr.rel (0) target = $region177
    $region176: #{tpu_custom_call.1} parent=1 // pred_region
      _
    $region177: #{tpu_custom_call.1} parent=1 // pred_fallthru
      _
    // Predicated region
    $region178: #{tpu_custom_call.1} parent=1 // pred_check
      _
    $region179: #{tpu_custom_call.1} parent=1 // pred_check_branch
      %315 = sbr.rel (0) target = $region181
    $region180: #{tpu_custom_call.1} parent=1 // pred_region
      %s317 = ssub.s32 16, 16
      %318 = vsyncadd [#allocation22], %s317
      %s320 = sshll.u32 [#allocation23], 4
      %s321 = int_to_ptr.vmem [resolvable:$true] %s320
      %323 = dma.hbm_to_vmem [thread:$0]  %s89, 16, %s321, [#allocation22]
    $region181: #{tpu_custom_call.1} parent=1 // pred_fallthru
      _
    // Predicated region
    $region182: #{tpu_custom_call.1} parent=1 // pred_check
      _
    $region183: #{tpu_custom_call.1} parent=1 // pred_check_branch
      %325 = sbr.rel (0) target = $region185
    $region184: #{tpu_custom_call.1} parent=1 // pred_region
      _
    $region185: #{tpu_custom_call.1} parent=1 // pred_fallthru
      _
    // Predicated region
    $region186: #{tpu_custom_call.1} parent=1 // pred_check
      _
    $region187: #{tpu_custom_call.1} parent=1 // pred_check_branch
      %327 = sbr.rel (0) target = $region189
    $region188: #{tpu_custom_call.1} parent=1 // pred_region
      _
    $region189: #{tpu_custom_call.1} parent=1 // pred_fallthru
      _
    // Predicated region
    $region190: #{tpu_custom_call.1} parent=1 // pred_check
      _
    $region191: #{tpu_custom_call.1} parent=1 // pred_check_branch
      %329 = sbr.rel (0) target = $region193
    $region192: #{tpu_custom_call.1} parent=1 // pred_region
      _
    $region193: #{tpu_custom_call.1} parent=1 // pred_fallthru
      _
    // Predicated region
    $region194: #{tpu_custom_call.1} parent=1 // pred_check
      _
    $region195: #{tpu_custom_call.1} parent=1 // pred_check_branch
      %331 = sbr.rel (0) target = $region197
    $region196: #{tpu_custom_call.1} parent=1 // pred_region
      _
    $region197: #{tpu_custom_call.1} parent=1 // pred_fallthru
      _
    // Predicated region
    $region198: #{tpu_custom_call.1} parent=1 // pred_check
      _
    $region199: #{tpu_custom_call.1} parent=1 // pred_check_branch
      %333 = sbr.rel (0) target = $region201
    $region200: #{tpu_custom_call.1} parent=1 // pred_region
      _
    $region201: #{tpu_custom_call.1} parent=1 // pred_fallthru
      _
    // Predicated region
    $region202: #{tpu_custom_call.1} parent=1 // pred_check
      _
    $region203: #{tpu_custom_call.1} parent=1 // pred_check_branch
      %335 = sbr.rel (0) target = $region205
    $region204: #{tpu_custom_call.1} parent=1 // pred_region
      %s337 = ssub.s32 16, 16
      %338 = vsyncadd [#allocation25], %s337
      %s340 = sshll.u32 [#allocation24], 4
      %s341 = int_to_ptr.vmem [resolvable:$true] %s340
      %343 = dma.hbm_to_vmem [thread:$0]  %s101, 16, %s341, [#allocation25]
    $region205: #{tpu_custom_call.1} parent=1 // pred_fallthru
      _
    // Predicated region
    $region206: #{tpu_custom_call.1} parent=1 // pred_check
      _
    $region207: #{tpu_custom_call.1} parent=1 // pred_check_branch
      %345 = sbr.rel (0) target = $region209
    $region208: #{tpu_custom_call.1} parent=1 // pred_region
      _
    $region209: #{tpu_custom_call.1} parent=1 // pred_fallthru
      _
    // Predicated region
    $region210: #{tpu_custom_call.1} parent=1 // pred_check
      _
    $region211: #{tpu_custom_call.1} parent=1 // pred_check_branch
      %347 = sbr.rel (0) target = $region213
    $region212: #{tpu_custom_call.1} parent=1 // pred_region
      %s349 = ssub.s32 16, 16
      %350 = vsyncadd [#allocation25], %s349
      %s352 = sshll.u32 [#allocation26], 4
      %s353 = int_to_ptr.vmem [resolvable:$true] %s352
      %355 = dma.hbm_to_vmem [thread:$0]  %s105, 16, %s353, [#allocation25]
    $region213: #{tpu_custom_call.1} parent=1 // pred_fallthru
      _
    // Predicated region
    $region214: #{tpu_custom_call.1} parent=1 // pred_check
      _
    $region215: #{tpu_custom_call.1} parent=1 // pred_check_branch
      %357 = sbr.rel (0) target = $region217
    $region216: #{tpu_custom_call.1} parent=1 // pred_region
      _
    $region217: #{tpu_custom_call.1} parent=1 // pred_fallthru
      _
    // Predicated region
    $region218: #{tpu_custom_call.1} parent=1 // pred_check
      _
    $region219: #{tpu_custom_call.1} parent=1 // pred_check_branch
      %359 = sbr.rel (0) target = $region221
    $region220: #{tpu_custom_call.1} parent=1 // pred_region
      _
    $region221: #{tpu_custom_call.1} parent=1 // pred_fallthru
      _
    // Predicated region
    $region222: #{tpu_custom_call.1} parent=1 // pred_check
      _
    $region223: #{tpu_custom_call.1} parent=1 // pred_check_branch
      %361 = sbr.rel (0) target = $region225
    $region224: #{tpu_custom_call.1} parent=1 // pred_region
      _
    $region225: #{tpu_custom_call.1} parent=1 // pred_fallthru
      _
    // Predicated region
    $region226: #{tpu_custom_call.1} parent=1 // pred_check
      _
    $region227: #{tpu_custom_call.1} parent=1 // pred_check_branch
      %363 = sbr.rel (0) target = $region229
    $region228: #{tpu_custom_call.1} parent=1 // pred_region
      %s365 = ssub.s32 16, 16
      %366 = vsyncadd [#allocation28], %s365
      %s368 = sshll.u32 [#allocation27], 4
      %s369 = int_to_ptr.vmem [resolvable:$true] %s368
      %371 = dma.hbm_to_vmem [thread:$0]  %s113, 16, %s369, [#allocation28]
    $region229: #{tpu_custom_call.1} parent=1 // pred_fallthru
      _
    // Predicated region
    $region230: #{tpu_custom_call.1} parent=1 // pred_check
      _
    $region231: #{tpu_custom_call.1} parent=1 // pred_check_branch
      %373 = sbr.rel (0) target = $region233
    $region232: #{tpu_custom_call.1} parent=1 // pred_region
      _
    $region233: #{tpu_custom_call.1} parent=1 // pred_fallthru
      _
    // Predicated region
    $region234: #{tpu_custom_call.1} parent=1 // pred_check
      _
    $region235: #{tpu_custom_call.1} parent=1 // pred_check_branch
      %375 = sbr.rel (0) target = $region237
    $region236: #{tpu_custom_call.1} parent=1 // pred_region
      %s377 = ssub.s32 16, 16
      %378 = vsyncadd [#allocation28], %s377
      %s380 = sshll.u32 [#allocation29], 4
      %s381 = int_to_ptr.vmem [resolvable:$true] %s380
      %383 = dma.hbm_to_vmem [thread:$0]  %s117, 16, %s381, [#allocation28]
    $region237: #{tpu_custom_call.1} parent=1 // pred_fallthru
      _
    // Predicated region
    $region238: #{tpu_custom_call.1} parent=1 // pred_check
      _
    $region239: #{tpu_custom_call.1} parent=1 // pred_check_branch
      %385 = sbr.rel (0) target = $region241
    $region240: #{tpu_custom_call.1} parent=1 // pred_region
      _
    $region241: #{tpu_custom_call.1} parent=1 // pred_fallthru
      _
    // Predicated region
    $region242: #{tpu_custom_call.1} parent=1 // pred_check
      _
    $region243: #{tpu_custom_call.1} parent=1 // pred_check_branch
      %387 = sbr.rel (0) target = $region245
    $region244: #{tpu_custom_call.1} parent=1 // pred_region
      %s389 = ssub.s32 16, 16
      %390 = vsyncadd [#allocation31], %s389
      %s392 = sshll.u32 [#allocation30], 4
      %s393 = int_to_ptr.vmem [resolvable:$true] %s392
      %395 = dma.hbm_to_vmem [thread:$0]  %s121, 16, %s393, [#allocation31]
    $region245: #{tpu_custom_call.1} parent=1 // pred_fallthru
      _
    // Predicated region
    $region246: #{tpu_custom_call.1} parent=1 // pred_check
      _
    $region247: #{tpu_custom_call.1} parent=1 // pred_check_branch
      %397 = sbr.rel (0) target = $region249
    $region248: #{tpu_custom_call.1} parent=1 // pred_region
      _
    $region249: #{tpu_custom_call.1} parent=1 // pred_fallthru
      _
    // Predicated region
    $region250: #{tpu_custom_call.1} parent=1 // pred_check
      _
    $region251: #{tpu_custom_call.1} parent=1 // pred_check_branch
      %399 = sbr.rel (0) target = $region253
    $region252: #{tpu_custom_call.1} parent=1 // pred_region
      _
    $region253: #{tpu_custom_call.1} parent=1 // pred_fallthru
      _
    // Predicated region
    $region254: #{tpu_custom_call.1} parent=1 // pred_check
      _
    $region255: #{tpu_custom_call.1} parent=1 // pred_check_branch
      %401 = sbr.rel (0) target = $region257
    $region256: #{tpu_custom_call.1} parent=1 // pred_region
      _
    $region257: #{tpu_custom_call.1} parent=1 // pred_fallthru
      _
    // Predicated region
    $region258: #{tpu_custom_call.1} parent=1 // pred_check
      _
    $region259: #{tpu_custom_call.1} parent=1 // pred_check_branch
      %403 = sbr.rel (0) target = $region261
    $region260: #{tpu_custom_call.1} parent=1 // pred_region
      %s405 = ssub.s32 16, 16
      %406 = vsyncadd [#allocation31], %s405
      %s408 = sshll.u32 [#allocation32], 4
      %s409 = int_to_ptr.vmem [resolvable:$true] %s408
      %411 = dma.hbm_to_vmem [thread:$0]  %s129, 16, %s409, [#allocation31]
    $region261: #{tpu_custom_call.1} parent=1 // pred_fallthru
      _
    // Predicated region
    $region262: #{tpu_custom_call.1} parent=1 // pred_check
      _
    $region263: #{tpu_custom_call.1} parent=1 // pred_check_branch
      %413 = sbr.rel (0) target = $region265
    $region264: #{tpu_custom_call.1} parent=1 // pred_region
      _
    $region265: #{tpu_custom_call.1} parent=1 // pred_fallthru
      _
    // Predicated region
    $region266: #{tpu_custom_call.1} parent=1 // pred_check
      _
    $region267: #{tpu_custom_call.1} parent=1 // pred_check_branch
      %415 = sbr.rel (0) target = $region269
    $region268: #{tpu_custom_call.1} parent=1 // pred_region
      _
    $region269: #{tpu_custom_call.1} parent=1 // pred_fallthru
      _
    // Predicated region
    $region270: #{tpu_custom_call.1} parent=1 // pred_check
      _
    $region271: #{tpu_custom_call.1} parent=1 // pred_check_branch
      %417 = sbr.rel (0) target = $region273
    $region272: #{tpu_custom_call.1} parent=1 // pred_region
      _
    $region273: #{tpu_custom_call.1} parent=1 // pred_fallthru
      _
    // Predicated region
    $region274: #{tpu_custom_call.1} parent=1 // pred_check
      _
    $region275: #{tpu_custom_call.1} parent=1 // pred_check_branch
      %419 = sbr.rel (0) target = $region277
    $region276: #{tpu_custom_call.1} parent=1 // pred_region
      _
    $region277: #{tpu_custom_call.1} parent=1 // pred_fallthru
      _
    // Predicated region
    $region278: #{tpu_custom_call.1} parent=1 // pred_check
      _
    $region279: #{tpu_custom_call.1} parent=1 // pred_check_branch
      %421 = sbr.rel (0) target = $region281
    $region280: #{tpu_custom_call.1} parent=1 // pred_region
      _
    $region281: #{tpu_custom_call.1} parent=1 // pred_fallthru
      _
    // Predicated region
    $region282: #{tpu_custom_call.1} parent=1 // pred_check
      _
    $region283: #{tpu_custom_call.1} parent=1 // pred_check_branch
      %423 = sbr.rel (0) target = $region285
    $region284: #{tpu_custom_call.1} parent=1 // pred_region
      _
    $region285: #{tpu_custom_call.1} parent=1 // pred_fallthru
      _
    // Predicated region
    $region286: #{tpu_custom_call.1} parent=1 // pred_check
      _
    $region287: #{tpu_custom_call.1} parent=1 // pred_check_branch
      %425 = sbr.rel (0) target = $region289
    $region288: #{tpu_custom_call.1} parent=1 // pred_region
      %426 = dma.done [#allocation13], 16
    $region289: #{tpu_custom_call.1} parent=1 // pred_fallthru
      _
    // Predicated region
    $region290: #{tpu_custom_call.1} parent=1 // pred_check
      _
    $region291: #{tpu_custom_call.1} parent=1 // pred_check_branch
      %428 = sbr.rel (0) target = $region293
    $region292: #{tpu_custom_call.1} parent=1 // pred_region
      %429 = dma.done [#allocation16], 16
    $region293: #{tpu_custom_call.1} parent=1 // pred_fallthru
      _
    // Predicated region
    $region294: #{tpu_custom_call.1} parent=1 // pred_check
      _
    $region295: #{tpu_custom_call.1} parent=1 // pred_check_branch
      %431 = sbr.rel (0) target = $region297
    $region296: #{tpu_custom_call.1} parent=1 // pred_region
      %432 = dma.done [#allocation16], 16
    $region297: #{tpu_custom_call.1} parent=1 // pred_fallthru
      _
    // Predicated region
    $region298: #{tpu_custom_call.1} parent=1 // pred_check
      _
    $region299: #{tpu_custom_call.1} parent=1 // pred_check_branch
      %434 = sbr.rel (0) target = $region301
    $region300: #{tpu_custom_call.1} parent=1 // pred_region
      %435 = dma.done [#allocation19], 16
    $region301: #{tpu_custom_call.1} parent=1 // pred_fallthru
      _
    // Predicated region
    $region302: #{tpu_custom_call.1} parent=1 // pred_check
      _
    $region303: #{tpu_custom_call.1} parent=1 // pred_check_branch
      %437 = sbr.rel (0) target = $region305
    $region304: #{tpu_custom_call.1} parent=1 // pred_region
      %438 = dma.done [#allocation19], 16
    $region305: #{tpu_custom_call.1} parent=1 // pred_fallthru
      _
    // Predicated region
    $region306: #{tpu_custom_call.1} parent=1 // pred_check
      _
    $region307: #{tpu_custom_call.1} parent=1 // pred_check_branch
      %440 = sbr.rel (0) target = $region309
    $region308: #{tpu_custom_call.1} parent=1 // pred_region
      %441 = dma.done [#allocation22], 16
    $region309: #{tpu_custom_call.1} parent=1 // pred_fallthru
      _
    // Predicated region
    $region310: #{tpu_custom_call.1} parent=1 // pred_check
      _
    $region311: #{tpu_custom_call.1} parent=1 // pred_check_branch
      %443 = sbr.rel (0) target = $region313
    $region312: #{tpu_custom_call.1} parent=1 // pred_region
      %444 = dma.done [#allocation22], 16
    $region313: #{tpu_custom_call.1} parent=1 // pred_fallthru
      _
    // Predicated region
    $region314: #{tpu_custom_call.1} parent=1 // pred_check
      _
    $region315: #{tpu_custom_call.1} parent=1 // pred_check_branch
      %446 = sbr.rel (0) target = $region317
    $region316: #{tpu_custom_call.1} parent=1 // pred_region
      %447 = dma.done [#allocation25], 16
    $region317: #{tpu_custom_call.1} parent=1 // pred_fallthru
      _
    // Predicated region
    $region318: #{tpu_custom_call.1} parent=1 // pred_check
      _
    $region319: #{tpu_custom_call.1} parent=1 // pred_check_branch
      %449 = sbr.rel (0) target = $region321
    $region320: #{tpu_custom_call.1} parent=1 // pred_region
      %450 = dma.done [#allocation25], 16
    $region321: #{tpu_custom_call.1} parent=1 // pred_fallthru
      _
    // Predicated region
    $region322: #{tpu_custom_call.1} parent=1 // pred_check
      _
    $region323: #{tpu_custom_call.1} parent=1 // pred_check_branch
      %452 = sbr.rel (0) target = $region325
    $region324: #{tpu_custom_call.1} parent=1 // pred_region
      %453 = dma.done [#allocation28], 16
    $region325: #{tpu_custom_call.1} parent=1 // pred_fallthru
      _
    // Predicated region
    $region326: #{tpu_custom_call.1} parent=1 // pred_check
      _
    $region327: #{tpu_custom_call.1} parent=1 // pred_check_branch
      %455 = sbr.rel (0) target = $region329
    $region328: #{tpu_custom_call.1} parent=1 // pred_region
      %456 = dma.done [#allocation28], 16
    $region329: #{tpu_custom_call.1} parent=1 // pred_fallthru
      _
    // Predicated region
    $region330: #{tpu_custom_call.1} parent=1 // pred_check
      _
    $region331: #{tpu_custom_call.1} parent=1 // pred_check_branch
      %458 = sbr.rel (0) target = $region333
    $region332: #{tpu_custom_call.1} parent=1 // pred_region
      %459 = dma.done [#allocation31], 16
    $region333: #{tpu_custom_call.1} parent=1 // pred_fallthru
      _
    // Predicated region
    $region334: #{tpu_custom_call.1} parent=1 // pred_check
      _
    $region335: #{tpu_custom_call.1} parent=1 // pred_check_branch
      %461 = sbr.rel (0) target = $region337
    $region336: #{tpu_custom_call.1} parent=1 // pred_region
      %462 = dma.done [#allocation31], 16
    $region337: #{tpu_custom_call.1} parent=1 // pred_fallthru
      _
    %v464 = vld [vmem:[%s1] sm:$0xff]
    %v465 = vld [vmem:[%s1 + $0x8] sm:$0xff]
    %v466 = vld [vmem:[%s3] sm:$0xff]
    %v467 = vld [vmem:[%s3 + $0x8] sm:$0xff]
    %v468 = vld [vmem:[%s3 + $0x10] sm:$0xff]
    %v469 = vld [vmem:[%s3 + $0x18] sm:$0xff]
    %v470 = vld [vmem:[%s5] sm:$0x3]
    %v471 = vld [vmem:[%s7] sm:$0xf]
    %v472 = vld [vmem:[%s7 + $0x4] sm:$0xf]
    %v473 = vld [vmem:[%s7 + $0x8] sm:$0xf]
    %v474 = vld [vmem:[%s7 + $0xc] sm:$0xf]
    %v475 = vld [vmem:[%s9] sm:$0xf]
    %v476 = vld [vmem:[%s9 + $0x4] sm:$0xf]
    %v477 = vld [vmem:[%s9 + $0x8] sm:$0xf]
    %v478 = vld [vmem:[%s9 + $0xc] sm:$0xf]
    %v479 = vld [vmem:[%s11] sm:$0xff]
    %v480 = vld [vmem:[%s11 + $0x8] sm:$0xff]
    %v481 = vld [vmem:[%s11 + $0x10] sm:$0xff]
    %v482 = vld [vmem:[%s11 + $0x18] sm:$0xff]
    %v483 = vld [vmem:[%s13] sm:$0xff]
    %v484 = vld [vmem:[%s13 + $0x8] sm:$0xff]
    %v485 = vld [vmem:[%s15] sm:$0xff]
    %v486 = vld [vmem:[%s15 + $0x8] sm:$0xff]
    %v487 = vld [vmem:[%s17] sm:$0x1]
    %v488 = vld [vmem:[%s19] sm:$0x1]
    %v489 = vld [vmem:[%s21] sm:$0x1]
    %v490 = vld [vmem:[%s23] sm:$0xf]
    %v491 = vld [vmem:[%s23 + $0x4] sm:$0xf]
    %v492 = vld [vmem:[%s25] sm:$0xf]
    %v493 = vld [vmem:[%s25 + $0x4] sm:$0xf]
    %v494 = vld [vmem:[%s27] sm:$0x1]
    %v495 = vld [vmem:[%s29] sm:$0x1]
    %v496 = vld [vmem:[%s31] sm:$0xf]
    %v497 = vld [vmem:[%s31 + $0x4] sm:$0xf]
    %v498 = vld [vmem:[%s33] sm:$0xf]
    %v499 = vld [vmem:[%s33 + $0x4] sm:$0xf]
    %v500 = vld [vmem:[%s35] sm:$0xf]
    %v501 = vld [vmem:[%s35 + $0x4] sm:$0xf]
    %v502 = vld [vmem:[%s37] sm:$0xf]
    %v503 = vld [vmem:[%s37 + $0x4] sm:$0xf]
    %v504 = vld [vmem:[#allocation4] sm:$0x1]
    %v505 = vld [vmem:[#allocation5] sm:$0x1]
    %v506 = vld [vmem:[#allocation6] sm:$0x1]
    %v507 = vld [vmem:[%s45] sm:$0xf]
    %v508 = vld [vmem:[%s45 + $0x4] sm:$0xf]
    %v509 = vld [vmem:[#allocation7] sm:$0x1]
    %v510 = vld [vmem:[#allocation8] sm:$0x1]
    %v511 = vld [vmem:[%s51] sm:$0xf]
    %v512 = vld [vmem:[%s51 + $0x4] sm:$0xf]
    %v513 = vld [vmem:[%s53] sm:$0x1]
    %v514 = vld [vmem:[%s55] sm:$0xf]
    %v515 = vld [vmem:[%s55 + $0x4] sm:$0xf]
    %v516 = vld [vmem:[%s57] sm:$0xf]
    %v517 = vld [vmem:[%s57 + $0x4] sm:$0xf]
    %v518 = vld [vmem:[%s59] sm:$0xf]
    %v519 = vld [vmem:[%s59 + $0x4] sm:$0xf]
    %v520 = vld [vmem:[%s61] sm:$0xf]
    %v521 = vld [vmem:[%s61 + $0x4] sm:$0xf]
    %v522 = vld [vmem:[#allocation12] sm:$0x1]
    %v523 = vld [vmem:[%s65] sm:$0xf]
    %v524 = vld [vmem:[%s65 + $0x4] sm:$0xf]
    %v525 = vld [vmem:[%s67] sm:$0xf]
    %v526 = vld [vmem:[%s67 + $0x4] sm:$0xf]
    %v527 = vld [vmem:[%s69] sm:$0xf]
    %v528 = vld [vmem:[%s69 + $0x4] sm:$0xf]
    %v529 = vld [vmem:[%s71] sm:$0xf]
    %v530 = vld [vmem:[%s71 + $0x4] sm:$0xf]
    %v531 = vld [vmem:[#allocation15] sm:$0x1]
    %v532 = vld [vmem:[#allocation17] sm:$0x1]
    %v533 = vld [vmem:[#allocation18] sm:$0x1]
    %v534 = vld [vmem:[%s79] sm:$0xf]
    %v535 = vld [vmem:[%s79 + $0x4] sm:$0xf]
    %v536 = vld [vmem:[#allocation20] sm:$0x1]
    %v537 = vld [vmem:[#allocation21] sm:$0x1]
    %v538 = vld [vmem:[%s85] sm:$0xf]
    %v539 = vld [vmem:[%s85 + $0x4] sm:$0xf]
    %v540 = vld [vmem:[%s87] sm:$0xf]
    %v541 = vld [vmem:[%s87 + $0x4] sm:$0xf]
    %v542 = vld [vmem:[#allocation23] sm:$0x1]
    %v543 = vld [vmem:[%s91] sm:$0xf]
    %v544 = vld [vmem:[%s91 + $0x4] sm:$0xf]
    %v545 = vld [vmem:[%s93] sm:$0xf]
    %v546 = vld [vmem:[%s93 + $0x4] sm:$0xf]
    %v547 = vld [vmem:[%s95] sm:$0xf]
    %v548 = vld [vmem:[%s95 + $0x4] sm:$0xf]
    %v549 = vld [vmem:[%s97] sm:$0xf]
    %v550 = vld [vmem:[%s97 + $0x4] sm:$0xf]
    %v551 = vld [vmem:[%s99] sm:$0xf]
    %v552 = vld [vmem:[%s99 + $0x4] sm:$0xf]
    %v553 = vld [vmem:[#allocation24] sm:$0x1]
    %v554 = vld [vmem:[%s103] sm:$0xf]
    %v555 = vld [vmem:[%s103 + $0x4] sm:$0xf]
    %v556 = vld [vmem:[#allocation26] sm:$0x1]
    %v557 = vld [vmem:[#allocation9] sm:$0x1]
    %v558 = vld [vmem:[#allocation10] sm:$0x1]
    %v559 = vld [vmem:[%s111] sm:$0xf]
    %v560 = vld [vmem:[%s111 + $0x4] sm:$0xf]
    %v561 = vld [vmem:[#allocation27] sm:$0x1]
    %v562 = vld [vmem:[%s115] sm:$0xf]
    %v563 = vld [vmem:[%s115 + $0x4] sm:$0xf]
    %v564 = vld [vmem:[#allocation29] sm:$0x1]
    %v565 = vld [vmem:[%s119] sm:$0xf]
    %v566 = vld [vmem:[#allocation30] sm:$0x1]
    %v567 = vld [vmem:[%s123] sm:$0xf]
    %v568 = vld [vmem:[#allocation11] sm:$0x1]
    %v569 = vld [vmem:[%s127] sm:$0xf]
    %v570 = vld [vmem:[#allocation32] sm:$0x1]
    %v571 = vld [vmem:[%s131] sm:$0xf]
    %v572 = vld [vmem:[%s133] sm:$0xff]
    %v573 = vld [vmem:[%s135] sm:$0xf]
    %v574 = vld [vmem:[%s137] sm:$0xff]
    %v575 = vld [vmem:[%s139] sm:$0xf]
    %v576 = vld [vmem:[%s141] sm:$0xff]
    %v577 = vpack.c.bf16 %v467, %v466
    %v578 = vpack.c.bf16 %v469, %v468
    %v580 = vlaneseq
    %v581 = vshrl.u32 %v580, 7
    %v582 = vsub.s32 0, %v581
    %v583 = vrot.slane %v566, %v582
    %vm585 = vcmask 64512
    %v587 = vsel %vm585, %v577, 0
    %v590 = vsel %vm585, %v578, 0
    %vm592 = vcmask 1043456
    %v594 = vsel %vm592, %v565, 0
    %596 = vmatprep.subr.bf16.mxu0 0
    %597 = vmatpush1.bf16.msra.mxu0 %v594
    %598 = vmatprep.subr.bf16.mxu0 0
    %599 = vmatpush1.bf16.msra.mxu0 0
    %600 = vmatprep.subr.bf16.mxu0 0
    %601 = vmatpush1.bf16.msra.mxu0 0
    %602 = vmatprep.subr.bf16.mxu0 0
    %603 = vmatpush1.bf16.msra.mxu0 0
    %604 = vmatprep.subr.bf16.mxu0 0
    %605 = vmatpush1.bf16.msra.mxu0 0
    %606 = vmatprep.subr.bf16.mxu0 0
    %607 = vmatpush1.bf16.msra.mxu0 0
    %608 = vmatprep.subr.bf16.mxu0 0
    %609 = vmatpush1.bf16.msra.mxu0 0
    %610 = vmatprep.subr.bf16.mxu0 0
    %611 = vmatpush1.bf16.msra.mxu0 0
    %612 = vmatprep.subr.bf16.mxu0 0
    %613 = vmatpush1.bf16.msra.mxu0 0
    %614 = vmatprep.subr.bf16.mxu0 0
    %615 = vmatpush1.bf16.msra.mxu0 0
    %616 = vmatprep.subr.bf16.mxu0 0
    %617 = vmatpush1.bf16.msra.mxu0 0
    %618 = vmatprep.subr.bf16.mxu0 0
    %619 = vmatpush1.bf16.msra.mxu0 0
    %620 = vmatprep.subr.bf16.mxu0 0
    %621 = vmatpush1.bf16.msra.mxu0 0
    %622 = vmatprep.subr.bf16.mxu0 0
    %623 = vmatpush1.bf16.msra.mxu0 0
    %624 = vmatprep.subr.bf16.mxu0 0
    %625 = vmatpush1.bf16.msra.mxu0 0
    %626 = vmatprep.subr.bf16.mxu0 0
    %627 = vmatpush1.bf16.msra.mxu0 0
    %628 = vmatprep.mubr.bf16.mxu0 0
    %629 = vmatmul.mubr.bf16.gmra.mrb[0].mxu0 %v587
    %v630 = vpop.f32.mrb[0].mxu0
    %v631 = vadd.f32 %v583, %v630
    %v632 = vpop.f32.mrb[0].mxu0
    %v633 = vpop.f32.mrb[0].mxu0
    %v634 = vadd.f32 %v583, %v633
    %v635 = vpop.f32.mrb[0].mxu0
    %636 = vmatprep.mubr.bf16.mxu0 0
    %637 = vmatmul.mubr.bf16.gmra.mrb[0].mxu0 %v590
    %v638 = vpop.f32.mrb[0].mxu0
    %v639 = vadd.f32 %v583, %v638
    %v640 = vpop.f32.mrb[0].mxu0
    %v641 = vpop.f32.mrb[0].mxu0
    %v642 = vadd.f32 %v583, %v641
    %v643 = vpop.f32.mrb[0].mxu0
    %644 = vdwg.mxu0
    %v645 = vmax.f32 %v631, 0.0
    %v646 = vmax.f32 %v634, 0.0
    %v647 = vmax.f32 %v639, 0.0
    %v648 = vmax.f32 %v642, 0.0
    %v649 = vpack.c.bf16 %v465, %v464
    %v651 = vlaneseq
    %v652 = vshrl.u32 %v651, 7
    %v653 = vsub.s32 0, %v652
    %v654 = vrot.slane %v570, %v653
    %v657 = vsel %vm585, %v649, 0
    %v660 = vsel %vm592, %v569, 0
    %662 = vmatprep.subr.bf16.mxu0 0
    %663 = vmatpush1.bf16.msra.mxu0 %v660
    %664 = vmatprep.subr.bf16.mxu0 0
    %665 = vmatpush1.bf16.msra.mxu0 0
    %666 = vmatprep.subr.bf16.mxu0 0
    %667 = vmatpush1.bf16.msra.mxu0 0
    %668 = vmatprep.subr.bf16.mxu0 0
    %669 = vmatpush1.bf16.msra.mxu0 0
    %670 = vmatprep.subr.bf16.mxu0 0
    %671 = vmatpush1.bf16.msra.mxu0 0
    %672 = vmatprep.subr.bf16.mxu0 0
    %673 = vmatpush1.bf16.msra.mxu0 0
    %674 = vmatprep.subr.bf16.mxu0 0
    %675 = vmatpush1.bf16.msra.mxu0 0
    %676 = vmatprep.subr.bf16.mxu0 0
    %677 = vmatpush1.bf16.msra.mxu0 0
    %678 = vmatprep.subr.bf16.mxu0 0
    %679 = vmatpush1.bf16.msra.mxu0 0
    %680 = vmatprep.subr.bf16.mxu0 0
    %681 = vmatpush1.bf16.msra.mxu0 0
    %682 = vmatprep.subr.bf16.mxu0 0
    %683 = vmatpush1.bf16.msra.mxu0 0
    %684 = vmatprep.subr.bf16.mxu0 0
    %685 = vmatpush1.bf16.msra.mxu0 0
    %686 = vmatprep.subr.bf16.mxu0 0
    %687 = vmatpush1.bf16.msra.mxu0 0
    %688 = vmatprep.subr.bf16.mxu0 0
    %689 = vmatpush1.bf16.msra.mxu0 0
    %690 = vmatprep.subr.bf16.mxu0 0
    %691 = vmatpush1.bf16.msra.mxu0 0
    %692 = vmatprep.subr.bf16.mxu0 0
    %693 = vmatpush1.bf16.msra.mxu0 0
    %694 = vmatprep.mubr.bf16.mxu0 0
    %695 = vmatmul.mubr.bf16.gmra.mrb[0].mxu0 %v657
    %v696 = vpop.f32.mrb[0].mxu0
    %v697 = vadd.f32 %v654, %v696
    %v698 = vpop.f32.mrb[0].mxu0
    %v699 = vpop.f32.mrb[0].mxu0
    %v700 = vadd.f32 %v654, %v699
    %v701 = vpop.f32.mrb[0].mxu0
    %702 = vdwg.mxu0
    %v703 = vmax.f32 %v697, 0.0
    %v704 = vmax.f32 %v700, 0.0
    %v705 = vpack.c.bf16 %v470, %v470
    %v707 = vlaneseq
    %v708 = vshrl.u32 %v707, 7
    %v709 = vsub.s32 0, %v708
    %v710 = vrot.slane %v568, %v709
    %v713 = vsel %vm585, %v705, 0
    %v716 = vsel %vm592, %v567, 0
    %718 = vmatprep.subr.bf16.mxu0 0
    %719 = vmatpush1.bf16.msra.mxu0 %v716
    %720 = vmatprep.subr.bf16.mxu0 0
    %721 = vmatpush1.bf16.msra.mxu0 0
    %722 = vmatprep.subr.bf16.mxu0 0
    %723 = vmatpush1.bf16.msra.mxu0 0
    %724 = vmatprep.subr.bf16.mxu0 0
    %725 = vmatpush1.bf16.msra.mxu0 0
    %726 = vmatprep.subr.bf16.mxu0 0
    %727 = vmatpush1.bf16.msra.mxu0 0
    %728 = vmatprep.subr.bf16.mxu0 0
    %729 = vmatpush1.bf16.msra.mxu0 0
    %730 = vmatprep.subr.bf16.mxu0 0
    %731 = vmatpush1.bf16.msra.mxu0 0
    %732 = vmatprep.subr.bf16.mxu0 0
    %733 = vmatpush1.bf16.msra.mxu0 0
    %734 = vmatprep.subr.bf16.mxu0 0
    %735 = vmatpush1.bf16.msra.mxu0 0
    %736 = vmatprep.subr.bf16.mxu0 0
    %737 = vmatpush1.bf16.msra.mxu0 0
    %738 = vmatprep.subr.bf16.mxu0 0
    %739 = vmatpush1.bf16.msra.mxu0 0
    %740 = vmatprep.subr.bf16.mxu0 0
    %741 = vmatpush1.bf16.msra.mxu0 0
    %742 = vmatprep.subr.bf16.mxu0 0
    %743 = vmatpush1.bf16.msra.mxu0 0
    %744 = vmatprep.subr.bf16.mxu0 0
    %745 = vmatpush1.bf16.msra.mxu0 0
    %746 = vmatprep.subr.bf16.mxu0 0
    %747 = vmatpush1.bf16.msra.mxu0 0
    %748 = vmatprep.subr.bf16.mxu0 0
    %749 = vmatpush1.bf16.msra.mxu0 0
    %750 = vmatprep.mubr.bf16.mxu0 0
    %751 = vmatmul.mubr.bf16.gmra.mrb[0].mxu0 %v713
    %v752 = vpop.f32.mrb[0].mxu0
    %v753 = vadd.f32 %v710, %v752
    %v754 = vpop.f32.mrb[0].mxu0
    %v755 = vpop.f32.mrb[0].mxu0
    %v756 = vpop.f32.mrb[0].mxu0
    %757 = vdwg.mxu0
    %v758 = vmax.f32 %v753, 0.0
    %v759 = vpack.c.bf16 %v704, %v703
    %v764 = vunpack.c.l.b16 %v471
    %v765 = vunpack.c.l.b16 %v472
    %v766 = vunpack.c.l.b16 %v473
    %v767 = vunpack.c.l.b16 %v474
    %v768 = vpack.c.b16 %v765, %v764
    %v769 = vpack.c.b16 %v767, %v766
    %vm770 = vcmask 130048
    %v772 = vsel %vm770, %v768, 0
    %v775 = vsel %vm770, %v769, 0
    %777 = vmatprep.subr.bf16.mxu0 0
    %778 = vmatpush1.bf16.msra.mxu0 %v759
    %779 = vmatprep.subr.bf16.mxu0 0
    %780 = vmatpush1.bf16.msra.mxu0 0
    %781 = vmatprep.subr.bf16.mxu0 0
    %782 = vmatpush1.bf16.msra.mxu0 0
    %783 = vmatprep.subr.bf16.mxu0 0
    %784 = vmatpush1.bf16.msra.mxu0 0
    %785 = vmatprep.subr.bf16.mxu0 0
    %786 = vmatpush1.bf16.msra.mxu0 0
    %787 = vmatprep.subr.bf16.mxu0 0
    %788 = vmatpush1.bf16.msra.mxu0 0
    %789 = vmatprep.subr.bf16.mxu0 0
    %790 = vmatpush1.bf16.msra.mxu0 0
    %791 = vmatprep.subr.bf16.mxu0 0
    %792 = vmatpush1.bf16.msra.mxu0 0
    %793 = vmatprep.subr.bf16.mxu0 0
    %794 = vmatpush1.bf16.msra.mxu0 0
    %795 = vmatprep.subr.bf16.mxu0 0
    %796 = vmatpush1.bf16.msra.mxu0 0
    %797 = vmatprep.subr.bf16.mxu0 0
    %798 = vmatpush1.bf16.msra.mxu0 0
    %799 = vmatprep.subr.bf16.mxu0 0
    %800 = vmatpush1.bf16.msra.mxu0 0
    %801 = vmatprep.subr.bf16.mxu0 0
    %802 = vmatpush1.bf16.msra.mxu0 0
    %803 = vmatprep.subr.bf16.mxu0 0
    %804 = vmatpush1.bf16.msra.mxu0 0
    %805 = vmatprep.subr.bf16.mxu0 0
    %806 = vmatpush1.bf16.msra.mxu0 0
    %807 = vmatprep.subr.bf16.mxu0 0
    %808 = vmatpush1.bf16.msra.mxu0 0
    %809 = vmatprep.mubr.bf16.mxu0 0
    %810 = vmatmul.mubr.bf16.gmra.mrb[0].mxu0 %v772
    %v811 = vpop.f32.mrb[0].mxu0
    %v812 = vadd.f32 0.0, %v811
    %v813 = vpop.f32.mrb[0].mxu0
    %v814 = vpop.f32.mrb[0].mxu0
    %v815 = vadd.f32 0.0, %v814
    %v816 = vpop.f32.mrb[0].mxu0
    %817 = vmatprep.mubr.bf16.mxu0 0
    %818 = vmatmul.mubr.bf16.gmra.mrb[0].mxu0 %v775
    %v819 = vpop.f32.mrb[0].mxu0
    %v820 = vadd.f32 0.0, %v819
    %v821 = vpop.f32.mrb[0].mxu0
    %v822 = vpop.f32.mrb[0].mxu0
    %v823 = vadd.f32 0.0, %v822
    %v824 = vpop.f32.mrb[0].mxu0
    %825 = vdwg.mxu0
    %v830 = vunpack.c.l.b16 %v475
    %v831 = vunpack.c.l.b16 %v476
    %v832 = vunpack.c.l.b16 %v477
    %v833 = vunpack.c.l.b16 %v478
    %v834 = vpack.c.b16 %v831, %v830
    %v835 = vpack.c.b16 %v833, %v832
    %v837 = vsel %vm770, %v834, 0
    %v840 = vsel %vm770, %v835, 0
    %842 = vmatprep.subr.bf16.mxu0 0
    %843 = vmatpush1.bf16.msra.mxu0 %v759
    %844 = vmatprep.subr.bf16.mxu0 0
    %845 = vmatpush1.bf16.msra.mxu0 0
    %846 = vmatprep.subr.bf16.mxu0 0
    %847 = vmatpush1.bf16.msra.mxu0 0
    %848 = vmatprep.subr.bf16.mxu0 0
    %849 = vmatpush1.bf16.msra.mxu0 0
    %850 = vmatprep.subr.bf16.mxu0 0
    %851 = vmatpush1.bf16.msra.mxu0 0
    %852 = vmatprep.subr.bf16.mxu0 0
    %853 = vmatpush1.bf16.msra.mxu0 0
    %854 = vmatprep.subr.bf16.mxu0 0
    %855 = vmatpush1.bf16.msra.mxu0 0
    %856 = vmatprep.subr.bf16.mxu0 0
    %857 = vmatpush1.bf16.msra.mxu0 0
    %858 = vmatprep.subr.bf16.mxu0 0
    %859 = vmatpush1.bf16.msra.mxu0 0
    %860 = vmatprep.subr.bf16.mxu0 0
    %861 = vmatpush1.bf16.msra.mxu0 0
    %862 = vmatprep.subr.bf16.mxu0 0
    %863 = vmatpush1.bf16.msra.mxu0 0
    %864 = vmatprep.subr.bf16.mxu0 0
    %865 = vmatpush1.bf16.msra.mxu0 0
    %866 = vmatprep.subr.bf16.mxu0 0
    %867 = vmatpush1.bf16.msra.mxu0 0
    %868 = vmatprep.subr.bf16.mxu0 0
    %869 = vmatpush1.bf16.msra.mxu0 0
    %870 = vmatprep.subr.bf16.mxu0 0
    %871 = vmatpush1.bf16.msra.mxu0 0
    %872 = vmatprep.subr.bf16.mxu0 0
    %873 = vmatpush1.bf16.msra.mxu0 0
    %874 = vmatprep.mubr.bf16.mxu0 0
    %875 = vmatmul.mubr.bf16.gmra.mrb[0].mxu0 %v837
    %v876 = vpop.f32.mrb[0].mxu0
    %v877 = vadd.f32 0.0, %v876
    %v878 = vpop.f32.mrb[0].mxu0
    %v879 = vpop.f32.mrb[0].mxu0
    %v880 = vadd.f32 0.0, %v879
    %v881 = vpop.f32.mrb[0].mxu0
    %882 = vmatprep.mubr.bf16.mxu0 0
    %883 = vmatmul.mubr.bf16.gmra.mrb[0].mxu0 %v840
    %v884 = vpop.f32.mrb[0].mxu0
    %v885 = vadd.f32 0.0, %v884
    %v886 = vpop.f32.mrb[0].mxu0
    %v887 = vpop.f32.mrb[0].mxu0
    %v888 = vadd.f32 0.0, %v887
    %v889 = vpop.f32.mrb[0].mxu0
    %890 = vdwg.mxu0
    %v891 = vpack.c.bf16 %v758, %v758
    %vm892 = vcmask 7168
    %v894 = vsel %vm892, %v891, 0
    %vm896 = vcmask 1040384
    %v897 = vsel 0, 4294967295, 65535
    %v898 = vsel %vm896, %v897, 0
    %v900 = vand.u32 %v495, %v898
    %902 = vmatprep.subr.bf16.mxu0 0
    %903 = vmatpush1.bf16.msra.mxu0 %v900
    %904 = vmatprep.subr.bf16.mxu0 0
    %905 = vmatpush1.bf16.msra.mxu0 0
    %906 = vmatprep.subr.bf16.mxu0 0
    %907 = vmatpush1.bf16.msra.mxu0 0
    %908 = vmatprep.subr.bf16.mxu0 0
    %909 = vmatpush1.bf16.msra.mxu0 0
    %910 = vmatprep.subr.bf16.mxu0 0
    %911 = vmatpush1.bf16.msra.mxu0 0
    %912 = vmatprep.subr.bf16.mxu0 0
    %913 = vmatpush1.bf16.msra.mxu0 0
    %914 = vmatprep.subr.bf16.mxu0 0
    %915 = vmatpush1.bf16.msra.mxu0 0
    %916 = vmatprep.subr.bf16.mxu0 0
    %917 = vmatpush1.bf16.msra.mxu0 0
    %918 = vmatprep.subr.bf16.mxu0 0
    %919 = vmatpush1.bf16.msra.mxu0 0
    %920 = vmatprep.subr.bf16.mxu0 0
    %921 = vmatpush1.bf16.msra.mxu0 0
    %922 = vmatprep.subr.bf16.mxu0 0
    %923 = vmatpush1.bf16.msra.mxu0 0
    %924 = vmatprep.subr.bf16.mxu0 0
    %925 = vmatpush1.bf16.msra.mxu0 0
    %926 = vmatprep.subr.bf16.mxu0 0
    %927 = vmatpush1.bf16.msra.mxu0 0
    %928 = vmatprep.subr.bf16.mxu0 0
    %929 = vmatpush1.bf16.msra.mxu0 0
    %930 = vmatprep.subr.bf16.mxu0 0
    %931 = vmatpush1.bf16.msra.mxu0 0
    %932 = vmatprep.subr.bf16.mxu0 0
    %933 = vmatpush1.bf16.msra.mxu0 0
    %934 = vmatprep.mubr.bf16.mxu0 0
    %935 = vmatmul.mubr.bf16.gmra.mrb[0].mxu0 %v894
    %v936 = vpop.f32.mrb[0].mxu0
    %v937 = vadd.f32 0.0, %v936
    %v938 = vpop.f32.mrb[0].mxu0
    %v939 = vpop.f32.mrb[0].mxu0
    %v940 = vpop.f32.mrb[0].mxu0
    %941 = vdwg.mxu0
    %v942 = vlaneseq
    %v943 = vshrl.u32 %v942, 7
    %v944 = vsub.s32 0, %v943
    %v945 = vrot.slane %v937, %v944
    %v946 = vlaneseq
    %v947 = vshrl.u32 %v946, 7
    %v948 = vsub.s32 1, %v947
    %v949 = vrot.slane %v937, %v948
    %v950 = vpack.c.bf16 %v646, %v645
    %v951 = vpack.c.bf16 %v648, %v647
    %v952 = vpack.c.bf16 %v815, %v812
    %v953 = vpack.c.bf16 %v823, %v820
    %v956 = vunpack.c.l.b16 %v502
    %v957 = vunpack.c.l.b16 %v503
    %v958 = vpack.c.b16 %v957, %v956
    %v961 = vsel %vm770, %v952, 0
    %v964 = vsel %vm770, %v953, 0
    %966 = vmatprep.subr.bf16.mxu0 0
    %967 = vmatpush1.bf16.msra.mxu0 %v958
    %968 = vmatprep.subr.bf16.mxu0 0
    %969 = vmatpush1.bf16.msra.mxu0 0
    %970 = vmatprep.subr.bf16.mxu0 0
    %971 = vmatpush1.bf16.msra.mxu0 0
    %972 = vmatprep.subr.bf16.mxu0 0
    %973 = vmatpush1.bf16.msra.mxu0 0
    %974 = vmatprep.subr.bf16.mxu0 0
    %975 = vmatpush1.bf16.msra.mxu0 0
    %976 = vmatprep.subr.bf16.mxu0 0
    %977 = vmatpush1.bf16.msra.mxu0 0
    %978 = vmatprep.subr.bf16.mxu0 0
    %979 = vmatpush1.bf16.msra.mxu0 0
    %980 = vmatprep.subr.bf16.mxu0 0
    %981 = vmatpush1.bf16.msra.mxu0 0
    %982 = vmatprep.subr.bf16.mxu0 0
    %983 = vmatpush1.bf16.msra.mxu0 0
    %984 = vmatprep.subr.bf16.mxu0 0
    %985 = vmatpush1.bf16.msra.mxu0 0
    %986 = vmatprep.subr.bf16.mxu0 0
    %987 = vmatpush1.bf16.msra.mxu0 0
    %988 = vmatprep.subr.bf16.mxu0 0
    %989 = vmatpush1.bf16.msra.mxu0 0
    %990 = vmatprep.subr.bf16.mxu0 0
    %991 = vmatpush1.bf16.msra.mxu0 0
    %992 = vmatprep.subr.bf16.mxu0 0
    %993 = vmatpush1.bf16.msra.mxu0 0
    %994 = vmatprep.subr.bf16.mxu0 0
    %995 = vmatpush1.bf16.msra.mxu0 0
    %996 = vmatprep.subr.bf16.mxu0 0
    %997 = vmatpush1.bf16.msra.mxu0 0
    %998 = vmatprep.mubr.bf16.mxu0 0
    %999 = vmatmul.mubr.bf16.gmra.mrb[0].mxu0 %v961
    %v1000 = vpop.f32.mrb[0].mxu0
    %v1001 = vadd.f32 0.0, %v1000
    %v1002 = vpop.f32.mrb[0].mxu0
    %v1003 = vpop.f32.mrb[0].mxu0
    %v1004 = vadd.f32 0.0, %v1003
    %v1005 = vpop.f32.mrb[0].mxu0
    %1006 = vmatprep.mubr.bf16.mxu0 0
    %1007 = vmatmul.mubr.bf16.gmra.mrb[0].mxu0 %v964
    %v1008 = vpop.f32.mrb[0].mxu0
    %v1009 = vadd.f32 0.0, %v1008
    %v1010 = vpop.f32.mrb[0].mxu0
    %v1011 = vpop.f32.mrb[0].mxu0
    %v1012 = vadd.f32 0.0, %v1011
    %v1013 = vpop.f32.mrb[0].mxu0
    %1014 = vdwg.mxu0
    %v1017 = vunpack.c.l.b16 %v492
    %v1018 = vunpack.c.l.b16 %v493
    %v1019 = vpack.c.b16 %v1018, %v1017
    %v1022 = vsel %vm770, %v950, 0
    %v1025 = vsel %vm770, %v951, 0
    %1027 = vmatprep.subr.bf16.mxu0 0
    %1028 = vmatpush1.bf16.msra.mxu0 %v1019
    %1029 = vmatprep.subr.bf16.mxu0 0
    %1030 = vmatpush1.bf16.msra.mxu0 0
    %1031 = vmatprep.subr.bf16.mxu0 0
    %1032 = vmatpush1.bf16.msra.mxu0 0
    %1033 = vmatprep.subr.bf16.mxu0 0
    %1034 = vmatpush1.bf16.msra.mxu0 0
    %1035 = vmatprep.subr.bf16.mxu0 0
    %1036 = vmatpush1.bf16.msra.mxu0 0
    %1037 = vmatprep.subr.bf16.mxu0 0
    %1038 = vmatpush1.bf16.msra.mxu0 0
    %1039 = vmatprep.subr.bf16.mxu0 0
    %1040 = vmatpush1.bf16.msra.mxu0 0
    %1041 = vmatprep.subr.bf16.mxu0 0
    %1042 = vmatpush1.bf16.msra.mxu0 0
    %1043 = vmatprep.subr.bf16.mxu0 0
    %1044 = vmatpush1.bf16.msra.mxu0 0
    %1045 = vmatprep.subr.bf16.mxu0 0
    %1046 = vmatpush1.bf16.msra.mxu0 0
    %1047 = vmatprep.subr.bf16.mxu0 0
    %1048 = vmatpush1.bf16.msra.mxu0 0
    %1049 = vmatprep.subr.bf16.mxu0 0
    %1050 = vmatpush1.bf16.msra.mxu0 0
    %1051 = vmatprep.subr.bf16.mxu0 0
    %1052 = vmatpush1.bf16.msra.mxu0 0
    %1053 = vmatprep.subr.bf16.mxu0 0
    %1054 = vmatpush1.bf16.msra.mxu0 0
    %1055 = vmatprep.subr.bf16.mxu0 0
    %1056 = vmatpush1.bf16.msra.mxu0 0
    %1057 = vmatprep.subr.bf16.mxu0 0
    %1058 = vmatpush1.bf16.msra.mxu0 0
    %1059 = vmatprep.mubr.bf16.mxu0 0
    %1060 = vmatmul.mubr.bf16.gmra.mrb[0].mxu0 %v1022
    %v1061 = vpop.f32.mrb[0].mxu0
    %v1062 = vadd.f32 %v1001, %v1061
    %v1063 = vpop.f32.mrb[0].mxu0
    %v1064 = vpop.f32.mrb[0].mxu0
    %v1065 = vadd.f32 %v1004, %v1064
    %v1066 = vpop.f32.mrb[0].mxu0
    %1067 = vmatprep.mubr.bf16.mxu0 0
    %1068 = vmatmul.mubr.bf16.gmra.mrb[0].mxu0 %v1025
    %v1069 = vpop.f32.mrb[0].mxu0
    %v1070 = vadd.f32 %v1009, %v1069
    %v1071 = vpop.f32.mrb[0].mxu0
    %v1072 = vpop.f32.mrb[0].mxu0
    %v1073 = vadd.f32 %v1012, %v1072
    %v1074 = vpop.f32.mrb[0].mxu0
    %1075 = vdwg.mxu0
    %v1076 = vpack.c.bf16 %v880, %v877
    %v1077 = vpack.c.bf16 %v888, %v885
    %v1080 = vunpack.c.l.b16 %v498
    %v1081 = vunpack.c.l.b16 %v499
    %v1082 = vpack.c.b16 %v1081, %v1080
    %v1085 = vsel %vm770, %v1076, 0
    %v1088 = vsel %vm770, %v1077, 0
    %1090 = vmatprep.subr.bf16.mxu0 0
    %1091 = vmatpush1.bf16.msra.mxu0 %v1082
    %1092 = vmatprep.subr.bf16.mxu0 0
    %1093 = vmatpush1.bf16.msra.mxu0 0
    %1094 = vmatprep.subr.bf16.mxu0 0
    %1095 = vmatpush1.bf16.msra.mxu0 0
    %1096 = vmatprep.subr.bf16.mxu0 0
    %1097 = vmatpush1.bf16.msra.mxu0 0
    %1098 = vmatprep.subr.bf16.mxu0 0
    %1099 = vmatpush1.bf16.msra.mxu0 0
    %1100 = vmatprep.subr.bf16.mxu0 0
    %1101 = vmatpush1.bf16.msra.mxu0 0
    %1102 = vmatprep.subr.bf16.mxu0 0
    %1103 = vmatpush1.bf16.msra.mxu0 0
    %1104 = vmatprep.subr.bf16.mxu0 0
    %1105 = vmatpush1.bf16.msra.mxu0 0
    %1106 = vmatprep.subr.bf16.mxu0 0
    %1107 = vmatpush1.bf16.msra.mxu0 0
    %1108 = vmatprep.subr.bf16.mxu0 0
    %1109 = vmatpush1.bf16.msra.mxu0 0
    %1110 = vmatprep.subr.bf16.mxu0 0
    %1111 = vmatpush1.bf16.msra.mxu0 0
    %1112 = vmatprep.subr.bf16.mxu0 0
    %1113 = vmatpush1.bf16.msra.mxu0 0
    %1114 = vmatprep.subr.bf16.mxu0 0
    %1115 = vmatpush1.bf16.msra.mxu0 0
    %1116 = vmatprep.subr.bf16.mxu0 0
    %1117 = vmatpush1.bf16.msra.mxu0 0
    %1118 = vmatprep.subr.bf16.mxu0 0
    %1119 = vmatpush1.bf16.msra.mxu0 0
    %1120 = vmatprep.subr.bf16.mxu0 0
    %1121 = vmatpush1.bf16.msra.mxu0 0
    %1122 = vmatprep.mubr.bf16.mxu0 0
    %1123 = vmatmul.mubr.bf16.gmra.mrb[0].mxu0 %v1085
    %v1124 = vpop.f32.mrb[0].mxu0
    %v1125 = vadd.f32 0.0, %v1124
    %v1126 = vpop.f32.mrb[0].mxu0
    %v1127 = vpop.f32.mrb[0].mxu0
    %v1128 = vadd.f32 0.0, %v1127
    %v1129 = vpop.f32.mrb[0].mxu0
    %1130 = vmatprep.mubr.bf16.mxu0 0
    %1131 = vmatmul.mubr.bf16.gmra.mrb[0].mxu0 %v1088
    %v1132 = vpop.f32.mrb[0].mxu0
    %v1133 = vadd.f32 0.0, %v1132
    %v1134 = vpop.f32.mrb[0].mxu0
    %v1135 = vpop.f32.mrb[0].mxu0
    %v1136 = vadd.f32 0.0, %v1135
    %v1137 = vpop.f32.mrb[0].mxu0
    %1138 = vdwg.mxu0
    %v1139 = vadd.f32 %v1062, %v1125
    %v1140 = vadd.f32 %v1065, %v1128
    %v1141 = vadd.f32 %v1070, %v1133
    %v1142 = vadd.f32 %v1073, %v1136
    %v1143 = vadd.f32 %v1139, %v945
    %v1144 = vadd.f32 %v1140, %v945
    %v1145 = vadd.f32 %v1141, %v949
    %v1146 = vadd.f32 %v1142, %v949
    %v1148 = vlaneseq
    %v1149 = vshrl.u32 %v1148, 7
    %v1150 = vsub.s32 0, %v1149
    %v1151 = vrot.slane %v487, %v1150
    %v1153 = vadd.f32 %v1143, %v1151
    %v1154 = vadd.f32 %v1144, %v1151
    %v1155 = vadd.f32 %v1145, %v1151
    %v1156 = vadd.f32 %v1146, %v1151
    %v1158 = vand.u32 %v537, %v898
    %1160 = vmatprep.subr.bf16.mxu0 0
    %1161 = vmatpush1.bf16.msra.mxu0 %v1158
    %1162 = vmatprep.subr.bf16.mxu0 0
    %1163 = vmatpush1.bf16.msra.mxu0 0
    %1164 = vmatprep.subr.bf16.mxu0 0
    %1165 = vmatpush1.bf16.msra.mxu0 0
    %1166 = vmatprep.subr.bf16.mxu0 0
    %1167 = vmatpush1.bf16.msra.mxu0 0
    %1168 = vmatprep.subr.bf16.mxu0 0
    %1169 = vmatpush1.bf16.msra.mxu0 0
    %1170 = vmatprep.subr.bf16.mxu0 0
    %1171 = vmatpush1.bf16.msra.mxu0 0
    %1172 = vmatprep.subr.bf16.mxu0 0
    %1173 = vmatpush1.bf16.msra.mxu0 0
    %1174 = vmatprep.subr.bf16.mxu0 0
    %1175 = vmatpush1.bf16.msra.mxu0 0
    %1176 = vmatprep.subr.bf16.mxu0 0
    %1177 = vmatpush1.bf16.msra.mxu0 0
    %1178 = vmatprep.subr.bf16.mxu0 0
    %1179 = vmatpush1.bf16.msra.mxu0 0
    %1180 = vmatprep.subr.bf16.mxu0 0
    %1181 = vmatpush1.bf16.msra.mxu0 0
    %1182 = vmatprep.subr.bf16.mxu0 0
    %1183 = vmatpush1.bf16.msra.mxu0 0
    %1184 = vmatprep.subr.bf16.mxu0 0
    %1185 = vmatpush1.bf16.msra.mxu0 0
    %1186 = vmatprep.subr.bf16.mxu0 0
    %1187 = vmatpush1.bf16.msra.mxu0 0
    %1188 = vmatprep.subr.bf16.mxu0 0
    %1189 = vmatpush1.bf16.msra.mxu0 0
    %1190 = vmatprep.subr.bf16.mxu0 0
    %1191 = vmatpush1.bf16.msra.mxu0 0
    %1192 = vmatprep.mubr.bf16.mxu0 0
    %1193 = vmatmul.mubr.bf16.gmra.mrb[0].mxu0 %v894
    %v1194 = vpop.f32.mrb[0].mxu0
    %v1195 = vadd.f32 0.0, %v1194
    %v1196 = vpop.f32.mrb[0].mxu0
    %v1197 = vpop.f32.mrb[0].mxu0
    %v1198 = vpop.f32.mrb[0].mxu0
    %1199 = vdwg.mxu0
    %v1200 = vlaneseq
    %v1201 = vshrl.u32 %v1200, 7
    %v1202 = vsub.s32 0, %v1201
    %v1203 = vrot.slane %v1195, %v1202
    %v1204 = vlaneseq
    %v1205 = vshrl.u32 %v1204, 7
    %v1206 = vsub.s32 1, %v1205
    %v1207 = vrot.slane %v1195, %v1206
    %v1210 = vunpack.c.l.b16 %v540
    %v1211 = vunpack.c.l.b16 %v541
    %v1212 = vpack.c.b16 %v1211, %v1210
    %v1215 = vsel %vm770, %v759, 0
    %1217 = vmatprep.subr.bf16.mxu0 0
    %1218 = vmatpush1.bf16.msra.mxu0 %v1212
    %1219 = vmatprep.subr.bf16.mxu0 0
    %1220 = vmatpush1.bf16.msra.mxu0 0
    %1221 = vmatprep.subr.bf16.mxu0 0
    %1222 = vmatpush1.bf16.msra.mxu0 0
    %1223 = vmatprep.subr.bf16.mxu0 0
    %1224 = vmatpush1.bf16.msra.mxu0 0
    %1225 = vmatprep.subr.bf16.mxu0 0
    %1226 = vmatpush1.bf16.msra.mxu0 0
    %1227 = vmatprep.subr.bf16.mxu0 0
    %1228 = vmatpush1.bf16.msra.mxu0 0
    %1229 = vmatprep.subr.bf16.mxu0 0
    %1230 = vmatpush1.bf16.msra.mxu0 0
    %1231 = vmatprep.subr.bf16.mxu0 0
    %1232 = vmatpush1.bf16.msra.mxu0 0
    %1233 = vmatprep.subr.bf16.mxu0 0
    %1234 = vmatpush1.bf16.msra.mxu0 0
    %1235 = vmatprep.subr.bf16.mxu0 0
    %1236 = vmatpush1.bf16.msra.mxu0 0
    %1237 = vmatprep.subr.bf16.mxu0 0
    %1238 = vmatpush1.bf16.msra.mxu0 0
    %1239 = vmatprep.subr.bf16.mxu0 0
    %1240 = vmatpush1.bf16.msra.mxu0 0
    %1241 = vmatprep.subr.bf16.mxu0 0
    %1242 = vmatpush1.bf16.msra.mxu0 0
    %1243 = vmatprep.subr.bf16.mxu0 0
    %1244 = vmatpush1.bf16.msra.mxu0 0
    %1245 = vmatprep.subr.bf16.mxu0 0
    %1246 = vmatpush1.bf16.msra.mxu0 0
    %1247 = vmatprep.subr.bf16.mxu0 0
    %1248 = vmatpush1.bf16.msra.mxu0 0
    %1249 = vmatprep.mubr.bf16.mxu0 0
    %1250 = vmatmul.mubr.bf16.gmra.mrb[0].mxu0 %v1215
    %v1251 = vpop.f32.mrb[0].mxu0
    %v1252 = vadd.f32 %v1203, %v1251
    %v1253 = vpop.f32.mrb[0].mxu0
    %v1254 = vpop.f32.mrb[0].mxu0
    %v1255 = vadd.f32 %v1207, %v1254
    %v1256 = vpop.f32.mrb[0].mxu0
    %1257 = vdwg.mxu0
    %v1259 = vlaneseq
    %v1260 = vshrl.u32 %v1259, 7
    %v1261 = vsub.s32 0, %v1260
    %v1262 = vrot.slane %v531, %v1261
    %v1264 = vadd.f32 %v1252, %v1262
    %v1265 = vadd.f32 %v1255, %v1262
    %v1267 = vlaneseq
    %v1268 = vshrl.u32 %v1267, 7
    %v1269 = vsub.s32 0, %v1268
    %v1270 = vrot.slane %v504, %v1269
    %v1273 = vand.u32 %v510, %v898
    %1275 = vmatprep.subr.bf16.mxu0 0
    %1276 = vmatpush1.bf16.msra.mxu0 %v1273
    %1277 = vmatprep.subr.bf16.mxu0 0
    %1278 = vmatpush1.bf16.msra.mxu0 0
    %1279 = vmatprep.subr.bf16.mxu0 0
    %1280 = vmatpush1.bf16.msra.mxu0 0
    %1281 = vmatprep.subr.bf16.mxu0 0
    %1282 = vmatpush1.bf16.msra.mxu0 0
    %1283 = vmatprep.subr.bf16.mxu0 0
    %1284 = vmatpush1.bf16.msra.mxu0 0
    %1285 = vmatprep.subr.bf16.mxu0 0
    %1286 = vmatpush1.bf16.msra.mxu0 0
    %1287 = vmatprep.subr.bf16.mxu0 0
    %1288 = vmatpush1.bf16.msra.mxu0 0
    %1289 = vmatprep.subr.bf16.mxu0 0
    %1290 = vmatpush1.bf16.msra.mxu0 0
    %1291 = vmatprep.subr.bf16.mxu0 0
    %1292 = vmatpush1.bf16.msra.mxu0 0
    %1293 = vmatprep.subr.bf16.mxu0 0
    %1294 = vmatpush1.bf16.msra.mxu0 0
    %1295 = vmatprep.subr.bf16.mxu0 0
    %1296 = vmatpush1.bf16.msra.mxu0 0
    %1297 = vmatprep.subr.bf16.mxu0 0
    %1298 = vmatpush1.bf16.msra.mxu0 0
    %1299 = vmatprep.subr.bf16.mxu0 0
    %1300 = vmatpush1.bf16.msra.mxu0 0
    %1301 = vmatprep.subr.bf16.mxu0 0
    %1302 = vmatpush1.bf16.msra.mxu0 0
    %1303 = vmatprep.subr.bf16.mxu0 0
    %1304 = vmatpush1.bf16.msra.mxu0 0
    %1305 = vmatprep.subr.bf16.mxu0 0
    %1306 = vmatpush1.bf16.msra.mxu0 0
    %1307 = vmatprep.mubr.bf16.mxu0 0
    %1308 = vmatmul.mubr.bf16.gmra.mrb[0].mxu0 %v894
    %v1309 = vpop.f32.mrb[0].mxu0
    %v1310 = vadd.f32 %v1270, %v1309
    %v1311 = vpop.f32.mrb[0].mxu0
    %v1312 = vpop.f32.mrb[0].mxu0
    %v1313 = vpop.f32.mrb[0].mxu0
    %1314 = vdwg.mxu0
    %v1316 = vand.u32 %v494, %v898
    %1318 = vmatprep.subr.bf16.mxu0 0
    %1319 = vmatpush1.bf16.msra.mxu0 %v1316
    %1320 = vmatprep.subr.bf16.mxu0 0
    %1321 = vmatpush1.bf16.msra.mxu0 0
    %1322 = vmatprep.subr.bf16.mxu0 0
    %1323 = vmatpush1.bf16.msra.mxu0 0
    %1324 = vmatprep.subr.bf16.mxu0 0
    %1325 = vmatpush1.bf16.msra.mxu0 0
    %1326 = vmatprep.subr.bf16.mxu0 0
    %1327 = vmatpush1.bf16.msra.mxu0 0
    %1328 = vmatprep.subr.bf16.mxu0 0
    %1329 = vmatpush1.bf16.msra.mxu0 0
    %1330 = vmatprep.subr.bf16.mxu0 0
    %1331 = vmatpush1.bf16.msra.mxu0 0
    %1332 = vmatprep.subr.bf16.mxu0 0
    %1333 = vmatpush1.bf16.msra.mxu0 0
    %1334 = vmatprep.subr.bf16.mxu0 0
    %1335 = vmatpush1.bf16.msra.mxu0 0
    %1336 = vmatprep.subr.bf16.mxu0 0
    %1337 = vmatpush1.bf16.msra.mxu0 0
    %1338 = vmatprep.subr.bf16.mxu0 0
    %1339 = vmatpush1.bf16.msra.mxu0 0
    %1340 = vmatprep.subr.bf16.mxu0 0
    %1341 = vmatpush1.bf16.msra.mxu0 0
    %1342 = vmatprep.subr.bf16.mxu0 0
    %1343 = vmatpush1.bf16.msra.mxu0 0
    %1344 = vmatprep.subr.bf16.mxu0 0
    %1345 = vmatpush1.bf16.msra.mxu0 0
    %1346 = vmatprep.subr.bf16.mxu0 0
    %1347 = vmatpush1.bf16.msra.mxu0 0
    %1348 = vmatprep.subr.bf16.mxu0 0
    %1349 = vmatpush1.bf16.msra.mxu0 0
    %1350 = vmatprep.mubr.bf16.mxu0 0
    %1351 = vmatmul.mubr.bf16.gmra.mrb[0].mxu0 %v894
    %v1352 = vpop.f32.mrb[0].mxu0
    %v1353 = vadd.f32 0.0, %v1352
    %v1354 = vpop.f32.mrb[0].mxu0
    %v1355 = vpop.f32.mrb[0].mxu0
    %v1356 = vpop.f32.mrb[0].mxu0
    %1357 = vdwg.mxu0
    %v1358 = vlaneseq
    %v1359 = vshrl.u32 %v1358, 7
    %v1360 = vsub.s32 0, %v1359
    %v1361 = vrot.slane %v1353, %v1360
    %v1362 = vlaneseq
    %v1363 = vshrl.u32 %v1362, 7
    %v1364 = vsub.s32 1, %v1363
    %v1365 = vrot.slane %v1353, %v1364
    %v1368 = vunpack.c.l.b16 %v490
    %v1369 = vunpack.c.l.b16 %v491
    %v1370 = vpack.c.b16 %v1369, %v1368
    %1372 = vmatprep.subr.bf16.mxu0 0
    %1373 = vmatpush1.bf16.msra.mxu0 %v1370
    %1374 = vmatprep.subr.bf16.mxu0 0
    %1375 = vmatpush1.bf16.msra.mxu0 0
    %1376 = vmatprep.subr.bf16.mxu0 0
    %1377 = vmatpush1.bf16.msra.mxu0 0
    %1378 = vmatprep.subr.bf16.mxu0 0
    %1379 = vmatpush1.bf16.msra.mxu0 0
    %1380 = vmatprep.subr.bf16.mxu0 0
    %1381 = vmatpush1.bf16.msra.mxu0 0
    %1382 = vmatprep.subr.bf16.mxu0 0
    %1383 = vmatpush1.bf16.msra.mxu0 0
    %1384 = vmatprep.subr.bf16.mxu0 0
    %1385 = vmatpush1.bf16.msra.mxu0 0
    %1386 = vmatprep.subr.bf16.mxu0 0
    %1387 = vmatpush1.bf16.msra.mxu0 0
    %1388 = vmatprep.subr.bf16.mxu0 0
    %1389 = vmatpush1.bf16.msra.mxu0 0
    %1390 = vmatprep.subr.bf16.mxu0 0
    %1391 = vmatpush1.bf16.msra.mxu0 0
    %1392 = vmatprep.subr.bf16.mxu0 0
    %1393 = vmatpush1.bf16.msra.mxu0 0
    %1394 = vmatprep.subr.bf16.mxu0 0
    %1395 = vmatpush1.bf16.msra.mxu0 0
    %1396 = vmatprep.subr.bf16.mxu0 0
    %1397 = vmatpush1.bf16.msra.mxu0 0
    %1398 = vmatprep.subr.bf16.mxu0 0
    %1399 = vmatpush1.bf16.msra.mxu0 0
    %1400 = vmatprep.subr.bf16.mxu0 0
    %1401 = vmatpush1.bf16.msra.mxu0 0
    %1402 = vmatprep.subr.bf16.mxu0 0
    %1403 = vmatpush1.bf16.msra.mxu0 0
    %1404 = vmatprep.mubr.bf16.mxu0 0
    %1405 = vmatmul.mubr.bf16.gmra.mrb[0].mxu0 %v1022
    %v1406 = vpop.f32.mrb[0].mxu0
    %v1407 = vadd.f32 0.0, %v1406
    %v1408 = vpop.f32.mrb[0].mxu0
    %v1409 = vpop.f32.mrb[0].mxu0
    %v1410 = vadd.f32 0.0, %v1409
    %v1411 = vpop.f32.mrb[0].mxu0
    %1412 = vmatprep.mubr.bf16.mxu0 0
    %1413 = vmatmul.mubr.bf16.gmra.mrb[0].mxu0 %v1025
    %v1414 = vpop.f32.mrb[0].mxu0
    %v1415 = vadd.f32 0.0, %v1414
    %v1416 = vpop.f32.mrb[0].mxu0
    %v1417 = vpop.f32.mrb[0].mxu0
    %v1418 = vadd.f32 0.0, %v1417
    %v1419 = vpop.f32.mrb[0].mxu0
    %1420 = vdwg.mxu0
    %v1421 = vadd.f32 %v1153, %v1407
    %v1422 = vadd.f32 %v1154, %v1410
    %v1423 = vadd.f32 %v1155, %v1415
    %v1424 = vadd.f32 %v1156, %v1418
    %v1427 = vunpack.c.l.b16 %v500
    %v1428 = vunpack.c.l.b16 %v501
    %v1429 = vpack.c.b16 %v1428, %v1427
    %1431 = vmatprep.subr.bf16.mxu0 0
    %1432 = vmatpush1.bf16.msra.mxu0 %v1429
    %1433 = vmatprep.subr.bf16.mxu0 0
    %1434 = vmatpush1.bf16.msra.mxu0 0
    %1435 = vmatprep.subr.bf16.mxu0 0
    %1436 = vmatpush1.bf16.msra.mxu0 0
    %1437 = vmatprep.subr.bf16.mxu0 0
    %1438 = vmatpush1.bf16.msra.mxu0 0
    %1439 = vmatprep.subr.bf16.mxu0 0
    %1440 = vmatpush1.bf16.msra.mxu0 0
    %1441 = vmatprep.subr.bf16.mxu0 0
    %1442 = vmatpush1.bf16.msra.mxu0 0
    %1443 = vmatprep.subr.bf16.mxu0 0
    %1444 = vmatpush1.bf16.msra.mxu0 0
    %1445 = vmatprep.subr.bf16.mxu0 0
    %1446 = vmatpush1.bf16.msra.mxu0 0
    %1447 = vmatprep.subr.bf16.mxu0 0
    %1448 = vmatpush1.bf16.msra.mxu0 0
    %1449 = vmatprep.subr.bf16.mxu0 0
    %1450 = vmatpush1.bf16.msra.mxu0 0
    %1451 = vmatprep.subr.bf16.mxu0 0
    %1452 = vmatpush1.bf16.msra.mxu0 0
    %1453 = vmatprep.subr.bf16.mxu0 0
    %1454 = vmatpush1.bf16.msra.mxu0 0
    %1455 = vmatprep.subr.bf16.mxu0 0
    %1456 = vmatpush1.bf16.msra.mxu0 0
    %1457 = vmatprep.subr.bf16.mxu0 0
    %1458 = vmatpush1.bf16.msra.mxu0 0
    %1459 = vmatprep.subr.bf16.mxu0 0
    %1460 = vmatpush1.bf16.msra.mxu0 0
    %1461 = vmatprep.subr.bf16.mxu0 0
    %1462 = vmatpush1.bf16.msra.mxu0 0
    %1463 = vmatprep.mubr.bf16.mxu0 0
    %1464 = vmatmul.mubr.bf16.gmra.mrb[0].mxu0 %v961
    %v1465 = vpop.f32.mrb[0].mxu0
    %v1466 = vadd.f32 0.0, %v1465
    %v1467 = vpop.f32.mrb[0].mxu0
    %v1468 = vpop.f32.mrb[0].mxu0
    %v1469 = vadd.f32 0.0, %v1468
    %v1470 = vpop.f32.mrb[0].mxu0
    %1471 = vmatprep.mubr.bf16.mxu0 0
    %1472 = vmatmul.mubr.bf16.gmra.mrb[0].mxu0 %v964
    %v1473 = vpop.f32.mrb[0].mxu0
    %v1474 = vadd.f32 0.0, %v1473
    %v1475 = vpop.f32.mrb[0].mxu0
    %v1476 = vpop.f32.mrb[0].mxu0
    %v1477 = vadd.f32 0.0, %v1476
    %v1478 = vpop.f32.mrb[0].mxu0
    %1479 = vdwg.mxu0
    %v1480 = vadd.f32 %v1421, %v1466
    %v1481 = vadd.f32 %v1422, %v1469
    %v1482 = vadd.f32 %v1423, %v1474
    %v1483 = vadd.f32 %v1424, %v1477
    %v1486 = vunpack.c.l.b16 %v496
    %v1487 = vunpack.c.l.b16 %v497
    %v1488 = vpack.c.b16 %v1487, %v1486
    %1490 = vmatprep.subr.bf16.mxu0 0
    %1491 = vmatpush1.bf16.msra.mxu0 %v1488
    %1492 = vmatprep.subr.bf16.mxu0 0
    %1493 = vmatpush1.bf16.msra.mxu0 0
    %1494 = vmatprep.subr.bf16.mxu0 0
    %1495 = vmatpush1.bf16.msra.mxu0 0
    %1496 = vmatprep.subr.bf16.mxu0 0
    %1497 = vmatpush1.bf16.msra.mxu0 0
    %1498 = vmatprep.subr.bf16.mxu0 0
    %1499 = vmatpush1.bf16.msra.mxu0 0
    %1500 = vmatprep.subr.bf16.mxu0 0
    %1501 = vmatpush1.bf16.msra.mxu0 0
    %1502 = vmatprep.subr.bf16.mxu0 0
    %1503 = vmatpush1.bf16.msra.mxu0 0
    %1504 = vmatprep.subr.bf16.mxu0 0
    %1505 = vmatpush1.bf16.msra.mxu0 0
    %1506 = vmatprep.subr.bf16.mxu0 0
    %1507 = vmatpush1.bf16.msra.mxu0 0
    %1508 = vmatprep.subr.bf16.mxu0 0
    %1509 = vmatpush1.bf16.msra.mxu0 0
    %1510 = vmatprep.subr.bf16.mxu0 0
    %1511 = vmatpush1.bf16.msra.mxu0 0
    %1512 = vmatprep.subr.bf16.mxu0 0
    %1513 = vmatpush1.bf16.msra.mxu0 0
    %1514 = vmatprep.subr.bf16.mxu0 0
    %1515 = vmatpush1.bf16.msra.mxu0 0
    %1516 = vmatprep.subr.bf16.mxu0 0
    %1517 = vmatpush1.bf16.msra.mxu0 0
    %1518 = vmatprep.subr.bf16.mxu0 0
    %1519 = vmatpush1.bf16.msra.mxu0 0
    %1520 = vmatprep.subr.bf16.mxu0 0
    %1521 = vmatpush1.bf16.msra.mxu0 0
    %1522 = vmatprep.mubr.bf16.mxu0 0
    %1523 = vmatmul.mubr.bf16.gmra.mrb[0].mxu0 %v1085
    %v1524 = vpop.f32.mrb[0].mxu0
    %v1525 = vadd.f32 0.0, %v1524
    %v1526 = vpop.f32.mrb[0].mxu0
    %v1527 = vpop.f32.mrb[0].mxu0
    %v1528 = vadd.f32 0.0, %v1527
    %v1529 = vpop.f32.mrb[0].mxu0
    %1530 = vmatprep.mubr.bf16.mxu0 0
    %1531 = vmatmul.mubr.bf16.gmra.mrb[0].mxu0 %v1088
    %v1532 = vpop.f32.mrb[0].mxu0
    %v1533 = vadd.f32 0.0, %v1532
    %v1534 = vpop.f32.mrb[0].mxu0
    %v1535 = vpop.f32.mrb[0].mxu0
    %v1536 = vadd.f32 0.0, %v1535
    %v1537 = vpop.f32.mrb[0].mxu0
    %1538 = vdwg.mxu0
    %v1539 = vadd.f32 %v1480, %v1525
    %v1540 = vadd.f32 %v1481, %v1528
    %v1541 = vadd.f32 %v1482, %v1533
    %v1542 = vadd.f32 %v1483, %v1536
    %v1543 = vadd.f32 %v1539, %v1361
    %v1544 = vadd.f32 %v1540, %v1361
    %v1545 = vadd.f32 %v1541, %v1365
    %v1546 = vadd.f32 %v1542, %v1365
    %v1547 = vmax.f32 %v1543, 0.0
    %v1548 = vmax.f32 %v1544, 0.0
    %v1549 = vmax.f32 %v1545, 0.0
    %v1550 = vmax.f32 %v1546, 0.0
    %v1551 = vsel %vm770, %v1547, 0.0
    %1552 = vadd.xlane.f32.xlu0 %v1551
    %v1553 = vpop.xlane.xlu0 %1552
    %v1554 = vsel %vm770, %v1548, 0.0
    %1555 = vadd.xlane.f32.xlu0 %v1554
    %v1556 = vpop.xlane.xlu0 %1555
    %v1557 = vsel %vm770, %v1549, 0.0
    %1558 = vadd.xlane.f32.xlu0 %v1557
    %v1559 = vpop.xlane.xlu0 %1558
    %v1560 = vsel %vm770, %v1550, 0.0
    %1561 = vadd.xlane.f32.xlu0 %v1560
    %v1562 = vpop.xlane.xlu0 %1561
    %v1563 = vrcp.pop 16.0
    %v1564 = vmul.f32 %v1553, %v1563
    %v1565 = vmul.f32 %v1556, %v1563
    %v1566 = vmul.f32 %v1559, %v1563
    %v1567 = vmul.f32 %v1562, %v1563
    %v1568 = vsub.f32 %v1547, %v1564
    %v1569 = vsub.f32 %v1548, %v1565
    %v1570 = vsub.f32 %v1549, %v1566
    %v1571 = vsub.f32 %v1550, %v1567
    %v1572 = vmul.f32 %v1568, %v1568
    %v1573 = vmul.f32 %v1569, %v1569
    %v1574 = vmul.f32 %v1570, %v1570
    %v1575 = vmul.f32 %v1571, %v1571
    %v1576 = vsel %vm770, %v1572, 0.0
    %1577 = vadd.xlane.f32.xlu0 %v1576
    %v1578 = vpop.xlane.xlu0 %1577
    %v1579 = vsel %vm770, %v1573, 0.0
    %1580 = vadd.xlane.f32.xlu0 %v1579
    %v1581 = vpop.xlane.xlu0 %1580
    %v1582 = vsel %vm770, %v1574, 0.0
    %1583 = vadd.xlane.f32.xlu0 %v1582
    %v1584 = vpop.xlane.xlu0 %1583
    %v1585 = vsel %vm770, %v1575, 0.0
    %1586 = vadd.xlane.f32.xlu0 %v1585
    %v1587 = vpop.xlane.xlu0 %1586
    %v1588 = vmul.f32 %v1578, %v1563
    %v1589 = vmul.f32 %v1581, %v1563
    %v1590 = vmul.f32 %v1584, %v1563
    %v1591 = vmul.f32 %v1587, %v1563
    %v1592 = vadd.f32 %v1588, 1e-05
    %v1593 = vadd.f32 %v1589, 1e-05
    %v1594 = vadd.f32 %v1590, 1e-05
    %v1595 = vadd.f32 %v1591, 1e-05
    %v1596 = vrsqrt.pop %v1592
    %v1597 = vrsqrt.pop %v1593
    %v1598 = vrsqrt.pop %v1594
    %v1599 = vrsqrt.pop %v1595
    %v1600 = vmul.f32 %v1568, %v1596
    %v1601 = vmul.f32 %v1569, %v1597
    %v1602 = vmul.f32 %v1570, %v1598
    %v1603 = vmul.f32 %v1571, %v1599
    %v1605 = vlaneseq
    %v1606 = vshrl.u32 %v1605, 7
    %v1607 = vsub.s32 0, %v1606
    %v1608 = vrot.slane %v489, %v1607
    %v1610 = vmul.f32 %v1600, %v1608
    %v1611 = vmul.f32 %v1601, %v1608
    %v1612 = vmul.f32 %v1602, %v1608
    %v1613 = vmul.f32 %v1603, %v1608
    %v1615 = vlaneseq
    %v1616 = vshrl.u32 %v1615, 7
    %v1617 = vsub.s32 0, %v1616
    %v1618 = vrot.slane %v488, %v1617
    %v1620 = vadd.f32 %v1610, %v1618
    %v1621 = vadd.f32 %v1611, %v1618
    %v1622 = vadd.f32 %v1612, %v1618
    %v1623 = vadd.f32 %v1613, %v1618
    %v1624 = vpack.c.bf16 %v1621, %v1620
    %v1625 = vpack.c.bf16 %v1623, %v1622
    %1628 = vxpose.xlu0.c.b16.start [1/8] %v834, 128
    %1629 = vxpose.xlu0.c.b16.cont [2/8] %v835, 128
    %1630 = vxpose.xlu0.c.b16.cont [3/8] 0, 128
    %1631 = vxpose.xlu0.c.b16.cont [4/8] 0, 128
    %1632 = vxpose.xlu0.c.b16.cont [5/8] 0, 128
    %1633 = vxpose.xlu0.c.b16.cont [6/8] 0, 128
    %1634 = vxpose.xlu0.c.b16.cont [7/8] 0, 128
    %1635 = vxpose.xlu0.c.b16.end [8/8] 0, 128
    %v1636 = vpop.trf.xlu0
    %v1637 = vpop.trf.xlu0
    %v1638 = vpop.trf.xlu0
    %v1639 = vpop.trf.xlu0
    %v1640 = vpop.trf.xlu0
    %v1641 = vpop.trf.xlu0
    %v1642 = vpop.trf.xlu0
    %v1643 = vpop.trf.xlu0
    %vm1644 = vcmask 261120
    %v1646 = vsel %vm1644, %v1636, 0
    %1648 = vmatprep.subr.bf16.mxu0 0
    %1649 = vmatpush1.bf16.msra.mxu0 %v1624
    %1650 = vmatprep.subr.bf16.mxu0 0
    %1651 = vmatpush1.bf16.msra.mxu0 %v1625
    %1652 = vmatprep.subr.bf16.mxu0 0
    %1653 = vmatpush1.bf16.msra.mxu0 0
    %1654 = vmatprep.subr.bf16.mxu0 0
    %1655 = vmatpush1.bf16.msra.mxu0 0
    %1656 = vmatprep.subr.bf16.mxu0 0
    %1657 = vmatpush1.bf16.msra.mxu0 0
    %1658 = vmatprep.subr.bf16.mxu0 0
    %1659 = vmatpush1.bf16.msra.mxu0 0
    %1660 = vmatprep.subr.bf16.mxu0 0
    %1661 = vmatpush1.bf16.msra.mxu0 0
    %1662 = vmatprep.subr.bf16.mxu0 0
    %1663 = vmatpush1.bf16.msra.mxu0 0
    %1664 = vmatprep.subr.bf16.mxu0 0
    %1665 = vmatpush1.bf16.msra.mxu0 0
    %1666 = vmatprep.subr.bf16.mxu0 0
    %1667 = vmatpush1.bf16.msra.mxu0 0
    %1668 = vmatprep.subr.bf16.mxu0 0
    %1669 = vmatpush1.bf16.msra.mxu0 0
    %1670 = vmatprep.subr.bf16.mxu0 0
    %1671 = vmatpush1.bf16.msra.mxu0 0
    %1672 = vmatprep.subr.bf16.mxu0 0
    %1673 = vmatpush1.bf16.msra.mxu0 0
    %1674 = vmatprep.subr.bf16.mxu0 0
    %1675 = vmatpush1.bf16.msra.mxu0 0
    %1676 = vmatprep.subr.bf16.mxu0 0
    %1677 = vmatpush1.bf16.msra.mxu0 0
    %1678 = vmatprep.subr.bf16.mxu0 0
    %1679 = vmatpush1.bf16.msra.mxu0 0
    %1680 = vmatprep.mubr.bf16.mxu0 0
    %1681 = vmatmul.mubr.bf16.gmra.mrb[0].mxu0 %v1646
    %v1682 = vpop.f32.mrb[0].mxu0
    %v1683 = vadd.f32 0.0, %v1682
    %v1684 = vpop.f32.mrb[0].mxu0
    %v1685 = vpop.f32.mrb[0].mxu0
    %v1686 = vadd.f32 0.0, %v1685
    %v1687 = vpop.f32.mrb[0].mxu0
    %1688 = vdwg.mxu0
    %1690 = vset.pattern.permute.xlu0 0
    %1691 = vperm.xlu0 %1690, %v483
    %v1692 = vpop.permute.xlu0 %1691
    %1695 = vset.pattern.permute.xlu0 0
    %1696 = vperm.xlu0 %1695, %v484
    %v1697 = vpop.permute.xlu0 %1696
    %v1699 = vmul.f32 %v1683, %v1692
    %v1700 = vmul.f32 %v1686, %v1697
    loop: start=0, step=1, limit=16
    $region338: #{tpu_custom_call.1} parent=1 // loop_pre_header
      _
    $region339: #{tpu_custom_call.1} parent=1 // loop_header
      %s1702 = sphi 0, %s1706
      %p1703 = scmp.ge.s32.totalorder %s1702, 16
    $region340: #{tpu_custom_call.1} parent=1 // loop_header_branch
      %1705 = sbr.rel (%p1703) target = $region344
    $region341: #{tpu_custom_call.1} parent=1 // loop_body
      %v1707 = vstv %s1702
      %vm1708 = vcmp.eq.s32.totalorder %v479, %v1707
      %vm1709 = vcmp.eq.s32.totalorder %v480, %v1707
      %vm1710 = vcmp.eq.s32.totalorder %v481, %v1707
      %vm1711 = vcmp.eq.s32.totalorder %v482, %v1707
      %v1712 = vsel %vm1708, 1, 0
      %v1713 = vsel %vm1709, 1, 0
      %v1714 = vsel %vm1710, 1, 0
      %v1715 = vsel %vm1711, 1, 0
      %1716 = vset.pattern.permute.xlu0 0
      %1717 = vperm.xlu0 %1716, %v1712
      %v1718 = vpop.permute.xlu0 %1717
      %1719 = vset.pattern.permute.xlu0 0
      %1720 = vperm.xlu0 %1719, %v1713
      %v1721 = vpop.permute.xlu0 %1720
      %1722 = vset.pattern.permute.xlu0 0
      %1723 = vperm.xlu0 %1722, %v1714
      %v1724 = vpop.permute.xlu0 %1723
      %1725 = vset.pattern.permute.xlu0 0
      %1726 = vperm.xlu0 %1725, %v1715
      %v1727 = vpop.permute.xlu0 %1726
      %vm1728 = vcmp.eq.s32.totalorder %v1718, 1
      %vm1729 = vcmp.eq.s32.totalorder %v1721, 1
      %vm1730 = vcmp.eq.s32.totalorder %v1724, 1
      %vm1731 = vcmp.eq.s32.totalorder %v1727, 1
      %v1732 = vsel %vm1728, %v1620, -3.4028235e+38
      %v1733 = vsel %vm1729, %v1621, -3.4028235e+38
      %v1734 = vsel %vm1730, %v1622, -3.4028235e+38
      %v1735 = vsel %vm1731, %v1623, -3.4028235e+38
      %v1736 = vsel %vm770, %v1732, -inf
      %v1737 = vsel %vm770, %v1733, -inf
      %v1738 = vsel %vm770, %v1734, -inf
      %v1739 = vsel %vm770, %v1735, -inf
      %v1740 = vmax.f32 %v1736, %v1737
      %v1741 = vmax.f32 %v1738, %v1739
      %v1742 = vmax.f32 %v1740, %v1741
      %v1743 = vrot.slane %v1742, 4
      %v1744 = vmax.f32 %v1742, %v1743
      %v1745 = vrot.slane %v1744, 2
      %v1746 = vmax.f32 %v1744, %v1745
      %v1747 = vrot.slane %v1746, 1
      %v1748 = vmax.f32 %v1746, %v1747
      %s1749 = scalar_lea.vmem [#allocation2], %s1702
      %vm1750 = vcmask 122880
      %1751 = vst.msk [vmem:[%s1749] sm:$0x1] %vm1750, %v1748
      %v1752 = vsel %vm1728, %v1620, 3.4028235e+38
      %v1753 = vsel %vm1729, %v1621, 3.4028235e+38
      %v1754 = vsel %vm1730, %v1622, 3.4028235e+38
      %v1755 = vsel %vm1731, %v1623, 3.4028235e+38
      %v1756 = vsel %vm770, %v1752, inf
      %v1757 = vsel %vm770, %v1753, inf
      %v1758 = vsel %vm770, %v1754, inf
      %v1759 = vsel %vm770, %v1755, inf
      %v1760 = vmin.f32 %v1756, %v1757
      %v1761 = vmin.f32 %v1758, %v1759
      %v1762 = vmin.f32 %v1760, %v1761
      %v1763 = vrot.slane %v1762, 4
      %v1764 = vmin.f32 %v1762, %v1763
      %v1765 = vrot.slane %v1764, 2
      %v1766 = vmin.f32 %v1764, %v1765
      %v1767 = vrot.slane %v1766, 1
      %v1768 = vmin.f32 %v1766, %v1767
      %s1769 = scalar_lea.vmem [#allocation3], %s1702
      %1770 = vst.msk [vmem:[%s1769] sm:$0x1] %vm1750, %v1768
    $region342: #{tpu_custom_call.1} parent=1 // loop_footer
      %s1706 = sadd.s32 1, %s1702
    $region343: #{tpu_custom_call.1} parent=1 // loop_footer_branch
      %1701 = sbr.rel target = $region339
    $region344: #{tpu_custom_call.1} parent=1 // loop_exit
      _
    %vm1771 = vcmp.gt.f32.partialorder %v485, 0.5
    %vm1772 = vcmp.gt.f32.partialorder %v486, 0.5
    %v1773 = vld [vmem:[#allocation2] sm:$0xff]
    %v1774 = vld [vmem:[#allocation2 + $0x8] sm:$0xff]
    %v1775 = vsel %vm1771, 1, 0
    %v1776 = vsel %vm1772, 1, 0
    %1777 = vset.pattern.permute.xlu0 0
    %1778 = vperm.xlu0 %1777, %v1775
    %v1779 = vpop.permute.xlu0 %1778
    %1780 = vset.pattern.permute.xlu0 0
    %1781 = vperm.xlu0 %1780, %v1776
    %v1782 = vpop.permute.xlu0 %1781
    %vm1783 = vcmp.eq.s32.totalorder %v1779, 1
    %vm1784 = vcmp.eq.s32.totalorder %v1782, 1
    %v1785 = vsel %vm1783, %v1773, 0.0
    %v1786 = vsel %vm1784, %v1774, 0.0
    %v1787 = vld [vmem:[#allocation3] sm:$0xff]
    %v1788 = vld [vmem:[#allocation3 + $0x8] sm:$0xff]
    %v1789 = vsel %vm1783, %v1787, 0.0
    %v1790 = vsel %vm1784, %v1788, 0.0
    %v1791 = vpack.c.bf16 %v1686, %v1683
    %v1792 = vpack.c.bf16 %v1786, %v1785
    %v1795 = vunpack.c.l.b16 %v543
    %v1796 = vunpack.c.l.b16 %v544
    %v1797 = vpack.c.b16 %v1796, %v1795
    %v1800 = vsel %vm770, %v1792, 0
    %1802 = vmatprep.subr.bf16.mxu0 0
    %1803 = vmatpush1.bf16.msra.mxu0 %v1797
    %1804 = vmatprep.subr.bf16.mxu0 0
    %1805 = vmatpush1.bf16.msra.mxu0 0
    %1806 = vmatprep.subr.bf16.mxu0 0
    %1807 = vmatpush1.bf16.msra.mxu0 0
    %1808 = vmatprep.subr.bf16.mxu0 0
    %1809 = vmatpush1.bf16.msra.mxu0 0
    %1810 = vmatprep.subr.bf16.mxu0 0
    %1811 = vmatpush1.bf16.msra.mxu0 0
    %1812 = vmatprep.subr.bf16.mxu0 0
    %1813 = vmatpush1.bf16.msra.mxu0 0
    %1814 = vmatprep.subr.bf16.mxu0 0
    %1815 = vmatpush1.bf16.msra.mxu0 0
    %1816 = vmatprep.subr.bf16.mxu0 0
    %1817 = vmatpush1.bf16.msra.mxu0 0
    %1818 = vmatprep.subr.bf16.mxu0 0
    %1819 = vmatpush1.bf16.msra.mxu0 0
    %1820 = vmatprep.subr.bf16.mxu0 0
    %1821 = vmatpush1.bf16.msra.mxu0 0
    %1822 = vmatprep.subr.bf16.mxu0 0
    %1823 = vmatpush1.bf16.msra.mxu0 0
    %1824 = vmatprep.subr.bf16.mxu0 0
    %1825 = vmatpush1.bf16.msra.mxu0 0
    %1826 = vmatprep.subr.bf16.mxu0 0
    %1827 = vmatpush1.bf16.msra.mxu0 0
    %1828 = vmatprep.subr.bf16.mxu0 0
    %1829 = vmatpush1.bf16.msra.mxu0 0
    %1830 = vmatprep.subr.bf16.mxu0 0
    %1831 = vmatpush1.bf16.msra.mxu0 0
    %1832 = vmatprep.subr.bf16.mxu0 0
    %1833 = vmatpush1.bf16.msra.mxu0 0
    %1834 = vmatprep.mubr.bf16.mxu0 0
    %1835 = vmatmul.mubr.bf16.gmra.mrb[0].mxu0 %v1800
    %v1836 = vpop.f32.mrb[0].mxu0
    %v1837 = vadd.f32 0.0, %v1836
    %v1838 = vpop.f32.mrb[0].mxu0
    %v1839 = vpop.f32.mrb[0].mxu0
    %v1840 = vadd.f32 0.0, %v1839
    %v1841 = vpop.f32.mrb[0].mxu0
    %1842 = vdwg.mxu0
    %v1845 = vunpack.c.l.b16 %v549
    %v1846 = vunpack.c.l.b16 %v550
    %v1847 = vpack.c.b16 %v1846, %v1845
    %v1850 = vsel %vm770, %v1791, 0
    %1852 = vmatprep.subr.bf16.mxu0 0
    %1853 = vmatpush1.bf16.msra.mxu0 %v1847
    %1854 = vmatprep.subr.bf16.mxu0 0
    %1855 = vmatpush1.bf16.msra.mxu0 0
    %1856 = vmatprep.subr.bf16.mxu0 0
    %1857 = vmatpush1.bf16.msra.mxu0 0
    %1858 = vmatprep.subr.bf16.mxu0 0
    %1859 = vmatpush1.bf16.msra.mxu0 0
    %1860 = vmatprep.subr.bf16.mxu0 0
    %1861 = vmatpush1.bf16.msra.mxu0 0
    %1862 = vmatprep.subr.bf16.mxu0 0
    %1863 = vmatpush1.bf16.msra.mxu0 0
    %1864 = vmatprep.subr.bf16.mxu0 0
    %1865 = vmatpush1.bf16.msra.mxu0 0
    %1866 = vmatprep.subr.bf16.mxu0 0
    %1867 = vmatpush1.bf16.msra.mxu0 0
    %1868 = vmatprep.subr.bf16.mxu0 0
    %1869 = vmatpush1.bf16.msra.mxu0 0
    %1870 = vmatprep.subr.bf16.mxu0 0
    %1871 = vmatpush1.bf16.msra.mxu0 0
    %1872 = vmatprep.subr.bf16.mxu0 0
    %1873 = vmatpush1.bf16.msra.mxu0 0
    %1874 = vmatprep.subr.bf16.mxu0 0
    %1875 = vmatpush1.bf16.msra.mxu0 0
    %1876 = vmatprep.subr.bf16.mxu0 0
    %1877 = vmatpush1.bf16.msra.mxu0 0
    %1878 = vmatprep.subr.bf16.mxu0 0
    %1879 = vmatpush1.bf16.msra.mxu0 0
    %1880 = vmatprep.subr.bf16.mxu0 0
    %1881 = vmatpush1.bf16.msra.mxu0 0
    %1882 = vmatprep.subr.bf16.mxu0 0
    %1883 = vmatpush1.bf16.msra.mxu0 0
    %1884 = vmatprep.mubr.bf16.mxu0 0
    %1885 = vmatmul.mubr.bf16.gmra.mrb[0].mxu0 %v1850
    %v1886 = vpop.f32.mrb[0].mxu0
    %v1887 = vadd.f32 %v1837, %v1886
    %v1888 = vpop.f32.mrb[0].mxu0
    %v1889 = vpop.f32.mrb[0].mxu0
    %v1890 = vadd.f32 %v1840, %v1889
    %v1891 = vpop.f32.mrb[0].mxu0
    %1892 = vdwg.mxu0
    %v1893 = vpack.c.bf16 %v1700, %v1699
    %v1896 = vunpack.c.l.b16 %v545
    %v1897 = vunpack.c.l.b16 %v546
    %v1898 = vpack.c.b16 %v1897, %v1896
    %v1901 = vsel %vm770, %v1893, 0
    %1903 = vmatprep.subr.bf16.mxu0 0
    %1904 = vmatpush1.bf16.msra.mxu0 %v1898
    %1905 = vmatprep.subr.bf16.mxu0 0
    %1906 = vmatpush1.bf16.msra.mxu0 0
    %1907 = vmatprep.subr.bf16.mxu0 0
    %1908 = vmatpush1.bf16.msra.mxu0 0
    %1909 = vmatprep.subr.bf16.mxu0 0
    %1910 = vmatpush1.bf16.msra.mxu0 0
    %1911 = vmatprep.subr.bf16.mxu0 0
    %1912 = vmatpush1.bf16.msra.mxu0 0
    %1913 = vmatprep.subr.bf16.mxu0 0
    %1914 = vmatpush1.bf16.msra.mxu0 0
    %1915 = vmatprep.subr.bf16.mxu0 0
    %1916 = vmatpush1.bf16.msra.mxu0 0
    %1917 = vmatprep.subr.bf16.mxu0 0
    %1918 = vmatpush1.bf16.msra.mxu0 0
    %1919 = vmatprep.subr.bf16.mxu0 0
    %1920 = vmatpush1.bf16.msra.mxu0 0
    %1921 = vmatprep.subr.bf16.mxu0 0
    %1922 = vmatpush1.bf16.msra.mxu0 0
    %1923 = vmatprep.subr.bf16.mxu0 0
    %1924 = vmatpush1.bf16.msra.mxu0 0
    %1925 = vmatprep.subr.bf16.mxu0 0
    %1926 = vmatpush1.bf16.msra.mxu0 0
    %1927 = vmatprep.subr.bf16.mxu0 0
    %1928 = vmatpush1.bf16.msra.mxu0 0
    %1929 = vmatprep.subr.bf16.mxu0 0
    %1930 = vmatpush1.bf16.msra.mxu0 0
    %1931 = vmatprep.subr.bf16.mxu0 0
    %1932 = vmatpush1.bf16.msra.mxu0 0
    %1933 = vmatprep.subr.bf16.mxu0 0
    %1934 = vmatpush1.bf16.msra.mxu0 0
    %1935 = vmatprep.mubr.bf16.mxu0 0
    %1936 = vmatmul.mubr.bf16.gmra.mrb[0].mxu0 %v1901
    %v1937 = vpop.f32.mrb[0].mxu0
    %v1938 = vadd.f32 0.0, %v1937
    %v1939 = vpop.f32.mrb[0].mxu0
    %v1940 = vpop.f32.mrb[0].mxu0
    %v1941 = vadd.f32 0.0, %v1940
    %v1942 = vpop.f32.mrb[0].mxu0
    %1943 = vdwg.mxu0
    %v1944 = vadd.f32 %v1887, %v1938
    %v1945 = vadd.f32 %v1890, %v1941
    %v1946 = vpack.c.bf16 %v1790, %v1789
    %v1949 = vunpack.c.l.b16 %v547
    %v1950 = vunpack.c.l.b16 %v548
    %v1951 = vpack.c.b16 %v1950, %v1949
    %v1954 = vsel %vm770, %v1946, 0
    %1956 = vmatprep.subr.bf16.mxu0 0
    %1957 = vmatpush1.bf16.msra.mxu0 %v1951
    %1958 = vmatprep.subr.bf16.mxu0 0
    %1959 = vmatpush1.bf16.msra.mxu0 0
    %1960 = vmatprep.subr.bf16.mxu0 0
    %1961 = vmatpush1.bf16.msra.mxu0 0
    %1962 = vmatprep.subr.bf16.mxu0 0
    %1963 = vmatpush1.bf16.msra.mxu0 0
    %1964 = vmatprep.subr.bf16.mxu0 0
    %1965 = vmatpush1.bf16.msra.mxu0 0
    %1966 = vmatprep.subr.bf16.mxu0 0
    %1967 = vmatpush1.bf16.msra.mxu0 0
    %1968 = vmatprep.subr.bf16.mxu0 0
    %1969 = vmatpush1.bf16.msra.mxu0 0
    %1970 = vmatprep.subr.bf16.mxu0 0
    %1971 = vmatpush1.bf16.msra.mxu0 0
    %1972 = vmatprep.subr.bf16.mxu0 0
    %1973 = vmatpush1.bf16.msra.mxu0 0
    %1974 = vmatprep.subr.bf16.mxu0 0
    %1975 = vmatpush1.bf16.msra.mxu0 0
    %1976 = vmatprep.subr.bf16.mxu0 0
    %1977 = vmatpush1.bf16.msra.mxu0 0
    %1978 = vmatprep.subr.bf16.mxu0 0
    %1979 = vmatpush1.bf16.msra.mxu0 0
    %1980 = vmatprep.subr.bf16.mxu0 0
    %1981 = vmatpush1.bf16.msra.mxu0 0
    %1982 = vmatprep.subr.bf16.mxu0 0
    %1983 = vmatpush1.bf16.msra.mxu0 0
    %1984 = vmatprep.subr.bf16.mxu0 0
    %1985 = vmatpush1.bf16.msra.mxu0 0
    %1986 = vmatprep.subr.bf16.mxu0 0
    %1987 = vmatpush1.bf16.msra.mxu0 0
    %1988 = vmatprep.mubr.bf16.mxu0 0
    %1989 = vmatmul.mubr.bf16.gmra.mrb[0].mxu0 %v1954
    %v1990 = vpop.f32.mrb[0].mxu0
    %v1991 = vadd.f32 0.0, %v1990
    %v1992 = vpop.f32.mrb[0].mxu0
    %v1993 = vpop.f32.mrb[0].mxu0
    %v1994 = vadd.f32 0.0, %v1993
    %v1995 = vpop.f32.mrb[0].mxu0
    %1996 = vdwg.mxu0
    %v1997 = vadd.f32 %v1944, %v1991
    %v1998 = vadd.f32 %v1945, %v1994
    %v2000 = vlaneseq
    %v2001 = vshrl.u32 %v2000, 7
    %v2002 = vsub.s32 0, %v2001
    %v2003 = vrot.slane %v542, %v2002
    %v2005 = vadd.f32 %v1997, %v2003
    %v2006 = vadd.f32 %v1998, %v2003
    %v2007 = vmax.f32 %v2005, 0.0
    %v2008 = vmax.f32 %v2006, 0.0
    %v2010 = vand.u32 %v536, %v898
    %2012 = vmatprep.subr.bf16.mxu0 0
    %2013 = vmatpush1.bf16.msra.mxu0 %v2010
    %2014 = vmatprep.subr.bf16.mxu0 0
    %2015 = vmatpush1.bf16.msra.mxu0 0
    %2016 = vmatprep.subr.bf16.mxu0 0
    %2017 = vmatpush1.bf16.msra.mxu0 0
    %2018 = vmatprep.subr.bf16.mxu0 0
    %2019 = vmatpush1.bf16.msra.mxu0 0
    %2020 = vmatprep.subr.bf16.mxu0 0
    %2021 = vmatpush1.bf16.msra.mxu0 0
    %2022 = vmatprep.subr.bf16.mxu0 0
    %2023 = vmatpush1.bf16.msra.mxu0 0
    %2024 = vmatprep.subr.bf16.mxu0 0
    %2025 = vmatpush1.bf16.msra.mxu0 0
    %2026 = vmatprep.subr.bf16.mxu0 0
    %2027 = vmatpush1.bf16.msra.mxu0 0
    %2028 = vmatprep.subr.bf16.mxu0 0
    %2029 = vmatpush1.bf16.msra.mxu0 0
    %2030 = vmatprep.subr.bf16.mxu0 0
    %2031 = vmatpush1.bf16.msra.mxu0 0
    %2032 = vmatprep.subr.bf16.mxu0 0
    %2033 = vmatpush1.bf16.msra.mxu0 0
    %2034 = vmatprep.subr.bf16.mxu0 0
    %2035 = vmatpush1.bf16.msra.mxu0 0
    %2036 = vmatprep.subr.bf16.mxu0 0
    %2037 = vmatpush1.bf16.msra.mxu0 0
    %2038 = vmatprep.subr.bf16.mxu0 0
    %2039 = vmatpush1.bf16.msra.mxu0 0
    %2040 = vmatprep.subr.bf16.mxu0 0
    %2041 = vmatpush1.bf16.msra.mxu0 0
    %2042 = vmatprep.subr.bf16.mxu0 0
    %2043 = vmatpush1.bf16.msra.mxu0 0
    %2044 = vmatprep.mubr.bf16.mxu0 0
    %2045 = vmatmul.mubr.bf16.gmra.mrb[0].mxu0 %v894
    %v2046 = vpop.f32.mrb[0].mxu0
    %v2047 = vadd.f32 0.0, %v2046
    %v2048 = vpop.f32.mrb[0].mxu0
    %v2049 = vpop.f32.mrb[0].mxu0
    %v2050 = vpop.f32.mrb[0].mxu0
    %2051 = vdwg.mxu0
    %v2052 = vlaneseq
    %v2053 = vshrl.u32 %v2052, 7
    %v2054 = vsub.s32 0, %v2053
    %v2055 = vrot.slane %v2047, %v2054
    %v2056 = vlaneseq
    %v2057 = vshrl.u32 %v2056, 7
    %v2058 = vsub.s32 1, %v2057
    %v2059 = vrot.slane %v2047, %v2058
    %v2062 = vunpack.c.l.b16 %v538
    %v2063 = vunpack.c.l.b16 %v539
    %v2064 = vpack.c.b16 %v2063, %v2062
    %2066 = vmatprep.subr.bf16.mxu0 0
    %2067 = vmatpush1.bf16.msra.mxu0 %v2064
    %2068 = vmatprep.subr.bf16.mxu0 0
    %2069 = vmatpush1.bf16.msra.mxu0 0
    %2070 = vmatprep.subr.bf16.mxu0 0
    %2071 = vmatpush1.bf16.msra.mxu0 0
    %2072 = vmatprep.subr.bf16.mxu0 0
    %2073 = vmatpush1.bf16.msra.mxu0 0
    %2074 = vmatprep.subr.bf16.mxu0 0
    %2075 = vmatpush1.bf16.msra.mxu0 0
    %2076 = vmatprep.subr.bf16.mxu0 0
    %2077 = vmatpush1.bf16.msra.mxu0 0
    %2078 = vmatprep.subr.bf16.mxu0 0
    %2079 = vmatpush1.bf16.msra.mxu0 0
    %2080 = vmatprep.subr.bf16.mxu0 0
    %2081 = vmatpush1.bf16.msra.mxu0 0
    %2082 = vmatprep.subr.bf16.mxu0 0
    %2083 = vmatpush1.bf16.msra.mxu0 0
    %2084 = vmatprep.subr.bf16.mxu0 0
    %2085 = vmatpush1.bf16.msra.mxu0 0
    %2086 = vmatprep.subr.bf16.mxu0 0
    %2087 = vmatpush1.bf16.msra.mxu0 0
    %2088 = vmatprep.subr.bf16.mxu0 0
    %2089 = vmatpush1.bf16.msra.mxu0 0
    %2090 = vmatprep.subr.bf16.mxu0 0
    %2091 = vmatpush1.bf16.msra.mxu0 0
    %2092 = vmatprep.subr.bf16.mxu0 0
    %2093 = vmatpush1.bf16.msra.mxu0 0
    %2094 = vmatprep.subr.bf16.mxu0 0
    %2095 = vmatpush1.bf16.msra.mxu0 0
    %2096 = vmatprep.subr.bf16.mxu0 0
    %2097 = vmatpush1.bf16.msra.mxu0 0
    %2098 = vmatprep.mubr.bf16.mxu0 0
    %2099 = vmatmul.mubr.bf16.gmra.mrb[0].mxu0 %v1215
    %v2100 = vpop.f32.mrb[0].mxu0
    %v2101 = vadd.f32 0.0, %v2100
    %v2102 = vpop.f32.mrb[0].mxu0
    %v2103 = vpop.f32.mrb[0].mxu0
    %v2104 = vadd.f32 0.0, %v2103
    %v2105 = vpop.f32.mrb[0].mxu0
    %2106 = vdwg.mxu0
    %v2107 = vadd.f32 %v1264, %v2101
    %v2108 = vadd.f32 %v1265, %v2104
    %v2109 = vpack.c.bf16 %v2008, %v2007
    %v2112 = vunpack.c.l.b16 %v534
    %v2113 = vunpack.c.l.b16 %v535
    %v2114 = vpack.c.b16 %v2113, %v2112
    %v2117 = vsel %vm770, %v2109, 0
    %2119 = vmatprep.subr.bf16.mxu0 0
    %2120 = vmatpush1.bf16.msra.mxu0 %v2114
    %2121 = vmatprep.subr.bf16.mxu0 0
    %2122 = vmatpush1.bf16.msra.mxu0 0
    %2123 = vmatprep.subr.bf16.mxu0 0
    %2124 = vmatpush1.bf16.msra.mxu0 0
    %2125 = vmatprep.subr.bf16.mxu0 0
    %2126 = vmatpush1.bf16.msra.mxu0 0
    %2127 = vmatprep.subr.bf16.mxu0 0
    %2128 = vmatpush1.bf16.msra.mxu0 0
    %2129 = vmatprep.subr.bf16.mxu0 0
    %2130 = vmatpush1.bf16.msra.mxu0 0
    %2131 = vmatprep.subr.bf16.mxu0 0
    %2132 = vmatpush1.bf16.msra.mxu0 0
    %2133 = vmatprep.subr.bf16.mxu0 0
    %2134 = vmatpush1.bf16.msra.mxu0 0
    %2135 = vmatprep.subr.bf16.mxu0 0
    %2136 = vmatpush1.bf16.msra.mxu0 0
    %2137 = vmatprep.subr.bf16.mxu0 0
    %2138 = vmatpush1.bf16.msra.mxu0 0
    %2139 = vmatprep.subr.bf16.mxu0 0
    %2140 = vmatpush1.bf16.msra.mxu0 0
    %2141 = vmatprep.subr.bf16.mxu0 0
    %2142 = vmatpush1.bf16.msra.mxu0 0
    %2143 = vmatprep.subr.bf16.mxu0 0
    %2144 = vmatpush1.bf16.msra.mxu0 0
    %2145 = vmatprep.subr.bf16.mxu0 0
    %2146 = vmatpush1.bf16.msra.mxu0 0
    %2147 = vmatprep.subr.bf16.mxu0 0
    %2148 = vmatpush1.bf16.msra.mxu0 0
    %2149 = vmatprep.subr.bf16.mxu0 0
    %2150 = vmatpush1.bf16.msra.mxu0 0
    %2151 = vmatprep.mubr.bf16.mxu0 0
    %2152 = vmatmul.mubr.bf16.gmra.mrb[0].mxu0 %v2117
    %v2153 = vpop.f32.mrb[0].mxu0
    %v2154 = vadd.f32 0.0, %v2153
    %v2155 = vpop.f32.mrb[0].mxu0
    %v2156 = vpop.f32.mrb[0].mxu0
    %v2157 = vadd.f32 0.0, %v2156
    %v2158 = vpop.f32.mrb[0].mxu0
    %2159 = vdwg.mxu0
    %v2160 = vadd.f32 %v2107, %v2154
    %v2161 = vadd.f32 %v2108, %v2157
    %v2162 = vadd.f32 %v2160, %v2055
    %v2163 = vadd.f32 %v2161, %v2059
    %v2164 = vmax.f32 %v2162, 0.0
    %v2165 = vmax.f32 %v2163, 0.0
    %v2166 = vsel %vm770, %v2164, 0.0
    %2167 = vadd.xlane.f32.xlu0 %v2166
    %v2168 = vpop.xlane.xlu0 %2167
    %v2169 = vsel %vm770, %v2165, 0.0
    %2170 = vadd.xlane.f32.xlu0 %v2169
    %v2171 = vpop.xlane.xlu0 %2170
    %v2172 = vmul.f32 %v2168, %v1563
    %v2173 = vmul.f32 %v2171, %v1563
    %v2174 = vsub.f32 %v2164, %v2172
    %v2175 = vsub.f32 %v2165, %v2173
    %v2176 = vmul.f32 %v2174, %v2174
    %v2177 = vmul.f32 %v2175, %v2175
    %v2178 = vsel %vm770, %v2176, 0.0
    %2179 = vadd.xlane.f32.xlu0 %v2178
    %v2180 = vpop.xlane.xlu0 %2179
    %v2181 = vsel %vm770, %v2177, 0.0
    %2182 = vadd.xlane.f32.xlu0 %v2181
    %v2183 = vpop.xlane.xlu0 %2182
    %v2184 = vmul.f32 %v2180, %v1563
    %v2185 = vmul.f32 %v2183, %v1563
    %v2186 = vadd.f32 %v2184, 1e-05
    %v2187 = vadd.f32 %v2185, 1e-05
    %v2188 = vrsqrt.pop %v2186
    %v2189 = vrsqrt.pop %v2187
    %v2190 = vmul.f32 %v2174, %v2188
    %v2191 = vmul.f32 %v2175, %v2189
    %v2193 = vlaneseq
    %v2194 = vshrl.u32 %v2193, 7
    %v2195 = vsub.s32 0, %v2194
    %v2196 = vrot.slane %v533, %v2195
    %v2198 = vmul.f32 %v2190, %v2196
    %v2199 = vmul.f32 %v2191, %v2196
    %v2201 = vlaneseq
    %v2202 = vshrl.u32 %v2201, 7
    %v2203 = vsub.s32 0, %v2202
    %v2204 = vrot.slane %v532, %v2203
    %v2206 = vadd.f32 %v2198, %v2204
    %v2207 = vadd.f32 %v2199, %v2204
    %v2208 = vsel %vm770, %v1620, 0.0
    %v2209 = vsel %vm770, %v1621, 0.0
    %v2210 = vadd.f32 %v2208, %v2209
    %v2211 = vrot.slane %v2210, 4
    %v2212 = vadd.f32 %v2210, %v2211
    %v2213 = vrot.slane %v2212, 2
    %v2214 = vadd.f32 %v2212, %v2213
    %v2215 = vrot.slane %v2214, 1
    %v2216 = vadd.f32 %v2214, %v2215
    %v2217 = vsel %vm770, %v1620, -inf
    %v2218 = vsel %vm770, %v1621, -inf
    %v2219 = vmax.f32 %v2217, %v2218
    %v2220 = vrot.slane %v2219, 4
    %v2221 = vmax.f32 %v2219, %v2220
    %v2222 = vrot.slane %v2221, 2
    %v2223 = vmax.f32 %v2221, %v2222
    %v2224 = vrot.slane %v2223, 1
    %v2225 = vmax.f32 %v2223, %v2224
    %v2226 = vsel %vm770, %v1620, inf
    %v2227 = vsel %vm770, %v1621, inf
    %v2228 = vmin.f32 %v2226, %v2227
    %v2229 = vrot.slane %v2228, 4
    %v2230 = vmin.f32 %v2228, %v2229
    %v2231 = vrot.slane %v2230, 2
    %v2232 = vmin.f32 %v2230, %v2231
    %v2233 = vrot.slane %v2232, 1
    %v2234 = vmin.f32 %v2232, %v2233
    %v2235 = vsel %vm770, %v1622, 0.0
    %v2236 = vsel %vm770, %v1623, 0.0
    %v2237 = vadd.f32 %v2235, %v2236
    %v2238 = vrot.slane %v2237, 4
    %v2239 = vadd.f32 %v2237, %v2238
    %v2240 = vrot.slane %v2239, 2
    %v2241 = vadd.f32 %v2239, %v2240
    %v2242 = vrot.slane %v2241, 1
    %v2243 = vadd.f32 %v2241, %v2242
    %v2244 = vsel %vm770, %v1622, -inf
    %v2245 = vsel %vm770, %v1623, -inf
    %v2246 = vmax.f32 %v2244, %v2245
    %v2247 = vrot.slane %v2246, 4
    %v2248 = vmax.f32 %v2246, %v2247
    %v2249 = vrot.slane %v2248, 2
    %v2250 = vmax.f32 %v2248, %v2249
    %v2251 = vrot.slane %v2250, 1
    %v2252 = vmax.f32 %v2250, %v2251
    %v2253 = vsel %vm770, %v1622, inf
    %v2254 = vsel %vm770, %v1623, inf
    %v2255 = vmin.f32 %v2253, %v2254
    %v2256 = vrot.slane %v2255, 4
    %v2257 = vmin.f32 %v2255, %v2256
    %v2258 = vrot.slane %v2257, 2
    %v2259 = vmin.f32 %v2257, %v2258
    %v2260 = vrot.slane %v2259, 1
    %v2261 = vmin.f32 %v2259, %v2260
    %v2262 = vsel %vm896, %v2216, %v2243
    %v2263 = vsel %vm896, %v2225, %v2252
    %v2264 = vsel %vm896, %v2234, %v2261
    %v2265 = vmul.f32 %v2262, 0.0625
    %v2266 = vsel %vm770, %v2206, 0.0
    %v2267 = vrot.slane %v2266, 4
    %v2268 = vadd.f32 %v2266, %v2267
    %v2269 = vrot.slane %v2268, 2
    %v2270 = vadd.f32 %v2268, %v2269
    %v2271 = vrot.slane %v2270, 1
    %v2272 = vadd.f32 %v2270, %v2271
    %v2273 = vsel %vm770, %v2206, -inf
    %v2274 = vrot.slane %v2273, 4
    %v2275 = vmax.f32 %v2273, %v2274
    %v2276 = vrot.slane %v2275, 2
    %v2277 = vmax.f32 %v2275, %v2276
    %v2278 = vrot.slane %v2277, 1
    %v2279 = vmax.f32 %v2277, %v2278
    %v2280 = vsel %vm770, %v2206, inf
    %v2281 = vrot.slane %v2280, 4
    %v2282 = vmin.f32 %v2280, %v2281
    %v2283 = vrot.slane %v2282, 2
    %v2284 = vmin.f32 %v2282, %v2283
    %v2285 = vrot.slane %v2284, 1
    %v2286 = vmin.f32 %v2284, %v2285
    %v2287 = vsel %vm770, %v2207, 0.0
    %v2288 = vrot.slane %v2287, 4
    %v2289 = vadd.f32 %v2287, %v2288
    %v2290 = vrot.slane %v2289, 2
    %v2291 = vadd.f32 %v2289, %v2290
    %v2292 = vrot.slane %v2291, 1
    %v2293 = vadd.f32 %v2291, %v2292
    %v2294 = vsel %vm770, %v2207, -inf
    %v2295 = vrot.slane %v2294, 4
    %v2296 = vmax.f32 %v2294, %v2295
    %v2297 = vrot.slane %v2296, 2
    %v2298 = vmax.f32 %v2296, %v2297
    %v2299 = vrot.slane %v2298, 1
    %v2300 = vmax.f32 %v2298, %v2299
    %v2301 = vsel %vm770, %v2207, inf
    %v2302 = vrot.slane %v2301, 4
    %v2303 = vmin.f32 %v2301, %v2302
    %v2304 = vrot.slane %v2303, 2
    %v2305 = vmin.f32 %v2303, %v2304
    %v2306 = vrot.slane %v2305, 1
    %v2307 = vmin.f32 %v2305, %v2306
    %v2308 = vsel %vm896, %v2272, %v2293
    %v2309 = vsel %vm896, %v2279, %v2300
    %v2310 = vsel %vm896, %v2286, %v2307
    %v2311 = vmul.f32 %v2308, 0.125
    %v2312 = vpack.c.bf16 %v2262, %v2262
    %v2313 = vpack.c.bf16 %v2263, %v2263
    %v2316 = vunpack.c.l.b16 %v514
    %v2317 = vunpack.c.l.b16 %v515
    %v2318 = vpack.c.b16 %v2317, %v2316
    %v2321 = vsel %vm770, %v2313, 0
    %2323 = vmatprep.subr.bf16.mxu0 0
    %2324 = vmatpush1.bf16.msra.mxu0 %v2318
    %2325 = vmatprep.subr.bf16.mxu0 0
    %2326 = vmatpush1.bf16.msra.mxu0 0
    %2327 = vmatprep.subr.bf16.mxu0 0
    %2328 = vmatpush1.bf16.msra.mxu0 0
    %2329 = vmatprep.subr.bf16.mxu0 0
    %2330 = vmatpush1.bf16.msra.mxu0 0
    %2331 = vmatprep.subr.bf16.mxu0 0
    %2332 = vmatpush1.bf16.msra.mxu0 0
    %2333 = vmatprep.subr.bf16.mxu0 0
    %2334 = vmatpush1.bf16.msra.mxu0 0
    %2335 = vmatprep.subr.bf16.mxu0 0
    %2336 = vmatpush1.bf16.msra.mxu0 0
    %2337 = vmatprep.subr.bf16.mxu0 0
    %2338 = vmatpush1.bf16.msra.mxu0 0
    %2339 = vmatprep.subr.bf16.mxu0 0
    %2340 = vmatpush1.bf16.msra.mxu0 0
    %2341 = vmatprep.subr.bf16.mxu0 0
    %2342 = vmatpush1.bf16.msra.mxu0 0
    %2343 = vmatprep.subr.bf16.mxu0 0
    %2344 = vmatpush1.bf16.msra.mxu0 0
    %2345 = vmatprep.subr.bf16.mxu0 0
    %2346 = vmatpush1.bf16.msra.mxu0 0
    %2347 = vmatprep.subr.bf16.mxu0 0
    %2348 = vmatpush1.bf16.msra.mxu0 0
    %2349 = vmatprep.subr.bf16.mxu0 0
    %2350 = vmatpush1.bf16.msra.mxu0 0
    %2351 = vmatprep.subr.bf16.mxu0 0
    %2352 = vmatpush1.bf16.msra.mxu0 0
    %2353 = vmatprep.subr.bf16.mxu0 0
    %2354 = vmatpush1.bf16.msra.mxu0 0
    %2355 = vmatprep.mubr.bf16.mxu0 0
    %2356 = vmatmul.mubr.bf16.gmra.mrb[0].mxu0 %v2321
    %v2357 = vpop.f32.mrb[0].mxu0
    %v2358 = vadd.f32 0.0, %v2357
    %v2359 = vpop.f32.mrb[0].mxu0
    %v2360 = vpop.f32.mrb[0].mxu0
    %v2361 = vpop.f32.mrb[0].mxu0
    %2362 = vdwg.mxu0
    %v2365 = vunpack.c.l.b16 %v520
    %v2366 = vunpack.c.l.b16 %v521
    %v2367 = vpack.c.b16 %v2366, %v2365
    %v2370 = vsel %vm770, %v2312, 0
    %2372 = vmatprep.subr.bf16.mxu0 0
    %2373 = vmatpush1.bf16.msra.mxu0 %v2367
    %2374 = vmatprep.subr.bf16.mxu0 0
    %2375 = vmatpush1.bf16.msra.mxu0 0
    %2376 = vmatprep.subr.bf16.mxu0 0
    %2377 = vmatpush1.bf16.msra.mxu0 0
    %2378 = vmatprep.subr.bf16.mxu0 0
    %2379 = vmatpush1.bf16.msra.mxu0 0
    %2380 = vmatprep.subr.bf16.mxu0 0
    %2381 = vmatpush1.bf16.msra.mxu0 0
    %2382 = vmatprep.subr.bf16.mxu0 0
    %2383 = vmatpush1.bf16.msra.mxu0 0
    %2384 = vmatprep.subr.bf16.mxu0 0
    %2385 = vmatpush1.bf16.msra.mxu0 0
    %2386 = vmatprep.subr.bf16.mxu0 0
    %2387 = vmatpush1.bf16.msra.mxu0 0
    %2388 = vmatprep.subr.bf16.mxu0 0
    %2389 = vmatpush1.bf16.msra.mxu0 0
    %2390 = vmatprep.subr.bf16.mxu0 0
    %2391 = vmatpush1.bf16.msra.mxu0 0
    %2392 = vmatprep.subr.bf16.mxu0 0
    %2393 = vmatpush1.bf16.msra.mxu0 0
    %2394 = vmatprep.subr.bf16.mxu0 0
    %2395 = vmatpush1.bf16.msra.mxu0 0
    %2396 = vmatprep.subr.bf16.mxu0 0
    %2397 = vmatpush1.bf16.msra.mxu0 0
    %2398 = vmatprep.subr.bf16.mxu0 0
    %2399 = vmatpush1.bf16.msra.mxu0 0
    %2400 = vmatprep.subr.bf16.mxu0 0
    %2401 = vmatpush1.bf16.msra.mxu0 0
    %2402 = vmatprep.subr.bf16.mxu0 0
    %2403 = vmatpush1.bf16.msra.mxu0 0
    %2404 = vmatprep.mubr.bf16.mxu0 0
    %2405 = vmatmul.mubr.bf16.gmra.mrb[0].mxu0 %v2370
    %v2406 = vpop.f32.mrb[0].mxu0
    %v2407 = vadd.f32 %v2358, %v2406
    %v2408 = vpop.f32.mrb[0].mxu0
    %v2409 = vpop.f32.mrb[0].mxu0
    %v2410 = vpop.f32.mrb[0].mxu0
    %2411 = vdwg.mxu0
    %v2412 = vpack.c.bf16 %v2265, %v2265
    %v2415 = vunpack.c.l.b16 %v516
    %v2416 = vunpack.c.l.b16 %v517
    %v2417 = vpack.c.b16 %v2416, %v2415
    %v2420 = vsel %vm770, %v2412, 0
    %2422 = vmatprep.subr.bf16.mxu0 0
    %2423 = vmatpush1.bf16.msra.mxu0 %v2417
    %2424 = vmatprep.subr.bf16.mxu0 0
    %2425 = vmatpush1.bf16.msra.mxu0 0
    %2426 = vmatprep.subr.bf16.mxu0 0
    %2427 = vmatpush1.bf16.msra.mxu0 0
    %2428 = vmatprep.subr.bf16.mxu0 0
    %2429 = vmatpush1.bf16.msra.mxu0 0
    %2430 = vmatprep.subr.bf16.mxu0 0
    %2431 = vmatpush1.bf16.msra.mxu0 0
    %2432 = vmatprep.subr.bf16.mxu0 0
    %2433 = vmatpush1.bf16.msra.mxu0 0
    %2434 = vmatprep.subr.bf16.mxu0 0
    %2435 = vmatpush1.bf16.msra.mxu0 0
    %2436 = vmatprep.subr.bf16.mxu0 0
    %2437 = vmatpush1.bf16.msra.mxu0 0
    %2438 = vmatprep.subr.bf16.mxu0 0
    %2439 = vmatpush1.bf16.msra.mxu0 0
    %2440 = vmatprep.subr.bf16.mxu0 0
    %2441 = vmatpush1.bf16.msra.mxu0 0
    %2442 = vmatprep.subr.bf16.mxu0 0
    %2443 = vmatpush1.bf16.msra.mxu0 0
    %2444 = vmatprep.subr.bf16.mxu0 0
    %2445 = vmatpush1.bf16.msra.mxu0 0
    %2446 = vmatprep.subr.bf16.mxu0 0
    %2447 = vmatpush1.bf16.msra.mxu0 0
    %2448 = vmatprep.subr.bf16.mxu0 0
    %2449 = vmatpush1.bf16.msra.mxu0 0
    %2450 = vmatprep.subr.bf16.mxu0 0
    %2451 = vmatpush1.bf16.msra.mxu0 0
    %2452 = vmatprep.subr.bf16.mxu0 0
    %2453 = vmatpush1.bf16.msra.mxu0 0
    %2454 = vmatprep.mubr.bf16.mxu0 0
    %2455 = vmatmul.mubr.bf16.gmra.mrb[0].mxu0 %v2420
    %v2456 = vpop.f32.mrb[0].mxu0
    %v2457 = vadd.f32 0.0, %v2456
    %v2458 = vpop.f32.mrb[0].mxu0
    %v2459 = vpop.f32.mrb[0].mxu0
    %v2460 = vpop.f32.mrb[0].mxu0
    %2461 = vdwg.mxu0
    %v2462 = vadd.f32 %v2407, %v2457
    %v2463 = vpack.c.bf16 %v2264, %v2264
    %v2466 = vunpack.c.l.b16 %v518
    %v2467 = vunpack.c.l.b16 %v519
    %v2468 = vpack.c.b16 %v2467, %v2466
    %v2471 = vsel %vm770, %v2463, 0
    %2473 = vmatprep.subr.bf16.mxu0 0
    %2474 = vmatpush1.bf16.msra.mxu0 %v2468
    %2475 = vmatprep.subr.bf16.mxu0 0
    %2476 = vmatpush1.bf16.msra.mxu0 0
    %2477 = vmatprep.subr.bf16.mxu0 0
    %2478 = vmatpush1.bf16.msra.mxu0 0
    %2479 = vmatprep.subr.bf16.mxu0 0
    %2480 = vmatpush1.bf16.msra.mxu0 0
    %2481 = vmatprep.subr.bf16.mxu0 0
    %2482 = vmatpush1.bf16.msra.mxu0 0
    %2483 = vmatprep.subr.bf16.mxu0 0
    %2484 = vmatpush1.bf16.msra.mxu0 0
    %2485 = vmatprep.subr.bf16.mxu0 0
    %2486 = vmatpush1.bf16.msra.mxu0 0
    %2487 = vmatprep.subr.bf16.mxu0 0
    %2488 = vmatpush1.bf16.msra.mxu0 0
    %2489 = vmatprep.subr.bf16.mxu0 0
    %2490 = vmatpush1.bf16.msra.mxu0 0
    %2491 = vmatprep.subr.bf16.mxu0 0
    %2492 = vmatpush1.bf16.msra.mxu0 0
    %2493 = vmatprep.subr.bf16.mxu0 0
    %2494 = vmatpush1.bf16.msra.mxu0 0
    %2495 = vmatprep.subr.bf16.mxu0 0
    %2496 = vmatpush1.bf16.msra.mxu0 0
    %2497 = vmatprep.subr.bf16.mxu0 0
    %2498 = vmatpush1.bf16.msra.mxu0 0
    %2499 = vmatprep.subr.bf16.mxu0 0
    %2500 = vmatpush1.bf16.msra.mxu0 0
    %2501 = vmatprep.subr.bf16.mxu0 0
    %2502 = vmatpush1.bf16.msra.mxu0 0
    %2503 = vmatprep.subr.bf16.mxu0 0
    %2504 = vmatpush1.bf16.msra.mxu0 0
    %2505 = vmatprep.mubr.bf16.mxu0 0
    %2506 = vmatmul.mubr.bf16.gmra.mrb[0].mxu0 %v2471
    %v2507 = vpop.f32.mrb[0].mxu0
    %v2508 = vadd.f32 0.0, %v2507
    %v2509 = vpop.f32.mrb[0].mxu0
    %v2510 = vpop.f32.mrb[0].mxu0
    %v2511 = vpop.f32.mrb[0].mxu0
    %2512 = vdwg.mxu0
    %v2513 = vadd.f32 %v2462, %v2508
    %v2515 = vlaneseq
    %v2516 = vshrl.u32 %v2515, 7
    %v2517 = vsub.s32 0, %v2516
    %v2518 = vrot.slane %v513, %v2517
    %v2520 = vadd.f32 %v2513, %v2518
    %v2521 = vmax.f32 %v2520, 0.0
    %v2522 = vpack.c.bf16 %v2308, %v2308
    %v2523 = vpack.c.bf16 %v2309, %v2309
    %v2526 = vunpack.c.l.b16 %v523
    %v2527 = vunpack.c.l.b16 %v524
    %v2528 = vpack.c.b16 %v2527, %v2526
    %v2531 = vsel %vm770, %v2523, 0
    %2533 = vmatprep.subr.bf16.mxu0 0
    %2534 = vmatpush1.bf16.msra.mxu0 %v2528
    %2535 = vmatprep.subr.bf16.mxu0 0
    %2536 = vmatpush1.bf16.msra.mxu0 0
    %2537 = vmatprep.subr.bf16.mxu0 0
    %2538 = vmatpush1.bf16.msra.mxu0 0
    %2539 = vmatprep.subr.bf16.mxu0 0
    %2540 = vmatpush1.bf16.msra.mxu0 0
    %2541 = vmatprep.subr.bf16.mxu0 0
    %2542 = vmatpush1.bf16.msra.mxu0 0
    %2543 = vmatprep.subr.bf16.mxu0 0
    %2544 = vmatpush1.bf16.msra.mxu0 0
    %2545 = vmatprep.subr.bf16.mxu0 0
    %2546 = vmatpush1.bf16.msra.mxu0 0
    %2547 = vmatprep.subr.bf16.mxu0 0
    %2548 = vmatpush1.bf16.msra.mxu0 0
    %2549 = vmatprep.subr.bf16.mxu0 0
    %2550 = vmatpush1.bf16.msra.mxu0 0
    %2551 = vmatprep.subr.bf16.mxu0 0
    %2552 = vmatpush1.bf16.msra.mxu0 0
    %2553 = vmatprep.subr.bf16.mxu0 0
    %2554 = vmatpush1.bf16.msra.mxu0 0
    %2555 = vmatprep.subr.bf16.mxu0 0
    %2556 = vmatpush1.bf16.msra.mxu0 0
    %2557 = vmatprep.subr.bf16.mxu0 0
    %2558 = vmatpush1.bf16.msra.mxu0 0
    %2559 = vmatprep.subr.bf16.mxu0 0
    %2560 = vmatpush1.bf16.msra.mxu0 0
    %2561 = vmatprep.subr.bf16.mxu0 0
    %2562 = vmatpush1.bf16.msra.mxu0 0
    %2563 = vmatprep.subr.bf16.mxu0 0
    %2564 = vmatpush1.bf16.msra.mxu0 0
    %2565 = vmatprep.mubr.bf16.mxu0 0
    %2566 = vmatmul.mubr.bf16.gmra.mrb[0].mxu0 %v2531
    %v2567 = vpop.f32.mrb[0].mxu0
    %v2568 = vadd.f32 0.0, %v2567
    %v2569 = vpop.f32.mrb[0].mxu0
    %v2570 = vpop.f32.mrb[0].mxu0
    %v2571 = vpop.f32.mrb[0].mxu0
    %2572 = vdwg.mxu0
    %v2575 = vunpack.c.l.b16 %v529
    %v2576 = vunpack.c.l.b16 %v530
    %v2577 = vpack.c.b16 %v2576, %v2575
    %v2580 = vsel %vm770, %v2522, 0
    %2582 = vmatprep.subr.bf16.mxu0 0
    %2583 = vmatpush1.bf16.msra.mxu0 %v2577
    %2584 = vmatprep.subr.bf16.mxu0 0
    %2585 = vmatpush1.bf16.msra.mxu0 0
    %2586 = vmatprep.subr.bf16.mxu0 0
    %2587 = vmatpush1.bf16.msra.mxu0 0
    %2588 = vmatprep.subr.bf16.mxu0 0
    %2589 = vmatpush1.bf16.msra.mxu0 0
    %2590 = vmatprep.subr.bf16.mxu0 0
    %2591 = vmatpush1.bf16.msra.mxu0 0
    %2592 = vmatprep.subr.bf16.mxu0 0
    %2593 = vmatpush1.bf16.msra.mxu0 0
    %2594 = vmatprep.subr.bf16.mxu0 0
    %2595 = vmatpush1.bf16.msra.mxu0 0
    %2596 = vmatprep.subr.bf16.mxu0 0
    %2597 = vmatpush1.bf16.msra.mxu0 0
    %2598 = vmatprep.subr.bf16.mxu0 0
    %2599 = vmatpush1.bf16.msra.mxu0 0
    %2600 = vmatprep.subr.bf16.mxu0 0
    %2601 = vmatpush1.bf16.msra.mxu0 0
    %2602 = vmatprep.subr.bf16.mxu0 0
    %2603 = vmatpush1.bf16.msra.mxu0 0
    %2604 = vmatprep.subr.bf16.mxu0 0
    %2605 = vmatpush1.bf16.msra.mxu0 0
    %2606 = vmatprep.subr.bf16.mxu0 0
    %2607 = vmatpush1.bf16.msra.mxu0 0
    %2608 = vmatprep.subr.bf16.mxu0 0
    %2609 = vmatpush1.bf16.msra.mxu0 0
    %2610 = vmatprep.subr.bf16.mxu0 0
    %2611 = vmatpush1.bf16.msra.mxu0 0
    %2612 = vmatprep.subr.bf16.mxu0 0
    %2613 = vmatpush1.bf16.msra.mxu0 0
    %2614 = vmatprep.mubr.bf16.mxu0 0
    %2615 = vmatmul.mubr.bf16.gmra.mrb[0].mxu0 %v2580
    %v2616 = vpop.f32.mrb[0].mxu0
    %v2617 = vadd.f32 %v2568, %v2616
    %v2618 = vpop.f32.mrb[0].mxu0
    %v2619 = vpop.f32.mrb[0].mxu0
    %v2620 = vpop.f32.mrb[0].mxu0
    %2621 = vdwg.mxu0
    %v2622 = vpack.c.bf16 %v2311, %v2311
    %v2625 = vunpack.c.l.b16 %v525
    %v2626 = vunpack.c.l.b16 %v526
    %v2627 = vpack.c.b16 %v2626, %v2625
    %v2630 = vsel %vm770, %v2622, 0
    %2632 = vmatprep.subr.bf16.mxu0 0
    %2633 = vmatpush1.bf16.msra.mxu0 %v2627
    %2634 = vmatprep.subr.bf16.mxu0 0
    %2635 = vmatpush1.bf16.msra.mxu0 0
    %2636 = vmatprep.subr.bf16.mxu0 0
    %2637 = vmatpush1.bf16.msra.mxu0 0
    %2638 = vmatprep.subr.bf16.mxu0 0
    %2639 = vmatpush1.bf16.msra.mxu0 0
    %2640 = vmatprep.subr.bf16.mxu0 0
    %2641 = vmatpush1.bf16.msra.mxu0 0
    %2642 = vmatprep.subr.bf16.mxu0 0
    %2643 = vmatpush1.bf16.msra.mxu0 0
    %2644 = vmatprep.subr.bf16.mxu0 0
    %2645 = vmatpush1.bf16.msra.mxu0 0
    %2646 = vmatprep.subr.bf16.mxu0 0
    %2647 = vmatpush1.bf16.msra.mxu0 0
    %2648 = vmatprep.subr.bf16.mxu0 0
    %2649 = vmatpush1.bf16.msra.mxu0 0
    %2650 = vmatprep.subr.bf16.mxu0 0
    %2651 = vmatpush1.bf16.msra.mxu0 0
    %2652 = vmatprep.subr.bf16.mxu0 0
    %2653 = vmatpush1.bf16.msra.mxu0 0
    %2654 = vmatprep.subr.bf16.mxu0 0
    %2655 = vmatpush1.bf16.msra.mxu0 0
    %2656 = vmatprep.subr.bf16.mxu0 0
    %2657 = vmatpush1.bf16.msra.mxu0 0
    %2658 = vmatprep.subr.bf16.mxu0 0
    %2659 = vmatpush1.bf16.msra.mxu0 0
    %2660 = vmatprep.subr.bf16.mxu0 0
    %2661 = vmatpush1.bf16.msra.mxu0 0
    %2662 = vmatprep.subr.bf16.mxu0 0
    %2663 = vmatpush1.bf16.msra.mxu0 0
    %2664 = vmatprep.mubr.bf16.mxu0 0
    %2665 = vmatmul.mubr.bf16.gmra.mrb[0].mxu0 %v2630
    %v2666 = vpop.f32.mrb[0].mxu0
    %v2667 = vadd.f32 0.0, %v2666
    %v2668 = vpop.f32.mrb[0].mxu0
    %v2669 = vpop.f32.mrb[0].mxu0
    %v2670 = vpop.f32.mrb[0].mxu0
    %2671 = vdwg.mxu0
    %v2672 = vadd.f32 %v2617, %v2667
    %v2673 = vpack.c.bf16 %v2310, %v2310
    %v2676 = vunpack.c.l.b16 %v527
    %v2677 = vunpack.c.l.b16 %v528
    %v2678 = vpack.c.b16 %v2677, %v2676
    %v2681 = vsel %vm770, %v2673, 0
    %2683 = vmatprep.subr.bf16.mxu0 0
    %2684 = vmatpush1.bf16.msra.mxu0 %v2678
    %2685 = vmatprep.subr.bf16.mxu0 0
    %2686 = vmatpush1.bf16.msra.mxu0 0
    %2687 = vmatprep.subr.bf16.mxu0 0
    %2688 = vmatpush1.bf16.msra.mxu0 0
    %2689 = vmatprep.subr.bf16.mxu0 0
    %2690 = vmatpush1.bf16.msra.mxu0 0
    %2691 = vmatprep.subr.bf16.mxu0 0
    %2692 = vmatpush1.bf16.msra.mxu0 0
    %2693 = vmatprep.subr.bf16.mxu0 0
    %2694 = vmatpush1.bf16.msra.mxu0 0
    %2695 = vmatprep.subr.bf16.mxu0 0
    %2696 = vmatpush1.bf16.msra.mxu0 0
    %2697 = vmatprep.subr.bf16.mxu0 0
    %2698 = vmatpush1.bf16.msra.mxu0 0
    %2699 = vmatprep.subr.bf16.mxu0 0
    %2700 = vmatpush1.bf16.msra.mxu0 0
    %2701 = vmatprep.subr.bf16.mxu0 0
    %2702 = vmatpush1.bf16.msra.mxu0 0
    %2703 = vmatprep.subr.bf16.mxu0 0
    %2704 = vmatpush1.bf16.msra.mxu0 0
    %2705 = vmatprep.subr.bf16.mxu0 0
    %2706 = vmatpush1.bf16.msra.mxu0 0
    %2707 = vmatprep.subr.bf16.mxu0 0
    %2708 = vmatpush1.bf16.msra.mxu0 0
    %2709 = vmatprep.subr.bf16.mxu0 0
    %2710 = vmatpush1.bf16.msra.mxu0 0
    %2711 = vmatprep.subr.bf16.mxu0 0
    %2712 = vmatpush1.bf16.msra.mxu0 0
    %2713 = vmatprep.subr.bf16.mxu0 0
    %2714 = vmatpush1.bf16.msra.mxu0 0
    %2715 = vmatprep.mubr.bf16.mxu0 0
    %2716 = vmatmul.mubr.bf16.gmra.mrb[0].mxu0 %v2681
    %v2717 = vpop.f32.mrb[0].mxu0
    %v2718 = vadd.f32 0.0, %v2717
    %v2719 = vpop.f32.mrb[0].mxu0
    %v2720 = vpop.f32.mrb[0].mxu0
    %v2721 = vpop.f32.mrb[0].mxu0
    %2722 = vdwg.mxu0
    %v2723 = vadd.f32 %v2672, %v2718
    %v2725 = vlaneseq
    %v2726 = vshrl.u32 %v2725, 7
    %v2727 = vsub.s32 0, %v2726
    %v2728 = vrot.slane %v522, %v2727
    %v2730 = vadd.f32 %v2723, %v2728
    %v2731 = vmax.f32 %v2730, 0.0
    %v2733 = vand.u32 %v509, %v898
    %2735 = vmatprep.subr.bf16.mxu0 0
    %2736 = vmatpush1.bf16.msra.mxu0 %v2733
    %2737 = vmatprep.subr.bf16.mxu0 0
    %2738 = vmatpush1.bf16.msra.mxu0 0
    %2739 = vmatprep.subr.bf16.mxu0 0
    %2740 = vmatpush1.bf16.msra.mxu0 0
    %2741 = vmatprep.subr.bf16.mxu0 0
    %2742 = vmatpush1.bf16.msra.mxu0 0
    %2743 = vmatprep.subr.bf16.mxu0 0
    %2744 = vmatpush1.bf16.msra.mxu0 0
    %2745 = vmatprep.subr.bf16.mxu0 0
    %2746 = vmatpush1.bf16.msra.mxu0 0
    %2747 = vmatprep.subr.bf16.mxu0 0
    %2748 = vmatpush1.bf16.msra.mxu0 0
    %2749 = vmatprep.subr.bf16.mxu0 0
    %2750 = vmatpush1.bf16.msra.mxu0 0
    %2751 = vmatprep.subr.bf16.mxu0 0
    %2752 = vmatpush1.bf16.msra.mxu0 0
    %2753 = vmatprep.subr.bf16.mxu0 0
    %2754 = vmatpush1.bf16.msra.mxu0 0
    %2755 = vmatprep.subr.bf16.mxu0 0
    %2756 = vmatpush1.bf16.msra.mxu0 0
    %2757 = vmatprep.subr.bf16.mxu0 0
    %2758 = vmatpush1.bf16.msra.mxu0 0
    %2759 = vmatprep.subr.bf16.mxu0 0
    %2760 = vmatpush1.bf16.msra.mxu0 0
    %2761 = vmatprep.subr.bf16.mxu0 0
    %2762 = vmatpush1.bf16.msra.mxu0 0
    %2763 = vmatprep.subr.bf16.mxu0 0
    %2764 = vmatpush1.bf16.msra.mxu0 0
    %2765 = vmatprep.subr.bf16.mxu0 0
    %2766 = vmatpush1.bf16.msra.mxu0 0
    %2767 = vmatprep.mubr.bf16.mxu0 0
    %2768 = vmatmul.mubr.bf16.gmra.mrb[0].mxu0 %v894
    %v2769 = vpop.f32.mrb[0].mxu0
    %v2770 = vadd.f32 0.0, %v2769
    %v2771 = vpop.f32.mrb[0].mxu0
    %v2772 = vpop.f32.mrb[0].mxu0
    %v2773 = vpop.f32.mrb[0].mxu0
    %2774 = vdwg.mxu0
    %v2775 = vadd.f32 %v1310, %v2770
    %v2776 = vpack.c.bf16 %v2731, %v2731
    %v2779 = vunpack.c.l.b16 %v511
    %v2780 = vunpack.c.l.b16 %v512
    %v2781 = vpack.c.b16 %v2780, %v2779
    %v2784 = vsel %vm770, %v2776, 0
    %2786 = vmatprep.subr.bf16.mxu0 0
    %2787 = vmatpush1.bf16.msra.mxu0 %v2781
    %2788 = vmatprep.subr.bf16.mxu0 0
    %2789 = vmatpush1.bf16.msra.mxu0 0
    %2790 = vmatprep.subr.bf16.mxu0 0
    %2791 = vmatpush1.bf16.msra.mxu0 0
    %2792 = vmatprep.subr.bf16.mxu0 0
    %2793 = vmatpush1.bf16.msra.mxu0 0
    %2794 = vmatprep.subr.bf16.mxu0 0
    %2795 = vmatpush1.bf16.msra.mxu0 0
    %2796 = vmatprep.subr.bf16.mxu0 0
    %2797 = vmatpush1.bf16.msra.mxu0 0
    %2798 = vmatprep.subr.bf16.mxu0 0
    %2799 = vmatpush1.bf16.msra.mxu0 0
    %2800 = vmatprep.subr.bf16.mxu0 0
    %2801 = vmatpush1.bf16.msra.mxu0 0
    %2802 = vmatprep.subr.bf16.mxu0 0
    %2803 = vmatpush1.bf16.msra.mxu0 0
    %2804 = vmatprep.subr.bf16.mxu0 0
    %2805 = vmatpush1.bf16.msra.mxu0 0
    %2806 = vmatprep.subr.bf16.mxu0 0
    %2807 = vmatpush1.bf16.msra.mxu0 0
    %2808 = vmatprep.subr.bf16.mxu0 0
    %2809 = vmatpush1.bf16.msra.mxu0 0
    %2810 = vmatprep.subr.bf16.mxu0 0
    %2811 = vmatpush1.bf16.msra.mxu0 0
    %2812 = vmatprep.subr.bf16.mxu0 0
    %2813 = vmatpush1.bf16.msra.mxu0 0
    %2814 = vmatprep.subr.bf16.mxu0 0
    %2815 = vmatpush1.bf16.msra.mxu0 0
    %2816 = vmatprep.subr.bf16.mxu0 0
    %2817 = vmatpush1.bf16.msra.mxu0 0
    %2818 = vmatprep.mubr.bf16.mxu0 0
    %2819 = vmatmul.mubr.bf16.gmra.mrb[0].mxu0 %v2784
    %v2820 = vpop.f32.mrb[0].mxu0
    %v2821 = vadd.f32 0.0, %v2820
    %v2822 = vpop.f32.mrb[0].mxu0
    %v2823 = vpop.f32.mrb[0].mxu0
    %v2824 = vpop.f32.mrb[0].mxu0
    %2825 = vdwg.mxu0
    %v2826 = vadd.f32 %v2775, %v2821
    %v2827 = vpack.c.bf16 %v2521, %v2521
    %v2830 = vunpack.c.l.b16 %v507
    %v2831 = vunpack.c.l.b16 %v508
    %v2832 = vpack.c.b16 %v2831, %v2830
    %v2835 = vsel %vm770, %v2827, 0
    %2837 = vmatprep.subr.bf16.mxu0 0
    %2838 = vmatpush1.bf16.msra.mxu0 %v2832
    %2839 = vmatprep.subr.bf16.mxu0 0
    %2840 = vmatpush1.bf16.msra.mxu0 0
    %2841 = vmatprep.subr.bf16.mxu0 0
    %2842 = vmatpush1.bf16.msra.mxu0 0
    %2843 = vmatprep.subr.bf16.mxu0 0
    %2844 = vmatpush1.bf16.msra.mxu0 0
    %2845 = vmatprep.subr.bf16.mxu0 0
    %2846 = vmatpush1.bf16.msra.mxu0 0
    %2847 = vmatprep.subr.bf16.mxu0 0
    %2848 = vmatpush1.bf16.msra.mxu0 0
    %2849 = vmatprep.subr.bf16.mxu0 0
    %2850 = vmatpush1.bf16.msra.mxu0 0
    %2851 = vmatprep.subr.bf16.mxu0 0
    %2852 = vmatpush1.bf16.msra.mxu0 0
    %2853 = vmatprep.subr.bf16.mxu0 0
    %2854 = vmatpush1.bf16.msra.mxu0 0
    %2855 = vmatprep.subr.bf16.mxu0 0
    %2856 = vmatpush1.bf16.msra.mxu0 0
    %2857 = vmatprep.subr.bf16.mxu0 0
    %2858 = vmatpush1.bf16.msra.mxu0 0
    %2859 = vmatprep.subr.bf16.mxu0 0
    %2860 = vmatpush1.bf16.msra.mxu0 0
    %2861 = vmatprep.subr.bf16.mxu0 0
    %2862 = vmatpush1.bf16.msra.mxu0 0
    %2863 = vmatprep.subr.bf16.mxu0 0
    %2864 = vmatpush1.bf16.msra.mxu0 0
    %2865 = vmatprep.subr.bf16.mxu0 0
    %2866 = vmatpush1.bf16.msra.mxu0 0
    %2867 = vmatprep.subr.bf16.mxu0 0
    %2868 = vmatpush1.bf16.msra.mxu0 0
    %2869 = vmatprep.mubr.bf16.mxu0 0
    %2870 = vmatmul.mubr.bf16.gmra.mrb[0].mxu0 %v2835
    %v2871 = vpop.f32.mrb[0].mxu0
    %v2872 = vadd.f32 0.0, %v2871
    %v2873 = vpop.f32.mrb[0].mxu0
    %v2874 = vpop.f32.mrb[0].mxu0
    %v2875 = vpop.f32.mrb[0].mxu0
    %2876 = vdwg.mxu0
    %v2877 = vadd.f32 %v2826, %v2872
    %v2878 = vmax.f32 %v2877, 0.0
    %v2879 = vadd.f32 %v2878, 0.0
    %v2880 = vsub.f32 %v2878, %v2879
    %v2881 = vmul.f32 %v2880, %v2880
    %v2882 = vadd.f32 %v2881, 0.0
    %v2883 = vadd.f32 %v2882, 1e-05
    %v2884 = vrsqrt.pop %v2883
    %v2885 = vmul.f32 %v2880, %v2884
    %v2887 = vlaneseq
    %v2888 = vshrl.u32 %v2887, 7
    %v2889 = vsub.s32 0, %v2888
    %v2890 = vrot.slane %v506, %v2889
    %v2892 = vmul.f32 %v2885, %v2890
    %v2894 = vlaneseq
    %v2895 = vshrl.u32 %v2894, 7
    %v2896 = vsub.s32 0, %v2895
    %v2897 = vrot.slane %v505, %v2896
    %v2899 = vadd.f32 %v2892, %v2897
    %v2900 = vpack.c.bf16 %v2207, %v2206
    %2901 = vmatprep.subr.bf16.mxu0 0
    %2902 = vmatpush1.bf16.msra.mxu0 %v2900
    %2903 = vmatprep.subr.bf16.mxu0 0
    %2904 = vmatpush1.bf16.msra.mxu0 0
    %2905 = vmatprep.subr.bf16.mxu0 0
    %2906 = vmatpush1.bf16.msra.mxu0 0
    %2907 = vmatprep.subr.bf16.mxu0 0
    %2908 = vmatpush1.bf16.msra.mxu0 0
    %2909 = vmatprep.subr.bf16.mxu0 0
    %2910 = vmatpush1.bf16.msra.mxu0 0
    %2911 = vmatprep.subr.bf16.mxu0 0
    %2912 = vmatpush1.bf16.msra.mxu0 0
    %2913 = vmatprep.subr.bf16.mxu0 0
    %2914 = vmatpush1.bf16.msra.mxu0 0
    %2915 = vmatprep.subr.bf16.mxu0 0
    %2916 = vmatpush1.bf16.msra.mxu0 0
    %2917 = vmatprep.subr.bf16.mxu0 0
    %2918 = vmatpush1.bf16.msra.mxu0 0
    %2919 = vmatprep.subr.bf16.mxu0 0
    %2920 = vmatpush1.bf16.msra.mxu0 0
    %2921 = vmatprep.subr.bf16.mxu0 0
    %2922 = vmatpush1.bf16.msra.mxu0 0
    %2923 = vmatprep.subr.bf16.mxu0 0
    %2924 = vmatpush1.bf16.msra.mxu0 0
    %2925 = vmatprep.subr.bf16.mxu0 0
    %2926 = vmatpush1.bf16.msra.mxu0 0
    %2927 = vmatprep.subr.bf16.mxu0 0
    %2928 = vmatpush1.bf16.msra.mxu0 0
    %2929 = vmatprep.subr.bf16.mxu0 0
    %2930 = vmatpush1.bf16.msra.mxu0 0
    %2931 = vmatprep.subr.bf16.mxu0 0
    %2932 = vmatpush1.bf16.msra.mxu0 0
    %2933 = vmatprep.mubr.bf16.mxu0 0
    %2934 = vmatmul.mubr.bf16.gmra.mrb[0].mxu0 %v772
    %v2935 = vpop.f32.mrb[0].mxu0
    %v2936 = vadd.f32 0.0, %v2935
    %v2937 = vpop.f32.mrb[0].mxu0
    %v2938 = vpop.f32.mrb[0].mxu0
    %v2939 = vadd.f32 0.0, %v2938
    %v2940 = vpop.f32.mrb[0].mxu0
    %2941 = vmatprep.mubr.bf16.mxu0 0
    %2942 = vmatmul.mubr.bf16.gmra.mrb[0].mxu0 %v775
    %v2943 = vpop.f32.mrb[0].mxu0
    %v2944 = vadd.f32 0.0, %v2943
    %v2945 = vpop.f32.mrb[0].mxu0
    %v2946 = vpop.f32.mrb[0].mxu0
    %v2947 = vadd.f32 0.0, %v2946
    %v2948 = vpop.f32.mrb[0].mxu0
    %2949 = vdwg.mxu0
    %2950 = vmatprep.subr.bf16.mxu0 0
    %2951 = vmatpush1.bf16.msra.mxu0 %v2900
    %2952 = vmatprep.subr.bf16.mxu0 0
    %2953 = vmatpush1.bf16.msra.mxu0 0
    %2954 = vmatprep.subr.bf16.mxu0 0
    %2955 = vmatpush1.bf16.msra.mxu0 0
    %2956 = vmatprep.subr.bf16.mxu0 0
    %2957 = vmatpush1.bf16.msra.mxu0 0
    %2958 = vmatprep.subr.bf16.mxu0 0
    %2959 = vmatpush1.bf16.msra.mxu0 0
    %2960 = vmatprep.subr.bf16.mxu0 0
    %2961 = vmatpush1.bf16.msra.mxu0 0
    %2962 = vmatprep.subr.bf16.mxu0 0
    %2963 = vmatpush1.bf16.msra.mxu0 0
    %2964 = vmatprep.subr.bf16.mxu0 0
    %2965 = vmatpush1.bf16.msra.mxu0 0
    %2966 = vmatprep.subr.bf16.mxu0 0
    %2967 = vmatpush1.bf16.msra.mxu0 0
    %2968 = vmatprep.subr.bf16.mxu0 0
    %2969 = vmatpush1.bf16.msra.mxu0 0
    %2970 = vmatprep.subr.bf16.mxu0 0
    %2971 = vmatpush1.bf16.msra.mxu0 0
    %2972 = vmatprep.subr.bf16.mxu0 0
    %2973 = vmatpush1.bf16.msra.mxu0 0
    %2974 = vmatprep.subr.bf16.mxu0 0
    %2975 = vmatpush1.bf16.msra.mxu0 0
    %2976 = vmatprep.subr.bf16.mxu0 0
    %2977 = vmatpush1.bf16.msra.mxu0 0
    %2978 = vmatprep.subr.bf16.mxu0 0
    %2979 = vmatpush1.bf16.msra.mxu0 0
    %2980 = vmatprep.subr.bf16.mxu0 0
    %2981 = vmatpush1.bf16.msra.mxu0 0
    %2982 = vmatprep.mubr.bf16.mxu0 0
    %2983 = vmatmul.mubr.bf16.gmra.mrb[0].mxu0 %v837
    %v2984 = vpop.f32.mrb[0].mxu0
    %v2985 = vadd.f32 0.0, %v2984
    %v2986 = vpop.f32.mrb[0].mxu0
    %v2987 = vpop.f32.mrb[0].mxu0
    %v2988 = vadd.f32 0.0, %v2987
    %v2989 = vpop.f32.mrb[0].mxu0
    %2990 = vmatprep.mubr.bf16.mxu0 0
    %2991 = vmatmul.mubr.bf16.gmra.mrb[0].mxu0 %v840
    %v2992 = vpop.f32.mrb[0].mxu0
    %v2993 = vadd.f32 0.0, %v2992
    %v2994 = vpop.f32.mrb[0].mxu0
    %v2995 = vpop.f32.mrb[0].mxu0
    %v2996 = vadd.f32 0.0, %v2995
    %v2997 = vpop.f32.mrb[0].mxu0
    %2998 = vdwg.mxu0
    %v2999 = vpack.c.bf16 %v2899, %v2899
    %v3001 = vsel %vm892, %v2999, 0
    %3003 = vmatprep.subr.bf16.mxu0 0
    %3004 = vmatpush1.bf16.msra.mxu0 %v1316
    %3005 = vmatprep.subr.bf16.mxu0 0
    %3006 = vmatpush1.bf16.msra.mxu0 0
    %3007 = vmatprep.subr.bf16.mxu0 0
    %3008 = vmatpush1.bf16.msra.mxu0 0
    %3009 = vmatprep.subr.bf16.mxu0 0
    %3010 = vmatpush1.bf16.msra.mxu0 0
    %3011 = vmatprep.subr.bf16.mxu0 0
    %3012 = vmatpush1.bf16.msra.mxu0 0
    %3013 = vmatprep.subr.bf16.mxu0 0
    %3014 = vmatpush1.bf16.msra.mxu0 0
    %3015 = vmatprep.subr.bf16.mxu0 0
    %3016 = vmatpush1.bf16.msra.mxu0 0
    %3017 = vmatprep.subr.bf16.mxu0 0
    %3018 = vmatpush1.bf16.msra.mxu0 0
    %3019 = vmatprep.subr.bf16.mxu0 0
    %3020 = vmatpush1.bf16.msra.mxu0 0
    %3021 = vmatprep.subr.bf16.mxu0 0
    %3022 = vmatpush1.bf16.msra.mxu0 0
    %3023 = vmatprep.subr.bf16.mxu0 0
    %3024 = vmatpush1.bf16.msra.mxu0 0
    %3025 = vmatprep.subr.bf16.mxu0 0
    %3026 = vmatpush1.bf16.msra.mxu0 0
    %3027 = vmatprep.subr.bf16.mxu0 0
    %3028 = vmatpush1.bf16.msra.mxu0 0
    %3029 = vmatprep.subr.bf16.mxu0 0
    %3030 = vmatpush1.bf16.msra.mxu0 0
    %3031 = vmatprep.subr.bf16.mxu0 0
    %3032 = vmatpush1.bf16.msra.mxu0 0
    %3033 = vmatprep.subr.bf16.mxu0 0
    %3034 = vmatpush1.bf16.msra.mxu0 0
    %3035 = vmatprep.mubr.bf16.mxu0 0
    %3036 = vmatmul.mubr.bf16.gmra.mrb[0].mxu0 %v3001
    %v3037 = vpop.f32.mrb[0].mxu0
    %v3038 = vadd.f32 0.0, %v3037
    %v3039 = vpop.f32.mrb[0].mxu0
    %v3040 = vpop.f32.mrb[0].mxu0
    %v3041 = vpop.f32.mrb[0].mxu0
    %3042 = vdwg.mxu0
    %v3043 = vlaneseq
    %v3044 = vshrl.u32 %v3043, 7
    %v3045 = vsub.s32 0, %v3044
    %v3046 = vrot.slane %v3038, %v3045
    %v3047 = vlaneseq
    %v3048 = vshrl.u32 %v3047, 7
    %v3049 = vsub.s32 1, %v3048
    %v3050 = vrot.slane %v3038, %v3049
    %v3052 = vsel %vm770, %v1624, 0
    %v3055 = vsel %vm770, %v1625, 0
    %3057 = vmatprep.subr.bf16.mxu0 0
    %3058 = vmatpush1.bf16.msra.mxu0 %v1370
    %3059 = vmatprep.subr.bf16.mxu0 0
    %3060 = vmatpush1.bf16.msra.mxu0 0
    %3061 = vmatprep.subr.bf16.mxu0 0
    %3062 = vmatpush1.bf16.msra.mxu0 0
    %3063 = vmatprep.subr.bf16.mxu0 0
    %3064 = vmatpush1.bf16.msra.mxu0 0
    %3065 = vmatprep.subr.bf16.mxu0 0
    %3066 = vmatpush1.bf16.msra.mxu0 0
    %3067 = vmatprep.subr.bf16.mxu0 0
    %3068 = vmatpush1.bf16.msra.mxu0 0
    %3069 = vmatprep.subr.bf16.mxu0 0
    %3070 = vmatpush1.bf16.msra.mxu0 0
    %3071 = vmatprep.subr.bf16.mxu0 0
    %3072 = vmatpush1.bf16.msra.mxu0 0
    %3073 = vmatprep.subr.bf16.mxu0 0
    %3074 = vmatpush1.bf16.msra.mxu0 0
    %3075 = vmatprep.subr.bf16.mxu0 0
    %3076 = vmatpush1.bf16.msra.mxu0 0
    %3077 = vmatprep.subr.bf16.mxu0 0
    %3078 = vmatpush1.bf16.msra.mxu0 0
    %3079 = vmatprep.subr.bf16.mxu0 0
    %3080 = vmatpush1.bf16.msra.mxu0 0
    %3081 = vmatprep.subr.bf16.mxu0 0
    %3082 = vmatpush1.bf16.msra.mxu0 0
    %3083 = vmatprep.subr.bf16.mxu0 0
    %3084 = vmatpush1.bf16.msra.mxu0 0
    %3085 = vmatprep.subr.bf16.mxu0 0
    %3086 = vmatpush1.bf16.msra.mxu0 0
    %3087 = vmatprep.subr.bf16.mxu0 0
    %3088 = vmatpush1.bf16.msra.mxu0 0
    %3089 = vmatprep.mubr.bf16.mxu0 0
    %3090 = vmatmul.mubr.bf16.gmra.mrb[0].mxu0 %v3052
    %v3091 = vpop.f32.mrb[0].mxu0
    %v3092 = vadd.f32 0.0, %v3091
    %v3093 = vpop.f32.mrb[0].mxu0
    %v3094 = vpop.f32.mrb[0].mxu0
    %v3095 = vadd.f32 0.0, %v3094
    %v3096 = vpop.f32.mrb[0].mxu0
    %3097 = vmatprep.mubr.bf16.mxu0 0
    %3098 = vmatmul.mubr.bf16.gmra.mrb[0].mxu0 %v3055
    %v3099 = vpop.f32.mrb[0].mxu0
    %v3100 = vadd.f32 0.0, %v3099
    %v3101 = vpop.f32.mrb[0].mxu0
    %v3102 = vpop.f32.mrb[0].mxu0
    %v3103 = vadd.f32 0.0, %v3102
    %v3104 = vpop.f32.mrb[0].mxu0
    %3105 = vdwg.mxu0
    %v3106 = vadd.f32 %v1153, %v3092
    %v3107 = vadd.f32 %v1154, %v3095
    %v3108 = vadd.f32 %v1155, %v3100
    %v3109 = vadd.f32 %v1156, %v3103
    %v3110 = vpack.c.bf16 %v2939, %v2936
    %v3111 = vpack.c.bf16 %v2947, %v2944
    %v3113 = vsel %vm770, %v3110, 0
    %v3116 = vsel %vm770, %v3111, 0
    %3118 = vmatprep.subr.bf16.mxu0 0
    %3119 = vmatpush1.bf16.msra.mxu0 %v1429
    %3120 = vmatprep.subr.bf16.mxu0 0
    %3121 = vmatpush1.bf16.msra.mxu0 0
    %3122 = vmatprep.subr.bf16.mxu0 0
    %3123 = vmatpush1.bf16.msra.mxu0 0
    %3124 = vmatprep.subr.bf16.mxu0 0
    %3125 = vmatpush1.bf16.msra.mxu0 0
    %3126 = vmatprep.subr.bf16.mxu0 0
    %3127 = vmatpush1.bf16.msra.mxu0 0
    %3128 = vmatprep.subr.bf16.mxu0 0
    %3129 = vmatpush1.bf16.msra.mxu0 0
    %3130 = vmatprep.subr.bf16.mxu0 0
    %3131 = vmatpush1.bf16.msra.mxu0 0
    %3132 = vmatprep.subr.bf16.mxu0 0
    %3133 = vmatpush1.bf16.msra.mxu0 0
    %3134 = vmatprep.subr.bf16.mxu0 0
    %3135 = vmatpush1.bf16.msra.mxu0 0
    %3136 = vmatprep.subr.bf16.mxu0 0
    %3137 = vmatpush1.bf16.msra.mxu0 0
    %3138 = vmatprep.subr.bf16.mxu0 0
    %3139 = vmatpush1.bf16.msra.mxu0 0
    %3140 = vmatprep.subr.bf16.mxu0 0
    %3141 = vmatpush1.bf16.msra.mxu0 0
    %3142 = vmatprep.subr.bf16.mxu0 0
    %3143 = vmatpush1.bf16.msra.mxu0 0
    %3144 = vmatprep.subr.bf16.mxu0 0
    %3145 = vmatpush1.bf16.msra.mxu0 0
    %3146 = vmatprep.subr.bf16.mxu0 0
    %3147 = vmatpush1.bf16.msra.mxu0 0
    %3148 = vmatprep.subr.bf16.mxu0 0
    %3149 = vmatpush1.bf16.msra.mxu0 0
    %3150 = vmatprep.mubr.bf16.mxu0 0
    %3151 = vmatmul.mubr.bf16.gmra.mrb[0].mxu0 %v3113
    %v3152 = vpop.f32.mrb[0].mxu0
    %v3153 = vadd.f32 0.0, %v3152
    %v3154 = vpop.f32.mrb[0].mxu0
    %v3155 = vpop.f32.mrb[0].mxu0
    %v3156 = vadd.f32 0.0, %v3155
    %v3157 = vpop.f32.mrb[0].mxu0
    %3158 = vmatprep.mubr.bf16.mxu0 0
    %3159 = vmatmul.mubr.bf16.gmra.mrb[0].mxu0 %v3116
    %v3160 = vpop.f32.mrb[0].mxu0
    %v3161 = vadd.f32 0.0, %v3160
    %v3162 = vpop.f32.mrb[0].mxu0
    %v3163 = vpop.f32.mrb[0].mxu0
    %v3164 = vadd.f32 0.0, %v3163
    %v3165 = vpop.f32.mrb[0].mxu0
    %3166 = vdwg.mxu0
    %v3167 = vadd.f32 %v3106, %v3153
    %v3168 = vadd.f32 %v3107, %v3156
    %v3169 = vadd.f32 %v3108, %v3161
    %v3170 = vadd.f32 %v3109, %v3164
    %v3171 = vpack.c.bf16 %v2988, %v2985
    %v3172 = vpack.c.bf16 %v2996, %v2993
    %v3174 = vsel %vm770, %v3171, 0
    %v3177 = vsel %vm770, %v3172, 0
    %3179 = vmatprep.subr.bf16.mxu0 0
    %3180 = vmatpush1.bf16.msra.mxu0 %v1488
    %3181 = vmatprep.subr.bf16.mxu0 0
    %3182 = vmatpush1.bf16.msra.mxu0 0
    %3183 = vmatprep.subr.bf16.mxu0 0
    %3184 = vmatpush1.bf16.msra.mxu0 0
    %3185 = vmatprep.subr.bf16.mxu0 0
    %3186 = vmatpush1.bf16.msra.mxu0 0
    %3187 = vmatprep.subr.bf16.mxu0 0
    %3188 = vmatpush1.bf16.msra.mxu0 0
    %3189 = vmatprep.subr.bf16.mxu0 0
    %3190 = vmatpush1.bf16.msra.mxu0 0
    %3191 = vmatprep.subr.bf16.mxu0 0
    %3192 = vmatpush1.bf16.msra.mxu0 0
    %3193 = vmatprep.subr.bf16.mxu0 0
    %3194 = vmatpush1.bf16.msra.mxu0 0
    %3195 = vmatprep.subr.bf16.mxu0 0
    %3196 = vmatpush1.bf16.msra.mxu0 0
    %3197 = vmatprep.subr.bf16.mxu0 0
    %3198 = vmatpush1.bf16.msra.mxu0 0
    %3199 = vmatprep.subr.bf16.mxu0 0
    %3200 = vmatpush1.bf16.msra.mxu0 0
    %3201 = vmatprep.subr.bf16.mxu0 0
    %3202 = vmatpush1.bf16.msra.mxu0 0
    %3203 = vmatprep.subr.bf16.mxu0 0
    %3204 = vmatpush1.bf16.msra.mxu0 0
    %3205 = vmatprep.subr.bf16.mxu0 0
    %3206 = vmatpush1.bf16.msra.mxu0 0
    %3207 = vmatprep.subr.bf16.mxu0 0
    %3208 = vmatpush1.bf16.msra.mxu0 0
    %3209 = vmatprep.subr.bf16.mxu0 0
    %3210 = vmatpush1.bf16.msra.mxu0 0
    %3211 = vmatprep.mubr.bf16.mxu0 0
    %3212 = vmatmul.mubr.bf16.gmra.mrb[0].mxu0 %v3174
    %v3213 = vpop.f32.mrb[0].mxu0
    %v3214 = vadd.f32 0.0, %v3213
    %v3215 = vpop.f32.mrb[0].mxu0
    %v3216 = vpop.f32.mrb[0].mxu0
    %v3217 = vadd.f32 0.0, %v3216
    %v3218 = vpop.f32.mrb[0].mxu0
    %3219 = vmatprep.mubr.bf16.mxu0 0
    %3220 = vmatmul.mubr.bf16.gmra.mrb[0].mxu0 %v3177
    %v3221 = vpop.f32.mrb[0].mxu0
    %v3222 = vadd.f32 0.0, %v3221
    %v3223 = vpop.f32.mrb[0].mxu0
    %v3224 = vpop.f32.mrb[0].mxu0
    %v3225 = vadd.f32 0.0, %v3224
    %v3226 = vpop.f32.mrb[0].mxu0
    %3227 = vdwg.mxu0
    %v3228 = vadd.f32 %v3167, %v3214
    %v3229 = vadd.f32 %v3168, %v3217
    %v3230 = vadd.f32 %v3169, %v3222
    %v3231 = vadd.f32 %v3170, %v3225
    %v3232 = vadd.f32 %v3228, %v3046
    %v3233 = vadd.f32 %v3229, %v3046
    %v3234 = vadd.f32 %v3230, %v3050
    %v3235 = vadd.f32 %v3231, %v3050
    %v3236 = vmax.f32 %v3232, 0.0
    %v3237 = vmax.f32 %v3233, 0.0
    %v3238 = vmax.f32 %v3234, 0.0
    %v3239 = vmax.f32 %v3235, 0.0
    %v3240 = vsel %vm770, %v3236, 0.0
    %3241 = vadd.xlane.f32.xlu0 %v3240
    %v3242 = vpop.xlane.xlu0 %3241
    %v3243 = vsel %vm770, %v3237, 0.0
    %3244 = vadd.xlane.f32.xlu0 %v3243
    %v3245 = vpop.xlane.xlu0 %3244
    %v3246 = vsel %vm770, %v3238, 0.0
    %3247 = vadd.xlane.f32.xlu0 %v3246
    %v3248 = vpop.xlane.xlu0 %3247
    %v3249 = vsel %vm770, %v3239, 0.0
    %3250 = vadd.xlane.f32.xlu0 %v3249
    %v3251 = vpop.xlane.xlu0 %3250
    %v3252 = vmul.f32 %v3242, %v1563
    %v3253 = vmul.f32 %v3245, %v1563
    %v3254 = vmul.f32 %v3248, %v1563
    %v3255 = vmul.f32 %v3251, %v1563
    %v3256 = vsub.f32 %v3236, %v3252
    %v3257 = vsub.f32 %v3237, %v3253
    %v3258 = vsub.f32 %v3238, %v3254
    %v3259 = vsub.f32 %v3239, %v3255
    %v3260 = vmul.f32 %v3256, %v3256
    %v3261 = vmul.f32 %v3257, %v3257
    %v3262 = vmul.f32 %v3258, %v3258
    %v3263 = vmul.f32 %v3259, %v3259
    %v3264 = vsel %vm770, %v3260, 0.0
    %3265 = vadd.xlane.f32.xlu0 %v3264
    %v3266 = vpop.xlane.xlu0 %3265
    %v3267 = vsel %vm770, %v3261, 0.0
    %3268 = vadd.xlane.f32.xlu0 %v3267
    %v3269 = vpop.xlane.xlu0 %3268
    %v3270 = vsel %vm770, %v3262, 0.0
    %3271 = vadd.xlane.f32.xlu0 %v3270
    %v3272 = vpop.xlane.xlu0 %3271
    %v3273 = vsel %vm770, %v3263, 0.0
    %3274 = vadd.xlane.f32.xlu0 %v3273
    %v3275 = vpop.xlane.xlu0 %3274
    %v3276 = vmul.f32 %v3266, %v1563
    %v3277 = vmul.f32 %v3269, %v1563
    %v3278 = vmul.f32 %v3272, %v1563
    %v3279 = vmul.f32 %v3275, %v1563
    %v3280 = vadd.f32 %v3276, 1e-05
    %v3281 = vadd.f32 %v3277, 1e-05
    %v3282 = vadd.f32 %v3278, 1e-05
    %v3283 = vadd.f32 %v3279, 1e-05
    %v3284 = vrsqrt.pop %v3280
    %v3285 = vrsqrt.pop %v3281
    %v3286 = vrsqrt.pop %v3282
    %v3287 = vrsqrt.pop %v3283
    %v3288 = vmul.f32 %v3256, %v3284
    %v3289 = vmul.f32 %v3257, %v3285
    %v3290 = vmul.f32 %v3258, %v3286
    %v3291 = vmul.f32 %v3259, %v3287
    %v3292 = vmul.f32 %v3288, %v1608
    %v3293 = vmul.f32 %v3289, %v1608
    %v3294 = vmul.f32 %v3290, %v1608
    %v3295 = vmul.f32 %v3291, %v1608
    %v3296 = vadd.f32 %v3292, %v1618
    %v3297 = vadd.f32 %v3293, %v1618
    %v3298 = vadd.f32 %v3294, %v1618
    %v3299 = vadd.f32 %v3295, %v1618
    %v3300 = vpack.c.bf16 %v3297, %v3296
    %v3301 = vpack.c.bf16 %v3299, %v3298
    %3302 = vmatprep.subr.bf16.mxu0 0
    %3303 = vmatpush1.bf16.msra.mxu0 %v3300
    %3304 = vmatprep.subr.bf16.mxu0 0
    %3305 = vmatpush1.bf16.msra.mxu0 %v3301
    %3306 = vmatprep.subr.bf16.mxu0 0
    %3307 = vmatpush1.bf16.msra.mxu0 0
    %3308 = vmatprep.subr.bf16.mxu0 0
    %3309 = vmatpush1.bf16.msra.mxu0 0
    %3310 = vmatprep.subr.bf16.mxu0 0
    %3311 = vmatpush1.bf16.msra.mxu0 0
    %3312 = vmatprep.subr.bf16.mxu0 0
    %3313 = vmatpush1.bf16.msra.mxu0 0
    %3314 = vmatprep.subr.bf16.mxu0 0
    %3315 = vmatpush1.bf16.msra.mxu0 0
    %3316 = vmatprep.subr.bf16.mxu0 0
    %3317 = vmatpush1.bf16.msra.mxu0 0
    %3318 = vmatprep.subr.bf16.mxu0 0
    %3319 = vmatpush1.bf16.msra.mxu0 0
    %3320 = vmatprep.subr.bf16.mxu0 0
    %3321 = vmatpush1.bf16.msra.mxu0 0
    %3322 = vmatprep.subr.bf16.mxu0 0
    %3323 = vmatpush1.bf16.msra.mxu0 0
    %3324 = vmatprep.subr.bf16.mxu0 0
    %3325 = vmatpush1.bf16.msra.mxu0 0
    %3326 = vmatprep.subr.bf16.mxu0 0
    %3327 = vmatpush1.bf16.msra.mxu0 0
    %3328 = vmatprep.subr.bf16.mxu0 0
    %3329 = vmatpush1.bf16.msra.mxu0 0
    %3330 = vmatprep.subr.bf16.mxu0 0
    %3331 = vmatpush1.bf16.msra.mxu0 0
    %3332 = vmatprep.subr.bf16.mxu0 0
    %3333 = vmatpush1.bf16.msra.mxu0 0
    %3334 = vmatprep.mubr.bf16.mxu0 0
    %3335 = vmatmul.mubr.bf16.gmra.mrb[0].mxu0 %v1646
    %v3336 = vpop.f32.mrb[0].mxu0
    %v3337 = vadd.f32 0.0, %v3336
    %v3338 = vpop.f32.mrb[0].mxu0
    %v3339 = vpop.f32.mrb[0].mxu0
    %v3340 = vadd.f32 0.0, %v3339
    %v3341 = vpop.f32.mrb[0].mxu0
    %3342 = vdwg.mxu0
    %v3343 = vmul.f32 %v3337, %v1692
    %v3344 = vmul.f32 %v3340, %v1697
    loop: start=0, step=1, limit=16
    $region345: #{tpu_custom_call.1} parent=1 // loop_pre_header
      _
    $region346: #{tpu_custom_call.1} parent=1 // loop_header
      %s3346 = sphi 0, %s3350
      %p3347 = scmp.ge.s32.totalorder %s3346, 16
    $region347: #{tpu_custom_call.1} parent=1 // loop_header_branch
      %3349 = sbr.rel (%p3347) target = $region351
    $region348: #{tpu_custom_call.1} parent=1 // loop_body
      %v3351 = vstv %s3346
      %vm3352 = vcmp.eq.s32.totalorder %v479, %v3351
      %vm3353 = vcmp.eq.s32.totalorder %v480, %v3351
      %vm3354 = vcmp.eq.s32.totalorder %v481, %v3351
      %vm3355 = vcmp.eq.s32.totalorder %v482, %v3351
      %v3356 = vsel %vm3352, 1, 0
      %v3357 = vsel %vm3353, 1, 0
      %v3358 = vsel %vm3354, 1, 0
      %v3359 = vsel %vm3355, 1, 0
      %3360 = vset.pattern.permute.xlu0 0
      %3361 = vperm.xlu0 %3360, %v3356
      %v3362 = vpop.permute.xlu0 %3361
      %3363 = vset.pattern.permute.xlu0 0
      %3364 = vperm.xlu0 %3363, %v3357
      %v3365 = vpop.permute.xlu0 %3364
      %3366 = vset.pattern.permute.xlu0 0
      %3367 = vperm.xlu0 %3366, %v3358
      %v3368 = vpop.permute.xlu0 %3367
      %3369 = vset.pattern.permute.xlu0 0
      %3370 = vperm.xlu0 %3369, %v3359
      %v3371 = vpop.permute.xlu0 %3370
      %vm3372 = vcmp.eq.s32.totalorder %v3362, 1
      %vm3373 = vcmp.eq.s32.totalorder %v3365, 1
      %vm3374 = vcmp.eq.s32.totalorder %v3368, 1
      %vm3375 = vcmp.eq.s32.totalorder %v3371, 1
      %v3376 = vsel %vm3372, %v3296, -3.4028235e+38
      %v3377 = vsel %vm3373, %v3297, -3.4028235e+38
      %v3378 = vsel %vm3374, %v3298, -3.4028235e+38
      %v3379 = vsel %vm3375, %v3299, -3.4028235e+38
      %v3380 = vsel %vm770, %v3376, -inf
      %v3381 = vsel %vm770, %v3377, -inf
      %v3382 = vsel %vm770, %v3378, -inf
      %v3383 = vsel %vm770, %v3379, -inf
      %v3384 = vmax.f32 %v3380, %v3381
      %v3385 = vmax.f32 %v3382, %v3383
      %v3386 = vmax.f32 %v3384, %v3385
      %v3387 = vrot.slane %v3386, 4
      %v3388 = vmax.f32 %v3386, %v3387
      %v3389 = vrot.slane %v3388, 2
      %v3390 = vmax.f32 %v3388, %v3389
      %v3391 = vrot.slane %v3390, 1
      %v3392 = vmax.f32 %v3390, %v3391
      %s3393 = scalar_lea.vmem [#allocation2], %s3346
      %vm3394 = vcmask 122880
      %3395 = vst.msk [vmem:[%s3393] sm:$0x1] %vm3394, %v3392
      %v3396 = vsel %vm3372, %v3296, 3.4028235e+38
      %v3397 = vsel %vm3373, %v3297, 3.4028235e+38
      %v3398 = vsel %vm3374, %v3298, 3.4028235e+38
      %v3399 = vsel %vm3375, %v3299, 3.4028235e+38
      %v3400 = vsel %vm770, %v3396, inf
      %v3401 = vsel %vm770, %v3397, inf
      %v3402 = vsel %vm770, %v3398, inf
      %v3403 = vsel %vm770, %v3399, inf
      %v3404 = vmin.f32 %v3400, %v3401
      %v3405 = vmin.f32 %v3402, %v3403
      %v3406 = vmin.f32 %v3404, %v3405
      %v3407 = vrot.slane %v3406, 4
      %v3408 = vmin.f32 %v3406, %v3407
      %v3409 = vrot.slane %v3408, 2
      %v3410 = vmin.f32 %v3408, %v3409
      %v3411 = vrot.slane %v3410, 1
      %v3412 = vmin.f32 %v3410, %v3411
      %s3413 = scalar_lea.vmem [#allocation3], %s3346
      %3414 = vst.msk [vmem:[%s3413] sm:$0x1] %vm3394, %v3412
    $region349: #{tpu_custom_call.1} parent=1 // loop_footer
      %s3350 = sadd.s32 1, %s3346
    $region350: #{tpu_custom_call.1} parent=1 // loop_footer_branch
      %3345 = sbr.rel target = $region346
    $region351: #{tpu_custom_call.1} parent=1 // loop_exit
      _
    %v3415 = vld [vmem:[#allocation2] sm:$0xff]
    %v3416 = vld [vmem:[#allocation2 + $0x8] sm:$0xff]
    %v3417 = vsel %vm1783, %v3415, 0.0
    %v3418 = vsel %vm1784, %v3416, 0.0
    %v3419 = vld [vmem:[#allocation3] sm:$0xff]
    %v3420 = vld [vmem:[#allocation3 + $0x8] sm:$0xff]
    %v3421 = vsel %vm1783, %v3419, 0.0
    %v3422 = vsel %vm1784, %v3420, 0.0
    %v3423 = vpack.c.bf16 %v3340, %v3337
    %v3424 = vpack.c.bf16 %v3418, %v3417
    %v3426 = vsel %vm770, %v3424, 0
    %3428 = vmatprep.subr.bf16.mxu0 0
    %3429 = vmatpush1.bf16.msra.mxu0 %v1797
    %3430 = vmatprep.subr.bf16.mxu0 0
    %3431 = vmatpush1.bf16.msra.mxu0 0
    %3432 = vmatprep.subr.bf16.mxu0 0
    %3433 = vmatpush1.bf16.msra.mxu0 0
    %3434 = vmatprep.subr.bf16.mxu0 0
    %3435 = vmatpush1.bf16.msra.mxu0 0
    %3436 = vmatprep.subr.bf16.mxu0 0
    %3437 = vmatpush1.bf16.msra.mxu0 0
    %3438 = vmatprep.subr.bf16.mxu0 0
    %3439 = vmatpush1.bf16.msra.mxu0 0
    %3440 = vmatprep.subr.bf16.mxu0 0
    %3441 = vmatpush1.bf16.msra.mxu0 0
    %3442 = vmatprep.subr.bf16.mxu0 0
    %3443 = vmatpush1.bf16.msra.mxu0 0
    %3444 = vmatprep.subr.bf16.mxu0 0
    %3445 = vmatpush1.bf16.msra.mxu0 0
    %3446 = vmatprep.subr.bf16.mxu0 0
    %3447 = vmatpush1.bf16.msra.mxu0 0
    %3448 = vmatprep.subr.bf16.mxu0 0
    %3449 = vmatpush1.bf16.msra.mxu0 0
    %3450 = vmatprep.subr.bf16.mxu0 0
    %3451 = vmatpush1.bf16.msra.mxu0 0
    %3452 = vmatprep.subr.bf16.mxu0 0
    %3453 = vmatpush1.bf16.msra.mxu0 0
    %3454 = vmatprep.subr.bf16.mxu0 0
    %3455 = vmatpush1.bf16.msra.mxu0 0
    %3456 = vmatprep.subr.bf16.mxu0 0
    %3457 = vmatpush1.bf16.msra.mxu0 0
    %3458 = vmatprep.subr.bf16.mxu0 0
    %3459 = vmatpush1.bf16.msra.mxu0 0
    %3460 = vmatprep.mubr.bf16.mxu0 0
    %3461 = vmatmul.mubr.bf16.gmra.mrb[0].mxu0 %v3426
    %v3462 = vpop.f32.mrb[0].mxu0
    %v3463 = vadd.f32 0.0, %v3462
    %v3464 = vpop.f32.mrb[0].mxu0
    %v3465 = vpop.f32.mrb[0].mxu0
    %v3466 = vadd.f32 0.0, %v3465
    %v3467 = vpop.f32.mrb[0].mxu0
    %3468 = vdwg.mxu0
    %v3470 = vsel %vm770, %v3423, 0
    %3472 = vmatprep.subr.bf16.mxu0 0
    %3473 = vmatpush1.bf16.msra.mxu0 %v1847
    %3474 = vmatprep.subr.bf16.mxu0 0
    %3475 = vmatpush1.bf16.msra.mxu0 0
    %3476 = vmatprep.subr.bf16.mxu0 0
    %3477 = vmatpush1.bf16.msra.mxu0 0
    %3478 = vmatprep.subr.bf16.mxu0 0
    %3479 = vmatpush1.bf16.msra.mxu0 0
    %3480 = vmatprep.subr.bf16.mxu0 0
    %3481 = vmatpush1.bf16.msra.mxu0 0
    %3482 = vmatprep.subr.bf16.mxu0 0
    %3483 = vmatpush1.bf16.msra.mxu0 0
    %3484 = vmatprep.subr.bf16.mxu0 0
    %3485 = vmatpush1.bf16.msra.mxu0 0
    %3486 = vmatprep.subr.bf16.mxu0 0
    %3487 = vmatpush1.bf16.msra.mxu0 0
    %3488 = vmatprep.subr.bf16.mxu0 0
    %3489 = vmatpush1.bf16.msra.mxu0 0
    %3490 = vmatprep.subr.bf16.mxu0 0
    %3491 = vmatpush1.bf16.msra.mxu0 0
    %3492 = vmatprep.subr.bf16.mxu0 0
    %3493 = vmatpush1.bf16.msra.mxu0 0
    %3494 = vmatprep.subr.bf16.mxu0 0
    %3495 = vmatpush1.bf16.msra.mxu0 0
    %3496 = vmatprep.subr.bf16.mxu0 0
    %3497 = vmatpush1.bf16.msra.mxu0 0
    %3498 = vmatprep.subr.bf16.mxu0 0
    %3499 = vmatpush1.bf16.msra.mxu0 0
    %3500 = vmatprep.subr.bf16.mxu0 0
    %3501 = vmatpush1.bf16.msra.mxu0 0
    %3502 = vmatprep.subr.bf16.mxu0 0
    %3503 = vmatpush1.bf16.msra.mxu0 0
    %3504 = vmatprep.mubr.bf16.mxu0 0
    %3505 = vmatmul.mubr.bf16.gmra.mrb[0].mxu0 %v3470
    %v3506 = vpop.f32.mrb[0].mxu0
    %v3507 = vadd.f32 %v3463, %v3506
    %v3508 = vpop.f32.mrb[0].mxu0
    %v3509 = vpop.f32.mrb[0].mxu0
    %v3510 = vadd.f32 %v3466, %v3509
    %v3511 = vpop.f32.mrb[0].mxu0
    %3512 = vdwg.mxu0
    %v3513 = vpack.c.bf16 %v3344, %v3343
    %v3515 = vsel %vm770, %v3513, 0
    %3517 = vmatprep.subr.bf16.mxu0 0
    %3518 = vmatpush1.bf16.msra.mxu0 %v1898
    %3519 = vmatprep.subr.bf16.mxu0 0
    %3520 = vmatpush1.bf16.msra.mxu0 0
    %3521 = vmatprep.subr.bf16.mxu0 0
    %3522 = vmatpush1.bf16.msra.mxu0 0
    %3523 = vmatprep.subr.bf16.mxu0 0
    %3524 = vmatpush1.bf16.msra.mxu0 0
    %3525 = vmatprep.subr.bf16.mxu0 0
    %3526 = vmatpush1.bf16.msra.mxu0 0
    %3527 = vmatprep.subr.bf16.mxu0 0
    %3528 = vmatpush1.bf16.msra.mxu0 0
    %3529 = vmatprep.subr.bf16.mxu0 0
    %3530 = vmatpush1.bf16.msra.mxu0 0
    %3531 = vmatprep.subr.bf16.mxu0 0
    %3532 = vmatpush1.bf16.msra.mxu0 0
    %3533 = vmatprep.subr.bf16.mxu0 0
    %3534 = vmatpush1.bf16.msra.mxu0 0
    %3535 = vmatprep.subr.bf16.mxu0 0
    %3536 = vmatpush1.bf16.msra.mxu0 0
    %3537 = vmatprep.subr.bf16.mxu0 0
    %3538 = vmatpush1.bf16.msra.mxu0 0
    %3539 = vmatprep.subr.bf16.mxu0 0
    %3540 = vmatpush1.bf16.msra.mxu0 0
    %3541 = vmatprep.subr.bf16.mxu0 0
    %3542 = vmatpush1.bf16.msra.mxu0 0
    %3543 = vmatprep.subr.bf16.mxu0 0
    %3544 = vmatpush1.bf16.msra.mxu0 0
    %3545 = vmatprep.subr.bf16.mxu0 0
    %3546 = vmatpush1.bf16.msra.mxu0 0
    %3547 = vmatprep.subr.bf16.mxu0 0
    %3548 = vmatpush1.bf16.msra.mxu0 0
    %3549 = vmatprep.mubr.bf16.mxu0 0
    %3550 = vmatmul.mubr.bf16.gmra.mrb[0].mxu0 %v3515
    %v3551 = vpop.f32.mrb[0].mxu0
    %v3552 = vadd.f32 0.0, %v3551
    %v3553 = vpop.f32.mrb[0].mxu0
    %v3554 = vpop.f32.mrb[0].mxu0
    %v3555 = vadd.f32 0.0, %v3554
    %v3556 = vpop.f32.mrb[0].mxu0
    %3557 = vdwg.mxu0
    %v3558 = vadd.f32 %v3507, %v3552
    %v3559 = vadd.f32 %v3510, %v3555
    %v3560 = vpack.c.bf16 %v3422, %v3421
    %v3562 = vsel %vm770, %v3560, 0
    %3564 = vmatprep.subr.bf16.mxu0 0
    %3565 = vmatpush1.bf16.msra.mxu0 %v1951
    %3566 = vmatprep.subr.bf16.mxu0 0
    %3567 = vmatpush1.bf16.msra.mxu0 0
    %3568 = vmatprep.subr.bf16.mxu0 0
    %3569 = vmatpush1.bf16.msra.mxu0 0
    %3570 = vmatprep.subr.bf16.mxu0 0
    %3571 = vmatpush1.bf16.msra.mxu0 0
    %3572 = vmatprep.subr.bf16.mxu0 0
    %3573 = vmatpush1.bf16.msra.mxu0 0
    %3574 = vmatprep.subr.bf16.mxu0 0
    %3575 = vmatpush1.bf16.msra.mxu0 0
    %3576 = vmatprep.subr.bf16.mxu0 0
    %3577 = vmatpush1.bf16.msra.mxu0 0
    %3578 = vmatprep.subr.bf16.mxu0 0
    %3579 = vmatpush1.bf16.msra.mxu0 0
    %3580 = vmatprep.subr.bf16.mxu0 0
    %3581 = vmatpush1.bf16.msra.mxu0 0
    %3582 = vmatprep.subr.bf16.mxu0 0
    %3583 = vmatpush1.bf16.msra.mxu0 0
    %3584 = vmatprep.subr.bf16.mxu0 0
    %3585 = vmatpush1.bf16.msra.mxu0 0
    %3586 = vmatprep.subr.bf16.mxu0 0
    %3587 = vmatpush1.bf16.msra.mxu0 0
    %3588 = vmatprep.subr.bf16.mxu0 0
    %3589 = vmatpush1.bf16.msra.mxu0 0
    %3590 = vmatprep.subr.bf16.mxu0 0
    %3591 = vmatpush1.bf16.msra.mxu0 0
    %3592 = vmatprep.subr.bf16.mxu0 0
    %3593 = vmatpush1.bf16.msra.mxu0 0
    %3594 = vmatprep.subr.bf16.mxu0 0
    %3595 = vmatpush1.bf16.msra.mxu0 0
    %3596 = vmatprep.mubr.bf16.mxu0 0
    %3597 = vmatmul.mubr.bf16.gmra.mrb[0].mxu0 %v3562
    %v3598 = vpop.f32.mrb[0].mxu0
    %v3599 = vadd.f32 0.0, %v3598
    %v3600 = vpop.f32.mrb[0].mxu0
    %v3601 = vpop.f32.mrb[0].mxu0
    %v3602 = vadd.f32 0.0, %v3601
    %v3603 = vpop.f32.mrb[0].mxu0
    %3604 = vdwg.mxu0
    %v3605 = vadd.f32 %v3558, %v3599
    %v3606 = vadd.f32 %v3559, %v3602
    %v3607 = vadd.f32 %v3605, %v2003
    %v3608 = vadd.f32 %v3606, %v2003
    %v3609 = vmax.f32 %v3607, 0.0
    %v3610 = vmax.f32 %v3608, 0.0
    %3611 = vmatprep.subr.bf16.mxu0 0
    %3612 = vmatpush1.bf16.msra.mxu0 %v2010
    %3613 = vmatprep.subr.bf16.mxu0 0
    %3614 = vmatpush1.bf16.msra.mxu0 0
    %3615 = vmatprep.subr.bf16.mxu0 0
    %3616 = vmatpush1.bf16.msra.mxu0 0
    %3617 = vmatprep.subr.bf16.mxu0 0
    %3618 = vmatpush1.bf16.msra.mxu0 0
    %3619 = vmatprep.subr.bf16.mxu0 0
    %3620 = vmatpush1.bf16.msra.mxu0 0
    %3621 = vmatprep.subr.bf16.mxu0 0
    %3622 = vmatpush1.bf16.msra.mxu0 0
    %3623 = vmatprep.subr.bf16.mxu0 0
    %3624 = vmatpush1.bf16.msra.mxu0 0
    %3625 = vmatprep.subr.bf16.mxu0 0
    %3626 = vmatpush1.bf16.msra.mxu0 0
    %3627 = vmatprep.subr.bf16.mxu0 0
    %3628 = vmatpush1.bf16.msra.mxu0 0
    %3629 = vmatprep.subr.bf16.mxu0 0
    %3630 = vmatpush1.bf16.msra.mxu0 0
    %3631 = vmatprep.subr.bf16.mxu0 0
    %3632 = vmatpush1.bf16.msra.mxu0 0
    %3633 = vmatprep.subr.bf16.mxu0 0
    %3634 = vmatpush1.bf16.msra.mxu0 0
    %3635 = vmatprep.subr.bf16.mxu0 0
    %3636 = vmatpush1.bf16.msra.mxu0 0
    %3637 = vmatprep.subr.bf16.mxu0 0
    %3638 = vmatpush1.bf16.msra.mxu0 0
    %3639 = vmatprep.subr.bf16.mxu0 0
    %3640 = vmatpush1.bf16.msra.mxu0 0
    %3641 = vmatprep.subr.bf16.mxu0 0
    %3642 = vmatpush1.bf16.msra.mxu0 0
    %3643 = vmatprep.mubr.bf16.mxu0 0
    %3644 = vmatmul.mubr.bf16.gmra.mrb[0].mxu0 %v3001
    %v3645 = vpop.f32.mrb[0].mxu0
    %v3646 = vadd.f32 0.0, %v3645
    %v3647 = vpop.f32.mrb[0].mxu0
    %v3648 = vpop.f32.mrb[0].mxu0
    %v3649 = vpop.f32.mrb[0].mxu0
    %3650 = vdwg.mxu0
    %v3651 = vlaneseq
    %v3652 = vshrl.u32 %v3651, 7
    %v3653 = vsub.s32 0, %v3652
    %v3654 = vrot.slane %v3646, %v3653
    %v3655 = vlaneseq
    %v3656 = vshrl.u32 %v3655, 7
    %v3657 = vsub.s32 1, %v3656
    %v3658 = vrot.slane %v3646, %v3657
    %v3660 = vsel %vm770, %v2900, 0
    %3662 = vmatprep.subr.bf16.mxu0 0
    %3663 = vmatpush1.bf16.msra.mxu0 %v2064
    %3664 = vmatprep.subr.bf16.mxu0 0
    %3665 = vmatpush1.bf16.msra.mxu0 0
    %3666 = vmatprep.subr.bf16.mxu0 0
    %3667 = vmatpush1.bf16.msra.mxu0 0
    %3668 = vmatprep.subr.bf16.mxu0 0
    %3669 = vmatpush1.bf16.msra.mxu0 0
    %3670 = vmatprep.subr.bf16.mxu0 0
    %3671 = vmatpush1.bf16.msra.mxu0 0
    %3672 = vmatprep.subr.bf16.mxu0 0
    %3673 = vmatpush1.bf16.msra.mxu0 0
    %3674 = vmatprep.subr.bf16.mxu0 0
    %3675 = vmatpush1.bf16.msra.mxu0 0
    %3676 = vmatprep.subr.bf16.mxu0 0
    %3677 = vmatpush1.bf16.msra.mxu0 0
    %3678 = vmatprep.subr.bf16.mxu0 0
    %3679 = vmatpush1.bf16.msra.mxu0 0
    %3680 = vmatprep.subr.bf16.mxu0 0
    %3681 = vmatpush1.bf16.msra.mxu0 0
    %3682 = vmatprep.subr.bf16.mxu0 0
    %3683 = vmatpush1.bf16.msra.mxu0 0
    %3684 = vmatprep.subr.bf16.mxu0 0
    %3685 = vmatpush1.bf16.msra.mxu0 0
    %3686 = vmatprep.subr.bf16.mxu0 0
    %3687 = vmatpush1.bf16.msra.mxu0 0
    %3688 = vmatprep.subr.bf16.mxu0 0
    %3689 = vmatpush1.bf16.msra.mxu0 0
    %3690 = vmatprep.subr.bf16.mxu0 0
    %3691 = vmatpush1.bf16.msra.mxu0 0
    %3692 = vmatprep.subr.bf16.mxu0 0
    %3693 = vmatpush1.bf16.msra.mxu0 0
    %3694 = vmatprep.mubr.bf16.mxu0 0
    %3695 = vmatmul.mubr.bf16.gmra.mrb[0].mxu0 %v3660
    %v3696 = vpop.f32.mrb[0].mxu0
    %v3697 = vadd.f32 0.0, %v3696
    %v3698 = vpop.f32.mrb[0].mxu0
    %v3699 = vpop.f32.mrb[0].mxu0
    %v3700 = vadd.f32 0.0, %v3699
    %v3701 = vpop.f32.mrb[0].mxu0
    %3702 = vdwg.mxu0
    %v3703 = vadd.f32 %v1264, %v3697
    %v3704 = vadd.f32 %v1265, %v3700
    %v3705 = vpack.c.bf16 %v3610, %v3609
    %v3707 = vsel %vm770, %v3705, 0
    %3709 = vmatprep.subr.bf16.mxu0 0
    %3710 = vmatpush1.bf16.msra.mxu0 %v2114
    %3711 = vmatprep.subr.bf16.mxu0 0
    %3712 = vmatpush1.bf16.msra.mxu0 0
    %3713 = vmatprep.subr.bf16.mxu0 0
    %3714 = vmatpush1.bf16.msra.mxu0 0
    %3715 = vmatprep.subr.bf16.mxu0 0
    %3716 = vmatpush1.bf16.msra.mxu0 0
    %3717 = vmatprep.subr.bf16.mxu0 0
    %3718 = vmatpush1.bf16.msra.mxu0 0
    %3719 = vmatprep.subr.bf16.mxu0 0
    %3720 = vmatpush1.bf16.msra.mxu0 0
    %3721 = vmatprep.subr.bf16.mxu0 0
    %3722 = vmatpush1.bf16.msra.mxu0 0
    %3723 = vmatprep.subr.bf16.mxu0 0
    %3724 = vmatpush1.bf16.msra.mxu0 0
    %3725 = vmatprep.subr.bf16.mxu0 0
    %3726 = vmatpush1.bf16.msra.mxu0 0
    %3727 = vmatprep.subr.bf16.mxu0 0
    %3728 = vmatpush1.bf16.msra.mxu0 0
    %3729 = vmatprep.subr.bf16.mxu0 0
    %3730 = vmatpush1.bf16.msra.mxu0 0
    %3731 = vmatprep.subr.bf16.mxu0 0
    %3732 = vmatpush1.bf16.msra.mxu0 0
    %3733 = vmatprep.subr.bf16.mxu0 0
    %3734 = vmatpush1.bf16.msra.mxu0 0
    %3735 = vmatprep.subr.bf16.mxu0 0
    %3736 = vmatpush1.bf16.msra.mxu0 0
    %3737 = vmatprep.subr.bf16.mxu0 0
    %3738 = vmatpush1.bf16.msra.mxu0 0
    %3739 = vmatprep.subr.bf16.mxu0 0
    %3740 = vmatpush1.bf16.msra.mxu0 0
    %3741 = vmatprep.mubr.bf16.mxu0 0
    %3742 = vmatmul.mubr.bf16.gmra.mrb[0].mxu0 %v3707
    %v3743 = vpop.f32.mrb[0].mxu0
    %v3744 = vadd.f32 0.0, %v3743
    %v3745 = vpop.f32.mrb[0].mxu0
    %v3746 = vpop.f32.mrb[0].mxu0
    %v3747 = vadd.f32 0.0, %v3746
    %v3748 = vpop.f32.mrb[0].mxu0
    %3749 = vdwg.mxu0
    %v3750 = vadd.f32 %v3703, %v3744
    %v3751 = vadd.f32 %v3704, %v3747
    %v3752 = vadd.f32 %v3750, %v3654
    %v3753 = vadd.f32 %v3751, %v3658
    %v3754 = vmax.f32 %v3752, 0.0
    %v3755 = vmax.f32 %v3753, 0.0
    %v3756 = vsel %vm770, %v3754, 0.0
    %3757 = vadd.xlane.f32.xlu0 %v3756
    %v3758 = vpop.xlane.xlu0 %3757
    %v3759 = vsel %vm770, %v3755, 0.0
    %3760 = vadd.xlane.f32.xlu0 %v3759
    %v3761 = vpop.xlane.xlu0 %3760
    %v3762 = vmul.f32 %v3758, %v1563
    %v3763 = vmul.f32 %v3761, %v1563
    %v3764 = vsub.f32 %v3754, %v3762
    %v3765 = vsub.f32 %v3755, %v3763
    %v3766 = vmul.f32 %v3764, %v3764
    %v3767 = vmul.f32 %v3765, %v3765
    %v3768 = vsel %vm770, %v3766, 0.0
    %3769 = vadd.xlane.f32.xlu0 %v3768
    %v3770 = vpop.xlane.xlu0 %3769
    %v3771 = vsel %vm770, %v3767, 0.0
    %3772 = vadd.xlane.f32.xlu0 %v3771
    %v3773 = vpop.xlane.xlu0 %3772
    %v3774 = vmul.f32 %v3770, %v1563
    %v3775 = vmul.f32 %v3773, %v1563
    %v3776 = vadd.f32 %v3774, 1e-05
    %v3777 = vadd.f32 %v3775, 1e-05
    %v3778 = vrsqrt.pop %v3776
    %v3779 = vrsqrt.pop %v3777
    %v3780 = vmul.f32 %v3764, %v3778
    %v3781 = vmul.f32 %v3765, %v3779
    %v3782 = vmul.f32 %v3780, %v2196
    %v3783 = vmul.f32 %v3781, %v2196
    %v3784 = vadd.f32 %v3782, %v2204
    %v3785 = vadd.f32 %v3783, %v2204
    %v3786 = vsel %vm770, %v3296, 0.0
    %v3787 = vsel %vm770, %v3297, 0.0
    %v3788 = vadd.f32 %v3786, %v3787
    %v3789 = vrot.slane %v3788, 4
    %v3790 = vadd.f32 %v3788, %v3789
    %v3791 = vrot.slane %v3790, 2
    %v3792 = vadd.f32 %v3790, %v3791
    %v3793 = vrot.slane %v3792, 1
    %v3794 = vadd.f32 %v3792, %v3793
    %v3795 = vsel %vm770, %v3296, -inf
    %v3796 = vsel %vm770, %v3297, -inf
    %v3797 = vmax.f32 %v3795, %v3796
    %v3798 = vrot.slane %v3797, 4
    %v3799 = vmax.f32 %v3797, %v3798
    %v3800 = vrot.slane %v3799, 2
    %v3801 = vmax.f32 %v3799, %v3800
    %v3802 = vrot.slane %v3801, 1
    %v3803 = vmax.f32 %v3801, %v3802
    %v3804 = vsel %vm770, %v3296, inf
    %v3805 = vsel %vm770, %v3297, inf
    %v3806 = vmin.f32 %v3804, %v3805
    %v3807 = vrot.slane %v3806, 4
    %v3808 = vmin.f32 %v3806, %v3807
    %v3809 = vrot.slane %v3808, 2
    %v3810 = vmin.f32 %v3808, %v3809
    %v3811 = vrot.slane %v3810, 1
    %v3812 = vmin.f32 %v3810, %v3811
    %v3813 = vsel %vm770, %v3298, 0.0
    %v3814 = vsel %vm770, %v3299, 0.0
    %v3815 = vadd.f32 %v3813, %v3814
    %v3816 = vrot.slane %v3815, 4
    %v3817 = vadd.f32 %v3815, %v3816
    %v3818 = vrot.slane %v3817, 2
    %v3819 = vadd.f32 %v3817, %v3818
    %v3820 = vrot.slane %v3819, 1
    %v3821 = vadd.f32 %v3819, %v3820
    %v3822 = vsel %vm770, %v3298, -inf
    %v3823 = vsel %vm770, %v3299, -inf
    %v3824 = vmax.f32 %v3822, %v3823
    %v3825 = vrot.slane %v3824, 4
    %v3826 = vmax.f32 %v3824, %v3825
    %v3827 = vrot.slane %v3826, 2
    %v3828 = vmax.f32 %v3826, %v3827
    %v3829 = vrot.slane %v3828, 1
    %v3830 = vmax.f32 %v3828, %v3829
    %v3831 = vsel %vm770, %v3298, inf
    %v3832 = vsel %vm770, %v3299, inf
    %v3833 = vmin.f32 %v3831, %v3832
    %v3834 = vrot.slane %v3833, 4
    %v3835 = vmin.f32 %v3833, %v3834
    %v3836 = vrot.slane %v3835, 2
    %v3837 = vmin.f32 %v3835, %v3836
    %v3838 = vrot.slane %v3837, 1
    %v3839 = vmin.f32 %v3837, %v3838
    %v3840 = vsel %vm896, %v3794, %v3821
    %v3841 = vsel %vm896, %v3803, %v3830
    %v3842 = vsel %vm896, %v3812, %v3839
    %v3843 = vmul.f32 %v3840, 0.0625
    %v3844 = vsel %vm770, %v3784, 0.0
    %v3845 = vrot.slane %v3844, 4
    %v3846 = vadd.f32 %v3844, %v3845
    %v3847 = vrot.slane %v3846, 2
    %v3848 = vadd.f32 %v3846, %v3847
    %v3849 = vrot.slane %v3848, 1
    %v3850 = vadd.f32 %v3848, %v3849
    %v3851 = vsel %vm770, %v3784, -inf
    %v3852 = vrot.slane %v3851, 4
    %v3853 = vmax.f32 %v3851, %v3852
    %v3854 = vrot.slane %v3853, 2
    %v3855 = vmax.f32 %v3853, %v3854
    %v3856 = vrot.slane %v3855, 1
    %v3857 = vmax.f32 %v3855, %v3856
    %v3858 = vsel %vm770, %v3784, inf
    %v3859 = vrot.slane %v3858, 4
    %v3860 = vmin.f32 %v3858, %v3859
    %v3861 = vrot.slane %v3860, 2
    %v3862 = vmin.f32 %v3860, %v3861
    %v3863 = vrot.slane %v3862, 1
    %v3864 = vmin.f32 %v3862, %v3863
    %v3865 = vsel %vm770, %v3785, 0.0
    %v3866 = vrot.slane %v3865, 4
    %v3867 = vadd.f32 %v3865, %v3866
    %v3868 = vrot.slane %v3867, 2
    %v3869 = vadd.f32 %v3867, %v3868
    %v3870 = vrot.slane %v3869, 1
    %v3871 = vadd.f32 %v3869, %v3870
    %v3872 = vsel %vm770, %v3785, -inf
    %v3873 = vrot.slane %v3872, 4
    %v3874 = vmax.f32 %v3872, %v3873
    %v3875 = vrot.slane %v3874, 2
    %v3876 = vmax.f32 %v3874, %v3875
    %v3877 = vrot.slane %v3876, 1
    %v3878 = vmax.f32 %v3876, %v3877
    %v3879 = vsel %vm770, %v3785, inf
    %v3880 = vrot.slane %v3879, 4
    %v3881 = vmin.f32 %v3879, %v3880
    %v3882 = vrot.slane %v3881, 2
    %v3883 = vmin.f32 %v3881, %v3882
    %v3884 = vrot.slane %v3883, 1
    %v3885 = vmin.f32 %v3883, %v3884
    %v3886 = vsel %vm896, %v3850, %v3871
    %v3887 = vsel %vm896, %v3857, %v3878
    %v3888 = vsel %vm896, %v3864, %v3885
    %v3889 = vmul.f32 %v3886, 0.125
    %v3890 = vpack.c.bf16 %v3840, %v3840
    %v3891 = vpack.c.bf16 %v3841, %v3841
    %v3893 = vsel %vm770, %v3891, 0
    %3895 = vmatprep.subr.bf16.mxu0 0
    %3896 = vmatpush1.bf16.msra.mxu0 %v2318
    %3897 = vmatprep.subr.bf16.mxu0 0
    %3898 = vmatpush1.bf16.msra.mxu0 0
    %3899 = vmatprep.subr.bf16.mxu0 0
    %3900 = vmatpush1.bf16.msra.mxu0 0
    %3901 = vmatprep.subr.bf16.mxu0 0
    %3902 = vmatpush1.bf16.msra.mxu0 0
    %3903 = vmatprep.subr.bf16.mxu0 0
    %3904 = vmatpush1.bf16.msra.mxu0 0
    %3905 = vmatprep.subr.bf16.mxu0 0
    %3906 = vmatpush1.bf16.msra.mxu0 0
    %3907 = vmatprep.subr.bf16.mxu0 0
    %3908 = vmatpush1.bf16.msra.mxu0 0
    %3909 = vmatprep.subr.bf16.mxu0 0
    %3910 = vmatpush1.bf16.msra.mxu0 0
    %3911 = vmatprep.subr.bf16.mxu0 0
    %3912 = vmatpush1.bf16.msra.mxu0 0
    %3913 = vmatprep.subr.bf16.mxu0 0
    %3914 = vmatpush1.bf16.msra.mxu0 0
    %3915 = vmatprep.subr.bf16.mxu0 0
    %3916 = vmatpush1.bf16.msra.mxu0 0
    %3917 = vmatprep.subr.bf16.mxu0 0
    %3918 = vmatpush1.bf16.msra.mxu0 0
    %3919 = vmatprep.subr.bf16.mxu0 0
    %3920 = vmatpush1.bf16.msra.mxu0 0
    %3921 = vmatprep.subr.bf16.mxu0 0
    %3922 = vmatpush1.bf16.msra.mxu0 0
    %3923 = vmatprep.subr.bf16.mxu0 0
    %3924 = vmatpush1.bf16.msra.mxu0 0
    %3925 = vmatprep.subr.bf16.mxu0 0
    %3926 = vmatpush1.bf16.msra.mxu0 0
    %3927 = vmatprep.mubr.bf16.mxu0 0
    %3928 = vmatmul.mubr.bf16.gmra.mrb[0].mxu0 %v3893
    %v3929 = vpop.f32.mrb[0].mxu0
    %v3930 = vadd.f32 0.0, %v3929
    %v3931 = vpop.f32.mrb[0].mxu0
    %v3932 = vpop.f32.mrb[0].mxu0
    %v3933 = vpop.f32.mrb[0].mxu0
    %3934 = vdwg.mxu0
    %v3936 = vsel %vm770, %v3890, 0
    %3938 = vmatprep.subr.bf16.mxu0 0
    %3939 = vmatpush1.bf16.msra.mxu0 %v2367
    %3940 = vmatprep.subr.bf16.mxu0 0
    %3941 = vmatpush1.bf16.msra.mxu0 0
    %3942 = vmatprep.subr.bf16.mxu0 0
    %3943 = vmatpush1.bf16.msra.mxu0 0
    %3944 = vmatprep.subr.bf16.mxu0 0
    %3945 = vmatpush1.bf16.msra.mxu0 0
    %3946 = vmatprep.subr.bf16.mxu0 0
    %3947 = vmatpush1.bf16.msra.mxu0 0
    %3948 = vmatprep.subr.bf16.mxu0 0
    %3949 = vmatpush1.bf16.msra.mxu0 0
    %3950 = vmatprep.subr.bf16.mxu0 0
    %3951 = vmatpush1.bf16.msra.mxu0 0
    %3952 = vmatprep.subr.bf16.mxu0 0
    %3953 = vmatpush1.bf16.msra.mxu0 0
    %3954 = vmatprep.subr.bf16.mxu0 0
    %3955 = vmatpush1.bf16.msra.mxu0 0
    %3956 = vmatprep.subr.bf16.mxu0 0
    %3957 = vmatpush1.bf16.msra.mxu0 0
    %3958 = vmatprep.subr.bf16.mxu0 0
    %3959 = vmatpush1.bf16.msra.mxu0 0
    %3960 = vmatprep.subr.bf16.mxu0 0
    %3961 = vmatpush1.bf16.msra.mxu0 0
    %3962 = vmatprep.subr.bf16.mxu0 0
    %3963 = vmatpush1.bf16.msra.mxu0 0
    %3964 = vmatprep.subr.bf16.mxu0 0
    %3965 = vmatpush1.bf16.msra.mxu0 0
    %3966 = vmatprep.subr.bf16.mxu0 0
    %3967 = vmatpush1.bf16.msra.mxu0 0
    %3968 = vmatprep.subr.bf16.mxu0 0
    %3969 = vmatpush1.bf16.msra.mxu0 0
    %3970 = vmatprep.mubr.bf16.mxu0 0
    %3971 = vmatmul.mubr.bf16.gmra.mrb[0].mxu0 %v3936
    %v3972 = vpop.f32.mrb[0].mxu0
    %v3973 = vadd.f32 %v3930, %v3972
    %v3974 = vpop.f32.mrb[0].mxu0
    %v3975 = vpop.f32.mrb[0].mxu0
    %v3976 = vpop.f32.mrb[0].mxu0
    %3977 = vdwg.mxu0
    %v3978 = vpack.c.bf16 %v3843, %v3843
    %v3980 = vsel %vm770, %v3978, 0
    %3982 = vmatprep.subr.bf16.mxu0 0
    %3983 = vmatpush1.bf16.msra.mxu0 %v2417
    %3984 = vmatprep.subr.bf16.mxu0 0
    %3985 = vmatpush1.bf16.msra.mxu0 0
    %3986 = vmatprep.subr.bf16.mxu0 0
    %3987 = vmatpush1.bf16.msra.mxu0 0
    %3988 = vmatprep.subr.bf16.mxu0 0
    %3989 = vmatpush1.bf16.msra.mxu0 0
    %3990 = vmatprep.subr.bf16.mxu0 0
    %3991 = vmatpush1.bf16.msra.mxu0 0
    %3992 = vmatprep.subr.bf16.mxu0 0
    %3993 = vmatpush1.bf16.msra.mxu0 0
    %3994 = vmatprep.subr.bf16.mxu0 0
    %3995 = vmatpush1.bf16.msra.mxu0 0
    %3996 = vmatprep.subr.bf16.mxu0 0
    %3997 = vmatpush1.bf16.msra.mxu0 0
    %3998 = vmatprep.subr.bf16.mxu0 0
    %3999 = vmatpush1.bf16.msra.mxu0 0
    %4000 = vmatprep.subr.bf16.mxu0 0
    %4001 = vmatpush1.bf16.msra.mxu0 0
    %4002 = vmatprep.subr.bf16.mxu0 0
    %4003 = vmatpush1.bf16.msra.mxu0 0
    %4004 = vmatprep.subr.bf16.mxu0 0
    %4005 = vmatpush1.bf16.msra.mxu0 0
    %4006 = vmatprep.subr.bf16.mxu0 0
    %4007 = vmatpush1.bf16.msra.mxu0 0
    %4008 = vmatprep.subr.bf16.mxu0 0
    %4009 = vmatpush1.bf16.msra.mxu0 0
    %4010 = vmatprep.subr.bf16.mxu0 0
    %4011 = vmatpush1.bf16.msra.mxu0 0
    %4012 = vmatprep.subr.bf16.mxu0 0
    %4013 = vmatpush1.bf16.msra.mxu0 0
    %4014 = vmatprep.mubr.bf16.mxu0 0
    %4015 = vmatmul.mubr.bf16.gmra.mrb[0].mxu0 %v3980
    %v4016 = vpop.f32.mrb[0].mxu0
    %v4017 = vadd.f32 0.0, %v4016
    %v4018 = vpop.f32.mrb[0].mxu0
    %v4019 = vpop.f32.mrb[0].mxu0
    %v4020 = vpop.f32.mrb[0].mxu0
    %4021 = vdwg.mxu0
    %v4022 = vadd.f32 %v3973, %v4017
    %v4023 = vpack.c.bf16 %v3842, %v3842
    %v4025 = vsel %vm770, %v4023, 0
    %4027 = vmatprep.subr.bf16.mxu0 0
    %4028 = vmatpush1.bf16.msra.mxu0 %v2468
    %4029 = vmatprep.subr.bf16.mxu0 0
    %4030 = vmatpush1.bf16.msra.mxu0 0
    %4031 = vmatprep.subr.bf16.mxu0 0
    %4032 = vmatpush1.bf16.msra.mxu0 0
    %4033 = vmatprep.subr.bf16.mxu0 0
    %4034 = vmatpush1.bf16.msra.mxu0 0
    %4035 = vmatprep.subr.bf16.mxu0 0
    %4036 = vmatpush1.bf16.msra.mxu0 0
    %4037 = vmatprep.subr.bf16.mxu0 0
    %4038 = vmatpush1.bf16.msra.mxu0 0
    %4039 = vmatprep.subr.bf16.mxu0 0
    %4040 = vmatpush1.bf16.msra.mxu0 0
    %4041 = vmatprep.subr.bf16.mxu0 0
    %4042 = vmatpush1.bf16.msra.mxu0 0
    %4043 = vmatprep.subr.bf16.mxu0 0
    %4044 = vmatpush1.bf16.msra.mxu0 0
    %4045 = vmatprep.subr.bf16.mxu0 0
    %4046 = vmatpush1.bf16.msra.mxu0 0
    %4047 = vmatprep.subr.bf16.mxu0 0
    %4048 = vmatpush1.bf16.msra.mxu0 0
    %4049 = vmatprep.subr.bf16.mxu0 0
    %4050 = vmatpush1.bf16.msra.mxu0 0
    %4051 = vmatprep.subr.bf16.mxu0 0
    %4052 = vmatpush1.bf16.msra.mxu0 0
    %4053 = vmatprep.subr.bf16.mxu0 0
    %4054 = vmatpush1.bf16.msra.mxu0 0
    %4055 = vmatprep.subr.bf16.mxu0 0
    %4056 = vmatpush1.bf16.msra.mxu0 0
    %4057 = vmatprep.subr.bf16.mxu0 0
    %4058 = vmatpush1.bf16.msra.mxu0 0
    %4059 = vmatprep.mubr.bf16.mxu0 0
    %4060 = vmatmul.mubr.bf16.gmra.mrb[0].mxu0 %v4025
    %v4061 = vpop.f32.mrb[0].mxu0
    %v4062 = vadd.f32 0.0, %v4061
    %v4063 = vpop.f32.mrb[0].mxu0
    %v4064 = vpop.f32.mrb[0].mxu0
    %v4065 = vpop.f32.mrb[0].mxu0
    %4066 = vdwg.mxu0
    %v4067 = vadd.f32 %v4022, %v4062
    %v4068 = vadd.f32 %v4067, %v2518
    %v4069 = vmax.f32 %v4068, 0.0
    %v4070 = vpack.c.bf16 %v3886, %v3886
    %v4071 = vpack.c.bf16 %v3887, %v3887
    %v4073 = vsel %vm770, %v4071, 0
    %4075 = vmatprep.subr.bf16.mxu0 0
    %4076 = vmatpush1.bf16.msra.mxu0 %v2528
    %4077 = vmatprep.subr.bf16.mxu0 0
    %4078 = vmatpush1.bf16.msra.mxu0 0
    %4079 = vmatprep.subr.bf16.mxu0 0
    %4080 = vmatpush1.bf16.msra.mxu0 0
    %4081 = vmatprep.subr.bf16.mxu0 0
    %4082 = vmatpush1.bf16.msra.mxu0 0
    %4083 = vmatprep.subr.bf16.mxu0 0
    %4084 = vmatpush1.bf16.msra.mxu0 0
    %4085 = vmatprep.subr.bf16.mxu0 0
    %4086 = vmatpush1.bf16.msra.mxu0 0
    %4087 = vmatprep.subr.bf16.mxu0 0
    %4088 = vmatpush1.bf16.msra.mxu0 0
    %4089 = vmatprep.subr.bf16.mxu0 0
    %4090 = vmatpush1.bf16.msra.mxu0 0
    %4091 = vmatprep.subr.bf16.mxu0 0
    %4092 = vmatpush1.bf16.msra.mxu0 0
    %4093 = vmatprep.subr.bf16.mxu0 0
    %4094 = vmatpush1.bf16.msra.mxu0 0
    %4095 = vmatprep.subr.bf16.mxu0 0
    %4096 = vmatpush1.bf16.msra.mxu0 0
    %4097 = vmatprep.subr.bf16.mxu0 0
    %4098 = vmatpush1.bf16.msra.mxu0 0
    %4099 = vmatprep.subr.bf16.mxu0 0
    %4100 = vmatpush1.bf16.msra.mxu0 0
    %4101 = vmatprep.subr.bf16.mxu0 0
    %4102 = vmatpush1.bf16.msra.mxu0 0
    %4103 = vmatprep.subr.bf16.mxu0 0
    %4104 = vmatpush1.bf16.msra.mxu0 0
    %4105 = vmatprep.subr.bf16.mxu0 0
    %4106 = vmatpush1.bf16.msra.mxu0 0
    %4107 = vmatprep.mubr.bf16.mxu0 0
    %4108 = vmatmul.mubr.bf16.gmra.mrb[0].mxu0 %v4073
    %v4109 = vpop.f32.mrb[0].mxu0
    %v4110 = vadd.f32 0.0, %v4109
    %v4111 = vpop.f32.mrb[0].mxu0
    %v4112 = vpop.f32.mrb[0].mxu0
    %v4113 = vpop.f32.mrb[0].mxu0
    %4114 = vdwg.mxu0
    %v4116 = vsel %vm770, %v4070, 0
    %4118 = vmatprep.subr.bf16.mxu0 0
    %4119 = vmatpush1.bf16.msra.mxu0 %v2577
    %4120 = vmatprep.subr.bf16.mxu0 0
    %4121 = vmatpush1.bf16.msra.mxu0 0
    %4122 = vmatprep.subr.bf16.mxu0 0
    %4123 = vmatpush1.bf16.msra.mxu0 0
    %4124 = vmatprep.subr.bf16.mxu0 0
    %4125 = vmatpush1.bf16.msra.mxu0 0
    %4126 = vmatprep.subr.bf16.mxu0 0
    %4127 = vmatpush1.bf16.msra.mxu0 0
    %4128 = vmatprep.subr.bf16.mxu0 0
    %4129 = vmatpush1.bf16.msra.mxu0 0
    %4130 = vmatprep.subr.bf16.mxu0 0
    %4131 = vmatpush1.bf16.msra.mxu0 0
    %4132 = vmatprep.subr.bf16.mxu0 0
    %4133 = vmatpush1.bf16.msra.mxu0 0
    %4134 = vmatprep.subr.bf16.mxu0 0
    %4135 = vmatpush1.bf16.msra.mxu0 0
    %4136 = vmatprep.subr.bf16.mxu0 0
    %4137 = vmatpush1.bf16.msra.mxu0 0
    %4138 = vmatprep.subr.bf16.mxu0 0
    %4139 = vmatpush1.bf16.msra.mxu0 0
    %4140 = vmatprep.subr.bf16.mxu0 0
    %4141 = vmatpush1.bf16.msra.mxu0 0
    %4142 = vmatprep.subr.bf16.mxu0 0
    %4143 = vmatpush1.bf16.msra.mxu0 0
    %4144 = vmatprep.subr.bf16.mxu0 0
    %4145 = vmatpush1.bf16.msra.mxu0 0
    %4146 = vmatprep.subr.bf16.mxu0 0
    %4147 = vmatpush1.bf16.msra.mxu0 0
    %4148 = vmatprep.subr.bf16.mxu0 0
    %4149 = vmatpush1.bf16.msra.mxu0 0
    %4150 = vmatprep.mubr.bf16.mxu0 0
    %4151 = vmatmul.mubr.bf16.gmra.mrb[0].mxu0 %v4116
    %v4152 = vpop.f32.mrb[0].mxu0
    %v4153 = vadd.f32 %v4110, %v4152
    %v4154 = vpop.f32.mrb[0].mxu0
    %v4155 = vpop.f32.mrb[0].mxu0
    %v4156 = vpop.f32.mrb[0].mxu0
    %4157 = vdwg.mxu0
    %v4158 = vpack.c.bf16 %v3889, %v3889
    %v4160 = vsel %vm770, %v4158, 0
    %4162 = vmatprep.subr.bf16.mxu0 0
    %4163 = vmatpush1.bf16.msra.mxu0 %v2627
    %4164 = vmatprep.subr.bf16.mxu0 0
    %4165 = vmatpush1.bf16.msra.mxu0 0
    %4166 = vmatprep.subr.bf16.mxu0 0
    %4167 = vmatpush1.bf16.msra.mxu0 0
    %4168 = vmatprep.subr.bf16.mxu0 0
    %4169 = vmatpush1.bf16.msra.mxu0 0
    %4170 = vmatprep.subr.bf16.mxu0 0
    %4171 = vmatpush1.bf16.msra.mxu0 0
    %4172 = vmatprep.subr.bf16.mxu0 0
    %4173 = vmatpush1.bf16.msra.mxu0 0
    %4174 = vmatprep.subr.bf16.mxu0 0
    %4175 = vmatpush1.bf16.msra.mxu0 0
    %4176 = vmatprep.subr.bf16.mxu0 0
    %4177 = vmatpush1.bf16.msra.mxu0 0
    %4178 = vmatprep.subr.bf16.mxu0 0
    %4179 = vmatpush1.bf16.msra.mxu0 0
    %4180 = vmatprep.subr.bf16.mxu0 0
    %4181 = vmatpush1.bf16.msra.mxu0 0
    %4182 = vmatprep.subr.bf16.mxu0 0
    %4183 = vmatpush1.bf16.msra.mxu0 0
    %4184 = vmatprep.subr.bf16.mxu0 0
    %4185 = vmatpush1.bf16.msra.mxu0 0
    %4186 = vmatprep.subr.bf16.mxu0 0
    %4187 = vmatpush1.bf16.msra.mxu0 0
    %4188 = vmatprep.subr.bf16.mxu0 0
    %4189 = vmatpush1.bf16.msra.mxu0 0
    %4190 = vmatprep.subr.bf16.mxu0 0
    %4191 = vmatpush1.bf16.msra.mxu0 0
    %4192 = vmatprep.subr.bf16.mxu0 0
    %4193 = vmatpush1.bf16.msra.mxu0 0
    %4194 = vmatprep.mubr.bf16.mxu0 0
    %4195 = vmatmul.mubr.bf16.gmra.mrb[0].mxu0 %v4160
    %v4196 = vpop.f32.mrb[0].mxu0
    %v4197 = vadd.f32 0.0, %v4196
    %v4198 = vpop.f32.mrb[0].mxu0
    %v4199 = vpop.f32.mrb[0].mxu0
    %v4200 = vpop.f32.mrb[0].mxu0
    %4201 = vdwg.mxu0
    %v4202 = vadd.f32 %v4153, %v4197
    %v4203 = vpack.c.bf16 %v3888, %v3888
    %v4205 = vsel %vm770, %v4203, 0
    %4207 = vmatprep.subr.bf16.mxu0 0
    %4208 = vmatpush1.bf16.msra.mxu0 %v2678
    %4209 = vmatprep.subr.bf16.mxu0 0
    %4210 = vmatpush1.bf16.msra.mxu0 0
    %4211 = vmatprep.subr.bf16.mxu0 0
    %4212 = vmatpush1.bf16.msra.mxu0 0
    %4213 = vmatprep.subr.bf16.mxu0 0
    %4214 = vmatpush1.bf16.msra.mxu0 0
    %4215 = vmatprep.subr.bf16.mxu0 0
    %4216 = vmatpush1.bf16.msra.mxu0 0
    %4217 = vmatprep.subr.bf16.mxu0 0
    %4218 = vmatpush1.bf16.msra.mxu0 0
    %4219 = vmatprep.subr.bf16.mxu0 0
    %4220 = vmatpush1.bf16.msra.mxu0 0
    %4221 = vmatprep.subr.bf16.mxu0 0
    %4222 = vmatpush1.bf16.msra.mxu0 0
    %4223 = vmatprep.subr.bf16.mxu0 0
    %4224 = vmatpush1.bf16.msra.mxu0 0
    %4225 = vmatprep.subr.bf16.mxu0 0
    %4226 = vmatpush1.bf16.msra.mxu0 0
    %4227 = vmatprep.subr.bf16.mxu0 0
    %4228 = vmatpush1.bf16.msra.mxu0 0
    %4229 = vmatprep.subr.bf16.mxu0 0
    %4230 = vmatpush1.bf16.msra.mxu0 0
    %4231 = vmatprep.subr.bf16.mxu0 0
    %4232 = vmatpush1.bf16.msra.mxu0 0
    %4233 = vmatprep.subr.bf16.mxu0 0
    %4234 = vmatpush1.bf16.msra.mxu0 0
    %4235 = vmatprep.subr.bf16.mxu0 0
    %4236 = vmatpush1.bf16.msra.mxu0 0
    %4237 = vmatprep.subr.bf16.mxu0 0
    %4238 = vmatpush1.bf16.msra.mxu0 0
    %4239 = vmatprep.mubr.bf16.mxu0 0
    %4240 = vmatmul.mubr.bf16.gmra.mrb[0].mxu0 %v4205
    %v4241 = vpop.f32.mrb[0].mxu0
    %v4242 = vadd.f32 0.0, %v4241
    %v4243 = vpop.f32.mrb[0].mxu0
    %v4244 = vpop.f32.mrb[0].mxu0
    %v4245 = vpop.f32.mrb[0].mxu0
    %4246 = vdwg.mxu0
    %v4247 = vadd.f32 %v4202, %v4242
    %v4248 = vadd.f32 %v4247, %v2728
    %v4249 = vmax.f32 %v4248, 0.0
    %4250 = vmatprep.subr.bf16.mxu0 0
    %4251 = vmatpush1.bf16.msra.mxu0 %v2733
    %4252 = vmatprep.subr.bf16.mxu0 0
    %4253 = vmatpush1.bf16.msra.mxu0 0
    %4254 = vmatprep.subr.bf16.mxu0 0
    %4255 = vmatpush1.bf16.msra.mxu0 0
    %4256 = vmatprep.subr.bf16.mxu0 0
    %4257 = vmatpush1.bf16.msra.mxu0 0
    %4258 = vmatprep.subr.bf16.mxu0 0
    %4259 = vmatpush1.bf16.msra.mxu0 0
    %4260 = vmatprep.subr.bf16.mxu0 0
    %4261 = vmatpush1.bf16.msra.mxu0 0
    %4262 = vmatprep.subr.bf16.mxu0 0
    %4263 = vmatpush1.bf16.msra.mxu0 0
    %4264 = vmatprep.subr.bf16.mxu0 0
    %4265 = vmatpush1.bf16.msra.mxu0 0
    %4266 = vmatprep.subr.bf16.mxu0 0
    %4267 = vmatpush1.bf16.msra.mxu0 0
    %4268 = vmatprep.subr.bf16.mxu0 0
    %4269 = vmatpush1.bf16.msra.mxu0 0
    %4270 = vmatprep.subr.bf16.mxu0 0
    %4271 = vmatpush1.bf16.msra.mxu0 0
    %4272 = vmatprep.subr.bf16.mxu0 0
    %4273 = vmatpush1.bf16.msra.mxu0 0
    %4274 = vmatprep.subr.bf16.mxu0 0
    %4275 = vmatpush1.bf16.msra.mxu0 0
    %4276 = vmatprep.subr.bf16.mxu0 0
    %4277 = vmatpush1.bf16.msra.mxu0 0
    %4278 = vmatprep.subr.bf16.mxu0 0
    %4279 = vmatpush1.bf16.msra.mxu0 0
    %4280 = vmatprep.subr.bf16.mxu0 0
    %4281 = vmatpush1.bf16.msra.mxu0 0
    %4282 = vmatprep.mubr.bf16.mxu0 0
    %4283 = vmatmul.mubr.bf16.gmra.mrb[0].mxu0 %v3001
    %v4284 = vpop.f32.mrb[0].mxu0
    %v4285 = vadd.f32 0.0, %v4284
    %v4286 = vpop.f32.mrb[0].mxu0
    %v4287 = vpop.f32.mrb[0].mxu0
    %v4288 = vpop.f32.mrb[0].mxu0
    %4289 = vdwg.mxu0
    %v4290 = vadd.f32 %v1310, %v4285
    %v4291 = vpack.c.bf16 %v4249, %v4249
    %v4293 = vsel %vm770, %v4291, 0
    %4295 = vmatprep.subr.bf16.mxu0 0
    %4296 = vmatpush1.bf16.msra.mxu0 %v2781
    %4297 = vmatprep.subr.bf16.mxu0 0
    %4298 = vmatpush1.bf16.msra.mxu0 0
    %4299 = vmatprep.subr.bf16.mxu0 0
    %4300 = vmatpush1.bf16.msra.mxu0 0
    %4301 = vmatprep.subr.bf16.mxu0 0
    %4302 = vmatpush1.bf16.msra.mxu0 0
    %4303 = vmatprep.subr.bf16.mxu0 0
    %4304 = vmatpush1.bf16.msra.mxu0 0
    %4305 = vmatprep.subr.bf16.mxu0 0
    %4306 = vmatpush1.bf16.msra.mxu0 0
    %4307 = vmatprep.subr.bf16.mxu0 0
    %4308 = vmatpush1.bf16.msra.mxu0 0
    %4309 = vmatprep.subr.bf16.mxu0 0
    %4310 = vmatpush1.bf16.msra.mxu0 0
    %4311 = vmatprep.subr.bf16.mxu0 0
    %4312 = vmatpush1.bf16.msra.mxu0 0
    %4313 = vmatprep.subr.bf16.mxu0 0
    %4314 = vmatpush1.bf16.msra.mxu0 0
    %4315 = vmatprep.subr.bf16.mxu0 0
    %4316 = vmatpush1.bf16.msra.mxu0 0
    %4317 = vmatprep.subr.bf16.mxu0 0
    %4318 = vmatpush1.bf16.msra.mxu0 0
    %4319 = vmatprep.subr.bf16.mxu0 0
    %4320 = vmatpush1.bf16.msra.mxu0 0
    %4321 = vmatprep.subr.bf16.mxu0 0
    %4322 = vmatpush1.bf16.msra.mxu0 0
    %4323 = vmatprep.subr.bf16.mxu0 0
    %4324 = vmatpush1.bf16.msra.mxu0 0
    %4325 = vmatprep.subr.bf16.mxu0 0
    %4326 = vmatpush1.bf16.msra.mxu0 0
    %4327 = vmatprep.mubr.bf16.mxu0 0
    %4328 = vmatmul.mubr.bf16.gmra.mrb[0].mxu0 %v4293
    %v4329 = vpop.f32.mrb[0].mxu0
    %v4330 = vadd.f32 0.0, %v4329
    %v4331 = vpop.f32.mrb[0].mxu0
    %v4332 = vpop.f32.mrb[0].mxu0
    %v4333 = vpop.f32.mrb[0].mxu0
    %4334 = vdwg.mxu0
    %v4335 = vadd.f32 %v4290, %v4330
    %v4336 = vpack.c.bf16 %v4069, %v4069
    %v4338 = vsel %vm770, %v4336, 0
    %4340 = vmatprep.subr.bf16.mxu0 0
    %4341 = vmatpush1.bf16.msra.mxu0 %v2832
    %4342 = vmatprep.subr.bf16.mxu0 0
    %4343 = vmatpush1.bf16.msra.mxu0 0
    %4344 = vmatprep.subr.bf16.mxu0 0
    %4345 = vmatpush1.bf16.msra.mxu0 0
    %4346 = vmatprep.subr.bf16.mxu0 0
    %4347 = vmatpush1.bf16.msra.mxu0 0
    %4348 = vmatprep.subr.bf16.mxu0 0
    %4349 = vmatpush1.bf16.msra.mxu0 0
    %4350 = vmatprep.subr.bf16.mxu0 0
    %4351 = vmatpush1.bf16.msra.mxu0 0
    %4352 = vmatprep.subr.bf16.mxu0 0
    %4353 = vmatpush1.bf16.msra.mxu0 0
    %4354 = vmatprep.subr.bf16.mxu0 0
    %4355 = vmatpush1.bf16.msra.mxu0 0
    %4356 = vmatprep.subr.bf16.mxu0 0
    %4357 = vmatpush1.bf16.msra.mxu0 0
    %4358 = vmatprep.subr.bf16.mxu0 0
    %4359 = vmatpush1.bf16.msra.mxu0 0
    %4360 = vmatprep.subr.bf16.mxu0 0
    %4361 = vmatpush1.bf16.msra.mxu0 0
    %4362 = vmatprep.subr.bf16.mxu0 0
    %4363 = vmatpush1.bf16.msra.mxu0 0
    %4364 = vmatprep.subr.bf16.mxu0 0
    %4365 = vmatpush1.bf16.msra.mxu0 0
    %4366 = vmatprep.subr.bf16.mxu0 0
    %4367 = vmatpush1.bf16.msra.mxu0 0
    %4368 = vmatprep.subr.bf16.mxu0 0
    %4369 = vmatpush1.bf16.msra.mxu0 0
    %4370 = vmatprep.subr.bf16.mxu0 0
    %4371 = vmatpush1.bf16.msra.mxu0 0
    %4372 = vmatprep.mubr.bf16.mxu0 0
    %4373 = vmatmul.mubr.bf16.gmra.mrb[0].mxu0 %v4338
    %v4374 = vpop.f32.mrb[0].mxu0
    %v4375 = vadd.f32 0.0, %v4374
    %v4376 = vpop.f32.mrb[0].mxu0
    %v4377 = vpop.f32.mrb[0].mxu0
    %v4378 = vpop.f32.mrb[0].mxu0
    %4379 = vdwg.mxu0
    %v4380 = vadd.f32 %v4335, %v4375
    %v4381 = vmax.f32 %v4380, 0.0
    %v4382 = vadd.f32 %v4381, 0.0
    %v4383 = vsub.f32 %v4381, %v4382
    %v4384 = vmul.f32 %v4383, %v4383
    %v4385 = vadd.f32 %v4384, 0.0
    %v4386 = vadd.f32 %v4385, 1e-05
    %v4387 = vrsqrt.pop %v4386
    %v4388 = vmul.f32 %v4383, %v4387
    %v4389 = vmul.f32 %v4388, %v2890
    %v4390 = vadd.f32 %v4389, %v2897
    %v4392 = vlaneseq
    %v4393 = vshrl.u32 %v4392, 7
    %v4394 = vsub.s32 0, %v4393
    %v4395 = vrot.slane %v553, %v4394
    %v4399 = vunpack.c.l.b16 %v551
    %v4400 = vunpack.c.l.b16 %v552
    %v4401 = vpack.c.b16 %v4400, %v4399
    %v4404 = vsel %vm770, %v3300, 0
    %v4407 = vsel %vm770, %v3301, 0
    %4409 = vmatprep.subr.bf16.mxu0 0
    %4410 = vmatpush1.bf16.msra.mxu0 %v4401
    %4411 = vmatprep.subr.bf16.mxu0 0
    %4412 = vmatpush1.bf16.msra.mxu0 0
    %4413 = vmatprep.subr.bf16.mxu0 0
    %4414 = vmatpush1.bf16.msra.mxu0 0
    %4415 = vmatprep.subr.bf16.mxu0 0
    %4416 = vmatpush1.bf16.msra.mxu0 0
    %4417 = vmatprep.subr.bf16.mxu0 0
    %4418 = vmatpush1.bf16.msra.mxu0 0
    %4419 = vmatprep.subr.bf16.mxu0 0
    %4420 = vmatpush1.bf16.msra.mxu0 0
    %4421 = vmatprep.subr.bf16.mxu0 0
    %4422 = vmatpush1.bf16.msra.mxu0 0
    %4423 = vmatprep.subr.bf16.mxu0 0
    %4424 = vmatpush1.bf16.msra.mxu0 0
    %4425 = vmatprep.subr.bf16.mxu0 0
    %4426 = vmatpush1.bf16.msra.mxu0 0
    %4427 = vmatprep.subr.bf16.mxu0 0
    %4428 = vmatpush1.bf16.msra.mxu0 0
    %4429 = vmatprep.subr.bf16.mxu0 0
    %4430 = vmatpush1.bf16.msra.mxu0 0
    %4431 = vmatprep.subr.bf16.mxu0 0
    %4432 = vmatpush1.bf16.msra.mxu0 0
    %4433 = vmatprep.subr.bf16.mxu0 0
    %4434 = vmatpush1.bf16.msra.mxu0 0
    %4435 = vmatprep.subr.bf16.mxu0 0
    %4436 = vmatpush1.bf16.msra.mxu0 0
    %4437 = vmatprep.subr.bf16.mxu0 0
    %4438 = vmatpush1.bf16.msra.mxu0 0
    %4439 = vmatprep.subr.bf16.mxu0 0
    %4440 = vmatpush1.bf16.msra.mxu0 0
    %4441 = vmatprep.mubr.bf16.mxu0 0
    %4442 = vmatmul.mubr.bf16.gmra.mrb[0].mxu0 %v4404
    %v4443 = vpop.f32.mrb[0].mxu0
    %v4444 = vadd.f32 %v4395, %v4443
    %v4445 = vpop.f32.mrb[0].mxu0
    %v4446 = vpop.f32.mrb[0].mxu0
    %v4447 = vadd.f32 %v4395, %v4446
    %v4448 = vpop.f32.mrb[0].mxu0
    %4449 = vmatprep.mubr.bf16.mxu0 0
    %4450 = vmatmul.mubr.bf16.gmra.mrb[0].mxu0 %v4407
    %v4451 = vpop.f32.mrb[0].mxu0
    %v4452 = vadd.f32 %v4395, %v4451
    %v4453 = vpop.f32.mrb[0].mxu0
    %v4454 = vpop.f32.mrb[0].mxu0
    %v4455 = vadd.f32 %v4395, %v4454
    %v4456 = vpop.f32.mrb[0].mxu0
    %4457 = vdwg.mxu0
    %v4458 = vmax.f32 %v4444, 0.0
    %v4459 = vmax.f32 %v4447, 0.0
    %v4460 = vmax.f32 %v4452, 0.0
    %v4461 = vmax.f32 %v4455, 0.0
    %v4462 = vpack.c.bf16 %v4459, %v4458
    %v4463 = vpack.c.bf16 %v4461, %v4460
    %v4465 = vlaneseq
    %v4466 = vshrl.u32 %v4465, 7
    %v4467 = vsub.s32 0, %v4466
    %v4468 = vrot.slane %v556, %v4467
    %v4472 = vunpack.c.l.b16 %v554
    %v4473 = vunpack.c.l.b16 %v555
    %v4474 = vpack.c.b16 %v4473, %v4472
    %v4477 = vsel %vm770, %v4462, 0
    %v4480 = vsel %vm770, %v4463, 0
    %4482 = vmatprep.subr.bf16.mxu0 0
    %4483 = vmatpush1.bf16.msra.mxu0 %v4474
    %4484 = vmatprep.subr.bf16.mxu0 0
    %4485 = vmatpush1.bf16.msra.mxu0 0
    %4486 = vmatprep.subr.bf16.mxu0 0
    %4487 = vmatpush1.bf16.msra.mxu0 0
    %4488 = vmatprep.subr.bf16.mxu0 0
    %4489 = vmatpush1.bf16.msra.mxu0 0
    %4490 = vmatprep.subr.bf16.mxu0 0
    %4491 = vmatpush1.bf16.msra.mxu0 0
    %4492 = vmatprep.subr.bf16.mxu0 0
    %4493 = vmatpush1.bf16.msra.mxu0 0
    %4494 = vmatprep.subr.bf16.mxu0 0
    %4495 = vmatpush1.bf16.msra.mxu0 0
    %4496 = vmatprep.subr.bf16.mxu0 0
    %4497 = vmatpush1.bf16.msra.mxu0 0
    %4498 = vmatprep.subr.bf16.mxu0 0
    %4499 = vmatpush1.bf16.msra.mxu0 0
    %4500 = vmatprep.subr.bf16.mxu0 0
    %4501 = vmatpush1.bf16.msra.mxu0 0
    %4502 = vmatprep.subr.bf16.mxu0 0
    %4503 = vmatpush1.bf16.msra.mxu0 0
    %4504 = vmatprep.subr.bf16.mxu0 0
    %4505 = vmatpush1.bf16.msra.mxu0 0
    %4506 = vmatprep.subr.bf16.mxu0 0
    %4507 = vmatpush1.bf16.msra.mxu0 0
    %4508 = vmatprep.subr.bf16.mxu0 0
    %4509 = vmatpush1.bf16.msra.mxu0 0
    %4510 = vmatprep.subr.bf16.mxu0 0
    %4511 = vmatpush1.bf16.msra.mxu0 0
    %4512 = vmatprep.subr.bf16.mxu0 0
    %4513 = vmatpush1.bf16.msra.mxu0 0
    %4514 = vmatprep.mubr.bf16.mxu0 0
    %4515 = vmatmul.mubr.bf16.gmra.mrb[0].mxu0 %v4477
    %v4516 = vpop.f32.mrb[0].mxu0
    %v4517 = vadd.f32 %v4468, %v4516
    %v4518 = vpop.f32.mrb[0].mxu0
    %v4519 = vpop.f32.mrb[0].mxu0
    %v4520 = vadd.f32 %v4468, %v4519
    %v4521 = vpop.f32.mrb[0].mxu0
    %4522 = vmatprep.mubr.bf16.mxu0 0
    %4523 = vmatmul.mubr.bf16.gmra.mrb[0].mxu0 %v4480
    %v4524 = vpop.f32.mrb[0].mxu0
    %v4525 = vadd.f32 %v4468, %v4524
    %v4526 = vpop.f32.mrb[0].mxu0
    %v4527 = vpop.f32.mrb[0].mxu0
    %v4528 = vadd.f32 %v4468, %v4527
    %v4529 = vpop.f32.mrb[0].mxu0
    %4530 = vdwg.mxu0
    %v4531 = vmax.f32 %v4517, 0.0
    %v4532 = vmax.f32 %v4520, 0.0
    %v4533 = vmax.f32 %v4525, 0.0
    %v4534 = vmax.f32 %v4528, 0.0
    %v4535 = vpack.c.bf16 %v3785, %v3784
    %v4537 = vlaneseq
    %v4538 = vshrl.u32 %v4537, 7
    %v4539 = vsub.s32 0, %v4538
    %v4540 = vrot.slane %v561, %v4539
    %v4544 = vunpack.c.l.b16 %v559
    %v4545 = vunpack.c.l.b16 %v560
    %v4546 = vpack.c.b16 %v4545, %v4544
    %v4549 = vsel %vm770, %v4535, 0
    %4551 = vmatprep.subr.bf16.mxu0 0
    %4552 = vmatpush1.bf16.msra.mxu0 %v4546
    %4553 = vmatprep.subr.bf16.mxu0 0
    %4554 = vmatpush1.bf16.msra.mxu0 0
    %4555 = vmatprep.subr.bf16.mxu0 0
    %4556 = vmatpush1.bf16.msra.mxu0 0
    %4557 = vmatprep.subr.bf16.mxu0 0
    %4558 = vmatpush1.bf16.msra.mxu0 0
    %4559 = vmatprep.subr.bf16.mxu0 0
    %4560 = vmatpush1.bf16.msra.mxu0 0
    %4561 = vmatprep.subr.bf16.mxu0 0
    %4562 = vmatpush1.bf16.msra.mxu0 0
    %4563 = vmatprep.subr.bf16.mxu0 0
    %4564 = vmatpush1.bf16.msra.mxu0 0
    %4565 = vmatprep.subr.bf16.mxu0 0
    %4566 = vmatpush1.bf16.msra.mxu0 0
    %4567 = vmatprep.subr.bf16.mxu0 0
    %4568 = vmatpush1.bf16.msra.mxu0 0
    %4569 = vmatprep.subr.bf16.mxu0 0
    %4570 = vmatpush1.bf16.msra.mxu0 0
    %4571 = vmatprep.subr.bf16.mxu0 0
    %4572 = vmatpush1.bf16.msra.mxu0 0
    %4573 = vmatprep.subr.bf16.mxu0 0
    %4574 = vmatpush1.bf16.msra.mxu0 0
    %4575 = vmatprep.subr.bf16.mxu0 0
    %4576 = vmatpush1.bf16.msra.mxu0 0
    %4577 = vmatprep.subr.bf16.mxu0 0
    %4578 = vmatpush1.bf16.msra.mxu0 0
    %4579 = vmatprep.subr.bf16.mxu0 0
    %4580 = vmatpush1.bf16.msra.mxu0 0
    %4581 = vmatprep.subr.bf16.mxu0 0
    %4582 = vmatpush1.bf16.msra.mxu0 0
    %4583 = vmatprep.mubr.bf16.mxu0 0
    %4584 = vmatmul.mubr.bf16.gmra.mrb[0].mxu0 %v4549
    %v4585 = vpop.f32.mrb[0].mxu0
    %v4586 = vadd.f32 %v4540, %v4585
    %v4587 = vpop.f32.mrb[0].mxu0
    %v4588 = vpop.f32.mrb[0].mxu0
    %v4589 = vadd.f32 %v4540, %v4588
    %v4590 = vpop.f32.mrb[0].mxu0
    %4591 = vdwg.mxu0
    %v4592 = vmax.f32 %v4586, 0.0
    %v4593 = vmax.f32 %v4589, 0.0
    %v4594 = vpack.c.bf16 %v4593, %v4592
    %v4596 = vlaneseq
    %v4597 = vshrl.u32 %v4596, 7
    %v4598 = vsub.s32 0, %v4597
    %v4599 = vrot.slane %v564, %v4598
    %v4603 = vunpack.c.l.b16 %v562
    %v4604 = vunpack.c.l.b16 %v563
    %v4605 = vpack.c.b16 %v4604, %v4603
    %v4608 = vsel %vm770, %v4594, 0
    %4610 = vmatprep.subr.bf16.mxu0 0
    %4611 = vmatpush1.bf16.msra.mxu0 %v4605
    %4612 = vmatprep.subr.bf16.mxu0 0
    %4613 = vmatpush1.bf16.msra.mxu0 0
    %4614 = vmatprep.subr.bf16.mxu0 0
    %4615 = vmatpush1.bf16.msra.mxu0 0
    %4616 = vmatprep.subr.bf16.mxu0 0
    %4617 = vmatpush1.bf16.msra.mxu0 0
    %4618 = vmatprep.subr.bf16.mxu0 0
    %4619 = vmatpush1.bf16.msra.mxu0 0
    %4620 = vmatprep.subr.bf16.mxu0 0
    %4621 = vmatpush1.bf16.msra.mxu0 0
    %4622 = vmatprep.subr.bf16.mxu0 0
    %4623 = vmatpush1.bf16.msra.mxu0 0
    %4624 = vmatprep.subr.bf16.mxu0 0
    %4625 = vmatpush1.bf16.msra.mxu0 0
    %4626 = vmatprep.subr.bf16.mxu0 0
    %4627 = vmatpush1.bf16.msra.mxu0 0
    %4628 = vmatprep.subr.bf16.mxu0 0
    %4629 = vmatpush1.bf16.msra.mxu0 0
    %4630 = vmatprep.subr.bf16.mxu0 0
    %4631 = vmatpush1.bf16.msra.mxu0 0
    %4632 = vmatprep.subr.bf16.mxu0 0
    %4633 = vmatpush1.bf16.msra.mxu0 0
    %4634 = vmatprep.subr.bf16.mxu0 0
    %4635 = vmatpush1.bf16.msra.mxu0 0
    %4636 = vmatprep.subr.bf16.mxu0 0
    %4637 = vmatpush1.bf16.msra.mxu0 0
    %4638 = vmatprep.subr.bf16.mxu0 0
    %4639 = vmatpush1.bf16.msra.mxu0 0
    %4640 = vmatprep.subr.bf16.mxu0 0
    %4641 = vmatpush1.bf16.msra.mxu0 0
    %4642 = vmatprep.mubr.bf16.mxu0 0
    %4643 = vmatmul.mubr.bf16.gmra.mrb[0].mxu0 %v4608
    %v4644 = vpop.f32.mrb[0].mxu0
    %v4645 = vadd.f32 %v4599, %v4644
    %v4646 = vpop.f32.mrb[0].mxu0
    %v4647 = vpop.f32.mrb[0].mxu0
    %v4648 = vadd.f32 %v4599, %v4647
    %v4649 = vpop.f32.mrb[0].mxu0
    %4650 = vdwg.mxu0
    %v4651 = vmax.f32 %v4645, 0.0
    %v4652 = vmax.f32 %v4648, 0.0
    %v4653 = vpack.c.bf16 %v4390, %v4390
    %v4655 = vlaneseq
    %v4656 = vshrl.u32 %v4655, 7
    %v4657 = vsub.s32 0, %v4656
    %v4658 = vrot.slane %v558, %v4657
    %v4661 = vsel %vm892, %v4653, 0
    %v4664 = vand.u32 %v557, %v898
    %4666 = vmatprep.subr.bf16.mxu0 0
    %4667 = vmatpush1.bf16.msra.mxu0 %v4664
    %4668 = vmatprep.subr.bf16.mxu0 0
    %4669 = vmatpush1.bf16.msra.mxu0 0
    %4670 = vmatprep.subr.bf16.mxu0 0
    %4671 = vmatpush1.bf16.msra.mxu0 0
    %4672 = vmatprep.subr.bf16.mxu0 0
    %4673 = vmatpush1.bf16.msra.mxu0 0
    %4674 = vmatprep.subr.bf16.mxu0 0
    %4675 = vmatpush1.bf16.msra.mxu0 0
    %4676 = vmatprep.subr.bf16.mxu0 0
    %4677 = vmatpush1.bf16.msra.mxu0 0
    %4678 = vmatprep.subr.bf16.mxu0 0
    %4679 = vmatpush1.bf16.msra.mxu0 0
    %4680 = vmatprep.subr.bf16.mxu0 0
    %4681 = vmatpush1.bf16.msra.mxu0 0
    %4682 = vmatprep.subr.bf16.mxu0 0
    %4683 = vmatpush1.bf16.msra.mxu0 0
    %4684 = vmatprep.subr.bf16.mxu0 0
    %4685 = vmatpush1.bf16.msra.mxu0 0
    %4686 = vmatprep.subr.bf16.mxu0 0
    %4687 = vmatpush1.bf16.msra.mxu0 0
    %4688 = vmatprep.subr.bf16.mxu0 0
    %4689 = vmatpush1.bf16.msra.mxu0 0
    %4690 = vmatprep.subr.bf16.mxu0 0
    %4691 = vmatpush1.bf16.msra.mxu0 0
    %4692 = vmatprep.subr.bf16.mxu0 0
    %4693 = vmatpush1.bf16.msra.mxu0 0
    %4694 = vmatprep.subr.bf16.mxu0 0
    %4695 = vmatpush1.bf16.msra.mxu0 0
    %4696 = vmatprep.subr.bf16.mxu0 0
    %4697 = vmatpush1.bf16.msra.mxu0 0
    %4698 = vmatprep.mubr.bf16.mxu0 0
    %4699 = vmatmul.mubr.bf16.gmra.mrb[0].mxu0 %v4661
    %v4700 = vpop.f32.mrb[0].mxu0
    %v4701 = vadd.f32 %v4658, %v4700
    %v4702 = vpop.f32.mrb[0].mxu0
    %v4703 = vpop.f32.mrb[0].mxu0
    %v4704 = vpop.f32.mrb[0].mxu0
    %4705 = vdwg.mxu0
    %v4706 = vmax.f32 %v4701, 0.0
    %v4707 = vpack.c.bf16 %v4532, %v4531
    %v4708 = vpack.c.bf16 %v4534, %v4533
    %4710 = vset.pattern.permute.xlu0 0
    %4711 = vperm.xlu0 %4710, %v572
    %v4712 = vpop.permute.xlu0 %4711
    %v4715 = vsel %vm770, %v571, 0
    %v4718 = vsel %vm770, %v4707, 0
    %v4721 = vsel %vm770, %v4708, 0
    %4723 = vmatprep.subr.bf16.mxu0 0
    %4724 = vmatpush1.bf16.xpose.msra.mxu0 %v4718
    %4725 = vmatprep.subr.bf16.mxu0 0
    %4726 = vmatpush1.bf16.xpose.msra.mxu0 %v4721
    %4727 = vmatprep.subr.bf16.mxu0 0
    %4728 = vmatpush1.bf16.xpose.msra.mxu0 0
    %4729 = vmatprep.subr.bf16.mxu0 0
    %4730 = vmatpush1.bf16.xpose.msra.mxu0 0
    %4731 = vmatprep.subr.bf16.mxu0 0
    %4732 = vmatpush1.bf16.xpose.msra.mxu0 0
    %4733 = vmatprep.subr.bf16.mxu0 0
    %4734 = vmatpush1.bf16.xpose.msra.mxu0 0
    %4735 = vmatprep.subr.bf16.mxu0 0
    %4736 = vmatpush1.bf16.xpose.msra.mxu0 0
    %4737 = vmatprep.subr.bf16.mxu0 0
    %4738 = vmatpush1.bf16.xpose.msra.mxu0 0
    %4739 = vmatprep.subr.bf16.mxu0 0
    %4740 = vmatpush1.bf16.xpose.msra.mxu0 0
    %4741 = vmatprep.subr.bf16.mxu0 0
    %4742 = vmatpush1.bf16.xpose.msra.mxu0 0
    %4743 = vmatprep.subr.bf16.mxu0 0
    %4744 = vmatpush1.bf16.xpose.msra.mxu0 0
    %4745 = vmatprep.subr.bf16.mxu0 0
    %4746 = vmatpush1.bf16.xpose.msra.mxu0 0
    %4747 = vmatprep.subr.bf16.mxu0 0
    %4748 = vmatpush1.bf16.xpose.msra.mxu0 0
    %4749 = vmatprep.subr.bf16.mxu0 0
    %4750 = vmatpush1.bf16.xpose.msra.mxu0 0
    %4751 = vmatprep.subr.bf16.mxu0 0
    %4752 = vmatpush1.bf16.xpose.msra.mxu0 0
    %4753 = vmatprep.subr.bf16.mxu0 0
    %4754 = vmatpush1.bf16.xpose.msra.mxu0 0
    %4755 = vmatprep.mubr.bf16.mxu0 0
    %4756 = vmatmul.mubr.bf16.gmra.mrb[0].mxu0 %v4715
    %v4757 = vpop.f32.mrb[0].mxu0
    %v4758 = vadd.f32 %v4712, %v4757
    %v4759 = vpop.f32.mrb[0].mxu0
    %v4760 = vpop.f32.mrb[0].mxu0
    %v4761 = vpop.f32.mrb[0].mxu0
    %4762 = vdwg.mxu0
    %v4763 = vmul.f32 %v4758, 0.5
    %v4764 = vtanh.pop %v4763
    %v4765 = vadd.f32 %v4764, 1.0
    %v4766 = vmul.f32 %v4765, 0.5
    %4767 = vst.msk [vmem:[#allocation33] sm:$0xff] %vm1644, %v4766
    %v4768 = vpack.c.bf16 %v4652, %v4651
    %4770 = vset.pattern.permute.xlu0 0
    %4771 = vperm.xlu0 %4770, %v576
    %v4772 = vpop.permute.xlu0 %4771
    %v4775 = vsel %vm770, %v575, 0
    %v4778 = vsel %vm770, %v4768, 0
    %4780 = vmatprep.subr.bf16.mxu0 0
    %4781 = vmatpush1.bf16.xpose.msra.mxu0 %v4778
    %4782 = vmatprep.subr.bf16.mxu0 0
    %4783 = vmatpush1.bf16.xpose.msra.mxu0 0
    %4784 = vmatprep.subr.bf16.mxu0 0
    %4785 = vmatpush1.bf16.xpose.msra.mxu0 0
    %4786 = vmatprep.subr.bf16.mxu0 0
    %4787 = vmatpush1.bf16.xpose.msra.mxu0 0
    %4788 = vmatprep.subr.bf16.mxu0 0
    %4789 = vmatpush1.bf16.xpose.msra.mxu0 0
    %4790 = vmatprep.subr.bf16.mxu0 0
    %4791 = vmatpush1.bf16.xpose.msra.mxu0 0
    %4792 = vmatprep.subr.bf16.mxu0 0
    %4793 = vmatpush1.bf16.xpose.msra.mxu0 0
    %4794 = vmatprep.subr.bf16.mxu0 0
    %4795 = vmatpush1.bf16.xpose.msra.mxu0 0
    %4796 = vmatprep.subr.bf16.mxu0 0
    %4797 = vmatpush1.bf16.xpose.msra.mxu0 0
    %4798 = vmatprep.subr.bf16.mxu0 0
    %4799 = vmatpush1.bf16.xpose.msra.mxu0 0
    %4800 = vmatprep.subr.bf16.mxu0 0
    %4801 = vmatpush1.bf16.xpose.msra.mxu0 0
    %4802 = vmatprep.subr.bf16.mxu0 0
    %4803 = vmatpush1.bf16.xpose.msra.mxu0 0
    %4804 = vmatprep.subr.bf16.mxu0 0
    %4805 = vmatpush1.bf16.xpose.msra.mxu0 0
    %4806 = vmatprep.subr.bf16.mxu0 0
    %4807 = vmatpush1.bf16.xpose.msra.mxu0 0
    %4808 = vmatprep.subr.bf16.mxu0 0
    %4809 = vmatpush1.bf16.xpose.msra.mxu0 0
    %4810 = vmatprep.subr.bf16.mxu0 0
    %4811 = vmatpush1.bf16.xpose.msra.mxu0 0
    %4812 = vmatprep.mubr.bf16.mxu0 0
    %4813 = vmatmul.mubr.bf16.gmra.mrb[0].mxu0 %v4775
    %v4814 = vpop.f32.mrb[0].mxu0
    %v4815 = vadd.f32 %v4772, %v4814
    %v4816 = vpop.f32.mrb[0].mxu0
    %v4817 = vpop.f32.mrb[0].mxu0
    %v4818 = vpop.f32.mrb[0].mxu0
    %4819 = vdwg.mxu0
    %v4820 = vmul.f32 %v4815, 0.5
    %v4821 = vtanh.pop %v4820
    %v4822 = vadd.f32 %v4821, 1.0
    %v4823 = vmul.f32 %v4822, 0.5
    %4824 = vst.msk [vmem:[#allocation34] sm:$0xff] %vm770, %v4823
    %v4825 = vpack.c.bf16 %v4706, %v4706
    %4827 = vset.pattern.permute.xlu0 0
    %4828 = vperm.xlu0 %4827, %v574
    %v4829 = vpop.permute.xlu0 %4828
    %v4832 = vsel %vm892, %v573, 0
    %v4835 = vsel %vm892, %v4825, 0
    %4837 = vmatprep.subr.bf16.mxu0 0
    %4838 = vmatpush1.bf16.xpose.msra.mxu0 %v4835
    %4839 = vmatprep.subr.bf16.mxu0 0
    %4840 = vmatpush1.bf16.xpose.msra.mxu0 0
    %4841 = vmatprep.subr.bf16.mxu0 0
    %4842 = vmatpush1.bf16.xpose.msra.mxu0 0
    %4843 = vmatprep.subr.bf16.mxu0 0
    %4844 = vmatpush1.bf16.xpose.msra.mxu0 0
    %4845 = vmatprep.subr.bf16.mxu0 0
    %4846 = vmatpush1.bf16.xpose.msra.mxu0 0
    %4847 = vmatprep.subr.bf16.mxu0 0
    %4848 = vmatpush1.bf16.xpose.msra.mxu0 0
    %4849 = vmatprep.subr.bf16.mxu0 0
    %4850 = vmatpush1.bf16.xpose.msra.mxu0 0
    %4851 = vmatprep.subr.bf16.mxu0 0
    %4852 = vmatpush1.bf16.xpose.msra.mxu0 0
    %4853 = vmatprep.subr.bf16.mxu0 0
    %4854 = vmatpush1.bf16.xpose.msra.mxu0 0
    %4855 = vmatprep.subr.bf16.mxu0 0
    %4856 = vmatpush1.bf16.xpose.msra.mxu0 0
    %4857 = vmatprep.subr.bf16.mxu0 0
    %4858 = vmatpush1.bf16.xpose.msra.mxu0 0
    %4859 = vmatprep.subr.bf16.mxu0 0
    %4860 = vmatpush1.bf16.xpose.msra.mxu0 0
    %4861 = vmatprep.subr.bf16.mxu0 0
    %4862 = vmatpush1.bf16.xpose.msra.mxu0 0
    %4863 = vmatprep.subr.bf16.mxu0 0
    %4864 = vmatpush1.bf16.xpose.msra.mxu0 0
    %4865 = vmatprep.subr.bf16.mxu0 0
    %4866 = vmatpush1.bf16.xpose.msra.mxu0 0
    %4867 = vmatprep.subr.bf16.mxu0 0
    %4868 = vmatpush1.bf16.xpose.msra.mxu0 0
    %4869 = vmatprep.mubr.bf16.mxu0 0
    %4870 = vmatmul.mubr.bf16.gmra.mrb[0].mxu0 %v4832
    %v4871 = vpop.f32.mrb[0].mxu0
    %v4872 = vadd.f32 %v4829, %v4871
    %v4873 = vpop.f32.mrb[0].mxu0
    %v4874 = vpop.f32.mrb[0].mxu0
    %v4875 = vpop.f32.mrb[0].mxu0
    %4876 = vdwg.mxu0
    %vm4877 = vcmask 15360
    %4878 = vst.msk [vmem:[%s147] sm:$0xff] %vm4877, %v4872
    // Predicated region
    $region352: #{tpu_custom_call.1} parent=1 // pred_check
      _
    $region353: #{tpu_custom_call.1} parent=1 // pred_check_branch
      %4880 = sbr.rel (0) target = $region355
    $region354: #{tpu_custom_call.1} parent=1 // pred_region
      %s4882 = ssub.s32 128, 128
      %4883 = vsyncadd [#allocation14], %s4882
      %s4885 = sshll.u32 [#allocation33], 4
      %s4886 = int_to_ptr.vmem [resolvable:$true] %s4885
      %4888 = dma.vmem_to_hbm [thread:$0]  %s4886, 128, %s143, [#allocation14]
    $region355: #{tpu_custom_call.1} parent=1 // pred_fallthru
      _
    // Predicated region
    $region356: #{tpu_custom_call.1} parent=1 // pred_check
      _
    $region357: #{tpu_custom_call.1} parent=1 // pred_check_branch
      %4890 = sbr.rel (0) target = $region359
    $region358: #{tpu_custom_call.1} parent=1 // pred_region
      %s4892 = ssub.s32 128, 128
      %4893 = vsyncadd [#allocation35], %s4892
      %s4895 = sshll.u32 [#allocation34], 4
      %s4896 = int_to_ptr.vmem [resolvable:$true] %s4895
      %4898 = dma.vmem_to_hbm [thread:$0]  %s4896, 128, %s145, [#allocation35]
    $region359: #{tpu_custom_call.1} parent=1 // pred_fallthru
      _
    // Predicated region
    $region360: #{tpu_custom_call.1} parent=1 // pred_check
      _
    $region361: #{tpu_custom_call.1} parent=1 // pred_check_branch
      %4900 = sbr.rel (0) target = $region363
    $region362: #{tpu_custom_call.1} parent=1 // pred_region
      _
    $region363: #{tpu_custom_call.1} parent=1 // pred_fallthru
      _
    // Predicated region
    $region364: #{tpu_custom_call.1} parent=1 // pred_check
      _
    $region365: #{tpu_custom_call.1} parent=1 // pred_check_branch
      %4902 = sbr.rel (0) target = $region367
    $region366: #{tpu_custom_call.1} parent=1 // pred_region
      %4903 = dma.done [#allocation14], 128
    $region367: #{tpu_custom_call.1} parent=1 // pred_fallthru
      _
    // Predicated region
    $region368: #{tpu_custom_call.1} parent=1 // pred_check
      _
    $region369: #{tpu_custom_call.1} parent=1 // pred_check_branch
      %4905 = sbr.rel (0) target = $region371
    $region370: #{tpu_custom_call.1} parent=1 // pred_region
      %4906 = dma.done [#allocation35], 128
    $region371: #{tpu_custom_call.1} parent=1 // pred_fallthru
      _
    // Predicated region
    $region372: #{tpu_custom_call.1} parent=1 // pred_check
      _
    $region373: #{tpu_custom_call.1} parent=1 // pred_check_branch
      %4908 = sbr.rel (0) target = $region375
    $region374: #{tpu_custom_call.1} parent=1 // pred_region
      _
    $region375: #{tpu_custom_call.1} parent=1 // pred_fallthru
      _
    %4909 = vsyncpa [#allocation13], 1
    %4910 = vsyncpa [#allocation16], 1
    %4911 = vsyncpa [#allocation19], 1
    %4912 = vsyncpa [#allocation22], 1
    %4913 = vsyncpa [#allocation25], 1
    %4914 = vsyncpa [#allocation28], 1
    %4915 = vsyncpa [#allocation31], 1
    %4916 = vsyncpa [#allocation14], 1
    %4917 = vsyncpa [#allocation35], 1

</llo_original>
